<compile_context>
chip_gen: v7x
topology: tpu7x:2x2x1
jax: 0.10.0
libtpu: 0.0.40
codegen_flags: <defaults>
</compile_context>

<pallas_src>
import functools

import jax
import jax.numpy as jnp
import numpy as np
from jax import lax
from jax.experimental import pallas as pl
from jax.experimental.pallas import tpu as pltpu


def _round_up(x, m):
    return ((x + m - 1) // m) * m


def _classifier_kernel(x_hbm, w_ref, b_ref, o_ref, band_buf, sems, *,
                       row_tile, w_cols, dilations, max_pad):
    """One (batch n, row-tile t) grid step.

    x_hbm   : (N, Hp, Wp, Cin)      zero-padded NHWC image, resident in HBM
    w_ref   : (NB*3, 3*Cin, Cpad)   per-(branch, ky) K-folded weights (VMEM)
    b_ref   : (1, Cpad)             summed branch biases, f32 (VMEM)
    o_ref   : (row_tile*w_cols, Cpad) lane-dense flat output slab
    band_buf: VMEM (2, band_rows, Wp, Cin) double-buffered input band
    sems    : DMA semaphores, shape (2,)
    """
    n = pl.program_id(0)
    t = pl.program_id(1)
    num_tiles = pl.num_programs(1)
    band_rows = row_tile + 2 * max_pad
    slot = t % 2

    def band_copy(tile_idx, s):
        row0 = pl.multiple_of(tile_idx * row_tile, row_tile)
        return pltpu.make_async_copy(
            x_hbm.at[n, pl.ds(row0, band_rows)],
            band_buf.at[s], sems.at[s])

    # Prime the pipeline at the first row tile of this batch element.
    @pl.when(t == 0)
    def _():
        band_copy(0, 0).start()

    # Wait for this tile's band, then immediately prefetch the next one so its
    # HBM fetch overlaps the NB*3 matmuls below.
    band_copy(t, slot).wait()

    @pl.when(t + 1 < num_tiles)
    def _():
        band_copy(t + 1, 1 - slot).start()

    band = band_buf.at[slot]
    m = row_tile * w_cols
    cpad = o_ref.shape[-1]

    # f32 accumulator kept as a value (no per-step VMEM round-trips); the
    # summed bias is folded into its initialization; single store at the end.
    acc = jnp.broadcast_to(b_ref[...], (m, cpad)).astype(jnp.float32)
    for bi, d in enumerate(dilations):
        base = max_pad - d
        for ky in range(3):
            oy = base + ky * d                           # static band offsets
            # im2col limited to the row_tile rows actually used: fold the 3 kx
            # taps of this (branch, ky) into the contraction dimension.
            patch = jnp.concatenate(
                [band[oy:oy + row_tile,
                      base + kx * d: base + kx * d + w_cols, :]
                 for kx in range(3)],
                axis=-1).reshape(m, -1)
            acc = acc + jnp.dot(patch, w_ref[bi * 3 + ky],
                                preferred_element_type=jnp.float32)

    o_ref[...] = acc.astype(o_ref.dtype)


def _default_vmem_limit_bytes():
    # ~75% of physical VMEM: ~48 MiB on v7x (64 MiB), ~96 MiB on v5e/v6e (128 MiB).
    try:
        cap = int(pltpu.get_tpu_info().vmem_capacity_bytes)
        return max(min(cap * 3 // 4, 112 * 1024 * 1024), 32 * 1024 * 1024)
    except Exception:
        return 48 * 1024 * 1024


def classifier_module_forward(x_nchw, w_oihw, biases, dilation_series,
                              padding_series, *, compute_dtype=jnp.bfloat16,
                              row_tile=8, vmem_limit_bytes=None):
    """x_nchw: (N, Cin, H, W); w_oihw: (NB, Cout, Cin, 3, 3); biases: (NB, Cout)."""
    # padding == dilation in this module's usage -> same-size output everywhere.
    assert list(dilation_series) == list(padding_series), \
        "kernel assumes padding == dilation (same-size outputs for all branches)"

    N, Cin, H, W = x_nchw.shape
    NB, Cout = w_oihw.shape[0], w_oihw.shape[1]
    max_pad = int(max(padding_series))
    out_dtype = x_nchw.dtype

    # Lane/sublane-friendly padded sizes (all sliced back off below).
    cpad = _round_up(max(Cout, 1), 128)        # lane-dense output channels
    cin_pad = _round_up(Cin, 128)              # lane-dense K = 3*cin_pad
    w_pad = _round_up(W, 8)                    # layout-preserving flatten
    h_pad = _round_up(H, row_tile)             # keep T > 1 (no whole-H fallback)
    num_tiles = h_pad // row_tile
    band_rows = row_tile + 2 * max_pad
    hp = h_pad + 2 * max_pad
    wp = _round_up(w_pad + 2 * max_pad, 8)

    # ---- layout plumbing in plain JAX ----
    x_nhwc = jnp.transpose(x_nchw, (0, 2, 3, 1)).astype(compute_dtype)
    x_hbm = jnp.pad(x_nhwc, ((0, 0),
                             (max_pad, hp - H - max_pad),
                             (max_pad, wp - W - max_pad),
                             (0, cin_pad - Cin)))             # (N, hp, wp, cin_pad)

    # (NB,Cout,Cin,3,3) -> (NB,ky,kx,Cin,Cout) -> pad Cin/Cout -> (NB*3, 3*cin_pad, cpad)
    w_r = jnp.transpose(w_oihw, (0, 3, 4, 2, 1))
    w_r = jnp.pad(w_r, ((0, 0), (0, 0), (0, 0),
                        (0, cin_pad - Cin), (0, cpad - Cout)))
    w_stacked = w_r.reshape(NB * 3, 3 * cin_pad, cpad).astype(compute_dtype)

    bias_sum = jnp.pad(jnp.sum(biases, axis=0, keepdims=True).astype(jnp.float32),
                       ((0, 0), (0, cpad - Cout)))            # (1, cpad)

    if vmem_limit_bytes is None:
        vmem_limit_bytes = _default_vmem_limit_bytes()

    kernel = functools.partial(
        _classifier_kernel, row_tile=row_tile, w_cols=w_pad,
        dilations=tuple(int(d) for d in dilation_series), max_pad=max_pad)

    def build_call(single_buffer_invariants):
        inv = ({"pipeline_mode": pl.Buffered(1)}
               if single_buffer_invariants else {})
        return pl.pallas_call(
            kernel,
            out_shape=jax.ShapeDtypeStruct((N, h_pad * w_pad, cpad), out_dtype),
            grid=(N, num_tiles),
            in_specs=[
                # padded image stays in HBM; halo bands are streamed manually
                pl.BlockSpec(memory_space=pl.ANY),
                # grid-invariant weights / bias: fetched once, single-buffered
                pl.BlockSpec((NB * 3, 3 * cin_pad, cpad),
                             lambda n, t: (0, 0, 0), **inv),
                pl.BlockSpec((1, cpad), lambda n, t: (0, 0), **inv),
            ],
            out_specs=pl.BlockSpec((None, row_tile * w_pad, cpad),
                                   lambda n, t: (n, t, 0)),
            scratch_shapes=[
                pltpu.VMEM((2, band_rows, wp, cin_pad), compute_dtype),
                pltpu.SemaphoreType.DMA((2,)),
            ],
            compiler_params=pltpu.CompilerParams(
                # t must stay sequential per batch element (manual double
                # buffering across the row-tile axis); n shards across cores.
                dimension_semantics=("parallel", "arbitrary"),
                vmem_limit_bytes=vmem_limit_bytes),
        )

    try:
        out_flat = build_call(True)(x_hbm, w_stacked, bias_sum)
    except Exception:
        # pl.Buffered(1) unsupported on this JAX version -> default buffering.
        out_flat = build_call(False)(x_hbm, w_stacked, bias_sum)

    out_nhwc = out_flat.reshape(N, h_pad, w_pad, cpad)[:, :H, :W, :Cout]
    return jnp.transpose(out_nhwc, (0, 3, 1, 2)).astype(out_dtype)        # NCHW


def _reference_forward(x_nchw, w_oihw, biases, dilation_series, padding_series):
    """Pure-JAX reference matching the PyTorch module semantics."""
    out = None
    for i, (d, p) in enumerate(zip(dilation_series, padding_series)):
        o = lax.conv_general_dilated(
            x_nchw, w_oihw[i], window_strides=(1, 1),
            padding=[(p, p), (p, p)], rhs_dilation=(d, d),
            dimension_numbers=("NCHW", "OIHW", "NCHW"))
        o = o + biases[i][None, :, None, None]
        out = o if out is None else out + o
    return out


if __name__ == "__main__":
    # Small shapes consistent with the module's forward
    N, Cin, H, W = 2, 4, 16, 16
    num_classes = 6
    dilation_series = [1, 2, 4]
    padding_series = [1, 2, 4]
    NB = len(dilation_series)

    key = jax.random.PRNGKey(0)
    kx_, kw_, kb_ = jax.random.split(key, 3)

    x = jax.random.normal(kx_, (N, Cin, H, W), dtype=jnp.float32)
    # weight init matches module: normal(0, 0.01); bias: small deterministic uniform
    w = 0.01 * jax.random.normal(kw_, (NB, num_classes, Cin, 3, 3), dtype=jnp.float32)
    b = 0.1 * jax.random.uniform(kb_, (NB, num_classes), dtype=jnp.float32,
                                 minval=-1.0, maxval=1.0)

    ref = _reference_forward(x, w, b, dilation_series, padding_series)

    # Exact float32-operand path: validates the halo-band / dilation index math.
    out_f32 = jax.block_until_ready(
        classifier_module_forward(x, w, b, dilation_series, padding_series,
                                  compute_dtype=jnp.float32))
    np.testing.assert_allclose(np.asarray(out_f32), np.asarray(ref),
                               rtol=1e-4, atol=1e-4)

    # Default bf16-operand path (f32 MXU accumulation).
    out_bf16 = jax.block_until_ready(
        classifier_module_forward(x, w, b, dilation_series, padding_series))
    np.testing.assert_allclose(np.asarray(out_bf16), np.asarray(ref),
                               rtol=2e-2, atol=5e-3)

    print("KERNEL_OK")
</pallas_src>

<mosaic_0001>
module attributes {stable_mosaic.version = 11 : i64} {
  func.func @_classifier_kernel(%arg0: i32, %arg1: i32, %arg2: memref<2x24x24x128xf32, #tpu.memory_space<any>>, %arg3: memref<9x384x128xf32, #tpu.memory_space<vmem>>, %arg4: memref<1x128xf32, #tpu.memory_space<vmem>>, %arg5: memref<1x128x128xf32, #tpu.memory_space<vmem>>, %arg6: memref<2x16x24x128xf32, #tpu.memory_space<vmem>>, %arg7: memref<2x!tpu.dma_semaphore, #tpu.memory_space<semaphore_mem>>) attributes {dimension_semantics = [#tpu.dimension_semantics<parallel>, #tpu.dimension_semantics<arbitrary>], iteration_bounds = array<i64: 2, 2>, scalar_prefetch = 0 : i64, scratch_operands = 2 : i64, tpu.core_type = #tpu.core_type<tc>, window_params = [{}, {pipeline_mode = #tpu.pipeline_mode<synchronous>, transform_indices = @transform_1, window_bounds = array<i64: 9, 384, 128>}, {pipeline_mode = #tpu.pipeline_mode<synchronous>, transform_indices = @transform_2, window_bounds = array<i64: 1, 128>}, {transform_indices = @transform_3, window_bounds = array<i64: 1, 128, 128>}]} {
    %c2_i32 = arith.constant 2 : i32
    %c0_i32 = arith.constant 0 : i32
    %0 = arith.cmpi eq, %c2_i32, %c0_i32 : i32
    %c1_i32 = arith.constant 1 : i32
    %1 = arith.select %0, %c1_i32, %c2_i32 : i32
    %2 = arith.remsi %arg1, %1 : i32
    %c0_i32_0 = arith.constant 0 : i32
    %3 = arith.cmpi ne, %2, %c0_i32_0 : i32
    %c0_i32_1 = arith.constant 0 : i32
    %4 = arith.cmpi slt, %2, %c0_i32_1 : i32
    %c0_i32_2 = arith.constant 0 : i32
    %5 = arith.cmpi slt, %1, %c0_i32_2 : i32
    %6 = arith.xori %4, %5 : i1
    %7 = arith.andi %6, %3 : i1
    %8 = arith.addi %2, %1 : i32
    %9 = arith.select %7, %8, %2 : i32
    %c0_i32_3 = arith.constant 0 : i32
    %10 = arith.cmpi eq, %arg1, %c0_i32_3 : i32
    %11 = arith.extui %10 : i1 to i32
    %c0_i32_4 = arith.constant 0 : i32
    %12 = arith.cmpi ne, %11, %c0_i32_4 : i32
    scf.if %12 {
      %c0_i32_206 = arith.constant 0 : i32
      %166 = tpu.assume_multiple %c0_i32_206, 8 : i32
      %c0_i32_207 = arith.constant 0 : i32
      %c0_i32_208 = arith.constant 0 : i32
      %c0_i32_209 = arith.constant 0 : i32
      %c0_i32_210 = arith.constant 0 : i32
      %167 = tpu.memref_slice %arg2[%arg0, %166, %c0_i32_209, %c0_i32_210] : memref<2x24x24x128xf32, #tpu.memory_space<any>> -> memref<1x16x24x128xf32, #tpu.memory_space<any>>
      %168 = tpu.memref_squeeze %167 : memref<1x16x24x128xf32, #tpu.memory_space<any>> -> memref<16x24x128xf32, #tpu.memory_space<any>>
      %c0_i32_211 = arith.constant 0 : i32
      %c0_i32_212 = arith.constant 0 : i32
      %c0_i32_213 = arith.constant 0 : i32
      %169 = tpu.memref_slice %arg6[%c0_i32_207, %c0_i32_211, %c0_i32_212, %c0_i32_213] : memref<2x16x24x128xf32, #tpu.memory_space<vmem>> -> memref<1x16x24x128xf32, #tpu.memory_space<vmem>>
      %170 = tpu.memref_squeeze %169 : memref<1x16x24x128xf32, #tpu.memory_space<vmem>> -> memref<16x24x128xf32, #tpu.memory_space<vmem>>
      %171 = tpu.memref_slice %arg7[%c0_i32_208] : memref<2x!tpu.dma_semaphore, #tpu.memory_space<semaphore_mem>> -> memref<1x!tpu.dma_semaphore, #tpu.memory_space<semaphore_mem>>
      %172 = tpu.memref_squeeze %171 : memref<1x!tpu.dma_semaphore, #tpu.memory_space<semaphore_mem>> -> memref<!tpu.dma_semaphore, #tpu.memory_space<semaphore_mem>>
      tpu.enqueue_dma source(%168 : memref<16x24x128xf32, #tpu.memory_space<any>>) target(%170 : memref<16x24x128xf32, #tpu.memory_space<vmem>>) target_semaphore(%172 : memref<!tpu.dma_semaphore, #tpu.memory_space<semaphore_mem>>)
    } else {
    }
    %c8_i32 = arith.constant 8 : i32
    %13 = arith.muli %arg1, %c8_i32 : i32
    %14 = tpu.assume_multiple %13, 8 : i32
    %c0_i32_5 = arith.constant 0 : i32
    %c0_i32_6 = arith.constant 0 : i32
    %15 = tpu.memref_slice %arg2[%arg0, %14, %c0_i32_5, %c0_i32_6] : memref<2x24x24x128xf32, #tpu.memory_space<any>> -> memref<1x16x24x128xf32, #tpu.memory_space<any>>
    %16 = tpu.memref_squeeze %15 : memref<1x16x24x128xf32, #tpu.memory_space<any>> -> memref<16x24x128xf32, #tpu.memory_space<any>>
    %c0_i32_7 = arith.constant 0 : i32
    %c0_i32_8 = arith.constant 0 : i32
    %c0_i32_9 = arith.constant 0 : i32
    %17 = tpu.memref_slice %arg6[%9, %c0_i32_7, %c0_i32_8, %c0_i32_9] : memref<2x16x24x128xf32, #tpu.memory_space<vmem>> -> memref<1x16x24x128xf32, #tpu.memory_space<vmem>>
    %18 = tpu.memref_squeeze %17 : memref<1x16x24x128xf32, #tpu.memory_space<vmem>> -> memref<16x24x128xf32, #tpu.memory_space<vmem>>
    %19 = tpu.memref_slice %arg7[%9] : memref<2x!tpu.dma_semaphore, #tpu.memory_space<semaphore_mem>> -> memref<1x!tpu.dma_semaphore, #tpu.memory_space<semaphore_mem>>
    %20 = tpu.memref_squeeze %19 : memref<1x!tpu.dma_semaphore, #tpu.memory_space<semaphore_mem>> -> memref<!tpu.dma_semaphore, #tpu.memory_space<semaphore_mem>>
    tpu.wait_dma2 semaphore(%20 : memref<!tpu.dma_semaphore, #tpu.memory_space<semaphore_mem>>) src(%16 : memref<16x24x128xf32, #tpu.memory_space<any>>) dst(%18 : memref<16x24x128xf32, #tpu.memory_space<vmem>>)
    %c1_i32_10 = arith.constant 1 : i32
    %21 = arith.addi %arg1, %c1_i32_10 : i32
    %c2_i32_11 = arith.constant 2 : i32
    %22 = arith.cmpi slt, %21, %c2_i32_11 : i32
    %23 = arith.extui %22 : i1 to i32
    %c0_i32_12 = arith.constant 0 : i32
    %24 = arith.cmpi ne, %23, %c0_i32_12 : i32
    scf.if %24 {
      %c1_i32_206 = arith.constant 1 : i32
      %166 = arith.addi %arg1, %c1_i32_206 : i32
      %c1_i32_207 = arith.constant 1 : i32
      %167 = arith.subi %c1_i32_207, %9 : i32
      %c8_i32_208 = arith.constant 8 : i32
      %168 = arith.muli %166, %c8_i32_208 : i32
      %169 = tpu.assume_multiple %168, 8 : i32
      %c0_i32_209 = arith.constant 0 : i32
      %c0_i32_210 = arith.constant 0 : i32
      %170 = tpu.memref_slice %arg2[%arg0, %169, %c0_i32_209, %c0_i32_210] : memref<2x24x24x128xf32, #tpu.memory_space<any>> -> memref<1x16x24x128xf32, #tpu.memory_space<any>>
      %171 = tpu.memref_squeeze %170 : memref<1x16x24x128xf32, #tpu.memory_space<any>> -> memref<16x24x128xf32, #tpu.memory_space<any>>
      %c0_i32_211 = arith.constant 0 : i32
      %c0_i32_212 = arith.constant 0 : i32
      %c0_i32_213 = arith.constant 0 : i32
      %172 = tpu.memref_slice %arg6[%167, %c0_i32_211, %c0_i32_212, %c0_i32_213] : memref<2x16x24x128xf32, #tpu.memory_space<vmem>> -> memref<1x16x24x128xf32, #tpu.memory_space<vmem>>
      %173 = tpu.memref_squeeze %172 : memref<1x16x24x128xf32, #tpu.memory_space<vmem>> -> memref<16x24x128xf32, #tpu.memory_space<vmem>>
      %174 = tpu.memref_slice %arg7[%167] : memref<2x!tpu.dma_semaphore, #tpu.memory_space<semaphore_mem>> -> memref<1x!tpu.dma_semaphore, #tpu.memory_space<semaphore_mem>>
      %175 = tpu.memref_squeeze %174 : memref<1x!tpu.dma_semaphore, #tpu.memory_space<semaphore_mem>> -> memref<!tpu.dma_semaphore, #tpu.memory_space<semaphore_mem>>
      tpu.enqueue_dma source(%171 : memref<16x24x128xf32, #tpu.memory_space<any>>) target(%173 : memref<16x24x128xf32, #tpu.memory_space<vmem>>) target_semaphore(%175 : memref<!tpu.dma_semaphore, #tpu.memory_space<semaphore_mem>>)
    } else {
    }
    %c0 = arith.constant 0 : index
    %c0_13 = arith.constant 0 : index
    %25 = vector.load %arg4[%c0, %c0_13] : memref<1x128xf32, #tpu.memory_space<vmem>>, vector<1x128xf32>
    %26 = vector.shape_cast %25 : vector<1x128xf32> to vector<1x128xf32>
    %27 = vector.broadcast %26 : vector<1x128xf32> to vector<128x128xf32>
    %c0_i32_14 = arith.constant 0 : i32
    %c0_i32_15 = arith.constant 0 : i32
    %c0_i32_16 = arith.constant 0 : i32
    %28 = tpu.memref_slice %arg6[%9, %c0_i32_14, %c0_i32_15, %c0_i32_16] : memref<2x16x24x128xf32, #tpu.memory_space<vmem>> -> memref<1x16x24x128xf32, #tpu.memory_space<vmem>>
    %29 = tpu.memref_squeeze %28 : memref<1x16x24x128xf32, #tpu.memory_space<vmem>> -> memref<16x24x128xf32, #tpu.memory_space<vmem>>
    %c3 = arith.constant 3 : index
    %c3_17 = arith.constant 3 : index
    %c0_18 = arith.constant 0 : index
    %30 = vector.load %29[%c3, %c3_17, %c0_18] : memref<16x24x128xf32, #tpu.memory_space<vmem>>, vector<8x16x128xf32>
    %c0_i32_19 = arith.constant 0 : i32
    %c0_i32_20 = arith.constant 0 : i32
    %c0_i32_21 = arith.constant 0 : i32
    %31 = tpu.memref_slice %arg6[%9, %c0_i32_19, %c0_i32_20, %c0_i32_21] : memref<2x16x24x128xf32, #tpu.memory_space<vmem>> -> memref<1x16x24x128xf32, #tpu.memory_space<vmem>>
    %32 = tpu.memref_squeeze %31 : memref<1x16x24x128xf32, #tpu.memory_space<vmem>> -> memref<16x24x128xf32, #tpu.memory_space<vmem>>
    %c3_22 = arith.constant 3 : index
    %c4 = arith.constant 4 : index
    %c0_23 = arith.constant 0 : index
    %33 = vector.load %32[%c3_22, %c4, %c0_23] : memref<16x24x128xf32, #tpu.memory_space<vmem>>, vector<8x16x128xf32>
    %c0_i32_24 = arith.constant 0 : i32
    %c0_i32_25 = arith.constant 0 : i32
    %c0_i32_26 = arith.constant 0 : i32
    %34 = tpu.memref_slice %arg6[%9, %c0_i32_24, %c0_i32_25, %c0_i32_26] : memref<2x16x24x128xf32, #tpu.memory_space<vmem>> -> memref<1x16x24x128xf32, #tpu.memory_space<vmem>>
    %35 = tpu.memref_squeeze %34 : memref<1x16x24x128xf32, #tpu.memory_space<vmem>> -> memref<16x24x128xf32, #tpu.memory_space<vmem>>
    %c3_27 = arith.constant 3 : index
    %c5 = arith.constant 5 : index
    %c0_28 = arith.constant 0 : index
    %36 = vector.load %35[%c3_27, %c5, %c0_28] : memref<16x24x128xf32, #tpu.memory_space<vmem>>, vector<8x16x128xf32>
    %37 = tpu.concatenate %30, %33, %36 in 2 : vector<8x16x128xf32>, vector<8x16x128xf32>, vector<8x16x128xf32> -> vector<8x16x384xf32>
    %38 = vector.shape_cast %37 : vector<8x16x384xf32> to vector<128x384xf32>
    %c0_29 = arith.constant 0 : index
    %c0_30 = arith.constant 0 : index
    %c0_31 = arith.constant 0 : index
    %39 = vector.load %arg3[%c0_29, %c0_30, %c0_31] : memref<9x384x128xf32, #tpu.memory_space<vmem>>, vector<1x384x128xf32>
    %40 = vector.shape_cast %39 : vector<1x384x128xf32> to vector<384x128xf32>
    %cst = arith.constant dense<0.000000e+00> : vector<128x128xf32>
    %41 = tpu.matmul %38, %40, %cst {dimension_numbers = #tpu.dot_dimension_numbers<[1], [0], [0], [1], [0, 0, 1, 1], [], []>} : vector<128x384xf32>, vector<384x128xf32>, vector<128x128xf32> -> vector<128x128xf32>
    %42 = arith.addf %27, %41 : vector<128x128xf32>
    %c0_i32_32 = arith.constant 0 : i32
    %c0_i32_33 = arith.constant 0 : i32
    %c0_i32_34 = arith.constant 0 : i32
    %43 = tpu.memref_slice %arg6[%9, %c0_i32_32, %c0_i32_33, %c0_i32_34] : memref<2x16x24x128xf32, #tpu.memory_space<vmem>> -> memref<1x16x24x128xf32, #tpu.memory_space<vmem>>
    %44 = tpu.memref_squeeze %43 : memref<1x16x24x128xf32, #tpu.memory_space<vmem>> -> memref<16x24x128xf32, #tpu.memory_space<vmem>>
    %c4_35 = arith.constant 4 : index
    %c3_36 = arith.constant 3 : index
    %c0_37 = arith.constant 0 : index
    %45 = vector.load %44[%c4_35, %c3_36, %c0_37] : memref<16x24x128xf32, #tpu.memory_space<vmem>>, vector<8x16x128xf32>
    %c0_i32_38 = arith.constant 0 : i32
    %c0_i32_39 = arith.constant 0 : i32
    %c0_i32_40 = arith.constant 0 : i32
    %46 = tpu.memref_slice %arg6[%9, %c0_i32_38, %c0_i32_39, %c0_i32_40] : memref<2x16x24x128xf32, #tpu.memory_space<vmem>> -> memref<1x16x24x128xf32, #tpu.memory_space<vmem>>
    %47 = tpu.memref_squeeze %46 : memref<1x16x24x128xf32, #tpu.memory_space<vmem>> -> memref<16x24x128xf32, #tpu.memory_space<vmem>>
    %c4_41 = arith.constant 4 : index
    %c4_42 = arith.constant 4 : index
    %c0_43 = arith.constant 0 : index
    %48 = vector.load %47[%c4_41, %c4_42, %c0_43] : memref<16x24x128xf32, #tpu.memory_space<vmem>>, vector<8x16x128xf32>
    %c0_i32_44 = arith.constant 0 : i32
    %c0_i32_45 = arith.constant 0 : i32
    %c0_i32_46 = arith.constant 0 : i32
    %49 = tpu.memref_slice %arg6[%9, %c0_i32_44, %c0_i32_45, %c0_i32_46] : memref<2x16x24x128xf32, #tpu.memory_space<vmem>> -> memref<1x16x24x128xf32, #tpu.memory_space<vmem>>
    %50 = tpu.memref_squeeze %49 : memref<1x16x24x128xf32, #tpu.memory_space<vmem>> -> memref<16x24x128xf32, #tpu.memory_space<vmem>>
    %c4_47 = arith.constant 4 : index
    %c5_48 = arith.constant 5 : index
    %c0_49 = arith.constant 0 : index
    %51 = vector.load %50[%c4_47, %c5_48, %c0_49] : memref<16x24x128xf32, #tpu.memory_space<vmem>>, vector<8x16x128xf32>
    %52 = tpu.concatenate %45, %48, %51 in 2 : vector<8x16x128xf32>, vector<8x16x128xf32>, vector<8x16x128xf32> -> vector<8x16x384xf32>
    %53 = vector.shape_cast %52 : vector<8x16x384xf32> to vector<128x384xf32>
    %c1 = arith.constant 1 : index
    %c0_50 = arith.constant 0 : index
    %c0_51 = arith.constant 0 : index
    %54 = vector.load %arg3[%c1, %c0_50, %c0_51] : memref<9x384x128xf32, #tpu.memory_space<vmem>>, vector<1x384x128xf32>
    %55 = vector.shape_cast %54 : vector<1x384x128xf32> to vector<384x128xf32>
    %cst_52 = arith.constant dense<0.000000e+00> : vector<128x128xf32>
    %56 = tpu.matmul %53, %55, %cst_52 {dimension_numbers = #tpu.dot_dimension_numbers<[1], [0], [0], [1], [0, 0, 1, 1], [], []>} : vector<128x384xf32>, vector<384x128xf32>, vector<128x128xf32> -> vector<128x128xf32>
    %57 = arith.addf %42, %56 : vector<128x128xf32>
    %c0_i32_53 = arith.constant 0 : i32
    %c0_i32_54 = arith.constant 0 : i32
    %c0_i32_55 = arith.constant 0 : i32
    %58 = tpu.memref_slice %arg6[%9, %c0_i32_53, %c0_i32_54, %c0_i32_55] : memref<2x16x24x128xf32, #tpu.memory_space<vmem>> -> memref<1x16x24x128xf32, #tpu.memory_space<vmem>>
    %59 = tpu.memref_squeeze %58 : memref<1x16x24x128xf32, #tpu.memory_space<vmem>> -> memref<16x24x128xf32, #tpu.memory_space<vmem>>
    %c5_56 = arith.constant 5 : index
    %c3_57 = arith.constant 3 : index
    %c0_58 = arith.constant 0 : index
    %60 = vector.load %59[%c5_56, %c3_57, %c0_58] : memref<16x24x128xf32, #tpu.memory_space<vmem>>, vector<8x16x128xf32>
    %c0_i32_59 = arith.constant 0 : i32
    %c0_i32_60 = arith.constant 0 : i32
    %c0_i32_61 = arith.constant 0 : i32
    %61 = tpu.memref_slice %arg6[%9, %c0_i32_59, %c0_i32_60, %c0_i32_61] : memref<2x16x24x128xf32, #tpu.memory_space<vmem>> -> memref<1x16x24x128xf32, #tpu.memory_space<vmem>>
    %62 = tpu.memref_squeeze %61 : memref<1x16x24x128xf32, #tpu.memory_space<vmem>> -> memref<16x24x128xf32, #tpu.memory_space<vmem>>
    %c5_62 = arith.constant 5 : index
    %c4_63 = arith.constant 4 : index
    %c0_64 = arith.constant 0 : index
    %63 = vector.load %62[%c5_62, %c4_63, %c0_64] : memref<16x24x128xf32, #tpu.memory_space<vmem>>, vector<8x16x128xf32>
    %c0_i32_65 = arith.constant 0 : i32
    %c0_i32_66 = arith.constant 0 : i32
    %c0_i32_67 = arith.constant 0 : i32
    %64 = tpu.memref_slice %arg6[%9, %c0_i32_65, %c0_i32_66, %c0_i32_67] : memref<2x16x24x128xf32, #tpu.memory_space<vmem>> -> memref<1x16x24x128xf32, #tpu.memory_space<vmem>>
    %65 = tpu.memref_squeeze %64 : memref<1x16x24x128xf32, #tpu.memory_space<vmem>> -> memref<16x24x128xf32, #tpu.memory_space<vmem>>
    %c5_68 = arith.constant 5 : index
    %c5_69 = arith.constant 5 : index
    %c0_70 = arith.constant 0 : index
    %66 = vector.load %65[%c5_68, %c5_69, %c0_70] : memref<16x24x128xf32, #tpu.memory_space<vmem>>, vector<8x16x128xf32>
    %67 = tpu.concatenate %60, %63, %66 in 2 : vector<8x16x128xf32>, vector<8x16x128xf32>, vector<8x16x128xf32> -> vector<8x16x384xf32>
    %68 = vector.shape_cast %67 : vector<8x16x384xf32> to vector<128x384xf32>
    %c2 = arith.constant 2 : index
    %c0_71 = arith.constant 0 : index
    %c0_72 = arith.constant 0 : index
    %69 = vector.load %arg3[%c2, %c0_71, %c0_72] : memref<9x384x128xf32, #tpu.memory_space<vmem>>, vector<1x384x128xf32>
    %70 = vector.shape_cast %69 : vector<1x384x128xf32> to vector<384x128xf32>
    %cst_73 = arith.constant dense<0.000000e+00> : vector<128x128xf32>
    %71 = tpu.matmul %68, %70, %cst_73 {dimension_numbers = #tpu.dot_dimension_numbers<[1], [0], [0], [1], [0, 0, 1, 1], [], []>} : vector<128x384xf32>, vector<384x128xf32>, vector<128x128xf32> -> vector<128x128xf32>
    %72 = arith.addf %57, %71 : vector<128x128xf32>
    %c0_i32_74 = arith.constant 0 : i32
    %c0_i32_75 = arith.constant 0 : i32
    %c0_i32_76 = arith.constant 0 : i32
    %73 = tpu.memref_slice %arg6[%9, %c0_i32_74, %c0_i32_75, %c0_i32_76] : memref<2x16x24x128xf32, #tpu.memory_space<vmem>> -> memref<1x16x24x128xf32, #tpu.memory_space<vmem>>
    %74 = tpu.memref_squeeze %73 : memref<1x16x24x128xf32, #tpu.memory_space<vmem>> -> memref<16x24x128xf32, #tpu.memory_space<vmem>>
    %c2_77 = arith.constant 2 : index
    %c2_78 = arith.constant 2 : index
    %c0_79 = arith.constant 0 : index
    %75 = vector.load %74[%c2_77, %c2_78, %c0_79] : memref<16x24x128xf32, #tpu.memory_space<vmem>>, vector<8x16x128xf32>
    %c0_i32_80 = arith.constant 0 : i32
    %c0_i32_81 = arith.constant 0 : i32
    %c0_i32_82 = arith.constant 0 : i32
    %76 = tpu.memref_slice %arg6[%9, %c0_i32_80, %c0_i32_81, %c0_i32_82] : memref<2x16x24x128xf32, #tpu.memory_space<vmem>> -> memref<1x16x24x128xf32, #tpu.memory_space<vmem>>
    %77 = tpu.memref_squeeze %76 : memref<1x16x24x128xf32, #tpu.memory_space<vmem>> -> memref<16x24x128xf32, #tpu.memory_space<vmem>>
    %c2_83 = arith.constant 2 : index
    %c4_84 = arith.constant 4 : index
    %c0_85 = arith.constant 0 : index
    %78 = vector.load %77[%c2_83, %c4_84, %c0_85] : memref<16x24x128xf32, #tpu.memory_space<vmem>>, vector<8x16x128xf32>
    %c0_i32_86 = arith.constant 0 : i32
    %c0_i32_87 = arith.constant 0 : i32
    %c0_i32_88 = arith.constant 0 : i32
    %79 = tpu.memref_slice %arg6[%9, %c0_i32_86, %c0_i32_87, %c0_i32_88] : memref<2x16x24x128xf32, #tpu.memory_space<vmem>> -> memref<1x16x24x128xf32, #tpu.memory_space<vmem>>
    %80 = tpu.memref_squeeze %79 : memref<1x16x24x128xf32, #tpu.memory_space<vmem>> -> memref<16x24x128xf32, #tpu.memory_space<vmem>>
    %c2_89 = arith.constant 2 : index
    %c6 = arith.constant 6 : index
    %c0_90 = arith.constant 0 : index
    %81 = vector.load %80[%c2_89, %c6, %c0_90] : memref<16x24x128xf32, #tpu.memory_space<vmem>>, vector<8x16x128xf32>
    %82 = tpu.concatenate %75, %78, %81 in 2 : vector<8x16x128xf32>, vector<8x16x128xf32>, vector<8x16x128xf32> -> vector<8x16x384xf32>
    %83 = vector.shape_cast %82 : vector<8x16x384xf32> to vector<128x384xf32>
    %c3_91 = arith.constant 3 : index
    %c0_92 = arith.constant 0 : index
    %c0_93 = arith.constant 0 : index
    %84 = vector.load %arg3[%c3_91, %c0_92, %c0_93] : memref<9x384x128xf32, #tpu.memory_space<vmem>>, vector<1x384x128xf32>
    %85 = vector.shape_cast %84 : vector<1x384x128xf32> to vector<384x128xf32>
    %cst_94 = arith.constant dense<0.000000e+00> : vector<128x128xf32>
    %86 = tpu.matmul %83, %85, %cst_94 {dimension_numbers = #tpu.dot_dimension_numbers<[1], [0], [0], [1], [0, 0, 1, 1], [], []>} : vector<128x384xf32>, vector<384x128xf32>, vector<128x128xf32> -> vector<128x128xf32>
    %87 = arith.addf %72, %86 : vector<128x128xf32>
    %c0_i32_95 = arith.constant 0 : i32
    %c0_i32_96 = arith.constant 0 : i32
    %c0_i32_97 = arith.constant 0 : i32
    %88 = tpu.memref_slice %arg6[%9, %c0_i32_95, %c0_i32_96, %c0_i32_97] : memref<2x16x24x128xf32, #tpu.memory_space<vmem>> -> memref<1x16x24x128xf32, #tpu.memory_space<vmem>>
    %89 = tpu.memref_squeeze %88 : memref<1x16x24x128xf32, #tpu.memory_space<vmem>> -> memref<16x24x128xf32, #tpu.memory_space<vmem>>
    %c4_98 = arith.constant 4 : index
    %c2_99 = arith.constant 2 : index
    %c0_100 = arith.constant 0 : index
    %90 = vector.load %89[%c4_98, %c2_99, %c0_100] : memref<16x24x128xf32, #tpu.memory_space<vmem>>, vector<8x16x128xf32>
    %c0_i32_101 = arith.constant 0 : i32
    %c0_i32_102 = arith.constant 0 : i32
    %c0_i32_103 = arith.constant 0 : i32
    %91 = tpu.memref_slice %arg6[%9, %c0_i32_101, %c0_i32_102, %c0_i32_103] : memref<2x16x24x128xf32, #tpu.memory_space<vmem>> -> memref<1x16x24x128xf32, #tpu.memory_space<vmem>>
    %92 = tpu.memref_squeeze %91 : memref<1x16x24x128xf32, #tpu.memory_space<vmem>> -> memref<16x24x128xf32, #tpu.memory_space<vmem>>
    %c4_104 = arith.constant 4 : index
    %c4_105 = arith.constant 4 : index
    %c0_106 = arith.constant 0 : index
    %93 = vector.load %92[%c4_104, %c4_105, %c0_106] : memref<16x24x128xf32, #tpu.memory_space<vmem>>, vector<8x16x128xf32>
    %c0_i32_107 = arith.constant 0 : i32
    %c0_i32_108 = arith.constant 0 : i32
    %c0_i32_109 = arith.constant 0 : i32
    %94 = tpu.memref_slice %arg6[%9, %c0_i32_107, %c0_i32_108, %c0_i32_109] : memref<2x16x24x128xf32, #tpu.memory_space<vmem>> -> memref<1x16x24x128xf32, #tpu.memory_space<vmem>>
    %95 = tpu.memref_squeeze %94 : memref<1x16x24x128xf32, #tpu.memory_space<vmem>> -> memref<16x24x128xf32, #tpu.memory_space<vmem>>
    %c4_110 = arith.constant 4 : index
    %c6_111 = arith.constant 6 : index
    %c0_112 = arith.constant 0 : index
    %96 = vector.load %95[%c4_110, %c6_111, %c0_112] : memref<16x24x128xf32, #tpu.memory_space<vmem>>, vector<8x16x128xf32>
    %97 = tpu.concatenate %90, %93, %96 in 2 : vector<8x16x128xf32>, vector<8x16x128xf32>, vector<8x16x128xf32> -> vector<8x16x384xf32>
    %98 = vector.shape_cast %97 : vector<8x16x384xf32> to vector<128x384xf32>
    %c4_113 = arith.constant 4 : index
    %c0_114 = arith.constant 0 : index
    %c0_115 = arith.constant 0 : index
    %99 = vector.load %arg3[%c4_113, %c0_114, %c0_115] : memref<9x384x128xf32, #tpu.memory_space<vmem>>, vector<1x384x128xf32>
    %100 = vector.shape_cast %99 : vector<1x384x128xf32> to vector<384x128xf32>
    %cst_116 = arith.constant dense<0.000000e+00> : vector<128x128xf32>
    %101 = tpu.matmul %98, %100, %cst_116 {dimension_numbers = #tpu.dot_dimension_numbers<[1], [0], [0], [1], [0, 0, 1, 1], [], []>} : vector<128x384xf32>, vector<384x128xf32>, vector<128x128xf32> -> vector<128x128xf32>
    %102 = arith.addf %87, %101 : vector<128x128xf32>
    %c0_i32_117 = arith.constant 0 : i32
    %c0_i32_118 = arith.constant 0 : i32
    %c0_i32_119 = arith.constant 0 : i32
    %103 = tpu.memref_slice %arg6[%9, %c0_i32_117, %c0_i32_118, %c0_i32_119] : memref<2x16x24x128xf32, #tpu.memory_space<vmem>> -> memref<1x16x24x128xf32, #tpu.memory_space<vmem>>
    %104 = tpu.memref_squeeze %103 : memref<1x16x24x128xf32, #tpu.memory_space<vmem>> -> memref<16x24x128xf32, #tpu.memory_space<vmem>>
    %c6_120 = arith.constant 6 : index
    %c2_121 = arith.constant 2 : index
    %c0_122 = arith.constant 0 : index
    %105 = vector.load %104[%c6_120, %c2_121, %c0_122] : memref<16x24x128xf32, #tpu.memory_space<vmem>>, vector<8x16x128xf32>
    %c0_i32_123 = arith.constant 0 : i32
    %c0_i32_124 = arith.constant 0 : i32
    %c0_i32_125 = arith.constant 0 : i32
    %106 = tpu.memref_slice %arg6[%9, %c0_i32_123, %c0_i32_124, %c0_i32_125] : memref<2x16x24x128xf32, #tpu.memory_space<vmem>> -> memref<1x16x24x128xf32, #tpu.memory_space<vmem>>
    %107 = tpu.memref_squeeze %106 : memref<1x16x24x128xf32, #tpu.memory_space<vmem>> -> memref<16x24x128xf32, #tpu.memory_space<vmem>>
    %c6_126 = arith.constant 6 : index
    %c4_127 = arith.constant 4 : index
    %c0_128 = arith.constant 0 : index
    %108 = vector.load %107[%c6_126, %c4_127, %c0_128] : memref<16x24x128xf32, #tpu.memory_space<vmem>>, vector<8x16x128xf32>
    %c0_i32_129 = arith.constant 0 : i32
    %c0_i32_130 = arith.constant 0 : i32
    %c0_i32_131 = arith.constant 0 : i32
    %109 = tpu.memref_slice %arg6[%9, %c0_i32_129, %c0_i32_130, %c0_i32_131] : memref<2x16x24x128xf32, #tpu.memory_space<vmem>> -> memref<1x16x24x128xf32, #tpu.memory_space<vmem>>
    %110 = tpu.memref_squeeze %109 : memref<1x16x24x128xf32, #tpu.memory_space<vmem>> -> memref<16x24x128xf32, #tpu.memory_space<vmem>>
    %c6_132 = arith.constant 6 : index
    %c6_133 = arith.constant 6 : index
    %c0_134 = arith.constant 0 : index
    %111 = vector.load %110[%c6_132, %c6_133, %c0_134] : memref<16x24x128xf32, #tpu.memory_space<vmem>>, vector<8x16x128xf32>
    %112 = tpu.concatenate %105, %108, %111 in 2 : vector<8x16x128xf32>, vector<8x16x128xf32>, vector<8x16x128xf32> -> vector<8x16x384xf32>
    %113 = vector.shape_cast %112 : vector<8x16x384xf32> to vector<128x384xf32>
    %c5_135 = arith.constant 5 : index
    %c0_136 = arith.constant 0 : index
    %c0_137 = arith.constant 0 : index
    %114 = vector.load %arg3[%c5_135, %c0_136, %c0_137] : memref<9x384x128xf32, #tpu.memory_space<vmem>>, vector<1x384x128xf32>
    %115 = vector.shape_cast %114 : vector<1x384x128xf32> to vector<384x128xf32>
    %cst_138 = arith.constant dense<0.000000e+00> : vector<128x128xf32>
    %116 = tpu.matmul %113, %115, %cst_138 {dimension_numbers = #tpu.dot_dimension_numbers<[1], [0], [0], [1], [0, 0, 1, 1], [], []>} : vector<128x384xf32>, vector<384x128xf32>, vector<128x128xf32> -> vector<128x128xf32>
    %117 = arith.addf %102, %116 : vector<128x128xf32>
    %c0_i32_139 = arith.constant 0 : i32
    %c0_i32_140 = arith.constant 0 : i32
    %c0_i32_141 = arith.constant 0 : i32
    %118 = tpu.memref_slice %arg6[%9, %c0_i32_139, %c0_i32_140, %c0_i32_141] : memref<2x16x24x128xf32, #tpu.memory_space<vmem>> -> memref<1x16x24x128xf32, #tpu.memory_space<vmem>>
    %119 = tpu.memref_squeeze %118 : memref<1x16x24x128xf32, #tpu.memory_space<vmem>> -> memref<16x24x128xf32, #tpu.memory_space<vmem>>
    %c0_142 = arith.constant 0 : index
    %c0_143 = arith.constant 0 : index
    %c0_144 = arith.constant 0 : index
    %120 = vector.load %119[%c0_142, %c0_143, %c0_144] : memref<16x24x128xf32, #tpu.memory_space<vmem>>, vector<8x16x128xf32>
    %c0_i32_145 = arith.constant 0 : i32
    %c0_i32_146 = arith.constant 0 : i32
    %c0_i32_147 = arith.constant 0 : i32
    %121 = tpu.memref_slice %arg6[%9, %c0_i32_145, %c0_i32_146, %c0_i32_147] : memref<2x16x24x128xf32, #tpu.memory_space<vmem>> -> memref<1x16x24x128xf32, #tpu.memory_space<vmem>>
    %122 = tpu.memref_squeeze %121 : memref<1x16x24x128xf32, #tpu.memory_space<vmem>> -> memref<16x24x128xf32, #tpu.memory_space<vmem>>
    %c0_148 = arith.constant 0 : index
    %c4_149 = arith.constant 4 : index
    %c0_150 = arith.constant 0 : index
    %123 = vector.load %122[%c0_148, %c4_149, %c0_150] : memref<16x24x128xf32, #tpu.memory_space<vmem>>, vector<8x16x128xf32>
    %c0_i32_151 = arith.constant 0 : i32
    %c0_i32_152 = arith.constant 0 : i32
    %c0_i32_153 = arith.constant 0 : i32
    %124 = tpu.memref_slice %arg6[%9, %c0_i32_151, %c0_i32_152, %c0_i32_153] : memref<2x16x24x128xf32, #tpu.memory_space<vmem>> -> memref<1x16x24x128xf32, #tpu.memory_space<vmem>>
    %125 = tpu.memref_squeeze %124 : memref<1x16x24x128xf32, #tpu.memory_space<vmem>> -> memref<16x24x128xf32, #tpu.memory_space<vmem>>
    %c0_154 = arith.constant 0 : index
    %c8 = arith.constant 8 : index
    %c0_155 = arith.constant 0 : index
    %126 = vector.load %125[%c0_154, %c8, %c0_155] : memref<16x24x128xf32, #tpu.memory_space<vmem>>, vector<8x16x128xf32>
    %127 = tpu.concatenate %120, %123, %126 in 2 : vector<8x16x128xf32>, vector<8x16x128xf32>, vector<8x16x128xf32> -> vector<8x16x384xf32>
    %128 = vector.shape_cast %127 : vector<8x16x384xf32> to vector<128x384xf32>
    %c6_156 = arith.constant 6 : index
    %c0_157 = arith.constant 0 : index
    %c0_158 = arith.constant 0 : index
    %129 = vector.load %arg3[%c6_156, %c0_157, %c0_158] : memref<9x384x128xf32, #tpu.memory_space<vmem>>, vector<1x384x128xf32>
    %130 = vector.shape_cast %129 : vector<1x384x128xf32> to vector<384x128xf32>
    %cst_159 = arith.constant dense<0.000000e+00> : vector<128x128xf32>
    %131 = tpu.matmul %128, %130, %cst_159 {dimension_numbers = #tpu.dot_dimension_numbers<[1], [0], [0], [1], [0, 0, 1, 1], [], []>} : vector<128x384xf32>, vector<384x128xf32>, vector<128x128xf32> -> vector<128x128xf32>
    %132 = arith.addf %117, %131 : vector<128x128xf32>
    %c0_i32_160 = arith.constant 0 : i32
    %c0_i32_161 = arith.constant 0 : i32
    %c0_i32_162 = arith.constant 0 : i32
    %133 = tpu.memref_slice %arg6[%9, %c0_i32_160, %c0_i32_161, %c0_i32_162] : memref<2x16x24x128xf32, #tpu.memory_space<vmem>> -> memref<1x16x24x128xf32, #tpu.memory_space<vmem>>
    %134 = tpu.memref_squeeze %133 : memref<1x16x24x128xf32, #tpu.memory_space<vmem>> -> memref<16x24x128xf32, #tpu.memory_space<vmem>>
    %c4_163 = arith.constant 4 : index
    %c0_164 = arith.constant 0 : index
    %c0_165 = arith.constant 0 : index
    %135 = vector.load %134[%c4_163, %c0_164, %c0_165] : memref<16x24x128xf32, #tpu.memory_space<vmem>>, vector<8x16x128xf32>
    %c0_i32_166 = arith.constant 0 : i32
    %c0_i32_167 = arith.constant 0 : i32
    %c0_i32_168 = arith.constant 0 : i32
    %136 = tpu.memref_slice %arg6[%9, %c0_i32_166, %c0_i32_167, %c0_i32_168] : memref<2x16x24x128xf32, #tpu.memory_space<vmem>> -> memref<1x16x24x128xf32, #tpu.memory_space<vmem>>
    %137 = tpu.memref_squeeze %136 : memref<1x16x24x128xf32, #tpu.memory_space<vmem>> -> memref<16x24x128xf32, #tpu.memory_space<vmem>>
    %c4_169 = arith.constant 4 : index
    %c4_170 = arith.constant 4 : index
    %c0_171 = arith.constant 0 : index
    %138 = vector.load %137[%c4_169, %c4_170, %c0_171] : memref<16x24x128xf32, #tpu.memory_space<vmem>>, vector<8x16x128xf32>
    %c0_i32_172 = arith.constant 0 : i32
    %c0_i32_173 = arith.constant 0 : i32
    %c0_i32_174 = arith.constant 0 : i32
    %139 = tpu.memref_slice %arg6[%9, %c0_i32_172, %c0_i32_173, %c0_i32_174] : memref<2x16x24x128xf32, #tpu.memory_space<vmem>> -> memref<1x16x24x128xf32, #tpu.memory_space<vmem>>
    %140 = tpu.memref_squeeze %139 : memref<1x16x24x128xf32, #tpu.memory_space<vmem>> -> memref<16x24x128xf32, #tpu.memory_space<vmem>>
    %c4_175 = arith.constant 4 : index
    %c8_176 = arith.constant 8 : index
    %c0_177 = arith.constant 0 : index
    %141 = vector.load %140[%c4_175, %c8_176, %c0_177] : memref<16x24x128xf32, #tpu.memory_space<vmem>>, vector<8x16x128xf32>
    %142 = tpu.concatenate %135, %138, %141 in 2 : vector<8x16x128xf32>, vector<8x16x128xf32>, vector<8x16x128xf32> -> vector<8x16x384xf32>
    %143 = vector.shape_cast %142 : vector<8x16x384xf32> to vector<128x384xf32>
    %c7 = arith.constant 7 : index
    %c0_178 = arith.constant 0 : index
    %c0_179 = arith.constant 0 : index
    %144 = vector.load %arg3[%c7, %c0_178, %c0_179] : memref<9x384x128xf32, #tpu.memory_space<vmem>>, vector<1x384x128xf32>
    %145 = vector.shape_cast %144 : vector<1x384x128xf32> to vector<384x128xf32>
    %cst_180 = arith.constant dense<0.000000e+00> : vector<128x128xf32>
    %146 = tpu.matmul %143, %145, %cst_180 {dimension_numbers = #tpu.dot_dimension_numbers<[1], [0], [0], [1], [0, 0, 1, 1], [], []>} : vector<128x384xf32>, vector<384x128xf32>, vector<128x128xf32> -> vector<128x128xf32>
    %147 = arith.addf %132, %146 : vector<128x128xf32>
    %c0_i32_181 = arith.constant 0 : i32
    %c0_i32_182 = arith.constant 0 : i32
    %c0_i32_183 = arith.constant 0 : i32
    %148 = tpu.memref_slice %arg6[%9, %c0_i32_181, %c0_i32_182, %c0_i32_183] : memref<2x16x24x128xf32, #tpu.memory_space<vmem>> -> memref<1x16x24x128xf32, #tpu.memory_space<vmem>>
    %149 = tpu.memref_squeeze %148 : memref<1x16x24x128xf32, #tpu.memory_space<vmem>> -> memref<16x24x128xf32, #tpu.memory_space<vmem>>
    %c8_184 = arith.constant 8 : index
    %c0_185 = arith.constant 0 : index
    %c0_186 = arith.constant 0 : index
    %150 = vector.load %149[%c8_184, %c0_185, %c0_186] : memref<16x24x128xf32, #tpu.memory_space<vmem>>, vector<8x16x128xf32>
    %c0_i32_187 = arith.constant 0 : i32
    %c0_i32_188 = arith.constant 0 : i32
    %c0_i32_189 = arith.constant 0 : i32
    %151 = tpu.memref_slice %arg6[%9, %c0_i32_187, %c0_i32_188, %c0_i32_189] : memref<2x16x24x128xf32, #tpu.memory_space<vmem>> -> memref<1x16x24x128xf32, #tpu.memory_space<vmem>>
    %152 = tpu.memref_squeeze %151 : memref<1x16x24x128xf32, #tpu.memory_space<vmem>> -> memref<16x24x128xf32, #tpu.memory_space<vmem>>
    %c8_190 = arith.constant 8 : index
    %c4_191 = arith.constant 4 : index
    %c0_192 = arith.constant 0 : index
    %153 = vector.load %152[%c8_190, %c4_191, %c0_192] : memref<16x24x128xf32, #tpu.memory_space<vmem>>, vector<8x16x128xf32>
    %c0_i32_193 = arith.constant 0 : i32
    %c0_i32_194 = arith.constant 0 : i32
    %c0_i32_195 = arith.constant 0 : i32
    %154 = tpu.memref_slice %arg6[%9, %c0_i32_193, %c0_i32_194, %c0_i32_195] : memref<2x16x24x128xf32, #tpu.memory_space<vmem>> -> memref<1x16x24x128xf32, #tpu.memory_space<vmem>>
    %155 = tpu.memref_squeeze %154 : memref<1x16x24x128xf32, #tpu.memory_space<vmem>> -> memref<16x24x128xf32, #tpu.memory_space<vmem>>
    %c8_196 = arith.constant 8 : index
    %c8_197 = arith.constant 8 : index
    %c0_198 = arith.constant 0 : index
    %156 = vector.load %155[%c8_196, %c8_197, %c0_198] : memref<16x24x128xf32, #tpu.memory_space<vmem>>, vector<8x16x128xf32>
    %157 = tpu.concatenate %150, %153, %156 in 2 : vector<8x16x128xf32>, vector<8x16x128xf32>, vector<8x16x128xf32> -> vector<8x16x384xf32>
    %158 = vector.shape_cast %157 : vector<8x16x384xf32> to vector<128x384xf32>
    %c8_199 = arith.constant 8 : index
    %c0_200 = arith.constant 0 : index
    %c0_201 = arith.constant 0 : index
    %159 = vector.load %arg3[%c8_199, %c0_200, %c0_201] : memref<9x384x128xf32, #tpu.memory_space<vmem>>, vector<1x384x128xf32>
    %160 = vector.shape_cast %159 : vector<1x384x128xf32> to vector<384x128xf32>
    %cst_202 = arith.constant dense<0.000000e+00> : vector<128x128xf32>
    %161 = tpu.matmul %158, %160, %cst_202 {dimension_numbers = #tpu.dot_dimension_numbers<[1], [0], [0], [1], [0, 0, 1, 1], [], []>} : vector<128x384xf32>, vector<384x128xf32>, vector<128x128xf32> -> vector<128x128xf32>
    %162 = arith.addf %147, %161 : vector<128x128xf32>
    %c0_203 = arith.constant 0 : index
    %c0_204 = arith.constant 0 : index
    %c0_205 = arith.constant 0 : index
    %163 = vector.load %arg5[%c0_203, %c0_204, %c0_205] : memref<1x128x128xf32, #tpu.memory_space<vmem>>, vector<1x128x128xf32>
    %164 = vector.shape_cast %163 : vector<1x128x128xf32> to vector<128x128xf32>
    %165 = vector.shape_cast %162 : vector<128x128xf32> to vector<1x128x128xf32>
    tpu.vector_store %arg5[%c0_203, %c0_204, %c0_205], %165 {strides = array<i32>} : memref<1x128x128xf32, #tpu.memory_space<vmem>>, vector<1x128x128xf32>,
    return
  }
  func.func @transform_1(%arg0: i32, %arg1: i32) -> (i32, i32, i32) {
    %c0_i32 = arith.constant 0 : i32
    %c0_i32_0 = arith.constant 0 : i32
    %c0_i32_1 = arith.constant 0 : i32
    %c0_i32_2 = arith.constant 0 : i32
    return %c0_i32, %c0_i32_0, %c0_i32_1 : i32, i32, i32
  }
  func.func @transform_2(%arg0: i32, %arg1: i32) -> (i32, i32) {
    %c0_i32 = arith.constant 0 : i32
    %c0_i32_0 = arith.constant 0 : i32
    %c0_i32_1 = arith.constant 0 : i32
    return %c0_i32, %c0_i32_0 : i32, i32
  }
  func.func @transform_3(%arg0: i32, %arg1: i32) -> (i32, i32, i32) {
    %c0_i32 = arith.constant 0 : i32
    %c0_i32_0 = arith.constant 0 : i32
    return %arg0, %arg1, %c0_i32 : i32, i32, i32
  }
}

module attributes {stable_mosaic.version = 11 : i64} {
  func.func @_classifier_kernel(%arg0: i32, %arg1: i32, %arg2: memref<2x24x24x128xf32, #tpu.memory_space<any>>, %arg3: memref<9x384x128xf32, #tpu.memory_space<vmem>>, %arg4: memref<1x128xf32, #tpu.memory_space<vmem>>, %arg5: memref<1x128x128xf32, #tpu.memory_space<vmem>>, %arg6: memref<2x16x24x128xf32, #tpu.memory_space<vmem>>, %arg7: memref<2x!tpu.dma_semaphore, #tpu.memory_space<semaphore_mem>>) attributes {dimension_semantics = [#tpu.dimension_semantics<parallel>, #tpu.dimension_semantics<arbitrary>], iteration_bounds = array<i64: 2, 2>, scalar_prefetch = 0 : i64, scratch_operands = 2 : i64, tpu.core_type = #tpu.core_type<tc>, window_params = [{}, {pipeline_mode = #tpu.pipeline_mode<synchronous>, transform_indices = @transform_1, window_bounds = array<i64: 9, 384, 128>}, {pipeline_mode = #tpu.pipeline_mode<synchronous>, transform_indices = @transform_2, window_bounds = array<i64: 1, 128>}, {transform_indices = @transform_3, window_bounds = array<i64: 1, 128, 128>}]} {
    %c2_i32 = arith.constant 2 : i32
    %c0_i32 = arith.constant 0 : i32
    %0 = arith.cmpi eq, %c2_i32, %c0_i32 : i32
    %c1_i32 = arith.constant 1 : i32
    %1 = arith.select %0, %c1_i32, %c2_i32 : i32
    %2 = arith.remsi %arg1, %1 : i32
    %c0_i32_0 = arith.constant 0 : i32
    %3 = arith.cmpi ne, %2, %c0_i32_0 : i32
    %c0_i32_1 = arith.constant 0 : i32
    %4 = arith.cmpi slt, %2, %c0_i32_1 : i32
    %c0_i32_2 = arith.constant 0 : i32
    %5 = arith.cmpi slt, %1, %c0_i32_2 : i32
    %6 = arith.xori %4, %5 : i1
    %7 = arith.andi %6, %3 : i1
    %8 = arith.addi %2, %1 : i32
    %9 = arith.select %7, %8, %2 : i32
    %c0_i32_3 = arith.constant 0 : i32
    %10 = arith.cmpi eq, %arg1, %c0_i32_3 : i32
    %11 = arith.extui %10 : i1 to i32
    %c0_i32_4 = arith.constant 0 : i32
    %12 = arith.cmpi ne, %11, %c0_i32_4 : i32
    scf.if %12 {
      %c0_i32_206 = arith.constant 0 : i32
      %166 = tpu.assume_multiple %c0_i32_206, 8 : i32
      %c0_i32_207 = arith.constant 0 : i32
      %c0_i32_208 = arith.constant 0 : i32
      %c0_i32_209 = arith.constant 0 : i32
      %c0_i32_210 = arith.constant 0 : i32
      %167 = tpu.memref_slice %arg2[%arg0, %166, %c0_i32_209, %c0_i32_210] : memref<2x24x24x128xf32, #tpu.memory_space<any>> -> memref<1x16x24x128xf32, #tpu.memory_space<any>>
      %168 = tpu.memref_squeeze %167 : memref<1x16x24x128xf32, #tpu.memory_space<any>> -> memref<16x24x128xf32, #tpu.memory_space<any>>
      %c0_i32_211 = arith.constant 0 : i32
      %c0_i32_212 = arith.constant 0 : i32
      %c0_i32_213 = arith.constant 0 : i32
      %169 = tpu.memref_slice %arg6[%c0_i32_207, %c0_i32_211, %c0_i32_212, %c0_i32_213] : memref<2x16x24x128xf32, #tpu.memory_space<vmem>> -> memref<1x16x24x128xf32, #tpu.memory_space<vmem>>
      %170 = tpu.memref_squeeze %169 : memref<1x16x24x128xf32, #tpu.memory_space<vmem>> -> memref<16x24x128xf32, #tpu.memory_space<vmem>>
      %171 = tpu.memref_slice %arg7[%c0_i32_208] : memref<2x!tpu.dma_semaphore, #tpu.memory_space<semaphore_mem>> -> memref<1x!tpu.dma_semaphore, #tpu.memory_space<semaphore_mem>>
      %172 = tpu.memref_squeeze %171 : memref<1x!tpu.dma_semaphore, #tpu.memory_space<semaphore_mem>> -> memref<!tpu.dma_semaphore, #tpu.memory_space<semaphore_mem>>
      tpu.enqueue_dma source(%168 : memref<16x24x128xf32, #tpu.memory_space<any>>) target(%170 : memref<16x24x128xf32, #tpu.memory_space<vmem>>) target_semaphore(%172 : memref<!tpu.dma_semaphore, #tpu.memory_space<semaphore_mem>>)
    } else {
    }
    %c8_i32 = arith.constant 8 : i32
    %13 = arith.muli %arg1, %c8_i32 : i32
    %14 = tpu.assume_multiple %13, 8 : i32
    %c0_i32_5 = arith.constant 0 : i32
    %c0_i32_6 = arith.constant 0 : i32
    %15 = tpu.memref_slice %arg2[%arg0, %14, %c0_i32_5, %c0_i32_6] : memref<2x24x24x128xf32, #tpu.memory_space<any>> -> memref<1x16x24x128xf32, #tpu.memory_space<any>>
    %16 = tpu.memref_squeeze %15 : memref<1x16x24x128xf32, #tpu.memory_space<any>> -> memref<16x24x128xf32, #tpu.memory_space<any>>
    %c0_i32_7 = arith.constant 0 : i32
    %c0_i32_8 = arith.constant 0 : i32
    %c0_i32_9 = arith.constant 0 : i32
    %17 = tpu.memref_slice %arg6[%9, %c0_i32_7, %c0_i32_8, %c0_i32_9] : memref<2x16x24x128xf32, #tpu.memory_space<vmem>> -> memref<1x16x24x128xf32, #tpu.memory_space<vmem>>
    %18 = tpu.memref_squeeze %17 : memref<1x16x24x128xf32, #tpu.memory_space<vmem>> -> memref<16x24x128xf32, #tpu.memory_space<vmem>>
    %19 = tpu.memref_slice %arg7[%9] : memref<2x!tpu.dma_semaphore, #tpu.memory_space<semaphore_mem>> -> memref<1x!tpu.dma_semaphore, #tpu.memory_space<semaphore_mem>>
    %20 = tpu.memref_squeeze %19 : memref<1x!tpu.dma_semaphore, #tpu.memory_space<semaphore_mem>> -> memref<!tpu.dma_semaphore, #tpu.memory_space<semaphore_mem>>
    tpu.wait_dma2 semaphore(%20 : memref<!tpu.dma_semaphore, #tpu.memory_space<semaphore_mem>>) src(%16 : memref<16x24x128xf32, #tpu.memory_space<any>>) dst(%18 : memref<16x24x128xf32, #tpu.memory_space<vmem>>)
    %c1_i32_10 = arith.constant 1 : i32
    %21 = arith.addi %arg1, %c1_i32_10 : i32
    %c2_i32_11 = arith.constant 2 : i32
    %22 = arith.cmpi slt, %21, %c2_i32_11 : i32
    %23 = arith.extui %22 : i1 to i32
    %c0_i32_12 = arith.constant 0 : i32
    %24 = arith.cmpi ne, %23, %c0_i32_12 : i32
    scf.if %24 {
      %c1_i32_206 = arith.constant 1 : i32
      %166 = arith.addi %arg1, %c1_i32_206 : i32
      %c1_i32_207 = arith.constant 1 : i32
      %167 = arith.subi %c1_i32_207, %9 : i32
      %c8_i32_208 = arith.constant 8 : i32
      %168 = arith.muli %166, %c8_i32_208 : i32
      %169 = tpu.assume_multiple %168, 8 : i32
      %c0_i32_209 = arith.constant 0 : i32
      %c0_i32_210 = arith.constant 0 : i32
      %170 = tpu.memref_slice %arg2[%arg0, %169, %c0_i32_209, %c0_i32_210] : memref<2x24x24x128xf32, #tpu.memory_space<any>> -> memref<1x16x24x128xf32, #tpu.memory_space<any>>
      %171 = tpu.memref_squeeze %170 : memref<1x16x24x128xf32, #tpu.memory_space<any>> -> memref<16x24x128xf32, #tpu.memory_space<any>>
      %c0_i32_211 = arith.constant 0 : i32
      %c0_i32_212 = arith.constant 0 : i32
      %c0_i32_213 = arith.constant 0 : i32
      %172 = tpu.memref_slice %arg6[%167, %c0_i32_211, %c0_i32_212, %c0_i32_213] : memref<2x16x24x128xf32, #tpu.memory_space<vmem>> -> memref<1x16x24x128xf32, #tpu.memory_space<vmem>>
      %173 = tpu.memref_squeeze %172 : memref<1x16x24x128xf32, #tpu.memory_space<vmem>> -> memref<16x24x128xf32, #tpu.memory_space<vmem>>
      %174 = tpu.memref_slice %arg7[%167] : memref<2x!tpu.dma_semaphore, #tpu.memory_space<semaphore_mem>> -> memref<1x!tpu.dma_semaphore, #tpu.memory_space<semaphore_mem>>
      %175 = tpu.memref_squeeze %174 : memref<1x!tpu.dma_semaphore, #tpu.memory_space<semaphore_mem>> -> memref<!tpu.dma_semaphore, #tpu.memory_space<semaphore_mem>>
      tpu.enqueue_dma source(%171 : memref<16x24x128xf32, #tpu.memory_space<any>>) target(%173 : memref<16x24x128xf32, #tpu.memory_space<vmem>>) target_semaphore(%175 : memref<!tpu.dma_semaphore, #tpu.memory_space<semaphore_mem>>)
    } else {
    }
    %c0 = arith.constant 0 : index
    %c0_13 = arith.constant 0 : index
    %25 = vector.load %arg4[%c0, %c0_13] : memref<1x128xf32, #tpu.memory_space<vmem>>, vector<1x128xf32>
    %26 = vector.shape_cast %25 : vector<1x128xf32> to vector<1x128xf32>
    %27 = vector.broadcast %26 : vector<1x128xf32> to vector<128x128xf32>
    %c0_i32_14 = arith.constant 0 : i32
    %c0_i32_15 = arith.constant 0 : i32
    %c0_i32_16 = arith.constant 0 : i32
    %28 = tpu.memref_slice %arg6[%9, %c0_i32_14, %c0_i32_15, %c0_i32_16] : memref<2x16x24x128xf32, #tpu.memory_space<vmem>> -> memref<1x16x24x128xf32, #tpu.memory_space<vmem>>
    %29 = tpu.memref_squeeze %28 : memref<1x16x24x128xf32, #tpu.memory_space<vmem>> -> memref<16x24x128xf32, #tpu.memory_space<vmem>>
    %c3 = arith.constant 3 : index
    %c3_17 = arith.constant 3 : index
    %c0_18 = arith.constant 0 : index
    %30 = vector.load %29[%c3, %c3_17, %c0_18] : memref<16x24x128xf32, #tpu.memory_space<vmem>>, vector<8x16x128xf32>
    %c0_i32_19 = arith.constant 0 : i32
    %c0_i32_20 = arith.constant 0 : i32
    %c0_i32_21 = arith.constant 0 : i32
    %31 = tpu.memref_slice %arg6[%9, %c0_i32_19, %c0_i32_20, %c0_i32_21] : memref<2x16x24x128xf32, #tpu.memory_space<vmem>> -> memref<1x16x24x128xf32, #tpu.memory_space<vmem>>
    %32 = tpu.memref_squeeze %31 : memref<1x16x24x128xf32, #tpu.memory_space<vmem>> -> memref<16x24x128xf32, #tpu.memory_space<vmem>>
    %c3_22 = arith.constant 3 : index
    %c4 = arith.constant 4 : index
    %c0_23 = arith.constant 0 : index
    %33 = vector.load %32[%c3_22, %c4, %c0_23] : memref<16x24x128xf32, #tpu.memory_space<vmem>>, vector<8x16x128xf32>
    %c0_i32_24 = arith.constant 0 : i32
    %c0_i32_25 = arith.constant 0 : i32
    %c0_i32_26 = arith.constant 0 : i32
    %34 = tpu.memref_slice %arg6[%9, %c0_i32_24, %c0_i32_25, %c0_i32_26] : memref<2x16x24x128xf32, #tpu.memory_space<vmem>> -> memref<1x16x24x128xf32, #tpu.memory_space<vmem>>
    %35 = tpu.memref_squeeze %34 : memref<1x16x24x128xf32, #tpu.memory_space<vmem>> -> memref<16x24x128xf32, #tpu.memory_space<vmem>>
    %c3_27 = arith.constant 3 : index
    %c5 = arith.constant 5 : index
    %c0_28 = arith.constant 0 : index
    %36 = vector.load %35[%c3_27, %c5, %c0_28] : memref<16x24x128xf32, #tpu.memory_space<vmem>>, vector<8x16x128xf32>
    %37 = tpu.concatenate %30, %33, %36 in 2 : vector<8x16x128xf32>, vector<8x16x128xf32>, vector<8x16x128xf32> -> vector<8x16x384xf32>
    %38 = vector.shape_cast %37 : vector<8x16x384xf32> to vector<128x384xf32>
    %c0_29 = arith.constant 0 : index
    %c0_30 = arith.constant 0 : index
    %c0_31 = arith.constant 0 : index
    %39 = vector.load %arg3[%c0_29, %c0_30, %c0_31] : memref<9x384x128xf32, #tpu.memory_space<vmem>>, vector<1x384x128xf32>
    %40 = vector.shape_cast %39 : vector<1x384x128xf32> to vector<384x128xf32>
    %cst = arith.constant dense<0.000000e+00> : vector<128x128xf32>
    %41 = tpu.matmul %38, %40, %cst {dimension_numbers = #tpu.dot_dimension_numbers<[1], [0], [0], [1], [0, 0, 1, 1], [], []>} : vector<128x384xf32>, vector<384x128xf32>, vector<128x128xf32> -> vector<128x128xf32>
    %42 = arith.addf %27, %41 : vector<128x128xf32>
    %c0_i32_32 = arith.constant 0 : i32
    %c0_i32_33 = arith.constant 0 : i32
    %c0_i32_34 = arith.constant 0 : i32
    %43 = tpu.memref_slice %arg6[%9, %c0_i32_32, %c0_i32_33, %c0_i32_34] : memref<2x16x24x128xf32, #tpu.memory_space<vmem>> -> memref<1x16x24x128xf32, #tpu.memory_space<vmem>>
    %44 = tpu.memref_squeeze %43 : memref<1x16x24x128xf32, #tpu.memory_space<vmem>> -> memref<16x24x128xf32, #tpu.memory_space<vmem>>
    %c4_35 = arith.constant 4 : index
    %c3_36 = arith.constant 3 : index
    %c0_37 = arith.constant 0 : index
    %45 = vector.load %44[%c4_35, %c3_36, %c0_37] : memref<16x24x128xf32, #tpu.memory_space<vmem>>, vector<8x16x128xf32>
    %c0_i32_38 = arith.constant 0 : i32
    %c0_i32_39 = arith.constant 0 : i32
    %c0_i32_40 = arith.constant 0 : i32
    %46 = tpu.memref_slice %arg6[%9, %c0_i32_38, %c0_i32_39, %c0_i32_40] : memref<2x16x24x128xf32, #tpu.memory_space<vmem>> -> memref<1x16x24x128xf32, #tpu.memory_space<vmem>>
    %47 = tpu.memref_squeeze %46 : memref<1x16x24x128xf32, #tpu.memory_space<vmem>> -> memref<16x24x128xf32, #tpu.memory_space<vmem>>
    %c4_41 = arith.constant 4 : index
    %c4_42 = arith.constant 4 : index
    %c0_43 = arith.constant 0 : index
    %48 = vector.load %47[%c4_41, %c4_42, %c0_43] : memref<16x24x128xf32, #tpu.memory_space<vmem>>, vector<8x16x128xf32>
    %c0_i32_44 = arith.constant 0 : i32
    %c0_i32_45 = arith.constant 0 : i32
    %c0_i32_46 = arith.constant 0 : i32
    %49 = tpu.memref_slice %arg6[%9, %c0_i32_44, %c0_i32_45, %c0_i32_46] : memref<2x16x24x128xf32, #tpu.memory_space<vmem>> -> memref<1x16x24x128xf32, #tpu.memory_space<vmem>>
    %50 = tpu.memref_squeeze %49 : memref<1x16x24x128xf32, #tpu.memory_space<vmem>> -> memref<16x24x128xf32, #tpu.memory_space<vmem>>
    %c4_47 = arith.constant 4 : index
    %c5_48 = arith.constant 5 : index
    %c0_49 = arith.constant 0 : index
    %51 = vector.load %50[%c4_47, %c5_48, %c0_49] : memref<16x24x128xf32, #tpu.memory_space<vmem>>, vector<8x16x128xf32>
    %52 = tpu.concatenate %45, %48, %51 in 2 : vector<8x16x128xf32>, vector<8x16x128xf32>, vector<8x16x128xf32> -> vector<8x16x384xf32>
    %53 = vector.shape_cast %52 : vector<8x16x384xf32> to vector<128x384xf32>
    %c1 = arith.constant 1 : index
    %c0_50 = arith.constant 0 : index
    %c0_51 = arith.constant 0 : index
    %54 = vector.load %arg3[%c1, %c0_50, %c0_51] : memref<9x384x128xf32, #tpu.memory_space<vmem>>, vector<1x384x128xf32>
    %55 = vector.shape_cast %54 : vector<1x384x128xf32> to vector<384x128xf32>
    %cst_52 = arith.constant dense<0.000000e+00> : vector<128x128xf32>
    %56 = tpu.matmul %53, %55, %cst_52 {dimension_numbers = #tpu.dot_dimension_numbers<[1], [0], [0], [1], [0, 0, 1, 1], [], []>} : vector<128x384xf32>, vector<384x128xf32>, vector<128x128xf32> -> vector<128x128xf32>
    %57 = arith.addf %42, %56 : vector<128x128xf32>
    %c0_i32_53 = arith.constant 0 : i32
    %c0_i32_54 = arith.constant 0 : i32
    %c0_i32_55 = arith.constant 0 : i32
    %58 = tpu.memref_slice %arg6[%9, %c0_i32_53, %c0_i32_54, %c0_i32_55] : memref<2x16x24x128xf32, #tpu.memory_space<vmem>> -> memref<1x16x24x128xf32, #tpu.memory_space<vmem>>
    %59 = tpu.memref_squeeze %58 : memref<1x16x24x128xf32, #tpu.memory_space<vmem>> -> memref<16x24x128xf32, #tpu.memory_space<vmem>>
    %c5_56 = arith.constant 5 : index
    %c3_57 = arith.constant 3 : index
    %c0_58 = arith.constant 0 : index
    %60 = vector.load %59[%c5_56, %c3_57, %c0_58] : memref<16x24x128xf32, #tpu.memory_space<vmem>>, vector<8x16x128xf32>
    %c0_i32_59 = arith.constant 0 : i32
    %c0_i32_60 = arith.constant 0 : i32
    %c0_i32_61 = arith.constant 0 : i32
    %61 = tpu.memref_slice %arg6[%9, %c0_i32_59, %c0_i32_60, %c0_i32_61] : memref<2x16x24x128xf32, #tpu.memory_space<vmem>> -> memref<1x16x24x128xf32, #tpu.memory_space<vmem>>
    %62 = tpu.memref_squeeze %61 : memref<1x16x24x128xf32, #tpu.memory_space<vmem>> -> memref<16x24x128xf32, #tpu.memory_space<vmem>>
    %c5_62 = arith.constant 5 : index
    %c4_63 = arith.constant 4 : index
    %c0_64 = arith.constant 0 : index
    %63 = vector.load %62[%c5_62, %c4_63, %c0_64] : memref<16x24x128xf32, #tpu.memory_space<vmem>>, vector<8x16x128xf32>
    %c0_i32_65 = arith.constant 0 : i32
    %c0_i32_66 = arith.constant 0 : i32
    %c0_i32_67 = arith.constant 0 : i32
    %64 = tpu.memref_slice %arg6[%9, %c0_i32_65, %c0_i32_66, %c0_i32_67] : memref<2x16x24x128xf32, #tpu.memory_space<vmem>> -> memref<1x16x24x128xf32, #tpu.memory_space<vmem>>
    %65 = tpu.memref_squeeze %64 : memref<1x16x24x128xf32, #tpu.memory_space<vmem>> -> memref<16x24x128xf32, #tpu.memory_space<vmem>>
    %c5_68 = arith.constant 5 : index
    %c5_69 = arith.constant 5 : index
    %c0_70 = arith.constant 0 : index
    %66 = vector.load %65[%c5_68, %c5_69, %c0_70] : memref<16x24x128xf32, #tpu.memory_space<vmem>>, vector<8x16x128xf32>
    %67 = tpu.concatenate %60, %63, %66 in 2 : vector<8x16x128xf32>, vector<8x16x128xf32>, vector<8x16x128xf32> -> vector<8x16x384xf32>
    %68 = vector.shape_cast %67 : vector<8x16x384xf32> to vector<128x384xf32>
    %c2 = arith.constant 2 : index
    %c0_71 = arith.constant 0 : index
    %c0_72 = arith.constant 0 : index
    %69 = vector.load %arg3[%c2, %c0_71, %c0_72] : memref<9x384x128xf32, #tpu.memory_space<vmem>>, vector<1x384x128xf32>
    %70 = vector.shape_cast %69 : vector<1x384x128xf32> to vector<384x128xf32>
    %cst_73 = arith.constant dense<0.000000e+00> : vector<128x128xf32>
    %71 = tpu.matmul %68, %70, %cst_73 {dimension_numbers = #tpu.dot_dimension_numbers<[1], [0], [0], [1], [0, 0, 1, 1], [], []>} : vector<128x384xf32>, vector<384x128xf32>, vector<128x128xf32> -> vector<128x128xf32>
    %72 = arith.addf %57, %71 : vector<128x128xf32>
    %c0_i32_74 = arith.constant 0 : i32
    %c0_i32_75 = arith.constant 0 : i32
    %c0_i32_76 = arith.constant 0 : i32
    %73 = tpu.memref_slice %arg6[%9, %c0_i32_74, %c0_i32_75, %c0_i32_76] : memref<2x16x24x128xf32, #tpu.memory_space<vmem>> -> memref<1x16x24x128xf32, #tpu.memory_space<vmem>>
    %74 = tpu.memref_squeeze %73 : memref<1x16x24x128xf32, #tpu.memory_space<vmem>> -> memref<16x24x128xf32, #tpu.memory_space<vmem>>
    %c2_77 = arith.constant 2 : index
    %c2_78 = arith.constant 2 : index
    %c0_79 = arith.constant 0 : index
    %75 = vector.load %74[%c2_77, %c2_78, %c0_79] : memref<16x24x128xf32, #tpu.memory_space<vmem>>, vector<8x16x128xf32>
    %c0_i32_80 = arith.constant 0 : i32
    %c0_i32_81 = arith.constant 0 : i32
    %c0_i32_82 = arith.constant 0 : i32
    %76 = tpu.memref_slice %arg6[%9, %c0_i32_80, %c0_i32_81, %c0_i32_82] : memref<2x16x24x128xf32, #tpu.memory_space<vmem>> -> memref<1x16x24x128xf32, #tpu.memory_space<vmem>>
    %77 = tpu.memref_squeeze %76 : memref<1x16x24x128xf32, #tpu.memory_space<vmem>> -> memref<16x24x128xf32, #tpu.memory_space<vmem>>
    %c2_83 = arith.constant 2 : index
    %c4_84 = arith.constant 4 : index
    %c0_85 = arith.constant 0 : index
    %78 = vector.load %77[%c2_83, %c4_84, %c0_85] : memref<16x24x128xf32, #tpu.memory_space<vmem>>, vector<8x16x128xf32>
    %c0_i32_86 = arith.constant 0 : i32
    %c0_i32_87 = arith.constant 0 : i32
    %c0_i32_88 = arith.constant 0 : i32
    %79 = tpu.memref_slice %arg6[%9, %c0_i32_86, %c0_i32_87, %c0_i32_88] : memref<2x16x24x128xf32, #tpu.memory_space<vmem>> -> memref<1x16x24x128xf32, #tpu.memory_space<vmem>>
    %80 = tpu.memref_squeeze %79 : memref<1x16x24x128xf32, #tpu.memory_space<vmem>> -> memref<16x24x128xf32, #tpu.memory_space<vmem>>
    %c2_89 = arith.constant 2 : index
    %c6 = arith.constant 6 : index
    %c0_90 = arith.constant 0 : index
    %81 = vector.load %80[%c2_89, %c6, %c0_90] : memref<16x24x128xf32, #tpu.memory_space<vmem>>, vector<8x16x128xf32>
    %82 = tpu.concatenate %75, %78, %81 in 2 : vector<8x16x128xf32>, vector<8x16x128xf32>, vector<8x16x128xf32> -> vector<8x16x384xf32>
    %83 = vector.shape_cast %82 : vector<8x16x384xf32> to vector<128x384xf32>
    %c3_91 = arith.constant 3 : index
    %c0_92 = arith.constant 0 : index
    %c0_93 = arith.constant 0 : index
    %84 = vector.load %arg3[%c3_91, %c0_92, %c0_93] : memref<9x384x128xf32, #tpu.memory_space<vmem>>, vector<1x384x128xf32>
    %85 = vector.shape_cast %84 : vector<1x384x128xf32> to vector<384x128xf32>
    %cst_94 = arith.constant dense<0.000000e+00> : vector<128x128xf32>
    %86 = tpu.matmul %83, %85, %cst_94 {dimension_numbers = #tpu.dot_dimension_numbers<[1], [0], [0], [1], [0, 0, 1, 1], [], []>} : vector<128x384xf32>, vector<384x128xf32>, vector<128x128xf32> -> vector<128x128xf32>
    %87 = arith.addf %72, %86 : vector<128x128xf32>
    %c0_i32_95 = arith.constant 0 : i32
    %c0_i32_96 = arith.constant 0 : i32
    %c0_i32_97 = arith.constant 0 : i32
    %88 = tpu.memref_slice %arg6[%9, %c0_i32_95, %c0_i32_96, %c0_i32_97] : memref<2x16x24x128xf32, #tpu.memory_space<vmem>> -> memref<1x16x24x128xf32, #tpu.memory_space<vmem>>
    %89 = tpu.memref_squeeze %88 : memref<1x16x24x128xf32, #tpu.memory_space<vmem>> -> memref<16x24x128xf32, #tpu.memory_space<vmem>>
    %c4_98 = arith.constant 4 : index
    %c2_99 = arith.constant 2 : index
    %c0_100 = arith.constant 0 : index
    %90 = vector.load %89[%c4_98, %c2_99, %c0_100] : memref<16x24x128xf32, #tpu.memory_space<vmem>>, vector<8x16x128xf32>
    %c0_i32_101 = arith.constant 0 : i32
    %c0_i32_102 = arith.constant 0 : i32
    %c0_i32_103 = arith.constant 0 : i32
    %91 = tpu.memref_slice %arg6[%9, %c0_i32_101, %c0_i32_102, %c0_i32_103] : memref<2x16x24x128xf32, #tpu.memory_space<vmem>> -> memref<1x16x24x128xf32, #tpu.memory_space<vmem>>
    %92 = tpu.memref_squeeze %91 : memref<1x16x24x128xf32, #tpu.memory_space<vmem>> -> memref<16x24x128xf32, #tpu.memory_space<vmem>>
    %c4_104 = arith.constant 4 : index
    %c4_105 = arith.constant 4 : index
    %c0_106 = arith.constant 0 : index
    %93 = vector.load %92[%c4_104, %c4_105, %c0_106] : memref<16x24x128xf32, #tpu.memory_space<vmem>>, vector<8x16x128xf32>
    %c0_i32_107 = arith.constant 0 : i32
    %c0_i32_108 = arith.constant 0 : i32
    %c0_i32_109 = arith.constant 0 : i32
    %94 = tpu.memref_slice %arg6[%9, %c0_i32_107, %c0_i32_108, %c0_i32_109] : memref<2x16x24x128xf32, #tpu.memory_space<vmem>> -> memref<1x16x24x128xf32, #tpu.memory_space<vmem>>
    %95 = tpu.memref_squeeze %94 : memref<1x16x24x128xf32, #tpu.memory_space<vmem>> -> memref<16x24x128xf32, #tpu.memory_space<vmem>>
    %c4_110 = arith.constant 4 : index
    %c6_111 = arith.constant 6 : index
    %c0_112 = arith.constant 0 : index
    %96 = vector.load %95[%c4_110, %c6_111, %c0_112] : memref<16x24x128xf32, #tpu.memory_space<vmem>>, vector<8x16x128xf32>
    %97 = tpu.concatenate %90, %93, %96 in 2 : vector<8x16x128xf32>, vector<8x16x128xf32>, vector<8x16x128xf32> -> vector<8x16x384xf32>
    %98 = vector.shape_cast %97 : vector<8x16x384xf32> to vector<128x384xf32>
    %c4_113 = arith.constant 4 : index
    %c0_114 = arith.constant 0 : index
    %c0_115 = arith.constant 0 : index
    %99 = vector.load %arg3[%c4_113, %c0_114, %c0_115] : memref<9x384x128xf32, #tpu.memory_space<vmem>>, vector<1x384x128xf32>
    %100 = vector.shape_cast %99 : vector<1x384x128xf32> to vector<384x128xf32>
    %cst_116 = arith.constant dense<0.000000e+00> : vector<128x128xf32>
    %101 = tpu.matmul %98, %100, %cst_116 {dimension_numbers = #tpu.dot_dimension_numbers<[1], [0], [0], [1], [0, 0, 1, 1], [], []>} : vector<128x384xf32>, vector<384x128xf32>, vector<128x128xf32> -> vector<128x128xf32>
    %102 = arith.addf %87, %101 : vector<128x128xf32>
    %c0_i32_117 = arith.constant 0 : i32
    %c0_i32_118 = arith.constant 0 : i32
    %c0_i32_119 = arith.constant 0 : i32
    %103 = tpu.memref_slice %arg6[%9, %c0_i32_117, %c0_i32_118, %c0_i32_119] : memref<2x16x24x128xf32, #tpu.memory_space<vmem>> -> memref<1x16x24x128xf32, #tpu.memory_space<vmem>>
    %104 = tpu.memref_squeeze %103 : memref<1x16x24x128xf32, #tpu.memory_space<vmem>> -> memref<16x24x128xf32, #tpu.memory_space<vmem>>
    %c6_120 = arith.constant 6 : index
    %c2_121 = arith.constant 2 : index
    %c0_122 = arith.constant 0 : index
    %105 = vector.load %104[%c6_120, %c2_121, %c0_122] : memref<16x24x128xf32, #tpu.memory_space<vmem>>, vector<8x16x128xf32>
    %c0_i32_123 = arith.constant 0 : i32
    %c0_i32_124 = arith.constant 0 : i32
    %c0_i32_125 = arith.constant 0 : i32
    %106 = tpu.memref_slice %arg6[%9, %c0_i32_123, %c0_i32_124, %c0_i32_125] : memref<2x16x24x128xf32, #tpu.memory_space<vmem>> -> memref<1x16x24x128xf32, #tpu.memory_space<vmem>>
    %107 = tpu.memref_squeeze %106 : memref<1x16x24x128xf32, #tpu.memory_space<vmem>> -> memref<16x24x128xf32, #tpu.memory_space<vmem>>
    %c6_126 = arith.constant 6 : index
    %c4_127 = arith.constant 4 : index
    %c0_128 = arith.constant 0 : index
    %108 = vector.load %107[%c6_126, %c4_127, %c0_128] : memref<16x24x128xf32, #tpu.memory_space<vmem>>, vector<8x16x128xf32>
    %c0_i32_129 = arith.constant 0 : i32
    %c0_i32_130 = arith.constant 0 : i32
    %c0_i32_131 = arith.constant 0 : i32
    %109 = tpu.memref_slice %arg6[%9, %c0_i32_129, %c0_i32_130, %c0_i32_131] : memref<2x16x24x128xf32, #tpu.memory_space<vmem>> -> memref<1x16x24x128xf32, #tpu.memory_space<vmem>>
    %110 = tpu.memref_squeeze %109 : memref<1x16x24x128xf32, #tpu.memory_space<vmem>> -> memref<16x24x128xf32, #tpu.memory_space<vmem>>
    %c6_132 = arith.constant 6 : index
    %c6_133 = arith.constant 6 : index
    %c0_134 = arith.constant 0 : index
    %111 = vector.load %110[%c6_132, %c6_133, %c0_134] : memref<16x24x128xf32, #tpu.memory_space<vmem>>, vector<8x16x128xf32>
    %112 = tpu.concatenate %105, %108, %111 in 2 : vector<8x16x128xf32>, vector<8x16x128xf32>, vector<8x16x128xf32> -> vector<8x16x384xf32>
    %113 = vector.shape_cast %112 : vector<8x16x384xf32> to vector<128x384xf32>
    %c5_135 = arith.constant 5 : index
    %c0_136 = arith.constant 0 : index
    %c0_137 = arith.constant 0 : index
    %114 = vector.load %arg3[%c5_135, %c0_136, %c0_137] : memref<9x384x128xf32, #tpu.memory_space<vmem>>, vector<1x384x128xf32>
    %115 = vector.shape_cast %114 : vector<1x384x128xf32> to vector<384x128xf32>
    %cst_138 = arith.constant dense<0.000000e+00> : vector<128x128xf32>
    %116 = tpu.matmul %113, %115, %cst_138 {dimension_numbers = #tpu.dot_dimension_numbers<[1], [0], [0], [1], [0, 0, 1, 1], [], []>} : vector<128x384xf32>, vector<384x128xf32>, vector<128x128xf32> -> vector<128x128xf32>
    %117 = arith.addf %102, %116 : vector<128x128xf32>
    %c0_i32_139 = arith.constant 0 : i32
    %c0_i32_140 = arith.constant 0 : i32
    %c0_i32_141 = arith.constant 0 : i32
    %118 = tpu.memref_slice %arg6[%9, %c0_i32_139, %c0_i32_140, %c0_i32_141] : memref<2x16x24x128xf32, #tpu.memory_space<vmem>> -> memref<1x16x24x128xf32, #tpu.memory_space<vmem>>
    %119 = tpu.memref_squeeze %118 : memref<1x16x24x128xf32, #tpu.memory_space<vmem>> -> memref<16x24x128xf32, #tpu.memory_space<vmem>>
    %c0_142 = arith.constant 0 : index
    %c0_143 = arith.constant 0 : index
    %c0_144 = arith.constant 0 : index
    %120 = vector.load %119[%c0_142, %c0_143, %c0_144] : memref<16x24x128xf32, #tpu.memory_space<vmem>>, vector<8x16x128xf32>
    %c0_i32_145 = arith.constant 0 : i32
    %c0_i32_146 = arith.constant 0 : i32
    %c0_i32_147 = arith.constant 0 : i32
    %121 = tpu.memref_slice %arg6[%9, %c0_i32_145, %c0_i32_146, %c0_i32_147] : memref<2x16x24x128xf32, #tpu.memory_space<vmem>> -> memref<1x16x24x128xf32, #tpu.memory_space<vmem>>
    %122 = tpu.memref_squeeze %121 : memref<1x16x24x128xf32, #tpu.memory_space<vmem>> -> memref<16x24x128xf32, #tpu.memory_space<vmem>>
    %c0_148 = arith.constant 0 : index
    %c4_149 = arith.constant 4 : index
    %c0_150 = arith.constant 0 : index
    %123 = vector.load %122[%c0_148, %c4_149, %c0_150] : memref<16x24x128xf32, #tpu.memory_space<vmem>>, vector<8x16x128xf32>
    %c0_i32_151 = arith.constant 0 : i32
    %c0_i32_152 = arith.constant 0 : i32
    %c0_i32_153 = arith.constant 0 : i32
    %124 = tpu.memref_slice %arg6[%9, %c0_i32_151, %c0_i32_152, %c0_i32_153] : memref<2x16x24x128xf32, #tpu.memory_space<vmem>> -> memref<1x16x24x128xf32, #tpu.memory_space<vmem>>
    %125 = tpu.memref_squeeze %124 : memref<1x16x24x128xf32, #tpu.memory_space<vmem>> -> memref<16x24x128xf32, #tpu.memory_space<vmem>>
    %c0_154 = arith.constant 0 : index
    %c8 = arith.constant 8 : index
    %c0_155 = arith.constant 0 : index
    %126 = vector.load %125[%c0_154, %c8, %c0_155] : memref<16x24x128xf32, #tpu.memory_space<vmem>>, vector<8x16x128xf32>
    %127 = tpu.concatenate %120, %123, %126 in 2 : vector<8x16x128xf32>, vector<8x16x128xf32>, vector<8x16x128xf32> -> vector<8x16x384xf32>
    %128 = vector.shape_cast %127 : vector<8x16x384xf32> to vector<128x384xf32>
    %c6_156 = arith.constant 6 : index
    %c0_157 = arith.constant 0 : index
    %c0_158 = arith.constant 0 : index
    %129 = vector.load %arg3[%c6_156, %c0_157, %c0_158] : memref<9x384x128xf32, #tpu.memory_space<vmem>>, vector<1x384x128xf32>
    %130 = vector.shape_cast %129 : vector<1x384x128xf32> to vector<384x128xf32>
    %cst_159 = arith.constant dense<0.000000e+00> : vector<128x128xf32>
    %131 = tpu.matmul %128, %130, %cst_159 {dimension_numbers = #tpu.dot_dimension_numbers<[1], [0], [0], [1], [0, 0, 1, 1], [], []>} : vector<128x384xf32>, vector<384x128xf32>, vector<128x128xf32> -> vector<128x128xf32>
    %132 = arith.addf %117, %131 : vector<128x128xf32>
    %c0_i32_160 = arith.constant 0 : i32
    %c0_i32_161 = arith.constant 0 : i32
    %c0_i32_162 = arith.constant 0 : i32
    %133 = tpu.memref_slice %arg6[%9, %c0_i32_160, %c0_i32_161, %c0_i32_162] : memref<2x16x24x128xf32, #tpu.memory_space<vmem>> -> memref<1x16x24x128xf32, #tpu.memory_space<vmem>>
    %134 = tpu.memref_squeeze %133 : memref<1x16x24x128xf32, #tpu.memory_space<vmem>> -> memref<16x24x128xf32, #tpu.memory_space<vmem>>
    %c4_163 = arith.constant 4 : index
    %c0_164 = arith.constant 0 : index
    %c0_165 = arith.constant 0 : index
    %135 = vector.load %134[%c4_163, %c0_164, %c0_165] : memref<16x24x128xf32, #tpu.memory_space<vmem>>, vector<8x16x128xf32>
    %c0_i32_166 = arith.constant 0 : i32
    %c0_i32_167 = arith.constant 0 : i32
    %c0_i32_168 = arith.constant 0 : i32
    %136 = tpu.memref_slice %arg6[%9, %c0_i32_166, %c0_i32_167, %c0_i32_168] : memref<2x16x24x128xf32, #tpu.memory_space<vmem>> -> memref<1x16x24x128xf32, #tpu.memory_space<vmem>>
    %137 = tpu.memref_squeeze %136 : memref<1x16x24x128xf32, #tpu.memory_space<vmem>> -> memref<16x24x128xf32, #tpu.memory_space<vmem>>
    %c4_169 = arith.constant 4 : index
    %c4_170 = arith.constant 4 : index
    %c0_171 = arith.constant 0 : index
    %138 = vector.load %137[%c4_169, %c4_170, %c0_171] : memref<16x24x128xf32, #tpu.memory_space<vmem>>, vector<8x16x128xf32>
    %c0_i32_172 = arith.constant 0 : i32
    %c0_i32_173 = arith.constant 0 : i32
    %c0_i32_174 = arith.constant 0 : i32
    %139 = tpu.memref_slice %arg6[%9, %c0_i32_172, %c0_i32_173, %c0_i32_174] : memref<2x16x24x128xf32, #tpu.memory_space<vmem>> -> memref<1x16x24x128xf32, #tpu.memory_space<vmem>>
    %140 = tpu.memref_squeeze %139 : memref<1x16x24x128xf32, #tpu.memory_space<vmem>> -> memref<16x24x128xf32, #tpu.memory_space<vmem>>
    %c4_175 = arith.constant 4 : index
    %c8_176 = arith.constant 8 : index
    %c0_177 = arith.constant 0 : index
    %141 = vector.load %140[%c4_175, %c8_176, %c0_177] : memref<16x24x128xf32, #tpu.memory_space<vmem>>, vector<8x16x128xf32>
    %142 = tpu.concatenate %135, %138, %141 in 2 : vector<8x16x128xf32>, vector<8x16x128xf32>, vector<8x16x128xf32> -> vector<8x16x384xf32>
    %143 = vector.shape_cast %142 : vector<8x16x384xf32> to vector<128x384xf32>
    %c7 = arith.constant 7 : index
    %c0_178 = arith.constant 0 : index
    %c0_179 = arith.constant 0 : index
    %144 = vector.load %arg3[%c7, %c0_178, %c0_179] : memref<9x384x128xf32, #tpu.memory_space<vmem>>, vector<1x384x128xf32>
    %145 = vector.shape_cast %144 : vector<1x384x128xf32> to vector<384x128xf32>
    %cst_180 = arith.constant dense<0.000000e+00> : vector<128x128xf32>
    %146 = tpu.matmul %143, %145, %cst_180 {dimension_numbers = #tpu.dot_dimension_numbers<[1], [0], [0], [1], [0, 0, 1, 1], [], []>} : vector<128x384xf32>, vector<384x128xf32>, vector<128x128xf32> -> vector<128x128xf32>
    %147 = arith.addf %132, %146 : vector<128x128xf32>
    %c0_i32_181 = arith.constant 0 : i32
    %c0_i32_182 = arith.constant 0 : i32
    %c0_i32_183 = arith.constant 0 : i32
    %148 = tpu.memref_slice %arg6[%9, %c0_i32_181, %c0_i32_182, %c0_i32_183] : memref<2x16x24x128xf32, #tpu.memory_space<vmem>> -> memref<1x16x24x128xf32, #tpu.memory_space<vmem>>
    %149 = tpu.memref_squeeze %148 : memref<1x16x24x128xf32, #tpu.memory_space<vmem>> -> memref<16x24x128xf32, #tpu.memory_space<vmem>>
    %c8_184 = arith.constant 8 : index
    %c0_185 = arith.constant 0 : index
    %c0_186 = arith.constant 0 : index
    %150 = vector.load %149[%c8_184, %c0_185, %c0_186] : memref<16x24x128xf32, #tpu.memory_space<vmem>>, vector<8x16x128xf32>
    %c0_i32_187 = arith.constant 0 : i32
    %c0_i32_188 = arith.constant 0 : i32
    %c0_i32_189 = arith.constant 0 : i32
    %151 = tpu.memref_slice %arg6[%9, %c0_i32_187, %c0_i32_188, %c0_i32_189] : memref<2x16x24x128xf32, #tpu.memory_space<vmem>> -> memref<1x16x24x128xf32, #tpu.memory_space<vmem>>
    %152 = tpu.memref_squeeze %151 : memref<1x16x24x128xf32, #tpu.memory_space<vmem>> -> memref<16x24x128xf32, #tpu.memory_space<vmem>>
    %c8_190 = arith.constant 8 : index
    %c4_191 = arith.constant 4 : index
    %c0_192 = arith.constant 0 : index
    %153 = vector.load %152[%c8_190, %c4_191, %c0_192] : memref<16x24x128xf32, #tpu.memory_space<vmem>>, vector<8x16x128xf32>
    %c0_i32_193 = arith.constant 0 : i32
    %c0_i32_194 = arith.constant 0 : i32
    %c0_i32_195 = arith.constant 0 : i32
    %154 = tpu.memref_slice %arg6[%9, %c0_i32_193, %c0_i32_194, %c0_i32_195] : memref<2x16x24x128xf32, #tpu.memory_space<vmem>> -> memref<1x16x24x128xf32, #tpu.memory_space<vmem>>
    %155 = tpu.memref_squeeze %154 : memref<1x16x24x128xf32, #tpu.memory_space<vmem>> -> memref<16x24x128xf32, #tpu.memory_space<vmem>>
    %c8_196 = arith.constant 8 : index
    %c8_197 = arith.constant 8 : index
    %c0_198 = arith.constant 0 : index
    %156 = vector.load %155[%c8_196, %c8_197, %c0_198] : memref<16x24x128xf32, #tpu.memory_space<vmem>>, vector<8x16x128xf32>
    %157 = tpu.concatenate %150, %153, %156 in 2 : vector<8x16x128xf32>, vector<8x16x128xf32>, vector<8x16x128xf32> -> vector<8x16x384xf32>
    %158 = vector.shape_cast %157 : vector<8x16x384xf32> to vector<128x384xf32>
    %c8_199 = arith.constant 8 : index
    %c0_200 = arith.constant 0 : index
    %c0_201 = arith.constant 0 : index
    %159 = vector.load %arg3[%c8_199, %c0_200, %c0_201] : memref<9x384x128xf32, #tpu.memory_space<vmem>>, vector<1x384x128xf32>
    %160 = vector.shape_cast %159 : vector<1x384x128xf32> to vector<384x128xf32>
    %cst_202 = arith.constant dense<0.000000e+00> : vector<128x128xf32>
    %161 = tpu.matmul %158, %160, %cst_202 {dimension_numbers = #tpu.dot_dimension_numbers<[1], [0], [0], [1], [0, 0, 1, 1], [], []>} : vector<128x384xf32>, vector<384x128xf32>, vector<128x128xf32> -> vector<128x128xf32>
    %162 = arith.addf %147, %161 : vector<128x128xf32>
    %c0_203 = arith.constant 0 : index
    %c0_204 = arith.constant 0 : index
    %c0_205 = arith.constant 0 : index
    %163 = vector.load %arg5[%c0_203, %c0_204, %c0_205] : memref<1x128x128xf32, #tpu.memory_space<vmem>>, vector<1x128x128xf32>
    %164 = vector.shape_cast %163 : vector<1x128x128xf32> to vector<128x128xf32>
    %165 = vector.shape_cast %162 : vector<128x128xf32> to vector<1x128x128xf32>
    tpu.vector_store %arg5[%c0_203, %c0_204, %c0_205], %165 {strides = array<i32>} : memref<1x128x128xf32, #tpu.memory_space<vmem>>, vector<1x128x128xf32>,
    return
  }
  func.func @transform_1(%arg0: i32, %arg1: i32) -> (i32, i32, i32) {
    %c0_i32 = arith.constant 0 : i32
    %c0_i32_0 = arith.constant 0 : i32
    %c0_i32_1 = arith.constant 0 : i32
    %c0_i32_2 = arith.constant 0 : i32
    return %c0_i32, %c0_i32_0, %c0_i32_1 : i32, i32, i32
  }
  func.func @transform_2(%arg0: i32, %arg1: i32) -> (i32, i32) {
    %c0_i32 = arith.constant 0 : i32
    %c0_i32_0 = arith.constant 0 : i32
    %c0_i32_1 = arith.constant 0 : i32
    return %c0_i32, %c0_i32_0 : i32, i32
  }
  func.func @transform_3(%arg0: i32, %arg1: i32) -> (i32, i32, i32) {
    %c0_i32 = arith.constant 0 : i32
    %c0_i32_0 = arith.constant 0 : i32
    return %arg0, %arg1, %c0_i32 : i32, i32, i32
  }
}

</mosaic_0001>

<llo_original>
// kernel: tpu_custom_call.1
$region0: #{tpu_custom_call.1}
  #allocation0 [shape = 'u32[]', space=smem, size = 0x4, offset = 0x4, fixed_abs, tag = 'smem constant byte address 0x4 - core index']
  #allocation1 [shape = 'u32[144,128]{1,0:T(1,128)}', space=vmem, size = 0x12000, scoped, tag = 'internal scratch']
  #allocation2 [shape = 'f32[2,16,24,128]{3,2,1,0:T(8,128)}', space=vmem, size = 0x60000, scoped, tag = 'scratch operand']
  #allocation3 [shape = 's32[2]{0}', space=sflag, size = 0x8, scoped, tag = 'scratch operand']
  #allocation10 [shape = 's32[]', space=sflag, size = 0x4, offset = 0, fixed_abs, tag = 'sflag constant byte address 0x0 - dummy sync flag']
  #allocation11 [shape = 's32[]', space=sflag, size = 0x4, offset = 0, fixed_abs, tag = 'sflag constant byte address 0x0 - dummy sync flag']
  #allocation12 [shape = 'u32[]', space=smem, size = 0x4, offset = 0x44, fixed_abs, tag = 'smem constant byte address 0x44 - assertion arg 0']
  #allocation13 [shape = 'u32[]', space=smem, size = 0x4, offset = 0x48, fixed_abs, tag = 'smem constant byte address 0x48 - assertion arg 1']
  #allocation14 [shape = 's32[]', space=sflag, size = 0x4, offset = 0, fixed_abs, tag = 'sflag constant byte address 0x0 - dummy sync flag']
  #allocation15 [shape = 's32[]', space=sflag, size = 0x4, offset = 0, fixed_abs, tag = 'sflag constant byte address 0x0 - dummy sync flag']
  %s0 = inlined_call_operand.hbm [shape: f32[2,24,24,128], index: 0, kind: input, shape index: {}]
  %s1 = inlined_call_operand.hbm [shape: f32[9,384,128], index: 1, kind: input, shape index: {}]
  %s2 = inlined_call_operand.hbm [shape: f32[1,128], index: 2, kind: input, shape index: {}]
  %s3 = inlined_call_operand.hbm [shape: f32[2,256,128], index: 3, kind: output, shape index: {}]
  %s4 = sld [smem:[#allocation0]]
  $region65: #{tpu_custom_call.1} parent=0
    _
  %s6 = ssub.s32 1, %s4
  %s7 = scalar_select 0, %s6, %s4
  $region1: #{tpu_custom_call.1} parent=0
    #allocation4 [shape = 'u8[1769472]{0}', space=vmem, size = 0x1b0000, scoped, tag = 'input window, operand 1, single buffered']
    #allocation5 [shape = 's32[2]{0}', space=sflag, size = 0x8, scoped, tag = 'scoped memory for tpu_custom_call.1']
    #allocation6 [shape = 's32[2]{0}', space=sflag, size = 0x8, scoped, tag = 'scoped memory for tpu_custom_call.1']
    #allocation7 [shape = 'u8[512]{0}', space=vmem, size = 0x400, scoped, tag = 'input window, operand 2, single buffered']
    #allocation8 [shape = 's32[1]{0}', space=sflag, size = 0x4, scoped, tag = 'scoped memory for tpu_custom_call.1']
    #allocation9 [shape = 'u8[131072]{0}', space=vmem, size = 0x20000, scoped, tag = 'output window, operand 0']
    %8 = vsyncpa [#allocation5], 0
    %9 = vsyncpa [#allocation8], 0
    %10 = vsyncpa [#allocation6], 0
    %s11 = scalar_lea.sflag [#allocation6], 1
    %12 = vsyncpa %s11, 0
    loop: start=0, step=1, limit=6
    $region2: #{tpu_custom_call.1} parent=1 // loop_pre_header
      _
    $region3: #{tpu_custom_call.1} parent=1 // loop_header
      %s14 = sphi 0, %s18
      %p15 = scmp.ge.s32.totalorder %s14, 6
      %s21 = sphi 0, %s33
      %s22 = sphi 0, %s29
      %s23 = sphi 0, %s21
      %s24 = sphi 0, %s22
      %s25 = sphi 0, %s23
      %s26 = sphi 0, %s24
      %s34 = sphi 0, %s34
      %s36 = sphi 0, %s34
      %s37 = sphi 0, %s36
      %s51 = sphi 0, %s37
      %s55 = sphi 0, %s55
      %s57 = sphi 0, %s55
      %s58 = sphi 0, %s57
      %s72 = sphi 0, %s58
      %s80 = sphi 0, %s82
      %s83 = sphi 0, %s80
      %s84 = sphi 0, %s83
      %s100 = sphi 0, %s84
    $region4: #{tpu_custom_call.1} parent=1 // loop_header_branch
      %17 = sbr.rel (%p15) target = $region8
    $region5: #{tpu_custom_call.1} parent=1 // loop_body
      %s19 = ssub.s32 %s14, 1
      %s20 = ssub.s32 %s14, 2
      %s27 = sadd.s32 1, %s22
      %p28 = scmp.ge.s32.totalorder %s27, 2
      %s29 = scalar_select %p28, 0, %s27
      %s30 = sadd.s32 1, %s21
      %s31 = scalar_select %p28, %s30, %s21
      %p32 = scmp.ge.s32.totalorder %s31, 2
      %s33 = scalar_select %p32, 0, %s31
      %s35 = sadd.s32 %s34, 1
      %p38 = scmp.eq.s32.totalorder %s14, 3
      %p39 = scmp.ne.s32.totalorder %s34, %s36
      %p40 = scmp.eq.s32.totalorder %s14, 0
      %p41 = por %p39, %p40
      %p42 = scmp.ne.s32.totalorder %s34, %s36
      %p43 = scmp.eq.s32.totalorder %s19, 3
      %p44 = por %p42, %p43
      %p45 = scmp.ne.s32.totalorder %s36, %s37
      %p46 = scmp.eq.s32.totalorder %s19, 0
      %p47 = por %p45, %p46
      %p48 = scmp.ne.s32.totalorder %s36, %s37
      %p49 = scmp.eq.s32.totalorder %s20, 3
      %p50 = por %p48, %p49
      %p52 = scmp.ne.s32.totalorder %s37, %s51
      %p53 = scmp.eq.s32.totalorder %s20, 0
      %p54 = por %p52, %p53
      %s56 = sadd.s32 %s55, 1
      %p59 = scmp.eq.s32.totalorder %s14, 3
      %p60 = scmp.ne.s32.totalorder %s55, %s57
      %p61 = scmp.eq.s32.totalorder %s14, 0
      %p62 = por %p60, %p61
      %p63 = scmp.ne.s32.totalorder %s55, %s57
      %p64 = scmp.eq.s32.totalorder %s19, 3
      %p65 = por %p63, %p64
      %p66 = scmp.ne.s32.totalorder %s57, %s58
      %p67 = scmp.eq.s32.totalorder %s19, 0
      %p68 = por %p66, %p67
      %p69 = scmp.ne.s32.totalorder %s57, %s58
      %p70 = scmp.eq.s32.totalorder %s20, 3
      %p71 = por %p69, %p70
      %p73 = scmp.ne.s32.totalorder %s58, %s72
      %p74 = scmp.eq.s32.totalorder %s20, 0
      %p75 = por %p73, %p74
      %s76 = ssub.s32 %s21, %s33
      %s77 = ssub.s32 %s22, %s29
      %s78 = sor.u32 %s76, %s77
      %p79 = scmp.eq.s32.totalorder %s78, 0
      %s81 = sadd.s32 %s80, 1
      %s82 = scalar_select %p79, %s80, %s81
      %p85 = pneg %p79
      %p86 = scmp.eq.s32.totalorder %s14, 3
      %p87 = por %p85, %p86
      %p88 = scmp.ne.s32.totalorder %s80, %s83
      %p89 = scmp.eq.s32.totalorder %s14, 0
      %p90 = por %p88, %p89
      %p91 = scmp.ne.s32.totalorder %s80, %s83
      %p92 = scmp.eq.s32.totalorder %s19, 3
      %p93 = por %p91, %p92
      %p94 = scmp.ne.s32.totalorder %s83, %s84
      %p95 = scmp.eq.s32.totalorder %s19, 0
      %p96 = por %p94, %p95
      %p97 = scmp.ne.s32.totalorder %s83, %s84
      %p98 = scmp.eq.s32.totalorder %s20, 3
      %p99 = por %p97, %p98
      %p101 = scmp.ne.s32.totalorder %s84, %s100
      %p102 = scmp.eq.s32.totalorder %s20, 0
      %p103 = por %p101, %p102
      %p104 = scmp.le.s32.totalorder 1, %s14
      %p105 = scmp.lt.s32.totalorder %s14, 5
      %p106 = pnand %p104, %p105
      %p107 = pneg %p106
      // Predicated region
      $region9: #{tpu_custom_call.1} parent=5 // pred_check
        _
      $region10: #{tpu_custom_call.1} parent=5 // pred_check_branch
        %109 = sbr.rel (%p106) target = $region12
      $region11: #{tpu_custom_call.1} parent=5 // pred_region
        %s110 = ssub.s32 %s14, 1
        // Predicated region
        $region13: #{tpu_custom_call.1} parent=11 // pred_check
          %p111 = pneg %p47
        $region14: #{tpu_custom_call.1} parent=11 // pred_check_branch
          %113 = sbr.rel (%p111) target = $region16
        $region15: #{tpu_custom_call.1} parent=11 // pred_region
          %s115 = ssub.s32 55296, 55296
          %116 = vsyncadd [#allocation5], %s115
          %s117 = sshll.u32 [#allocation4], 4
          %s118 = int_to_ptr.vmem [resolvable:$true] %s117
          %123 = dma.hbm_to_vmem [thread:$0]  %s1, 55296, %s118, [#allocation5], 128, 128, 8
        $region16: #{tpu_custom_call.1} parent=11 // pred_fallthru
          _
        // Predicated region
        $region17: #{tpu_custom_call.1} parent=11 // pred_check
          %p124 = pneg %p68
        $region18: #{tpu_custom_call.1} parent=11 // pred_check_branch
          %126 = sbr.rel (%p124) target = $region20
        $region19: #{tpu_custom_call.1} parent=11 // pred_region
          %s128 = ssub.s32 16, 16
          %129 = vsyncadd [#allocation8], %s128
          %s131 = sshll.u32 [#allocation7], 4
          %s132 = int_to_ptr.vmem [resolvable:$true] %s131
          %134 = dma.hbm_to_vmem [thread:$0]  %s2, 16, %s132, [#allocation8]
        $region20: #{tpu_custom_call.1} parent=11 // pred_fallthru
          _
      $region12: #{tpu_custom_call.1} parent=5 // pred_fallthru
        _
      %p135 = scmp.lt.s32.totalorder %s14, 4
      // Predicated region
      $region21: #{tpu_custom_call.1} parent=5 // pred_check
        %p136 = pneg %p135
      $region22: #{tpu_custom_call.1} parent=5 // pred_check_branch
        %138 = sbr.rel (%p136) target = $region24
      $region23: #{tpu_custom_call.1} parent=5 // pred_region
        _
      $region24: #{tpu_custom_call.1} parent=5 // pred_fallthru
        _
      %p139 = scmp.le.s32.totalorder 1, %s14
      %p140 = scmp.lt.s32.totalorder %s14, 5
      %p141 = pnand %p139, %p140
      %p142 = pneg %p141
      // Predicated region
      $region25: #{tpu_custom_call.1} parent=5 // pred_check
        _
      $region26: #{tpu_custom_call.1} parent=5 // pred_check_branch
        %144 = sbr.rel (%p141) target = $region28
      $region27: #{tpu_custom_call.1} parent=5 // pred_region
        %s145 = ssub.s32 %s14, 1
        // Predicated region
        $region29: #{tpu_custom_call.1} parent=27 // pred_check
          %p146 = pneg %p47
        $region30: #{tpu_custom_call.1} parent=27 // pred_check_branch
          %148 = sbr.rel (%p146) target = $region32
        $region31: #{tpu_custom_call.1} parent=27 // pred_region
          %149 = dma.done [#allocation5], 55296
        $region32: #{tpu_custom_call.1} parent=27 // pred_fallthru
          _
        // Predicated region
        $region33: #{tpu_custom_call.1} parent=27 // pred_check
          %p150 = pneg %p68
        $region34: #{tpu_custom_call.1} parent=27 // pred_check_branch
          %152 = sbr.rel (%p150) target = $region36
        $region35: #{tpu_custom_call.1} parent=27 // pred_region
          %153 = dma.done [#allocation8], 16
        $region36: #{tpu_custom_call.1} parent=27 // pred_fallthru
          _
        %p154 = pneg %p47
        %p155 = pneg %p44
        %p156 = pneg %p68
        %p157 = pneg %p65
        %p158 = pneg %p96
        %p159 = pneg %p93
        %s160 = sand.u32 %s83, 1
        %s161 = scalar_lea.sflag [#allocation6], %s160
        %s162 = sand.u32 %s83, 1
        %s163 = smul.addr %s162, 128
        %s164 = scalar_lea.vmem [#allocation9], %s163
        %s165 = smul.u32 16, %s24
        %p166 = scmp.lt.s32.totalorder %s24, 0
        %s167 = ssub.s32 0, %s24
        %s168 = scalar_select %p166, %s167, %s24
        %s169 = sand.u32 %s168, 1
        %s170 = ssub.s32 0, %s169
        %s171 = scalar_select %p166, %s170, %s169
        %p172 = scmp.ne.s32.totalorder %s171, 0
        %p173 = scmp.lt.s32.totalorder %s171, 0
        %p174 = pnand %p173, %p172
        %p175 = pneg %p174
        %s176 = sadd.s32 %s171, 2
        %s177 = scalar_select %p175, %s176, %s171
        %p178 = scmp.eq.s32.totalorder %s24, 0
        // Predicated region
        $region37: #{tpu_custom_call.1} parent=27 // pred_check
          %p179 = pneg %p178
        $region38: #{tpu_custom_call.1} parent=27 // pred_check_branch
          %181 = sbr.rel (%p179) target = $region40
        $region39: #{tpu_custom_call.1} parent=27 // pred_region
          %s182 = smul.u32 0, 24
          %s183 = smul.u32 %s23, 576
          %s184 = sadd.s32 %s182, %s183
          %s185 = smul.addr %s184, 16
          %s186 = scalar_lea.hbm %s0, %s185
          // Predicated region
          $region41: #{tpu_custom_call.1} parent=39 // pred_check
            _
          $region42: #{tpu_custom_call.1} parent=39 // pred_check_branch
            %188 = sbr.rel target = $region44
          $region43: #{tpu_custom_call.1} parent=39 // pred_region
            %189 = sst [smem:[#allocation12]] [#allocation11]
            %190 = sst [smem:[#allocation13]] [#allocation10]
          $region44: #{tpu_custom_call.1} parent=39 // pred_fallthru
            _
          %192 = shalt.err (0)
          %s194 = sshll.u32 [#allocation2], 4
          %s195 = int_to_ptr.vmem [resolvable:$true] %s194
          %197 = dma.hbm_to_vmem [thread:$0]  %s186, 6144, %s195, [#allocation3]
        $region40: #{tpu_custom_call.1} parent=27 // pred_fallthru
          _
        %s198 = smul.u32 %s24, 8
        %s199 = smul.u32 %s177, 384
        %s200 = scalar_lea.vmem [#allocation2], %s199
        %s201 = scalar_lea.sflag [#allocation3], %s177
        %s202 = smul.u32 16, 24
        %s203 = smul.u32 %s202, 1
        %s204 = sshll.u32 %s203, 4
        %205 = dma.done %s201, %s204
        %s206 = sadd.s32 %s24, 1
        %p207 = scmp.lt.s32.totalorder %s206, 2
        // Predicated region
        $region45: #{tpu_custom_call.1} parent=27 // pred_check
          %p208 = pneg %p207
        $region46: #{tpu_custom_call.1} parent=27 // pred_check_branch
          %210 = sbr.rel (%p208) target = $region48
        $region47: #{tpu_custom_call.1} parent=27 // pred_region
          %s211 = ssub.s32 1, %s177
          %s212 = smul.u32 %s206, 8
          %s213 = smul.u32 %s212, 24
          %s214 = smul.u32 %s23, 576
          %s215 = sadd.s32 %s213, %s214
          %s216 = smul.addr %s215, 16
          %s217 = scalar_lea.hbm %s0, %s216
          %s218 = smul.u32 %s211, 384
          %s219 = scalar_lea.vmem [#allocation2], %s218
          %s220 = scalar_lea.sflag [#allocation3], %s211
          // Predicated region
          $region49: #{tpu_custom_call.1} parent=47 // pred_check
            _
          $region50: #{tpu_custom_call.1} parent=47 // pred_check_branch
            %222 = sbr.rel target = $region52
          $region51: #{tpu_custom_call.1} parent=47 // pred_region
            %223 = sst [smem:[#allocation12]] [#allocation15]
            %224 = sst [smem:[#allocation13]] [#allocation14]
          $region52: #{tpu_custom_call.1} parent=47 // pred_fallthru
            _
          %226 = shalt.err (0)
          %s228 = sshll.u32 %s219, 4
          %s229 = int_to_ptr.vmem [resolvable:$true] %s228
          %231 = dma.hbm_to_vmem [thread:$0]  %s217, 6144, %s229, %s220
        $region48: #{tpu_custom_call.1} parent=27 // pred_fallthru
          _
        %v232 = vld [vmem:[#allocation7] sm:$0x1]
        %v234 = vlaneseq
        %v235 = vshrl.u32 %v234, 7
        %v236 = vsub.s32 0, %v235
        %v237 = vrot.slane %v232, %v236
        %s239 = scalar_lea.vmem %s200, 72 [#allocation2]
        %v240 = vld [vmem:[%s239 + $0x3] sm:$0xff]
        %v241 = vld [vmem:[%s239 + $0xb] sm:$0xff]
        %v242 = vld [vmem:[%s239 + $0x1b] sm:$0xff]
        %v243 = vld [vmem:[%s239 + $0x23] sm:$0xff]
        %v244 = vld [vmem:[%s239 + $0x33] sm:$0xff]
        %v245 = vld [vmem:[%s239 + $0x3b] sm:$0xff]
        %v246 = vld [vmem:[%s239 + $0x4b] sm:$0xff]
        %v247 = vld [vmem:[%s239 + $0x53] sm:$0xff]
        %v248 = vld [vmem:[%s239 + $0x63] sm:$0xff]
        %v249 = vld [vmem:[%s239 + $0x6b] sm:$0xff]
        %v250 = vld [vmem:[%s239 + $0x7b] sm:$0xff]
        %v251 = vld [vmem:[%s239 + $0x83] sm:$0xff]
        %v252 = vld [vmem:[%s239 + $0x93] sm:$0xff]
        %v253 = vld [vmem:[%s239 + $0x9b] sm:$0xff]
        %v254 = vld [vmem:[%s239 + $0xab] sm:$0xff]
        %v255 = vld [vmem:[%s239 + $0xb3] sm:$0xff]
        %v256 = vld [vmem:[%s239 + $0x4] sm:$0xff]
        %v257 = vld [vmem:[%s239 + $0xc] sm:$0xff]
        %v258 = vld [vmem:[%s239 + $0x1c] sm:$0xff]
        %v259 = vld [vmem:[%s239 + $0x24] sm:$0xff]
        %v260 = vld [vmem:[%s239 + $0x34] sm:$0xff]
        %v261 = vld [vmem:[%s239 + $0x3c] sm:$0xff]
        %v262 = vld [vmem:[%s239 + $0x4c] sm:$0xff]
        %v263 = vld [vmem:[%s239 + $0x54] sm:$0xff]
        %v264 = vld [vmem:[%s239 + $0x64] sm:$0xff]
        %v265 = vld [vmem:[%s239 + $0x6c] sm:$0xff]
        %v266 = vld [vmem:[%s239 + $0x7c] sm:$0xff]
        %v267 = vld [vmem:[%s239 + $0x84] sm:$0xff]
        %v268 = vld [vmem:[%s239 + $0x94] sm:$0xff]
        %v269 = vld [vmem:[%s239 + $0x9c] sm:$0xff]
        %v270 = vld [vmem:[%s239 + $0xac] sm:$0xff]
        %v271 = vld [vmem:[%s239 + $0xb4] sm:$0xff]
        %v272 = vld [vmem:[%s239 + $0x5] sm:$0xff]
        %v273 = vld [vmem:[%s239 + $0xd] sm:$0xff]
        %v274 = vld [vmem:[%s239 + $0x1d] sm:$0xff]
        %v275 = vld [vmem:[%s239 + $0x25] sm:$0xff]
        %v276 = vld [vmem:[%s239 + $0x35] sm:$0xff]
        %v277 = vld [vmem:[%s239 + $0x3d] sm:$0xff]
        %v278 = vld [vmem:[%s239 + $0x4d] sm:$0xff]
        %v279 = vld [vmem:[%s239 + $0x55] sm:$0xff]
        %v280 = vld [vmem:[%s239 + $0x65] sm:$0xff]
        %v281 = vld [vmem:[%s239 + $0x6d] sm:$0xff]
        %v282 = vld [vmem:[%s239 + $0x7d] sm:$0xff]
        %v283 = vld [vmem:[%s239 + $0x85] sm:$0xff]
        %v284 = vld [vmem:[%s239 + $0x95] sm:$0xff]
        %v285 = vld [vmem:[%s239 + $0x9d] sm:$0xff]
        %v286 = vld [vmem:[%s239 + $0xad] sm:$0xff]
        %v287 = vld [vmem:[%s239 + $0xb5] sm:$0xff]
        %v288 = vld [vmem:[#allocation4] sm:$0xff]
        %v289 = vld [vmem:[#allocation4 + $0x8] sm:$0xff]
        %v290 = vld [vmem:[#allocation4 + $0x10] sm:$0xff]
        %v291 = vld [vmem:[#allocation4 + $0x18] sm:$0xff]
        %v292 = vld [vmem:[#allocation4 + $0x20] sm:$0xff]
        %v293 = vld [vmem:[#allocation4 + $0x28] sm:$0xff]
        %v294 = vld [vmem:[#allocation4 + $0x30] sm:$0xff]
        %v295 = vld [vmem:[#allocation4 + $0x38] sm:$0xff]
        %v296 = vld [vmem:[#allocation4 + $0x40] sm:$0xff]
        %v297 = vld [vmem:[#allocation4 + $0x48] sm:$0xff]
        %v298 = vld [vmem:[#allocation4 + $0x50] sm:$0xff]
        %v299 = vld [vmem:[#allocation4 + $0x58] sm:$0xff]
        %v300 = vld [vmem:[#allocation4 + $0x60] sm:$0xff]
        %v301 = vld [vmem:[#allocation4 + $0x68] sm:$0xff]
        %v302 = vld [vmem:[#allocation4 + $0x70] sm:$0xff]
        %v303 = vld [vmem:[#allocation4 + $0x78] sm:$0xff]
        %v304 = vld [vmem:[#allocation4 + $0x80] sm:$0xff]
        %v305 = vld [vmem:[#allocation4 + $0x88] sm:$0xff]
        %v306 = vld [vmem:[#allocation4 + $0x90] sm:$0xff]
        %v307 = vld [vmem:[#allocation4 + $0x98] sm:$0xff]
        %v308 = vld [vmem:[#allocation4 + $0xa0] sm:$0xff]
        %v309 = vld [vmem:[#allocation4 + $0xa8] sm:$0xff]
        %v310 = vld [vmem:[#allocation4 + $0xb0] sm:$0xff]
        %v311 = vld [vmem:[#allocation4 + $0xb8] sm:$0xff]
        %v312 = vld [vmem:[#allocation4 + $0xc0] sm:$0xff]
        %v313 = vld [vmem:[#allocation4 + $0xc8] sm:$0xff]
        %v314 = vld [vmem:[#allocation4 + $0xd0] sm:$0xff]
        %v315 = vld [vmem:[#allocation4 + $0xd8] sm:$0xff]
        %v316 = vld [vmem:[#allocation4 + $0xe0] sm:$0xff]
        %v317 = vld [vmem:[#allocation4 + $0xe8] sm:$0xff]
        %v318 = vld [vmem:[#allocation4 + $0xf0] sm:$0xff]
        %v319 = vld [vmem:[#allocation4 + $0xf8] sm:$0xff]
        %v320 = vld [vmem:[#allocation4 + $0x100] sm:$0xff]
        %v321 = vld [vmem:[#allocation4 + $0x108] sm:$0xff]
        %v322 = vld [vmem:[#allocation4 + $0x110] sm:$0xff]
        %v323 = vld [vmem:[#allocation4 + $0x118] sm:$0xff]
        %v324 = vld [vmem:[#allocation4 + $0x120] sm:$0xff]
        %v325 = vld [vmem:[#allocation4 + $0x128] sm:$0xff]
        %v326 = vld [vmem:[#allocation4 + $0x130] sm:$0xff]
        %v327 = vld [vmem:[#allocation4 + $0x138] sm:$0xff]
        %v328 = vld [vmem:[#allocation4 + $0x140] sm:$0xff]
        %v329 = vld [vmem:[#allocation4 + $0x148] sm:$0xff]
        %v330 = vld [vmem:[#allocation4 + $0x150] sm:$0xff]
        %v331 = vld [vmem:[#allocation4 + $0x158] sm:$0xff]
        %v332 = vld [vmem:[#allocation4 + $0x160] sm:$0xff]
        %v333 = vld [vmem:[#allocation4 + $0x168] sm:$0xff]
        %v334 = vld [vmem:[#allocation4 + $0x170] sm:$0xff]
        %v335 = vld [vmem:[#allocation4 + $0x178] sm:$0xff]
        %336 = vmatprep.subr.mxu0 0.0
        %337 = vmatpush1.msra.mxu0 %v288
        %338 = vmatprep.subr.mxu0 0.0
        %339 = vmatpush1.msra.mxu0 %v289
        %340 = vmatprep.subr.mxu0 0.0
        %341 = vmatpush1.msra.mxu0 %v290
        %342 = vmatprep.subr.mxu0 0.0
        %343 = vmatpush1.msra.mxu0 %v291
        %344 = vmatprep.subr.mxu0 0.0
        %345 = vmatpush1.msra.mxu0 %v292
        %346 = vmatprep.subr.mxu0 0.0
        %347 = vmatpush1.msra.mxu0 %v293
        %348 = vmatprep.subr.mxu0 0.0
        %349 = vmatpush1.msra.mxu0 %v294
        %350 = vmatprep.subr.mxu0 0.0
        %351 = vmatpush1.msra.mxu0 %v295
        %352 = vmatprep.subr.mxu0 0.0
        %353 = vmatpush1.msra.mxu0 %v296
        %354 = vmatprep.subr.mxu0 0.0
        %355 = vmatpush1.msra.mxu0 %v297
        %356 = vmatprep.subr.mxu0 0.0
        %357 = vmatpush1.msra.mxu0 %v298
        %358 = vmatprep.subr.mxu0 0.0
        %359 = vmatpush1.msra.mxu0 %v299
        %360 = vmatprep.subr.mxu0 0.0
        %361 = vmatpush1.msra.mxu0 %v300
        %362 = vmatprep.subr.mxu0 0.0
        %363 = vmatpush1.msra.mxu0 %v301
        %364 = vmatprep.subr.mxu0 0.0
        %365 = vmatpush1.msra.mxu0 %v302
        %366 = vmatprep.subr.mxu0 0.0
        %367 = vmatpush1.msra.mxu0 %v303
        %368 = vmatprep.subr.mxu0 0.0
        %369 = vmatpush1.msra.mxu0 %v304
        %370 = vmatprep.subr.mxu0 0.0
        %371 = vmatpush1.msra.mxu0 %v305
        %372 = vmatprep.subr.mxu0 0.0
        %373 = vmatpush1.msra.mxu0 %v306
        %374 = vmatprep.subr.mxu0 0.0
        %375 = vmatpush1.msra.mxu0 %v307
        %376 = vmatprep.subr.mxu0 0.0
        %377 = vmatpush1.msra.mxu0 %v308
        %378 = vmatprep.subr.mxu0 0.0
        %379 = vmatpush1.msra.mxu0 %v309
        %380 = vmatprep.subr.mxu0 0.0
        %381 = vmatpush1.msra.mxu0 %v310
        %382 = vmatprep.subr.mxu0 0.0
        %383 = vmatpush1.msra.mxu0 %v311
        %384 = vmatprep.subr.mxu0 0.0
        %385 = vmatpush1.msra.mxu0 %v312
        %386 = vmatprep.subr.mxu0 0.0
        %387 = vmatpush1.msra.mxu0 %v313
        %388 = vmatprep.subr.mxu0 0.0
        %389 = vmatpush1.msra.mxu0 %v314
        %390 = vmatprep.subr.mxu0 0.0
        %391 = vmatpush1.msra.mxu0 %v315
        %392 = vmatprep.subr.mxu0 0.0
        %393 = vmatpush1.msra.mxu0 %v316
        %394 = vmatprep.subr.mxu0 0.0
        %395 = vmatpush1.msra.mxu0 %v317
        %396 = vmatprep.subr.mxu0 0.0
        %397 = vmatpush1.msra.mxu0 %v318
        %398 = vmatprep.subr.mxu0 0.0
        %399 = vmatpush1.msra.mxu0 %v319
        %400 = vmatprep.mubr.f32.mxu0 %v256
        %401 = vmatmul.mubr.f32.gmra.mrb[0].mxu0 %v240
        %v402 = vpop.f32.mrb[0].mxu0
        %v403 = vadd.f32 0.0, %v402
        %v404 = vpop.f32.mrb[0].mxu0
        %405 = vmatprep.mubr.f32.mxu0 %v257
        %406 = vmatmul.mubr.f32.gmra.mrb[0].mxu0 %v241
        %v407 = vpop.f32.mrb[0].mxu0
        %v408 = vadd.f32 0.0, %v407
        %v409 = vpop.f32.mrb[0].mxu0
        %410 = vmatprep.mubr.f32.mxu0 %v258
        %411 = vmatmul.mubr.f32.gmra.mrb[0].mxu0 %v242
        %v412 = vpop.f32.mrb[0].mxu0
        %v413 = vadd.f32 0.0, %v412
        %v414 = vpop.f32.mrb[0].mxu0
        %415 = vmatprep.mubr.f32.mxu0 %v259
        %416 = vmatmul.mubr.f32.gmra.mrb[0].mxu0 %v243
        %v417 = vpop.f32.mrb[0].mxu0
        %v418 = vadd.f32 0.0, %v417
        %v419 = vpop.f32.mrb[0].mxu0
        %420 = vmatprep.mubr.f32.mxu0 %v260
        %421 = vmatmul.mubr.f32.gmra.mrb[0].mxu0 %v244
        %v422 = vpop.f32.mrb[0].mxu0
        %v423 = vadd.f32 0.0, %v422
        %v424 = vpop.f32.mrb[0].mxu0
        %425 = vmatprep.mubr.f32.mxu0 %v261
        %426 = vmatmul.mubr.f32.gmra.mrb[0].mxu0 %v245
        %v427 = vpop.f32.mrb[0].mxu0
        %v428 = vadd.f32 0.0, %v427
        %v429 = vpop.f32.mrb[0].mxu0
        %430 = vmatprep.mubr.f32.mxu0 %v262
        %431 = vmatmul.mubr.f32.gmra.mrb[0].mxu0 %v246
        %v432 = vpop.f32.mrb[0].mxu0
        %v433 = vadd.f32 0.0, %v432
        %v434 = vpop.f32.mrb[0].mxu0
        %435 = vmatprep.mubr.f32.mxu0 %v263
        %436 = vmatmul.mubr.f32.gmra.mrb[0].mxu0 %v247
        %v437 = vpop.f32.mrb[0].mxu0
        %v438 = vadd.f32 0.0, %v437
        %v439 = vpop.f32.mrb[0].mxu0
        %440 = vmatprep.mubr.f32.mxu0 %v264
        %441 = vmatmul.mubr.f32.gmra.mrb[0].mxu0 %v248
        %v442 = vpop.f32.mrb[0].mxu0
        %v443 = vadd.f32 0.0, %v442
        %v444 = vpop.f32.mrb[0].mxu0
        %445 = vmatprep.mubr.f32.mxu0 %v265
        %446 = vmatmul.mubr.f32.gmra.mrb[0].mxu0 %v249
        %v447 = vpop.f32.mrb[0].mxu0
        %v448 = vadd.f32 0.0, %v447
        %v449 = vpop.f32.mrb[0].mxu0
        %450 = vmatprep.mubr.f32.mxu0 %v266
        %451 = vmatmul.mubr.f32.gmra.mrb[0].mxu0 %v250
        %v452 = vpop.f32.mrb[0].mxu0
        %v453 = vadd.f32 0.0, %v452
        %v454 = vpop.f32.mrb[0].mxu0
        %455 = vmatprep.mubr.f32.mxu0 %v267
        %456 = vmatmul.mubr.f32.gmra.mrb[0].mxu0 %v251
        %v457 = vpop.f32.mrb[0].mxu0
        %v458 = vadd.f32 0.0, %v457
        %v459 = vpop.f32.mrb[0].mxu0
        %460 = vmatprep.mubr.f32.mxu0 %v268
        %461 = vmatmul.mubr.f32.gmra.mrb[0].mxu0 %v252
        %v462 = vpop.f32.mrb[0].mxu0
        %v463 = vadd.f32 0.0, %v462
        %v464 = vpop.f32.mrb[0].mxu0
        %465 = vmatprep.mubr.f32.mxu0 %v269
        %466 = vmatmul.mubr.f32.gmra.mrb[0].mxu0 %v253
        %v467 = vpop.f32.mrb[0].mxu0
        %v468 = vadd.f32 0.0, %v467
        %v469 = vpop.f32.mrb[0].mxu0
        %470 = vmatprep.mubr.f32.mxu0 %v270
        %471 = vmatmul.mubr.f32.gmra.mrb[0].mxu0 %v254
        %v472 = vpop.f32.mrb[0].mxu0
        %v473 = vadd.f32 0.0, %v472
        %v474 = vpop.f32.mrb[0].mxu0
        %475 = vmatprep.mubr.f32.mxu0 %v271
        %476 = vmatmul.mubr.f32.gmra.mrb[0].mxu0 %v255
        %v477 = vpop.f32.mrb[0].mxu0
        %v478 = vadd.f32 0.0, %v477
        %v479 = vpop.f32.mrb[0].mxu0
        %480 = vdwg.mxu0
        %481 = vmatprep.subr.mxu0 0.0
        %482 = vmatpush1.msra.mxu0 %v320
        %483 = vmatprep.subr.mxu0 0.0
        %484 = vmatpush1.msra.mxu0 %v321
        %485 = vmatprep.subr.mxu0 0.0
        %486 = vmatpush1.msra.mxu0 %v322
        %487 = vmatprep.subr.mxu0 0.0
        %488 = vmatpush1.msra.mxu0 %v323
        %489 = vmatprep.subr.mxu0 0.0
        %490 = vmatpush1.msra.mxu0 %v324
        %491 = vmatprep.subr.mxu0 0.0
        %492 = vmatpush1.msra.mxu0 %v325
        %493 = vmatprep.subr.mxu0 0.0
        %494 = vmatpush1.msra.mxu0 %v326
        %495 = vmatprep.subr.mxu0 0.0
        %496 = vmatpush1.msra.mxu0 %v327
        %497 = vmatprep.subr.mxu0 0.0
        %498 = vmatpush1.msra.mxu0 %v328
        %499 = vmatprep.subr.mxu0 0.0
        %500 = vmatpush1.msra.mxu0 %v329
        %501 = vmatprep.subr.mxu0 0.0
        %502 = vmatpush1.msra.mxu0 %v330
        %503 = vmatprep.subr.mxu0 0.0
        %504 = vmatpush1.msra.mxu0 %v331
        %505 = vmatprep.subr.mxu0 0.0
        %506 = vmatpush1.msra.mxu0 %v332
        %507 = vmatprep.subr.mxu0 0.0
        %508 = vmatpush1.msra.mxu0 %v333
        %509 = vmatprep.subr.mxu0 0.0
        %510 = vmatpush1.msra.mxu0 %v334
        %511 = vmatprep.subr.mxu0 0.0
        %512 = vmatpush1.msra.mxu0 %v335
        %513 = vmatprep.subr.mxu0 0.0
        %514 = vmatpush1.msra.mxu0 0.0
        %515 = vmatprep.subr.mxu0 0.0
        %516 = vmatpush1.msra.mxu0 0.0
        %517 = vmatprep.subr.mxu0 0.0
        %518 = vmatpush1.msra.mxu0 0.0
        %519 = vmatprep.subr.mxu0 0.0
        %520 = vmatpush1.msra.mxu0 0.0
        %521 = vmatprep.subr.mxu0 0.0
        %522 = vmatpush1.msra.mxu0 0.0
        %523 = vmatprep.subr.mxu0 0.0
        %524 = vmatpush1.msra.mxu0 0.0
        %525 = vmatprep.subr.mxu0 0.0
        %526 = vmatpush1.msra.mxu0 0.0
        %527 = vmatprep.subr.mxu0 0.0
        %528 = vmatpush1.msra.mxu0 0.0
        %529 = vmatprep.subr.mxu0 0.0
        %530 = vmatpush1.msra.mxu0 0.0
        %531 = vmatprep.subr.mxu0 0.0
        %532 = vmatpush1.msra.mxu0 0.0
        %533 = vmatprep.subr.mxu0 0.0
        %534 = vmatpush1.msra.mxu0 0.0
        %535 = vmatprep.subr.mxu0 0.0
        %536 = vmatpush1.msra.mxu0 0.0
        %537 = vmatprep.subr.mxu0 0.0
        %538 = vmatpush1.msra.mxu0 0.0
        %539 = vmatprep.subr.mxu0 0.0
        %540 = vmatpush1.msra.mxu0 0.0
        %541 = vmatprep.subr.mxu0 0.0
        %542 = vmatpush1.msra.mxu0 0.0
        %543 = vmatprep.subr.mxu0 0.0
        %544 = vmatpush1.msra.mxu0 0.0
        %545 = vmatprep.mubr.f32.mxu0 0.0
        %546 = vmatmul.mubr.f32.gmra.mrb[0].mxu0 %v272
        %v547 = vpop.f32.mrb[0].mxu0
        %v548 = vadd.f32 %v403, %v547
        %v549 = vpop.f32.mrb[0].mxu0
        %550 = vmatprep.mubr.f32.mxu0 0.0
        %551 = vmatmul.mubr.f32.gmra.mrb[0].mxu0 %v273
        %v552 = vpop.f32.mrb[0].mxu0
        %v553 = vadd.f32 %v408, %v552
        %v554 = vpop.f32.mrb[0].mxu0
        %555 = vmatprep.mubr.f32.mxu0 0.0
        %556 = vmatmul.mubr.f32.gmra.mrb[0].mxu0 %v274
        %v557 = vpop.f32.mrb[0].mxu0
        %v558 = vadd.f32 %v413, %v557
        %v559 = vpop.f32.mrb[0].mxu0
        %560 = vmatprep.mubr.f32.mxu0 0.0
        %561 = vmatmul.mubr.f32.gmra.mrb[0].mxu0 %v275
        %v562 = vpop.f32.mrb[0].mxu0
        %v563 = vadd.f32 %v418, %v562
        %v564 = vpop.f32.mrb[0].mxu0
        %565 = vmatprep.mubr.f32.mxu0 0.0
        %566 = vmatmul.mubr.f32.gmra.mrb[0].mxu0 %v276
        %v567 = vpop.f32.mrb[0].mxu0
        %v568 = vadd.f32 %v423, %v567
        %v569 = vpop.f32.mrb[0].mxu0
        %570 = vmatprep.mubr.f32.mxu0 0.0
        %571 = vmatmul.mubr.f32.gmra.mrb[0].mxu0 %v277
        %v572 = vpop.f32.mrb[0].mxu0
        %v573 = vadd.f32 %v428, %v572
        %v574 = vpop.f32.mrb[0].mxu0
        %575 = vmatprep.mubr.f32.mxu0 0.0
        %576 = vmatmul.mubr.f32.gmra.mrb[0].mxu0 %v278
        %v577 = vpop.f32.mrb[0].mxu0
        %v578 = vadd.f32 %v433, %v577
        %v579 = vpop.f32.mrb[0].mxu0
        %580 = vmatprep.mubr.f32.mxu0 0.0
        %581 = vmatmul.mubr.f32.gmra.mrb[0].mxu0 %v279
        %v582 = vpop.f32.mrb[0].mxu0
        %v583 = vadd.f32 %v438, %v582
        %v584 = vpop.f32.mrb[0].mxu0
        %585 = vmatprep.mubr.f32.mxu0 0.0
        %586 = vmatmul.mubr.f32.gmra.mrb[0].mxu0 %v280
        %v587 = vpop.f32.mrb[0].mxu0
        %v588 = vadd.f32 %v443, %v587
        %v589 = vpop.f32.mrb[0].mxu0
        %590 = vmatprep.mubr.f32.mxu0 0.0
        %591 = vmatmul.mubr.f32.gmra.mrb[0].mxu0 %v281
        %v592 = vpop.f32.mrb[0].mxu0
        %v593 = vadd.f32 %v448, %v592
        %v594 = vpop.f32.mrb[0].mxu0
        %595 = vmatprep.mubr.f32.mxu0 0.0
        %596 = vmatmul.mubr.f32.gmra.mrb[0].mxu0 %v282
        %v597 = vpop.f32.mrb[0].mxu0
        %v598 = vadd.f32 %v453, %v597
        %v599 = vpop.f32.mrb[0].mxu0
        %600 = vmatprep.mubr.f32.mxu0 0.0
        %601 = vmatmul.mubr.f32.gmra.mrb[0].mxu0 %v283
        %v602 = vpop.f32.mrb[0].mxu0
        %v603 = vadd.f32 %v458, %v602
        %v604 = vpop.f32.mrb[0].mxu0
        %605 = vmatprep.mubr.f32.mxu0 0.0
        %606 = vmatmul.mubr.f32.gmra.mrb[0].mxu0 %v284
        %v607 = vpop.f32.mrb[0].mxu0
        %v608 = vadd.f32 %v463, %v607
        %v609 = vpop.f32.mrb[0].mxu0
        %610 = vmatprep.mubr.f32.mxu0 0.0
        %611 = vmatmul.mubr.f32.gmra.mrb[0].mxu0 %v285
        %v612 = vpop.f32.mrb[0].mxu0
        %v613 = vadd.f32 %v468, %v612
        %v614 = vpop.f32.mrb[0].mxu0
        %615 = vmatprep.mubr.f32.mxu0 0.0
        %616 = vmatmul.mubr.f32.gmra.mrb[0].mxu0 %v286
        %v617 = vpop.f32.mrb[0].mxu0
        %v618 = vadd.f32 %v473, %v617
        %v619 = vpop.f32.mrb[0].mxu0
        %620 = vmatprep.mubr.f32.mxu0 0.0
        %621 = vmatmul.mubr.f32.gmra.mrb[0].mxu0 %v287
        %v622 = vpop.f32.mrb[0].mxu0
        %v623 = vadd.f32 %v478, %v622
        %v624 = vpop.f32.mrb[0].mxu0
        %625 = vdwg.mxu0
        %v626 = vadd.f32 %v237, %v548
        %v627 = vadd.f32 %v237, %v553
        %v628 = vadd.f32 %v237, %v558
        %v629 = vadd.f32 %v237, %v563
        %v630 = vadd.f32 %v237, %v568
        %v631 = vadd.f32 %v237, %v573
        %v632 = vadd.f32 %v237, %v578
        %v633 = vadd.f32 %v237, %v583
        %v634 = vadd.f32 %v237, %v588
        %v635 = vadd.f32 %v237, %v593
        %v636 = vadd.f32 %v237, %v598
        %v637 = vadd.f32 %v237, %v603
        %v638 = vadd.f32 %v237, %v608
        %v639 = vadd.f32 %v237, %v613
        %v640 = vadd.f32 %v237, %v618
        %v641 = vadd.f32 %v237, %v623
        %s642 = scalar_lea.vmem %s200, 96 [#allocation2]
        %v643 = vld [vmem:[%s642 + $0x3] sm:$0xff]
        %v644 = vld [vmem:[%s642 + $0xb] sm:$0xff]
        %v645 = vld [vmem:[%s642 + $0x1b] sm:$0xff]
        %v646 = vld [vmem:[%s642 + $0x23] sm:$0xff]
        %v647 = vld [vmem:[%s642 + $0x33] sm:$0xff]
        %v648 = vld [vmem:[%s642 + $0x3b] sm:$0xff]
        %v649 = vld [vmem:[%s642 + $0x4b] sm:$0xff]
        %v650 = vld [vmem:[%s642 + $0x53] sm:$0xff]
        %v651 = vld [vmem:[%s642 + $0x63] sm:$0xff]
        %v652 = vld [vmem:[%s642 + $0x6b] sm:$0xff]
        %v653 = vld [vmem:[%s642 + $0x7b] sm:$0xff]
        %v654 = vld [vmem:[%s642 + $0x83] sm:$0xff]
        %v655 = vld [vmem:[%s642 + $0x93] sm:$0xff]
        %v656 = vld [vmem:[%s642 + $0x9b] sm:$0xff]
        %v657 = vld [vmem:[%s642 + $0xab] sm:$0xff]
        %v658 = vld [vmem:[%s642 + $0xb3] sm:$0xff]
        %v659 = vld [vmem:[%s642 + $0x4] sm:$0xff]
        %v660 = vld [vmem:[%s642 + $0xc] sm:$0xff]
        %v661 = vld [vmem:[%s642 + $0x1c] sm:$0xff]
        %v662 = vld [vmem:[%s642 + $0x24] sm:$0xff]
        %v663 = vld [vmem:[%s642 + $0x34] sm:$0xff]
        %v664 = vld [vmem:[%s642 + $0x3c] sm:$0xff]
        %v665 = vld [vmem:[%s642 + $0x4c] sm:$0xff]
        %v666 = vld [vmem:[%s642 + $0x54] sm:$0xff]
        %v667 = vld [vmem:[%s642 + $0x64] sm:$0xff]
        %v668 = vld [vmem:[%s642 + $0x6c] sm:$0xff]
        %v669 = vld [vmem:[%s642 + $0x7c] sm:$0xff]
        %v670 = vld [vmem:[%s642 + $0x84] sm:$0xff]
        %v671 = vld [vmem:[%s642 + $0x94] sm:$0xff]
        %v672 = vld [vmem:[%s642 + $0x9c] sm:$0xff]
        %v673 = vld [vmem:[%s642 + $0xac] sm:$0xff]
        %v674 = vld [vmem:[%s642 + $0xb4] sm:$0xff]
        %v675 = vld [vmem:[%s642 + $0x5] sm:$0xff]
        %v676 = vld [vmem:[%s642 + $0xd] sm:$0xff]
        %v677 = vld [vmem:[%s642 + $0x1d] sm:$0xff]
        %v678 = vld [vmem:[%s642 + $0x25] sm:$0xff]
        %v679 = vld [vmem:[%s642 + $0x35] sm:$0xff]
        %v680 = vld [vmem:[%s642 + $0x3d] sm:$0xff]
        %v681 = vld [vmem:[%s642 + $0x4d] sm:$0xff]
        %v682 = vld [vmem:[%s642 + $0x55] sm:$0xff]
        %v683 = vld [vmem:[%s642 + $0x65] sm:$0xff]
        %v684 = vld [vmem:[%s642 + $0x6d] sm:$0xff]
        %v685 = vld [vmem:[%s642 + $0x7d] sm:$0xff]
        %v686 = vld [vmem:[%s642 + $0x85] sm:$0xff]
        %v687 = vld [vmem:[%s642 + $0x95] sm:$0xff]
        %v688 = vld [vmem:[%s642 + $0x9d] sm:$0xff]
        %v689 = vld [vmem:[%s642 + $0xad] sm:$0xff]
        %v690 = vld [vmem:[%s642 + $0xb5] sm:$0xff]
        %s691 = scalar_lea.vmem [#allocation4], 384
        %v692 = vld [vmem:[%s691] sm:$0xff]
        %v693 = vld [vmem:[%s691 + $0x8] sm:$0xff]
        %v694 = vld [vmem:[%s691 + $0x10] sm:$0xff]
        %v695 = vld [vmem:[%s691 + $0x18] sm:$0xff]
        %v696 = vld [vmem:[%s691 + $0x20] sm:$0xff]
        %v697 = vld [vmem:[%s691 + $0x28] sm:$0xff]
        %v698 = vld [vmem:[%s691 + $0x30] sm:$0xff]
        %v699 = vld [vmem:[%s691 + $0x38] sm:$0xff]
        %v700 = vld [vmem:[%s691 + $0x40] sm:$0xff]
        %v701 = vld [vmem:[%s691 + $0x48] sm:$0xff]
        %v702 = vld [vmem:[%s691 + $0x50] sm:$0xff]
        %v703 = vld [vmem:[%s691 + $0x58] sm:$0xff]
        %v704 = vld [vmem:[%s691 + $0x60] sm:$0xff]
        %v705 = vld [vmem:[%s691 + $0x68] sm:$0xff]
        %v706 = vld [vmem:[%s691 + $0x70] sm:$0xff]
        %v707 = vld [vmem:[%s691 + $0x78] sm:$0xff]
        %v708 = vld [vmem:[%s691 + $0x80] sm:$0xff]
        %v709 = vld [vmem:[%s691 + $0x88] sm:$0xff]
        %v710 = vld [vmem:[%s691 + $0x90] sm:$0xff]
        %v711 = vld [vmem:[%s691 + $0x98] sm:$0xff]
        %v712 = vld [vmem:[%s691 + $0xa0] sm:$0xff]
        %v713 = vld [vmem:[%s691 + $0xa8] sm:$0xff]
        %v714 = vld [vmem:[%s691 + $0xb0] sm:$0xff]
        %v715 = vld [vmem:[%s691 + $0xb8] sm:$0xff]
        %v716 = vld [vmem:[%s691 + $0xc0] sm:$0xff]
        %v717 = vld [vmem:[%s691 + $0xc8] sm:$0xff]
        %v718 = vld [vmem:[%s691 + $0xd0] sm:$0xff]
        %v719 = vld [vmem:[%s691 + $0xd8] sm:$0xff]
        %v720 = vld [vmem:[%s691 + $0xe0] sm:$0xff]
        %v721 = vld [vmem:[%s691 + $0xe8] sm:$0xff]
        %v722 = vld [vmem:[%s691 + $0xf0] sm:$0xff]
        %v723 = vld [vmem:[%s691 + $0xf8] sm:$0xff]
        %v724 = vld [vmem:[%s691 + $0x100] sm:$0xff]
        %v725 = vld [vmem:[%s691 + $0x108] sm:$0xff]
        %v726 = vld [vmem:[%s691 + $0x110] sm:$0xff]
        %v727 = vld [vmem:[%s691 + $0x118] sm:$0xff]
        %v728 = vld [vmem:[%s691 + $0x120] sm:$0xff]
        %v729 = vld [vmem:[%s691 + $0x128] sm:$0xff]
        %v730 = vld [vmem:[%s691 + $0x130] sm:$0xff]
        %v731 = vld [vmem:[%s691 + $0x138] sm:$0xff]
        %v732 = vld [vmem:[%s691 + $0x140] sm:$0xff]
        %v733 = vld [vmem:[%s691 + $0x148] sm:$0xff]
        %v734 = vld [vmem:[%s691 + $0x150] sm:$0xff]
        %v735 = vld [vmem:[%s691 + $0x158] sm:$0xff]
        %v736 = vld [vmem:[%s691 + $0x160] sm:$0xff]
        %v737 = vld [vmem:[%s691 + $0x168] sm:$0xff]
        %v738 = vld [vmem:[%s691 + $0x170] sm:$0xff]
        %v739 = vld [vmem:[%s691 + $0x178] sm:$0xff]
        %740 = vmatprep.subr.mxu0 0.0
        %741 = vmatpush1.msra.mxu0 %v692
        %742 = vmatprep.subr.mxu0 0.0
        %743 = vmatpush1.msra.mxu0 %v693
        %744 = vmatprep.subr.mxu0 0.0
        %745 = vmatpush1.msra.mxu0 %v694
        %746 = vmatprep.subr.mxu0 0.0
        %747 = vmatpush1.msra.mxu0 %v695
        %748 = vmatprep.subr.mxu0 0.0
        %749 = vmatpush1.msra.mxu0 %v696
        %750 = vmatprep.subr.mxu0 0.0
        %751 = vmatpush1.msra.mxu0 %v697
        %752 = vmatprep.subr.mxu0 0.0
        %753 = vmatpush1.msra.mxu0 %v698
        %754 = vmatprep.subr.mxu0 0.0
        %755 = vmatpush1.msra.mxu0 %v699
        %756 = vmatprep.subr.mxu0 0.0
        %757 = vmatpush1.msra.mxu0 %v700
        %758 = vmatprep.subr.mxu0 0.0
        %759 = vmatpush1.msra.mxu0 %v701
        %760 = vmatprep.subr.mxu0 0.0
        %761 = vmatpush1.msra.mxu0 %v702
        %762 = vmatprep.subr.mxu0 0.0
        %763 = vmatpush1.msra.mxu0 %v703
        %764 = vmatprep.subr.mxu0 0.0
        %765 = vmatpush1.msra.mxu0 %v704
        %766 = vmatprep.subr.mxu0 0.0
        %767 = vmatpush1.msra.mxu0 %v705
        %768 = vmatprep.subr.mxu0 0.0
        %769 = vmatpush1.msra.mxu0 %v706
        %770 = vmatprep.subr.mxu0 0.0
        %771 = vmatpush1.msra.mxu0 %v707
        %772 = vmatprep.subr.mxu0 0.0
        %773 = vmatpush1.msra.mxu0 %v708
        %774 = vmatprep.subr.mxu0 0.0
        %775 = vmatpush1.msra.mxu0 %v709
        %776 = vmatprep.subr.mxu0 0.0
        %777 = vmatpush1.msra.mxu0 %v710
        %778 = vmatprep.subr.mxu0 0.0
        %779 = vmatpush1.msra.mxu0 %v711
        %780 = vmatprep.subr.mxu0 0.0
        %781 = vmatpush1.msra.mxu0 %v712
        %782 = vmatprep.subr.mxu0 0.0
        %783 = vmatpush1.msra.mxu0 %v713
        %784 = vmatprep.subr.mxu0 0.0
        %785 = vmatpush1.msra.mxu0 %v714
        %786 = vmatprep.subr.mxu0 0.0
        %787 = vmatpush1.msra.mxu0 %v715
        %788 = vmatprep.subr.mxu0 0.0
        %789 = vmatpush1.msra.mxu0 %v716
        %790 = vmatprep.subr.mxu0 0.0
        %791 = vmatpush1.msra.mxu0 %v717
        %792 = vmatprep.subr.mxu0 0.0
        %793 = vmatpush1.msra.mxu0 %v718
        %794 = vmatprep.subr.mxu0 0.0
        %795 = vmatpush1.msra.mxu0 %v719
        %796 = vmatprep.subr.mxu0 0.0
        %797 = vmatpush1.msra.mxu0 %v720
        %798 = vmatprep.subr.mxu0 0.0
        %799 = vmatpush1.msra.mxu0 %v721
        %800 = vmatprep.subr.mxu0 0.0
        %801 = vmatpush1.msra.mxu0 %v722
        %802 = vmatprep.subr.mxu0 0.0
        %803 = vmatpush1.msra.mxu0 %v723
        %804 = vmatprep.mubr.f32.mxu0 %v659
        %805 = vmatmul.mubr.f32.gmra.mrb[0].mxu0 %v643
        %v806 = vpop.f32.mrb[0].mxu0
        %v807 = vadd.f32 0.0, %v806
        %v808 = vpop.f32.mrb[0].mxu0
        %809 = vmatprep.mubr.f32.mxu0 %v660
        %810 = vmatmul.mubr.f32.gmra.mrb[0].mxu0 %v644
        %v811 = vpop.f32.mrb[0].mxu0
        %v812 = vadd.f32 0.0, %v811
        %v813 = vpop.f32.mrb[0].mxu0
        %814 = vmatprep.mubr.f32.mxu0 %v661
        %815 = vmatmul.mubr.f32.gmra.mrb[0].mxu0 %v645
        %v816 = vpop.f32.mrb[0].mxu0
        %v817 = vadd.f32 0.0, %v816
        %v818 = vpop.f32.mrb[0].mxu0
        %819 = vmatprep.mubr.f32.mxu0 %v662
        %820 = vmatmul.mubr.f32.gmra.mrb[0].mxu0 %v646
        %v821 = vpop.f32.mrb[0].mxu0
        %v822 = vadd.f32 0.0, %v821
        %v823 = vpop.f32.mrb[0].mxu0
        %824 = vmatprep.mubr.f32.mxu0 %v663
        %825 = vmatmul.mubr.f32.gmra.mrb[0].mxu0 %v647
        %v826 = vpop.f32.mrb[0].mxu0
        %v827 = vadd.f32 0.0, %v826
        %v828 = vpop.f32.mrb[0].mxu0
        %829 = vmatprep.mubr.f32.mxu0 %v664
        %830 = vmatmul.mubr.f32.gmra.mrb[0].mxu0 %v648
        %v831 = vpop.f32.mrb[0].mxu0
        %v832 = vadd.f32 0.0, %v831
        %v833 = vpop.f32.mrb[0].mxu0
        %834 = vmatprep.mubr.f32.mxu0 %v665
        %835 = vmatmul.mubr.f32.gmra.mrb[0].mxu0 %v649
        %v836 = vpop.f32.mrb[0].mxu0
        %v837 = vadd.f32 0.0, %v836
        %v838 = vpop.f32.mrb[0].mxu0
        %839 = vmatprep.mubr.f32.mxu0 %v666
        %840 = vmatmul.mubr.f32.gmra.mrb[0].mxu0 %v650
        %v841 = vpop.f32.mrb[0].mxu0
        %v842 = vadd.f32 0.0, %v841
        %v843 = vpop.f32.mrb[0].mxu0
        %844 = vmatprep.mubr.f32.mxu0 %v667
        %845 = vmatmul.mubr.f32.gmra.mrb[0].mxu0 %v651
        %v846 = vpop.f32.mrb[0].mxu0
        %v847 = vadd.f32 0.0, %v846
        %v848 = vpop.f32.mrb[0].mxu0
        %849 = vmatprep.mubr.f32.mxu0 %v668
        %850 = vmatmul.mubr.f32.gmra.mrb[0].mxu0 %v652
        %v851 = vpop.f32.mrb[0].mxu0
        %v852 = vadd.f32 0.0, %v851
        %v853 = vpop.f32.mrb[0].mxu0
        %854 = vmatprep.mubr.f32.mxu0 %v669
        %855 = vmatmul.mubr.f32.gmra.mrb[0].mxu0 %v653
        %v856 = vpop.f32.mrb[0].mxu0
        %v857 = vadd.f32 0.0, %v856
        %v858 = vpop.f32.mrb[0].mxu0
        %859 = vmatprep.mubr.f32.mxu0 %v670
        %860 = vmatmul.mubr.f32.gmra.mrb[0].mxu0 %v654
        %v861 = vpop.f32.mrb[0].mxu0
        %v862 = vadd.f32 0.0, %v861
        %v863 = vpop.f32.mrb[0].mxu0
        %864 = vmatprep.mubr.f32.mxu0 %v671
        %865 = vmatmul.mubr.f32.gmra.mrb[0].mxu0 %v655
        %v866 = vpop.f32.mrb[0].mxu0
        %v867 = vadd.f32 0.0, %v866
        %v868 = vpop.f32.mrb[0].mxu0
        %869 = vmatprep.mubr.f32.mxu0 %v672
        %870 = vmatmul.mubr.f32.gmra.mrb[0].mxu0 %v656
        %v871 = vpop.f32.mrb[0].mxu0
        %v872 = vadd.f32 0.0, %v871
        %v873 = vpop.f32.mrb[0].mxu0
        %874 = vmatprep.mubr.f32.mxu0 %v673
        %875 = vmatmul.mubr.f32.gmra.mrb[0].mxu0 %v657
        %v876 = vpop.f32.mrb[0].mxu0
        %v877 = vadd.f32 0.0, %v876
        %v878 = vpop.f32.mrb[0].mxu0
        %879 = vmatprep.mubr.f32.mxu0 %v674
        %880 = vmatmul.mubr.f32.gmra.mrb[0].mxu0 %v658
        %v881 = vpop.f32.mrb[0].mxu0
        %v882 = vadd.f32 0.0, %v881
        %v883 = vpop.f32.mrb[0].mxu0
        %884 = vdwg.mxu0
        %885 = vmatprep.subr.mxu0 0.0
        %886 = vmatpush1.msra.mxu0 %v724
        %887 = vmatprep.subr.mxu0 0.0
        %888 = vmatpush1.msra.mxu0 %v725
        %889 = vmatprep.subr.mxu0 0.0
        %890 = vmatpush1.msra.mxu0 %v726
        %891 = vmatprep.subr.mxu0 0.0
        %892 = vmatpush1.msra.mxu0 %v727
        %893 = vmatprep.subr.mxu0 0.0
        %894 = vmatpush1.msra.mxu0 %v728
        %895 = vmatprep.subr.mxu0 0.0
        %896 = vmatpush1.msra.mxu0 %v729
        %897 = vmatprep.subr.mxu0 0.0
        %898 = vmatpush1.msra.mxu0 %v730
        %899 = vmatprep.subr.mxu0 0.0
        %900 = vmatpush1.msra.mxu0 %v731
        %901 = vmatprep.subr.mxu0 0.0
        %902 = vmatpush1.msra.mxu0 %v732
        %903 = vmatprep.subr.mxu0 0.0
        %904 = vmatpush1.msra.mxu0 %v733
        %905 = vmatprep.subr.mxu0 0.0
        %906 = vmatpush1.msra.mxu0 %v734
        %907 = vmatprep.subr.mxu0 0.0
        %908 = vmatpush1.msra.mxu0 %v735
        %909 = vmatprep.subr.mxu0 0.0
        %910 = vmatpush1.msra.mxu0 %v736
        %911 = vmatprep.subr.mxu0 0.0
        %912 = vmatpush1.msra.mxu0 %v737
        %913 = vmatprep.subr.mxu0 0.0
        %914 = vmatpush1.msra.mxu0 %v738
        %915 = vmatprep.subr.mxu0 0.0
        %916 = vmatpush1.msra.mxu0 %v739
        %917 = vmatprep.subr.mxu0 0.0
        %918 = vmatpush1.msra.mxu0 0.0
        %919 = vmatprep.subr.mxu0 0.0
        %920 = vmatpush1.msra.mxu0 0.0
        %921 = vmatprep.subr.mxu0 0.0
        %922 = vmatpush1.msra.mxu0 0.0
        %923 = vmatprep.subr.mxu0 0.0
        %924 = vmatpush1.msra.mxu0 0.0
        %925 = vmatprep.subr.mxu0 0.0
        %926 = vmatpush1.msra.mxu0 0.0
        %927 = vmatprep.subr.mxu0 0.0
        %928 = vmatpush1.msra.mxu0 0.0
        %929 = vmatprep.subr.mxu0 0.0
        %930 = vmatpush1.msra.mxu0 0.0
        %931 = vmatprep.subr.mxu0 0.0
        %932 = vmatpush1.msra.mxu0 0.0
        %933 = vmatprep.subr.mxu0 0.0
        %934 = vmatpush1.msra.mxu0 0.0
        %935 = vmatprep.subr.mxu0 0.0
        %936 = vmatpush1.msra.mxu0 0.0
        %937 = vmatprep.subr.mxu0 0.0
        %938 = vmatpush1.msra.mxu0 0.0
        %939 = vmatprep.subr.mxu0 0.0
        %940 = vmatpush1.msra.mxu0 0.0
        %941 = vmatprep.subr.mxu0 0.0
        %942 = vmatpush1.msra.mxu0 0.0
        %943 = vmatprep.subr.mxu0 0.0
        %944 = vmatpush1.msra.mxu0 0.0
        %945 = vmatprep.subr.mxu0 0.0
        %946 = vmatpush1.msra.mxu0 0.0
        %947 = vmatprep.subr.mxu0 0.0
        %948 = vmatpush1.msra.mxu0 0.0
        %949 = vmatprep.mubr.f32.mxu0 0.0
        %950 = vmatmul.mubr.f32.gmra.mrb[0].mxu0 %v675
        %v951 = vpop.f32.mrb[0].mxu0
        %v952 = vadd.f32 %v807, %v951
        %v953 = vpop.f32.mrb[0].mxu0
        %954 = vmatprep.mubr.f32.mxu0 0.0
        %955 = vmatmul.mubr.f32.gmra.mrb[0].mxu0 %v676
        %v956 = vpop.f32.mrb[0].mxu0
        %v957 = vadd.f32 %v812, %v956
        %v958 = vpop.f32.mrb[0].mxu0
        %959 = vmatprep.mubr.f32.mxu0 0.0
        %960 = vmatmul.mubr.f32.gmra.mrb[0].mxu0 %v677
        %v961 = vpop.f32.mrb[0].mxu0
        %v962 = vadd.f32 %v817, %v961
        %v963 = vpop.f32.mrb[0].mxu0
        %964 = vmatprep.mubr.f32.mxu0 0.0
        %965 = vmatmul.mubr.f32.gmra.mrb[0].mxu0 %v678
        %v966 = vpop.f32.mrb[0].mxu0
        %v967 = vadd.f32 %v822, %v966
        %v968 = vpop.f32.mrb[0].mxu0
        %969 = vmatprep.mubr.f32.mxu0 0.0
        %970 = vmatmul.mubr.f32.gmra.mrb[0].mxu0 %v679
        %v971 = vpop.f32.mrb[0].mxu0
        %v972 = vadd.f32 %v827, %v971
        %v973 = vpop.f32.mrb[0].mxu0
        %974 = vmatprep.mubr.f32.mxu0 0.0
        %975 = vmatmul.mubr.f32.gmra.mrb[0].mxu0 %v680
        %v976 = vpop.f32.mrb[0].mxu0
        %v977 = vadd.f32 %v832, %v976
        %v978 = vpop.f32.mrb[0].mxu0
        %979 = vmatprep.mubr.f32.mxu0 0.0
        %980 = vmatmul.mubr.f32.gmra.mrb[0].mxu0 %v681
        %v981 = vpop.f32.mrb[0].mxu0
        %v982 = vadd.f32 %v837, %v981
        %v983 = vpop.f32.mrb[0].mxu0
        %984 = vmatprep.mubr.f32.mxu0 0.0
        %985 = vmatmul.mubr.f32.gmra.mrb[0].mxu0 %v682
        %v986 = vpop.f32.mrb[0].mxu0
        %v987 = vadd.f32 %v842, %v986
        %v988 = vpop.f32.mrb[0].mxu0
        %989 = vmatprep.mubr.f32.mxu0 0.0
        %990 = vmatmul.mubr.f32.gmra.mrb[0].mxu0 %v683
        %v991 = vpop.f32.mrb[0].mxu0
        %v992 = vadd.f32 %v847, %v991
        %v993 = vpop.f32.mrb[0].mxu0
        %994 = vmatprep.mubr.f32.mxu0 0.0
        %995 = vmatmul.mubr.f32.gmra.mrb[0].mxu0 %v684
        %v996 = vpop.f32.mrb[0].mxu0
        %v997 = vadd.f32 %v852, %v996
        %v998 = vpop.f32.mrb[0].mxu0
        %999 = vmatprep.mubr.f32.mxu0 0.0
        %1000 = vmatmul.mubr.f32.gmra.mrb[0].mxu0 %v685
        %v1001 = vpop.f32.mrb[0].mxu0
        %v1002 = vadd.f32 %v857, %v1001
        %v1003 = vpop.f32.mrb[0].mxu0
        %1004 = vmatprep.mubr.f32.mxu0 0.0
        %1005 = vmatmul.mubr.f32.gmra.mrb[0].mxu0 %v686
        %v1006 = vpop.f32.mrb[0].mxu0
        %v1007 = vadd.f32 %v862, %v1006
        %v1008 = vpop.f32.mrb[0].mxu0
        %1009 = vmatprep.mubr.f32.mxu0 0.0
        %1010 = vmatmul.mubr.f32.gmra.mrb[0].mxu0 %v687
        %v1011 = vpop.f32.mrb[0].mxu0
        %v1012 = vadd.f32 %v867, %v1011
        %v1013 = vpop.f32.mrb[0].mxu0
        %1014 = vmatprep.mubr.f32.mxu0 0.0
        %1015 = vmatmul.mubr.f32.gmra.mrb[0].mxu0 %v688
        %v1016 = vpop.f32.mrb[0].mxu0
        %v1017 = vadd.f32 %v872, %v1016
        %v1018 = vpop.f32.mrb[0].mxu0
        %1019 = vmatprep.mubr.f32.mxu0 0.0
        %1020 = vmatmul.mubr.f32.gmra.mrb[0].mxu0 %v689
        %v1021 = vpop.f32.mrb[0].mxu0
        %v1022 = vadd.f32 %v877, %v1021
        %v1023 = vpop.f32.mrb[0].mxu0
        %1024 = vmatprep.mubr.f32.mxu0 0.0
        %1025 = vmatmul.mubr.f32.gmra.mrb[0].mxu0 %v690
        %v1026 = vpop.f32.mrb[0].mxu0
        %v1027 = vadd.f32 %v882, %v1026
        %v1028 = vpop.f32.mrb[0].mxu0
        %1029 = vdwg.mxu0
        %v1030 = vadd.f32 %v626, %v952
        %v1031 = vadd.f32 %v627, %v957
        %v1032 = vadd.f32 %v628, %v962
        %v1033 = vadd.f32 %v629, %v967
        %v1034 = vadd.f32 %v630, %v972
        %v1035 = vadd.f32 %v631, %v977
        %v1036 = vadd.f32 %v632, %v982
        %v1037 = vadd.f32 %v633, %v987
        %v1038 = vadd.f32 %v634, %v992
        %v1039 = vadd.f32 %v635, %v997
        %v1040 = vadd.f32 %v636, %v1002
        %v1041 = vadd.f32 %v637, %v1007
        %v1042 = vadd.f32 %v638, %v1012
        %v1043 = vadd.f32 %v639, %v1017
        %v1044 = vadd.f32 %v640, %v1022
        %v1045 = vadd.f32 %v641, %v1027
        %s1046 = scalar_lea.vmem %s200, 120 [#allocation2]
        %v1047 = vld [vmem:[%s1046 + $0x3] sm:$0xff]
        %v1048 = vld [vmem:[%s1046 + $0xb] sm:$0xff]
        %v1049 = vld [vmem:[%s1046 + $0x1b] sm:$0xff]
        %v1050 = vld [vmem:[%s1046 + $0x23] sm:$0xff]
        %v1051 = vld [vmem:[%s1046 + $0x33] sm:$0xff]
        %v1052 = vld [vmem:[%s1046 + $0x3b] sm:$0xff]
        %v1053 = vld [vmem:[%s1046 + $0x4b] sm:$0xff]
        %v1054 = vld [vmem:[%s1046 + $0x53] sm:$0xff]
        %v1055 = vld [vmem:[%s1046 + $0x63] sm:$0xff]
        %v1056 = vld [vmem:[%s1046 + $0x6b] sm:$0xff]
        %v1057 = vld [vmem:[%s1046 + $0x7b] sm:$0xff]
        %v1058 = vld [vmem:[%s1046 + $0x83] sm:$0xff]
        %v1059 = vld [vmem:[%s1046 + $0x93] sm:$0xff]
        %v1060 = vld [vmem:[%s1046 + $0x9b] sm:$0xff]
        %v1061 = vld [vmem:[%s1046 + $0xab] sm:$0xff]
        %v1062 = vld [vmem:[%s1046 + $0xb3] sm:$0xff]
        %v1063 = vld [vmem:[%s1046 + $0x4] sm:$0xff]
        %v1064 = vld [vmem:[%s1046 + $0xc] sm:$0xff]
        %v1065 = vld [vmem:[%s1046 + $0x1c] sm:$0xff]
        %v1066 = vld [vmem:[%s1046 + $0x24] sm:$0xff]
        %v1067 = vld [vmem:[%s1046 + $0x34] sm:$0xff]
        %v1068 = vld [vmem:[%s1046 + $0x3c] sm:$0xff]
        %v1069 = vld [vmem:[%s1046 + $0x4c] sm:$0xff]
        %v1070 = vld [vmem:[%s1046 + $0x54] sm:$0xff]
        %v1071 = vld [vmem:[%s1046 + $0x64] sm:$0xff]
        %v1072 = vld [vmem:[%s1046 + $0x6c] sm:$0xff]
        %v1073 = vld [vmem:[%s1046 + $0x7c] sm:$0xff]
        %v1074 = vld [vmem:[%s1046 + $0x84] sm:$0xff]
        %v1075 = vld [vmem:[%s1046 + $0x94] sm:$0xff]
        %v1076 = vld [vmem:[%s1046 + $0x9c] sm:$0xff]
        %v1077 = vld [vmem:[%s1046 + $0xac] sm:$0xff]
        %v1078 = vld [vmem:[%s1046 + $0xb4] sm:$0xff]
        %v1079 = vld [vmem:[%s1046 + $0x5] sm:$0xff]
        %v1080 = vld [vmem:[%s1046 + $0xd] sm:$0xff]
        %v1081 = vld [vmem:[%s1046 + $0x1d] sm:$0xff]
        %v1082 = vld [vmem:[%s1046 + $0x25] sm:$0xff]
        %v1083 = vld [vmem:[%s1046 + $0x35] sm:$0xff]
        %v1084 = vld [vmem:[%s1046 + $0x3d] sm:$0xff]
        %v1085 = vld [vmem:[%s1046 + $0x4d] sm:$0xff]
        %v1086 = vld [vmem:[%s1046 + $0x55] sm:$0xff]
        %v1087 = vld [vmem:[%s1046 + $0x65] sm:$0xff]
        %v1088 = vld [vmem:[%s1046 + $0x6d] sm:$0xff]
        %v1089 = vld [vmem:[%s1046 + $0x7d] sm:$0xff]
        %v1090 = vld [vmem:[%s1046 + $0x85] sm:$0xff]
        %v1091 = vld [vmem:[%s1046 + $0x95] sm:$0xff]
        %v1092 = vld [vmem:[%s1046 + $0x9d] sm:$0xff]
        %v1093 = vld [vmem:[%s1046 + $0xad] sm:$0xff]
        %v1094 = vld [vmem:[%s1046 + $0xb5] sm:$0xff]
        %s1095 = scalar_lea.vmem [#allocation4], 768
        %v1096 = vld [vmem:[%s1095] sm:$0xff]
        %v1097 = vld [vmem:[%s1095 + $0x8] sm:$0xff]
        %v1098 = vld [vmem:[%s1095 + $0x10] sm:$0xff]
        %v1099 = vld [vmem:[%s1095 + $0x18] sm:$0xff]
        %v1100 = vld [vmem:[%s1095 + $0x20] sm:$0xff]
        %v1101 = vld [vmem:[%s1095 + $0x28] sm:$0xff]
        %v1102 = vld [vmem:[%s1095 + $0x30] sm:$0xff]
        %v1103 = vld [vmem:[%s1095 + $0x38] sm:$0xff]
        %v1104 = vld [vmem:[%s1095 + $0x40] sm:$0xff]
        %v1105 = vld [vmem:[%s1095 + $0x48] sm:$0xff]
        %v1106 = vld [vmem:[%s1095 + $0x50] sm:$0xff]
        %v1107 = vld [vmem:[%s1095 + $0x58] sm:$0xff]
        %v1108 = vld [vmem:[%s1095 + $0x60] sm:$0xff]
        %v1109 = vld [vmem:[%s1095 + $0x68] sm:$0xff]
        %v1110 = vld [vmem:[%s1095 + $0x70] sm:$0xff]
        %v1111 = vld [vmem:[%s1095 + $0x78] sm:$0xff]
        %v1112 = vld [vmem:[%s1095 + $0x80] sm:$0xff]
        %v1113 = vld [vmem:[%s1095 + $0x88] sm:$0xff]
        %v1114 = vld [vmem:[%s1095 + $0x90] sm:$0xff]
        %v1115 = vld [vmem:[%s1095 + $0x98] sm:$0xff]
        %v1116 = vld [vmem:[%s1095 + $0xa0] sm:$0xff]
        %v1117 = vld [vmem:[%s1095 + $0xa8] sm:$0xff]
        %v1118 = vld [vmem:[%s1095 + $0xb0] sm:$0xff]
        %v1119 = vld [vmem:[%s1095 + $0xb8] sm:$0xff]
        %v1120 = vld [vmem:[%s1095 + $0xc0] sm:$0xff]
        %v1121 = vld [vmem:[%s1095 + $0xc8] sm:$0xff]
        %v1122 = vld [vmem:[%s1095 + $0xd0] sm:$0xff]
        %v1123 = vld [vmem:[%s1095 + $0xd8] sm:$0xff]
        %v1124 = vld [vmem:[%s1095 + $0xe0] sm:$0xff]
        %v1125 = vld [vmem:[%s1095 + $0xe8] sm:$0xff]
        %v1126 = vld [vmem:[%s1095 + $0xf0] sm:$0xff]
        %v1127 = vld [vmem:[%s1095 + $0xf8] sm:$0xff]
        %v1128 = vld [vmem:[%s1095 + $0x100] sm:$0xff]
        %v1129 = vld [vmem:[%s1095 + $0x108] sm:$0xff]
        %v1130 = vld [vmem:[%s1095 + $0x110] sm:$0xff]
        %v1131 = vld [vmem:[%s1095 + $0x118] sm:$0xff]
        %v1132 = vld [vmem:[%s1095 + $0x120] sm:$0xff]
        %v1133 = vld [vmem:[%s1095 + $0x128] sm:$0xff]
        %v1134 = vld [vmem:[%s1095 + $0x130] sm:$0xff]
        %v1135 = vld [vmem:[%s1095 + $0x138] sm:$0xff]
        %v1136 = vld [vmem:[%s1095 + $0x140] sm:$0xff]
        %v1137 = vld [vmem:[%s1095 + $0x148] sm:$0xff]
        %v1138 = vld [vmem:[%s1095 + $0x150] sm:$0xff]
        %v1139 = vld [vmem:[%s1095 + $0x158] sm:$0xff]
        %v1140 = vld [vmem:[%s1095 + $0x160] sm:$0xff]
        %v1141 = vld [vmem:[%s1095 + $0x168] sm:$0xff]
        %v1142 = vld [vmem:[%s1095 + $0x170] sm:$0xff]
        %v1143 = vld [vmem:[%s1095 + $0x178] sm:$0xff]
        %1144 = vmatprep.subr.mxu0 0.0
        %1145 = vmatpush1.msra.mxu0 %v1096
        %1146 = vmatprep.subr.mxu0 0.0
        %1147 = vmatpush1.msra.mxu0 %v1097
        %1148 = vmatprep.subr.mxu0 0.0
        %1149 = vmatpush1.msra.mxu0 %v1098
        %1150 = vmatprep.subr.mxu0 0.0
        %1151 = vmatpush1.msra.mxu0 %v1099
        %1152 = vmatprep.subr.mxu0 0.0
        %1153 = vmatpush1.msra.mxu0 %v1100
        %1154 = vmatprep.subr.mxu0 0.0
        %1155 = vmatpush1.msra.mxu0 %v1101
        %1156 = vmatprep.subr.mxu0 0.0
        %1157 = vmatpush1.msra.mxu0 %v1102
        %1158 = vmatprep.subr.mxu0 0.0
        %1159 = vmatpush1.msra.mxu0 %v1103
        %1160 = vmatprep.subr.mxu0 0.0
        %1161 = vmatpush1.msra.mxu0 %v1104
        %1162 = vmatprep.subr.mxu0 0.0
        %1163 = vmatpush1.msra.mxu0 %v1105
        %1164 = vmatprep.subr.mxu0 0.0
        %1165 = vmatpush1.msra.mxu0 %v1106
        %1166 = vmatprep.subr.mxu0 0.0
        %1167 = vmatpush1.msra.mxu0 %v1107
        %1168 = vmatprep.subr.mxu0 0.0
        %1169 = vmatpush1.msra.mxu0 %v1108
        %1170 = vmatprep.subr.mxu0 0.0
        %1171 = vmatpush1.msra.mxu0 %v1109
        %1172 = vmatprep.subr.mxu0 0.0
        %1173 = vmatpush1.msra.mxu0 %v1110
        %1174 = vmatprep.subr.mxu0 0.0
        %1175 = vmatpush1.msra.mxu0 %v1111
        %1176 = vmatprep.subr.mxu0 0.0
        %1177 = vmatpush1.msra.mxu0 %v1112
        %1178 = vmatprep.subr.mxu0 0.0
        %1179 = vmatpush1.msra.mxu0 %v1113
        %1180 = vmatprep.subr.mxu0 0.0
        %1181 = vmatpush1.msra.mxu0 %v1114
        %1182 = vmatprep.subr.mxu0 0.0
        %1183 = vmatpush1.msra.mxu0 %v1115
        %1184 = vmatprep.subr.mxu0 0.0
        %1185 = vmatpush1.msra.mxu0 %v1116
        %1186 = vmatprep.subr.mxu0 0.0
        %1187 = vmatpush1.msra.mxu0 %v1117
        %1188 = vmatprep.subr.mxu0 0.0
        %1189 = vmatpush1.msra.mxu0 %v1118
        %1190 = vmatprep.subr.mxu0 0.0
        %1191 = vmatpush1.msra.mxu0 %v1119
        %1192 = vmatprep.subr.mxu0 0.0
        %1193 = vmatpush1.msra.mxu0 %v1120
        %1194 = vmatprep.subr.mxu0 0.0
        %1195 = vmatpush1.msra.mxu0 %v1121
        %1196 = vmatprep.subr.mxu0 0.0
        %1197 = vmatpush1.msra.mxu0 %v1122
        %1198 = vmatprep.subr.mxu0 0.0
        %1199 = vmatpush1.msra.mxu0 %v1123
        %1200 = vmatprep.subr.mxu0 0.0
        %1201 = vmatpush1.msra.mxu0 %v1124
        %1202 = vmatprep.subr.mxu0 0.0
        %1203 = vmatpush1.msra.mxu0 %v1125
        %1204 = vmatprep.subr.mxu0 0.0
        %1205 = vmatpush1.msra.mxu0 %v1126
        %1206 = vmatprep.subr.mxu0 0.0
        %1207 = vmatpush1.msra.mxu0 %v1127
        %1208 = vmatprep.mubr.f32.mxu0 %v1063
        %1209 = vmatmul.mubr.f32.gmra.mrb[0].mxu0 %v1047
        %v1210 = vpop.f32.mrb[0].mxu0
        %v1211 = vadd.f32 0.0, %v1210
        %v1212 = vpop.f32.mrb[0].mxu0
        %1213 = vmatprep.mubr.f32.mxu0 %v1064
        %1214 = vmatmul.mubr.f32.gmra.mrb[0].mxu0 %v1048
        %v1215 = vpop.f32.mrb[0].mxu0
        %v1216 = vadd.f32 0.0, %v1215
        %v1217 = vpop.f32.mrb[0].mxu0
        %1218 = vmatprep.mubr.f32.mxu0 %v1065
        %1219 = vmatmul.mubr.f32.gmra.mrb[0].mxu0 %v1049
        %v1220 = vpop.f32.mrb[0].mxu0
        %v1221 = vadd.f32 0.0, %v1220
        %v1222 = vpop.f32.mrb[0].mxu0
        %1223 = vmatprep.mubr.f32.mxu0 %v1066
        %1224 = vmatmul.mubr.f32.gmra.mrb[0].mxu0 %v1050
        %v1225 = vpop.f32.mrb[0].mxu0
        %v1226 = vadd.f32 0.0, %v1225
        %v1227 = vpop.f32.mrb[0].mxu0
        %1228 = vmatprep.mubr.f32.mxu0 %v1067
        %1229 = vmatmul.mubr.f32.gmra.mrb[0].mxu0 %v1051
        %v1230 = vpop.f32.mrb[0].mxu0
        %v1231 = vadd.f32 0.0, %v1230
        %v1232 = vpop.f32.mrb[0].mxu0
        %1233 = vmatprep.mubr.f32.mxu0 %v1068
        %1234 = vmatmul.mubr.f32.gmra.mrb[0].mxu0 %v1052
        %v1235 = vpop.f32.mrb[0].mxu0
        %v1236 = vadd.f32 0.0, %v1235
        %v1237 = vpop.f32.mrb[0].mxu0
        %1238 = vmatprep.mubr.f32.mxu0 %v1069
        %1239 = vmatmul.mubr.f32.gmra.mrb[0].mxu0 %v1053
        %v1240 = vpop.f32.mrb[0].mxu0
        %v1241 = vadd.f32 0.0, %v1240
        %v1242 = vpop.f32.mrb[0].mxu0
        %1243 = vmatprep.mubr.f32.mxu0 %v1070
        %1244 = vmatmul.mubr.f32.gmra.mrb[0].mxu0 %v1054
        %v1245 = vpop.f32.mrb[0].mxu0
        %v1246 = vadd.f32 0.0, %v1245
        %v1247 = vpop.f32.mrb[0].mxu0
        %1248 = vmatprep.mubr.f32.mxu0 %v1071
        %1249 = vmatmul.mubr.f32.gmra.mrb[0].mxu0 %v1055
        %v1250 = vpop.f32.mrb[0].mxu0
        %v1251 = vadd.f32 0.0, %v1250
        %v1252 = vpop.f32.mrb[0].mxu0
        %1253 = vmatprep.mubr.f32.mxu0 %v1072
        %1254 = vmatmul.mubr.f32.gmra.mrb[0].mxu0 %v1056
        %v1255 = vpop.f32.mrb[0].mxu0
        %v1256 = vadd.f32 0.0, %v1255
        %v1257 = vpop.f32.mrb[0].mxu0
        %1258 = vmatprep.mubr.f32.mxu0 %v1073
        %1259 = vmatmul.mubr.f32.gmra.mrb[0].mxu0 %v1057
        %v1260 = vpop.f32.mrb[0].mxu0
        %v1261 = vadd.f32 0.0, %v1260
        %v1262 = vpop.f32.mrb[0].mxu0
        %1263 = vmatprep.mubr.f32.mxu0 %v1074
        %1264 = vmatmul.mubr.f32.gmra.mrb[0].mxu0 %v1058
        %v1265 = vpop.f32.mrb[0].mxu0
        %v1266 = vadd.f32 0.0, %v1265
        %v1267 = vpop.f32.mrb[0].mxu0
        %1268 = vmatprep.mubr.f32.mxu0 %v1075
        %1269 = vmatmul.mubr.f32.gmra.mrb[0].mxu0 %v1059
        %v1270 = vpop.f32.mrb[0].mxu0
        %v1271 = vadd.f32 0.0, %v1270
        %v1272 = vpop.f32.mrb[0].mxu0
        %1273 = vmatprep.mubr.f32.mxu0 %v1076
        %1274 = vmatmul.mubr.f32.gmra.mrb[0].mxu0 %v1060
        %v1275 = vpop.f32.mrb[0].mxu0
        %v1276 = vadd.f32 0.0, %v1275
        %v1277 = vpop.f32.mrb[0].mxu0
        %1278 = vmatprep.mubr.f32.mxu0 %v1077
        %1279 = vmatmul.mubr.f32.gmra.mrb[0].mxu0 %v1061
        %v1280 = vpop.f32.mrb[0].mxu0
        %v1281 = vadd.f32 0.0, %v1280
        %v1282 = vpop.f32.mrb[0].mxu0
        %1283 = vmatprep.mubr.f32.mxu0 %v1078
        %1284 = vmatmul.mubr.f32.gmra.mrb[0].mxu0 %v1062
        %v1285 = vpop.f32.mrb[0].mxu0
        %v1286 = vadd.f32 0.0, %v1285
        %v1287 = vpop.f32.mrb[0].mxu0
        %1288 = vdwg.mxu0
        %1289 = vmatprep.subr.mxu0 0.0
        %1290 = vmatpush1.msra.mxu0 %v1128
        %1291 = vmatprep.subr.mxu0 0.0
        %1292 = vmatpush1.msra.mxu0 %v1129
        %1293 = vmatprep.subr.mxu0 0.0
        %1294 = vmatpush1.msra.mxu0 %v1130
        %1295 = vmatprep.subr.mxu0 0.0
        %1296 = vmatpush1.msra.mxu0 %v1131
        %1297 = vmatprep.subr.mxu0 0.0
        %1298 = vmatpush1.msra.mxu0 %v1132
        %1299 = vmatprep.subr.mxu0 0.0
        %1300 = vmatpush1.msra.mxu0 %v1133
        %1301 = vmatprep.subr.mxu0 0.0
        %1302 = vmatpush1.msra.mxu0 %v1134
        %1303 = vmatprep.subr.mxu0 0.0
        %1304 = vmatpush1.msra.mxu0 %v1135
        %1305 = vmatprep.subr.mxu0 0.0
        %1306 = vmatpush1.msra.mxu0 %v1136
        %1307 = vmatprep.subr.mxu0 0.0
        %1308 = vmatpush1.msra.mxu0 %v1137
        %1309 = vmatprep.subr.mxu0 0.0
        %1310 = vmatpush1.msra.mxu0 %v1138
        %1311 = vmatprep.subr.mxu0 0.0
        %1312 = vmatpush1.msra.mxu0 %v1139
        %1313 = vmatprep.subr.mxu0 0.0
        %1314 = vmatpush1.msra.mxu0 %v1140
        %1315 = vmatprep.subr.mxu0 0.0
        %1316 = vmatpush1.msra.mxu0 %v1141
        %1317 = vmatprep.subr.mxu0 0.0
        %1318 = vmatpush1.msra.mxu0 %v1142
        %1319 = vmatprep.subr.mxu0 0.0
        %1320 = vmatpush1.msra.mxu0 %v1143
        %1321 = vmatprep.subr.mxu0 0.0
        %1322 = vmatpush1.msra.mxu0 0.0
        %1323 = vmatprep.subr.mxu0 0.0
        %1324 = vmatpush1.msra.mxu0 0.0
        %1325 = vmatprep.subr.mxu0 0.0
        %1326 = vmatpush1.msra.mxu0 0.0
        %1327 = vmatprep.subr.mxu0 0.0
        %1328 = vmatpush1.msra.mxu0 0.0
        %1329 = vmatprep.subr.mxu0 0.0
        %1330 = vmatpush1.msra.mxu0 0.0
        %1331 = vmatprep.subr.mxu0 0.0
        %1332 = vmatpush1.msra.mxu0 0.0
        %1333 = vmatprep.subr.mxu0 0.0
        %1334 = vmatpush1.msra.mxu0 0.0
        %1335 = vmatprep.subr.mxu0 0.0
        %1336 = vmatpush1.msra.mxu0 0.0
        %1337 = vmatprep.subr.mxu0 0.0
        %1338 = vmatpush1.msra.mxu0 0.0
        %1339 = vmatprep.subr.mxu0 0.0
        %1340 = vmatpush1.msra.mxu0 0.0
        %1341 = vmatprep.subr.mxu0 0.0
        %1342 = vmatpush1.msra.mxu0 0.0
        %1343 = vmatprep.subr.mxu0 0.0
        %1344 = vmatpush1.msra.mxu0 0.0
        %1345 = vmatprep.subr.mxu0 0.0
        %1346 = vmatpush1.msra.mxu0 0.0
        %1347 = vmatprep.subr.mxu0 0.0
        %1348 = vmatpush1.msra.mxu0 0.0
        %1349 = vmatprep.subr.mxu0 0.0
        %1350 = vmatpush1.msra.mxu0 0.0
        %1351 = vmatprep.subr.mxu0 0.0
        %1352 = vmatpush1.msra.mxu0 0.0
        %1353 = vmatprep.mubr.f32.mxu0 0.0
        %1354 = vmatmul.mubr.f32.gmra.mrb[0].mxu0 %v1079
        %v1355 = vpop.f32.mrb[0].mxu0
        %v1356 = vadd.f32 %v1211, %v1355
        %v1357 = vpop.f32.mrb[0].mxu0
        %1358 = vmatprep.mubr.f32.mxu0 0.0
        %1359 = vmatmul.mubr.f32.gmra.mrb[0].mxu0 %v1080
        %v1360 = vpop.f32.mrb[0].mxu0
        %v1361 = vadd.f32 %v1216, %v1360
        %v1362 = vpop.f32.mrb[0].mxu0
        %1363 = vmatprep.mubr.f32.mxu0 0.0
        %1364 = vmatmul.mubr.f32.gmra.mrb[0].mxu0 %v1081
        %v1365 = vpop.f32.mrb[0].mxu0
        %v1366 = vadd.f32 %v1221, %v1365
        %v1367 = vpop.f32.mrb[0].mxu0
        %1368 = vmatprep.mubr.f32.mxu0 0.0
        %1369 = vmatmul.mubr.f32.gmra.mrb[0].mxu0 %v1082
        %v1370 = vpop.f32.mrb[0].mxu0
        %v1371 = vadd.f32 %v1226, %v1370
        %v1372 = vpop.f32.mrb[0].mxu0
        %1373 = vmatprep.mubr.f32.mxu0 0.0
        %1374 = vmatmul.mubr.f32.gmra.mrb[0].mxu0 %v1083
        %v1375 = vpop.f32.mrb[0].mxu0
        %v1376 = vadd.f32 %v1231, %v1375
        %v1377 = vpop.f32.mrb[0].mxu0
        %1378 = vmatprep.mubr.f32.mxu0 0.0
        %1379 = vmatmul.mubr.f32.gmra.mrb[0].mxu0 %v1084
        %v1380 = vpop.f32.mrb[0].mxu0
        %v1381 = vadd.f32 %v1236, %v1380
        %v1382 = vpop.f32.mrb[0].mxu0
        %1383 = vmatprep.mubr.f32.mxu0 0.0
        %1384 = vmatmul.mubr.f32.gmra.mrb[0].mxu0 %v1085
        %v1385 = vpop.f32.mrb[0].mxu0
        %v1386 = vadd.f32 %v1241, %v1385
        %v1387 = vpop.f32.mrb[0].mxu0
        %1388 = vmatprep.mubr.f32.mxu0 0.0
        %1389 = vmatmul.mubr.f32.gmra.mrb[0].mxu0 %v1086
        %v1390 = vpop.f32.mrb[0].mxu0
        %v1391 = vadd.f32 %v1246, %v1390
        %v1392 = vpop.f32.mrb[0].mxu0
        %1393 = vmatprep.mubr.f32.mxu0 0.0
        %1394 = vmatmul.mubr.f32.gmra.mrb[0].mxu0 %v1087
        %v1395 = vpop.f32.mrb[0].mxu0
        %v1396 = vadd.f32 %v1251, %v1395
        %v1397 = vpop.f32.mrb[0].mxu0
        %1398 = vmatprep.mubr.f32.mxu0 0.0
        %1399 = vmatmul.mubr.f32.gmra.mrb[0].mxu0 %v1088
        %v1400 = vpop.f32.mrb[0].mxu0
        %v1401 = vadd.f32 %v1256, %v1400
        %v1402 = vpop.f32.mrb[0].mxu0
        %1403 = vmatprep.mubr.f32.mxu0 0.0
        %1404 = vmatmul.mubr.f32.gmra.mrb[0].mxu0 %v1089
        %v1405 = vpop.f32.mrb[0].mxu0
        %v1406 = vadd.f32 %v1261, %v1405
        %v1407 = vpop.f32.mrb[0].mxu0
        %1408 = vmatprep.mubr.f32.mxu0 0.0
        %1409 = vmatmul.mubr.f32.gmra.mrb[0].mxu0 %v1090
        %v1410 = vpop.f32.mrb[0].mxu0
        %v1411 = vadd.f32 %v1266, %v1410
        %v1412 = vpop.f32.mrb[0].mxu0
        %1413 = vmatprep.mubr.f32.mxu0 0.0
        %1414 = vmatmul.mubr.f32.gmra.mrb[0].mxu0 %v1091
        %v1415 = vpop.f32.mrb[0].mxu0
        %v1416 = vadd.f32 %v1271, %v1415
        %v1417 = vpop.f32.mrb[0].mxu0
        %1418 = vmatprep.mubr.f32.mxu0 0.0
        %1419 = vmatmul.mubr.f32.gmra.mrb[0].mxu0 %v1092
        %v1420 = vpop.f32.mrb[0].mxu0
        %v1421 = vadd.f32 %v1276, %v1420
        %v1422 = vpop.f32.mrb[0].mxu0
        %1423 = vmatprep.mubr.f32.mxu0 0.0
        %1424 = vmatmul.mubr.f32.gmra.mrb[0].mxu0 %v1093
        %v1425 = vpop.f32.mrb[0].mxu0
        %v1426 = vadd.f32 %v1281, %v1425
        %v1427 = vpop.f32.mrb[0].mxu0
        %1428 = vmatprep.mubr.f32.mxu0 0.0
        %1429 = vmatmul.mubr.f32.gmra.mrb[0].mxu0 %v1094
        %v1430 = vpop.f32.mrb[0].mxu0
        %v1431 = vadd.f32 %v1286, %v1430
        %v1432 = vpop.f32.mrb[0].mxu0
        %1433 = vdwg.mxu0
        %v1434 = vadd.f32 %v1030, %v1356
        %v1435 = vadd.f32 %v1031, %v1361
        %v1436 = vadd.f32 %v1032, %v1366
        %v1437 = vadd.f32 %v1033, %v1371
        %v1438 = vadd.f32 %v1034, %v1376
        %v1439 = vadd.f32 %v1035, %v1381
        %v1440 = vadd.f32 %v1036, %v1386
        %v1441 = vadd.f32 %v1037, %v1391
        %v1442 = vadd.f32 %v1038, %v1396
        %v1443 = vadd.f32 %v1039, %v1401
        %v1444 = vadd.f32 %v1040, %v1406
        %v1445 = vadd.f32 %v1041, %v1411
        %v1446 = vadd.f32 %v1042, %v1416
        %v1447 = vadd.f32 %v1043, %v1421
        %v1448 = vadd.f32 %v1044, %v1426
        %v1449 = vadd.f32 %v1045, %v1431
        %s1450 = scalar_lea.vmem %s200, 48 [#allocation2]
        %v1451 = vld [vmem:[%s1450 + $0x2] sm:$0xff]
        %v1452 = vld [vmem:[%s1450 + $0xa] sm:$0xff]
        %v1453 = vld [vmem:[%s1450 + $0x1a] sm:$0xff]
        %v1454 = vld [vmem:[%s1450 + $0x22] sm:$0xff]
        %v1455 = vld [vmem:[%s1450 + $0x32] sm:$0xff]
        %v1456 = vld [vmem:[%s1450 + $0x3a] sm:$0xff]
        %v1457 = vld [vmem:[%s1450 + $0x4a] sm:$0xff]
        %v1458 = vld [vmem:[%s1450 + $0x52] sm:$0xff]
        %v1459 = vld [vmem:[%s1450 + $0x62] sm:$0xff]
        %v1460 = vld [vmem:[%s1450 + $0x6a] sm:$0xff]
        %v1461 = vld [vmem:[%s1450 + $0x7a] sm:$0xff]
        %v1462 = vld [vmem:[%s1450 + $0x82] sm:$0xff]
        %v1463 = vld [vmem:[%s1450 + $0x92] sm:$0xff]
        %v1464 = vld [vmem:[%s1450 + $0x9a] sm:$0xff]
        %v1465 = vld [vmem:[%s1450 + $0xaa] sm:$0xff]
        %v1466 = vld [vmem:[%s1450 + $0xb2] sm:$0xff]
        %v1467 = vld [vmem:[%s1450 + $0x4] sm:$0xff]
        %v1468 = vld [vmem:[%s1450 + $0xc] sm:$0xff]
        %v1469 = vld [vmem:[%s1450 + $0x1c] sm:$0xff]
        %v1470 = vld [vmem:[%s1450 + $0x24] sm:$0xff]
        %v1471 = vld [vmem:[%s1450 + $0x34] sm:$0xff]
        %v1472 = vld [vmem:[%s1450 + $0x3c] sm:$0xff]
        %v1473 = vld [vmem:[%s1450 + $0x4c] sm:$0xff]
        %v1474 = vld [vmem:[%s1450 + $0x54] sm:$0xff]
        %v1475 = vld [vmem:[%s1450 + $0x64] sm:$0xff]
        %v1476 = vld [vmem:[%s1450 + $0x6c] sm:$0xff]
        %v1477 = vld [vmem:[%s1450 + $0x7c] sm:$0xff]
        %v1478 = vld [vmem:[%s1450 + $0x84] sm:$0xff]
        %v1479 = vld [vmem:[%s1450 + $0x94] sm:$0xff]
        %v1480 = vld [vmem:[%s1450 + $0x9c] sm:$0xff]
        %v1481 = vld [vmem:[%s1450 + $0xac] sm:$0xff]
        %v1482 = vld [vmem:[%s1450 + $0xb4] sm:$0xff]
        %v1483 = vld [vmem:[%s1450 + $0x6] sm:$0xff]
        %v1484 = vld [vmem:[%s1450 + $0xe] sm:$0xff]
        %v1485 = vld [vmem:[%s1450 + $0x1e] sm:$0xff]
        %v1486 = vld [vmem:[%s1450 + $0x26] sm:$0xff]
        %v1487 = vld [vmem:[%s1450 + $0x36] sm:$0xff]
        %v1488 = vld [vmem:[%s1450 + $0x3e] sm:$0xff]
        %v1489 = vld [vmem:[%s1450 + $0x4e] sm:$0xff]
        %v1490 = vld [vmem:[%s1450 + $0x56] sm:$0xff]
        %v1491 = vld [vmem:[%s1450 + $0x66] sm:$0xff]
        %v1492 = vld [vmem:[%s1450 + $0x6e] sm:$0xff]
        %v1493 = vld [vmem:[%s1450 + $0x7e] sm:$0xff]
        %v1494 = vld [vmem:[%s1450 + $0x86] sm:$0xff]
        %v1495 = vld [vmem:[%s1450 + $0x96] sm:$0xff]
        %v1496 = vld [vmem:[%s1450 + $0x9e] sm:$0xff]
        %v1497 = vld [vmem:[%s1450 + $0xae] sm:$0xff]
        %v1498 = vld [vmem:[%s1450 + $0xb6] sm:$0xff]
        %s1499 = scalar_lea.vmem [#allocation4], 1152
        %v1500 = vld [vmem:[%s1499] sm:$0xff]
        %v1501 = vld [vmem:[%s1499 + $0x8] sm:$0xff]
        %v1502 = vld [vmem:[%s1499 + $0x10] sm:$0xff]
        %v1503 = vld [vmem:[%s1499 + $0x18] sm:$0xff]
        %v1504 = vld [vmem:[%s1499 + $0x20] sm:$0xff]
        %v1505 = vld [vmem:[%s1499 + $0x28] sm:$0xff]
        %v1506 = vld [vmem:[%s1499 + $0x30] sm:$0xff]
        %v1507 = vld [vmem:[%s1499 + $0x38] sm:$0xff]
        %v1508 = vld [vmem:[%s1499 + $0x40] sm:$0xff]
        %v1509 = vld [vmem:[%s1499 + $0x48] sm:$0xff]
        %v1510 = vld [vmem:[%s1499 + $0x50] sm:$0xff]
        %v1511 = vld [vmem:[%s1499 + $0x58] sm:$0xff]
        %v1512 = vld [vmem:[%s1499 + $0x60] sm:$0xff]
        %v1513 = vld [vmem:[%s1499 + $0x68] sm:$0xff]
        %v1514 = vld [vmem:[%s1499 + $0x70] sm:$0xff]
        %v1515 = vld [vmem:[%s1499 + $0x78] sm:$0xff]
        %v1516 = vld [vmem:[%s1499 + $0x80] sm:$0xff]
        %v1517 = vld [vmem:[%s1499 + $0x88] sm:$0xff]
        %v1518 = vld [vmem:[%s1499 + $0x90] sm:$0xff]
        %v1519 = vld [vmem:[%s1499 + $0x98] sm:$0xff]
        %v1520 = vld [vmem:[%s1499 + $0xa0] sm:$0xff]
        %v1521 = vld [vmem:[%s1499 + $0xa8] sm:$0xff]
        %v1522 = vld [vmem:[%s1499 + $0xb0] sm:$0xff]
        %v1523 = vld [vmem:[%s1499 + $0xb8] sm:$0xff]
        %v1524 = vld [vmem:[%s1499 + $0xc0] sm:$0xff]
        %v1525 = vld [vmem:[%s1499 + $0xc8] sm:$0xff]
        %v1526 = vld [vmem:[%s1499 + $0xd0] sm:$0xff]
        %v1527 = vld [vmem:[%s1499 + $0xd8] sm:$0xff]
        %v1528 = vld [vmem:[%s1499 + $0xe0] sm:$0xff]
        %v1529 = vld [vmem:[%s1499 + $0xe8] sm:$0xff]
        %v1530 = vld [vmem:[%s1499 + $0xf0] sm:$0xff]
        %v1531 = vld [vmem:[%s1499 + $0xf8] sm:$0xff]
        %v1532 = vld [vmem:[%s1499 + $0x100] sm:$0xff]
        %v1533 = vld [vmem:[%s1499 + $0x108] sm:$0xff]
        %v1534 = vld [vmem:[%s1499 + $0x110] sm:$0xff]
        %v1535 = vld [vmem:[%s1499 + $0x118] sm:$0xff]
        %v1536 = vld [vmem:[%s1499 + $0x120] sm:$0xff]
        %v1537 = vld [vmem:[%s1499 + $0x128] sm:$0xff]
        %v1538 = vld [vmem:[%s1499 + $0x130] sm:$0xff]
        %v1539 = vld [vmem:[%s1499 + $0x138] sm:$0xff]
        %v1540 = vld [vmem:[%s1499 + $0x140] sm:$0xff]
        %v1541 = vld [vmem:[%s1499 + $0x148] sm:$0xff]
        %v1542 = vld [vmem:[%s1499 + $0x150] sm:$0xff]
        %v1543 = vld [vmem:[%s1499 + $0x158] sm:$0xff]
        %v1544 = vld [vmem:[%s1499 + $0x160] sm:$0xff]
        %v1545 = vld [vmem:[%s1499 + $0x168] sm:$0xff]
        %v1546 = vld [vmem:[%s1499 + $0x170] sm:$0xff]
        %v1547 = vld [vmem:[%s1499 + $0x178] sm:$0xff]
        %1548 = vmatprep.subr.mxu0 0.0
        %1549 = vmatpush1.msra.mxu0 %v1500
        %1550 = vmatprep.subr.mxu0 0.0
        %1551 = vmatpush1.msra.mxu0 %v1501
        %1552 = vmatprep.subr.mxu0 0.0
        %1553 = vmatpush1.msra.mxu0 %v1502
        %1554 = vmatprep.subr.mxu0 0.0
        %1555 = vmatpush1.msra.mxu0 %v1503
        %1556 = vmatprep.subr.mxu0 0.0
        %1557 = vmatpush1.msra.mxu0 %v1504
        %1558 = vmatprep.subr.mxu0 0.0
        %1559 = vmatpush1.msra.mxu0 %v1505
        %1560 = vmatprep.subr.mxu0 0.0
        %1561 = vmatpush1.msra.mxu0 %v1506
        %1562 = vmatprep.subr.mxu0 0.0
        %1563 = vmatpush1.msra.mxu0 %v1507
        %1564 = vmatprep.subr.mxu0 0.0
        %1565 = vmatpush1.msra.mxu0 %v1508
        %1566 = vmatprep.subr.mxu0 0.0
        %1567 = vmatpush1.msra.mxu0 %v1509
        %1568 = vmatprep.subr.mxu0 0.0
        %1569 = vmatpush1.msra.mxu0 %v1510
        %1570 = vmatprep.subr.mxu0 0.0
        %1571 = vmatpush1.msra.mxu0 %v1511
        %1572 = vmatprep.subr.mxu0 0.0
        %1573 = vmatpush1.msra.mxu0 %v1512
        %1574 = vmatprep.subr.mxu0 0.0
        %1575 = vmatpush1.msra.mxu0 %v1513
        %1576 = vmatprep.subr.mxu0 0.0
        %1577 = vmatpush1.msra.mxu0 %v1514
        %1578 = vmatprep.subr.mxu0 0.0
        %1579 = vmatpush1.msra.mxu0 %v1515
        %1580 = vmatprep.subr.mxu0 0.0
        %1581 = vmatpush1.msra.mxu0 %v1516
        %1582 = vmatprep.subr.mxu0 0.0
        %1583 = vmatpush1.msra.mxu0 %v1517
        %1584 = vmatprep.subr.mxu0 0.0
        %1585 = vmatpush1.msra.mxu0 %v1518
        %1586 = vmatprep.subr.mxu0 0.0
        %1587 = vmatpush1.msra.mxu0 %v1519
        %1588 = vmatprep.subr.mxu0 0.0
        %1589 = vmatpush1.msra.mxu0 %v1520
        %1590 = vmatprep.subr.mxu0 0.0
        %1591 = vmatpush1.msra.mxu0 %v1521
        %1592 = vmatprep.subr.mxu0 0.0
        %1593 = vmatpush1.msra.mxu0 %v1522
        %1594 = vmatprep.subr.mxu0 0.0
        %1595 = vmatpush1.msra.mxu0 %v1523
        %1596 = vmatprep.subr.mxu0 0.0
        %1597 = vmatpush1.msra.mxu0 %v1524
        %1598 = vmatprep.subr.mxu0 0.0
        %1599 = vmatpush1.msra.mxu0 %v1525
        %1600 = vmatprep.subr.mxu0 0.0
        %1601 = vmatpush1.msra.mxu0 %v1526
        %1602 = vmatprep.subr.mxu0 0.0
        %1603 = vmatpush1.msra.mxu0 %v1527
        %1604 = vmatprep.subr.mxu0 0.0
        %1605 = vmatpush1.msra.mxu0 %v1528
        %1606 = vmatprep.subr.mxu0 0.0
        %1607 = vmatpush1.msra.mxu0 %v1529
        %1608 = vmatprep.subr.mxu0 0.0
        %1609 = vmatpush1.msra.mxu0 %v1530
        %1610 = vmatprep.subr.mxu0 0.0
        %1611 = vmatpush1.msra.mxu0 %v1531
        %1612 = vmatprep.mubr.f32.mxu0 %v1467
        %1613 = vmatmul.mubr.f32.gmra.mrb[0].mxu0 %v1451
        %v1614 = vpop.f32.mrb[0].mxu0
        %v1615 = vadd.f32 0.0, %v1614
        %v1616 = vpop.f32.mrb[0].mxu0
        %1617 = vmatprep.mubr.f32.mxu0 %v1468
        %1618 = vmatmul.mubr.f32.gmra.mrb[0].mxu0 %v1452
        %v1619 = vpop.f32.mrb[0].mxu0
        %v1620 = vadd.f32 0.0, %v1619
        %v1621 = vpop.f32.mrb[0].mxu0
        %1622 = vmatprep.mubr.f32.mxu0 %v1469
        %1623 = vmatmul.mubr.f32.gmra.mrb[0].mxu0 %v1453
        %v1624 = vpop.f32.mrb[0].mxu0
        %v1625 = vadd.f32 0.0, %v1624
        %v1626 = vpop.f32.mrb[0].mxu0
        %1627 = vmatprep.mubr.f32.mxu0 %v1470
        %1628 = vmatmul.mubr.f32.gmra.mrb[0].mxu0 %v1454
        %v1629 = vpop.f32.mrb[0].mxu0
        %v1630 = vadd.f32 0.0, %v1629
        %v1631 = vpop.f32.mrb[0].mxu0
        %1632 = vmatprep.mubr.f32.mxu0 %v1471
        %1633 = vmatmul.mubr.f32.gmra.mrb[0].mxu0 %v1455
        %v1634 = vpop.f32.mrb[0].mxu0
        %v1635 = vadd.f32 0.0, %v1634
        %v1636 = vpop.f32.mrb[0].mxu0
        %1637 = vmatprep.mubr.f32.mxu0 %v1472
        %1638 = vmatmul.mubr.f32.gmra.mrb[0].mxu0 %v1456
        %v1639 = vpop.f32.mrb[0].mxu0
        %v1640 = vadd.f32 0.0, %v1639
        %v1641 = vpop.f32.mrb[0].mxu0
        %1642 = vmatprep.mubr.f32.mxu0 %v1473
        %1643 = vmatmul.mubr.f32.gmra.mrb[0].mxu0 %v1457
        %v1644 = vpop.f32.mrb[0].mxu0
        %v1645 = vadd.f32 0.0, %v1644
        %v1646 = vpop.f32.mrb[0].mxu0
        %1647 = vmatprep.mubr.f32.mxu0 %v1474
        %1648 = vmatmul.mubr.f32.gmra.mrb[0].mxu0 %v1458
        %v1649 = vpop.f32.mrb[0].mxu0
        %v1650 = vadd.f32 0.0, %v1649
        %v1651 = vpop.f32.mrb[0].mxu0
        %1652 = vmatprep.mubr.f32.mxu0 %v1475
        %1653 = vmatmul.mubr.f32.gmra.mrb[0].mxu0 %v1459
        %v1654 = vpop.f32.mrb[0].mxu0
        %v1655 = vadd.f32 0.0, %v1654
        %v1656 = vpop.f32.mrb[0].mxu0
        %1657 = vmatprep.mubr.f32.mxu0 %v1476
        %1658 = vmatmul.mubr.f32.gmra.mrb[0].mxu0 %v1460
        %v1659 = vpop.f32.mrb[0].mxu0
        %v1660 = vadd.f32 0.0, %v1659
        %v1661 = vpop.f32.mrb[0].mxu0
        %1662 = vmatprep.mubr.f32.mxu0 %v1477
        %1663 = vmatmul.mubr.f32.gmra.mrb[0].mxu0 %v1461
        %v1664 = vpop.f32.mrb[0].mxu0
        %v1665 = vadd.f32 0.0, %v1664
        %v1666 = vpop.f32.mrb[0].mxu0
        %1667 = vmatprep.mubr.f32.mxu0 %v1478
        %1668 = vmatmul.mubr.f32.gmra.mrb[0].mxu0 %v1462
        %v1669 = vpop.f32.mrb[0].mxu0
        %v1670 = vadd.f32 0.0, %v1669
        %v1671 = vpop.f32.mrb[0].mxu0
        %1672 = vmatprep.mubr.f32.mxu0 %v1479
        %1673 = vmatmul.mubr.f32.gmra.mrb[0].mxu0 %v1463
        %v1674 = vpop.f32.mrb[0].mxu0
        %v1675 = vadd.f32 0.0, %v1674
        %v1676 = vpop.f32.mrb[0].mxu0
        %1677 = vmatprep.mubr.f32.mxu0 %v1480
        %1678 = vmatmul.mubr.f32.gmra.mrb[0].mxu0 %v1464
        %v1679 = vpop.f32.mrb[0].mxu0
        %v1680 = vadd.f32 0.0, %v1679
        %v1681 = vpop.f32.mrb[0].mxu0
        %1682 = vmatprep.mubr.f32.mxu0 %v1481
        %1683 = vmatmul.mubr.f32.gmra.mrb[0].mxu0 %v1465
        %v1684 = vpop.f32.mrb[0].mxu0
        %v1685 = vadd.f32 0.0, %v1684
        %v1686 = vpop.f32.mrb[0].mxu0
        %1687 = vmatprep.mubr.f32.mxu0 %v1482
        %1688 = vmatmul.mubr.f32.gmra.mrb[0].mxu0 %v1466
        %v1689 = vpop.f32.mrb[0].mxu0
        %v1690 = vadd.f32 0.0, %v1689
        %v1691 = vpop.f32.mrb[0].mxu0
        %1692 = vdwg.mxu0
        %1693 = vmatprep.subr.mxu0 0.0
        %1694 = vmatpush1.msra.mxu0 %v1532
        %1695 = vmatprep.subr.mxu0 0.0
        %1696 = vmatpush1.msra.mxu0 %v1533
        %1697 = vmatprep.subr.mxu0 0.0
        %1698 = vmatpush1.msra.mxu0 %v1534
        %1699 = vmatprep.subr.mxu0 0.0
        %1700 = vmatpush1.msra.mxu0 %v1535
        %1701 = vmatprep.subr.mxu0 0.0
        %1702 = vmatpush1.msra.mxu0 %v1536
        %1703 = vmatprep.subr.mxu0 0.0
        %1704 = vmatpush1.msra.mxu0 %v1537
        %1705 = vmatprep.subr.mxu0 0.0
        %1706 = vmatpush1.msra.mxu0 %v1538
        %1707 = vmatprep.subr.mxu0 0.0
        %1708 = vmatpush1.msra.mxu0 %v1539
        %1709 = vmatprep.subr.mxu0 0.0
        %1710 = vmatpush1.msra.mxu0 %v1540
        %1711 = vmatprep.subr.mxu0 0.0
        %1712 = vmatpush1.msra.mxu0 %v1541
        %1713 = vmatprep.subr.mxu0 0.0
        %1714 = vmatpush1.msra.mxu0 %v1542
        %1715 = vmatprep.subr.mxu0 0.0
        %1716 = vmatpush1.msra.mxu0 %v1543
        %1717 = vmatprep.subr.mxu0 0.0
        %1718 = vmatpush1.msra.mxu0 %v1544
        %1719 = vmatprep.subr.mxu0 0.0
        %1720 = vmatpush1.msra.mxu0 %v1545
        %1721 = vmatprep.subr.mxu0 0.0
        %1722 = vmatpush1.msra.mxu0 %v1546
        %1723 = vmatprep.subr.mxu0 0.0
        %1724 = vmatpush1.msra.mxu0 %v1547
        %1725 = vmatprep.subr.mxu0 0.0
        %1726 = vmatpush1.msra.mxu0 0.0
        %1727 = vmatprep.subr.mxu0 0.0
        %1728 = vmatpush1.msra.mxu0 0.0
        %1729 = vmatprep.subr.mxu0 0.0
        %1730 = vmatpush1.msra.mxu0 0.0
        %1731 = vmatprep.subr.mxu0 0.0
        %1732 = vmatpush1.msra.mxu0 0.0
        %1733 = vmatprep.subr.mxu0 0.0
        %1734 = vmatpush1.msra.mxu0 0.0
        %1735 = vmatprep.subr.mxu0 0.0
        %1736 = vmatpush1.msra.mxu0 0.0
        %1737 = vmatprep.subr.mxu0 0.0
        %1738 = vmatpush1.msra.mxu0 0.0
        %1739 = vmatprep.subr.mxu0 0.0
        %1740 = vmatpush1.msra.mxu0 0.0
        %1741 = vmatprep.subr.mxu0 0.0
        %1742 = vmatpush1.msra.mxu0 0.0
        %1743 = vmatprep.subr.mxu0 0.0
        %1744 = vmatpush1.msra.mxu0 0.0
        %1745 = vmatprep.subr.mxu0 0.0
        %1746 = vmatpush1.msra.mxu0 0.0
        %1747 = vmatprep.subr.mxu0 0.0
        %1748 = vmatpush1.msra.mxu0 0.0
        %1749 = vmatprep.subr.mxu0 0.0
        %1750 = vmatpush1.msra.mxu0 0.0
        %1751 = vmatprep.subr.mxu0 0.0
        %1752 = vmatpush1.msra.mxu0 0.0
        %1753 = vmatprep.subr.mxu0 0.0
        %1754 = vmatpush1.msra.mxu0 0.0
        %1755 = vmatprep.subr.mxu0 0.0
        %1756 = vmatpush1.msra.mxu0 0.0
        %1757 = vmatprep.mubr.f32.mxu0 0.0
        %1758 = vmatmul.mubr.f32.gmra.mrb[0].mxu0 %v1483
        %v1759 = vpop.f32.mrb[0].mxu0
        %v1760 = vadd.f32 %v1615, %v1759
        %v1761 = vpop.f32.mrb[0].mxu0
        %1762 = vmatprep.mubr.f32.mxu0 0.0
        %1763 = vmatmul.mubr.f32.gmra.mrb[0].mxu0 %v1484
        %v1764 = vpop.f32.mrb[0].mxu0
        %v1765 = vadd.f32 %v1620, %v1764
        %v1766 = vpop.f32.mrb[0].mxu0
        %1767 = vmatprep.mubr.f32.mxu0 0.0
        %1768 = vmatmul.mubr.f32.gmra.mrb[0].mxu0 %v1485
        %v1769 = vpop.f32.mrb[0].mxu0
        %v1770 = vadd.f32 %v1625, %v1769
        %v1771 = vpop.f32.mrb[0].mxu0
        %1772 = vmatprep.mubr.f32.mxu0 0.0
        %1773 = vmatmul.mubr.f32.gmra.mrb[0].mxu0 %v1486
        %v1774 = vpop.f32.mrb[0].mxu0
        %v1775 = vadd.f32 %v1630, %v1774
        %v1776 = vpop.f32.mrb[0].mxu0
        %1777 = vmatprep.mubr.f32.mxu0 0.0
        %1778 = vmatmul.mubr.f32.gmra.mrb[0].mxu0 %v1487
        %v1779 = vpop.f32.mrb[0].mxu0
        %v1780 = vadd.f32 %v1635, %v1779
        %v1781 = vpop.f32.mrb[0].mxu0
        %1782 = vmatprep.mubr.f32.mxu0 0.0
        %1783 = vmatmul.mubr.f32.gmra.mrb[0].mxu0 %v1488
        %v1784 = vpop.f32.mrb[0].mxu0
        %v1785 = vadd.f32 %v1640, %v1784
        %v1786 = vpop.f32.mrb[0].mxu0
        %1787 = vmatprep.mubr.f32.mxu0 0.0
        %1788 = vmatmul.mubr.f32.gmra.mrb[0].mxu0 %v1489
        %v1789 = vpop.f32.mrb[0].mxu0
        %v1790 = vadd.f32 %v1645, %v1789
        %v1791 = vpop.f32.mrb[0].mxu0
        %1792 = vmatprep.mubr.f32.mxu0 0.0
        %1793 = vmatmul.mubr.f32.gmra.mrb[0].mxu0 %v1490
        %v1794 = vpop.f32.mrb[0].mxu0
        %v1795 = vadd.f32 %v1650, %v1794
        %v1796 = vpop.f32.mrb[0].mxu0
        %1797 = vmatprep.mubr.f32.mxu0 0.0
        %1798 = vmatmul.mubr.f32.gmra.mrb[0].mxu0 %v1491
        %v1799 = vpop.f32.mrb[0].mxu0
        %v1800 = vadd.f32 %v1655, %v1799
        %v1801 = vpop.f32.mrb[0].mxu0
        %1802 = vmatprep.mubr.f32.mxu0 0.0
        %1803 = vmatmul.mubr.f32.gmra.mrb[0].mxu0 %v1492
        %v1804 = vpop.f32.mrb[0].mxu0
        %v1805 = vadd.f32 %v1660, %v1804
        %v1806 = vpop.f32.mrb[0].mxu0
        %1807 = vmatprep.mubr.f32.mxu0 0.0
        %1808 = vmatmul.mubr.f32.gmra.mrb[0].mxu0 %v1493
        %v1809 = vpop.f32.mrb[0].mxu0
        %v1810 = vadd.f32 %v1665, %v1809
        %v1811 = vpop.f32.mrb[0].mxu0
        %1812 = vmatprep.mubr.f32.mxu0 0.0
        %1813 = vmatmul.mubr.f32.gmra.mrb[0].mxu0 %v1494
        %v1814 = vpop.f32.mrb[0].mxu0
        %v1815 = vadd.f32 %v1670, %v1814
        %v1816 = vpop.f32.mrb[0].mxu0
        %1817 = vmatprep.mubr.f32.mxu0 0.0
        %1818 = vmatmul.mubr.f32.gmra.mrb[0].mxu0 %v1495
        %v1819 = vpop.f32.mrb[0].mxu0
        %v1820 = vadd.f32 %v1675, %v1819
        %v1821 = vpop.f32.mrb[0].mxu0
        %1822 = vmatprep.mubr.f32.mxu0 0.0
        %1823 = vmatmul.mubr.f32.gmra.mrb[0].mxu0 %v1496
        %v1824 = vpop.f32.mrb[0].mxu0
        %v1825 = vadd.f32 %v1680, %v1824
        %v1826 = vpop.f32.mrb[0].mxu0
        %1827 = vmatprep.mubr.f32.mxu0 0.0
        %1828 = vmatmul.mubr.f32.gmra.mrb[0].mxu0 %v1497
        %v1829 = vpop.f32.mrb[0].mxu0
        %v1830 = vadd.f32 %v1685, %v1829
        %v1831 = vpop.f32.mrb[0].mxu0
        %1832 = vmatprep.mubr.f32.mxu0 0.0
        %1833 = vmatmul.mubr.f32.gmra.mrb[0].mxu0 %v1498
        %v1834 = vpop.f32.mrb[0].mxu0
        %v1835 = vadd.f32 %v1690, %v1834
        %v1836 = vpop.f32.mrb[0].mxu0
        %1837 = vdwg.mxu0
        %v1838 = vadd.f32 %v1434, %v1760
        %v1839 = vadd.f32 %v1435, %v1765
        %v1840 = vadd.f32 %v1436, %v1770
        %v1841 = vadd.f32 %v1437, %v1775
        %v1842 = vadd.f32 %v1438, %v1780
        %v1843 = vadd.f32 %v1439, %v1785
        %v1844 = vadd.f32 %v1440, %v1790
        %v1845 = vadd.f32 %v1441, %v1795
        %v1846 = vadd.f32 %v1442, %v1800
        %v1847 = vadd.f32 %v1443, %v1805
        %v1848 = vadd.f32 %v1444, %v1810
        %v1849 = vadd.f32 %v1445, %v1815
        %v1850 = vadd.f32 %v1446, %v1820
        %v1851 = vadd.f32 %v1447, %v1825
        %v1852 = vadd.f32 %v1448, %v1830
        %v1853 = vadd.f32 %v1449, %v1835
        %v1854 = vld [vmem:[%s642 + $0x2] sm:$0xff]
        %v1855 = vld [vmem:[%s642 + $0xa] sm:$0xff]
        %v1856 = vld [vmem:[%s642 + $0x1a] sm:$0xff]
        %v1857 = vld [vmem:[%s642 + $0x22] sm:$0xff]
        %v1858 = vld [vmem:[%s642 + $0x32] sm:$0xff]
        %v1859 = vld [vmem:[%s642 + $0x3a] sm:$0xff]
        %v1860 = vld [vmem:[%s642 + $0x4a] sm:$0xff]
        %v1861 = vld [vmem:[%s642 + $0x52] sm:$0xff]
        %v1862 = vld [vmem:[%s642 + $0x62] sm:$0xff]
        %v1863 = vld [vmem:[%s642 + $0x6a] sm:$0xff]
        %v1864 = vld [vmem:[%s642 + $0x7a] sm:$0xff]
        %v1865 = vld [vmem:[%s642 + $0x82] sm:$0xff]
        %v1866 = vld [vmem:[%s642 + $0x92] sm:$0xff]
        %v1867 = vld [vmem:[%s642 + $0x9a] sm:$0xff]
        %v1868 = vld [vmem:[%s642 + $0xaa] sm:$0xff]
        %v1869 = vld [vmem:[%s642 + $0xb2] sm:$0xff]
        %v1870 = vld [vmem:[%s642 + $0x6] sm:$0xff]
        %v1871 = vld [vmem:[%s642 + $0xe] sm:$0xff]
        %v1872 = vld [vmem:[%s642 + $0x1e] sm:$0xff]
        %v1873 = vld [vmem:[%s642 + $0x26] sm:$0xff]
        %v1874 = vld [vmem:[%s642 + $0x36] sm:$0xff]
        %v1875 = vld [vmem:[%s642 + $0x3e] sm:$0xff]
        %v1876 = vld [vmem:[%s642 + $0x4e] sm:$0xff]
        %v1877 = vld [vmem:[%s642 + $0x56] sm:$0xff]
        %v1878 = vld [vmem:[%s642 + $0x66] sm:$0xff]
        %v1879 = vld [vmem:[%s642 + $0x6e] sm:$0xff]
        %v1880 = vld [vmem:[%s642 + $0x7e] sm:$0xff]
        %v1881 = vld [vmem:[%s642 + $0x86] sm:$0xff]
        %v1882 = vld [vmem:[%s642 + $0x96] sm:$0xff]
        %v1883 = vld [vmem:[%s642 + $0x9e] sm:$0xff]
        %v1884 = vld [vmem:[%s642 + $0xae] sm:$0xff]
        %v1885 = vld [vmem:[%s642 + $0xb6] sm:$0xff]
        %s1886 = scalar_lea.vmem [#allocation4], 1536
        %v1887 = vld [vmem:[%s1886] sm:$0xff]
        %v1888 = vld [vmem:[%s1886 + $0x8] sm:$0xff]
        %v1889 = vld [vmem:[%s1886 + $0x10] sm:$0xff]
        %v1890 = vld [vmem:[%s1886 + $0x18] sm:$0xff]
        %v1891 = vld [vmem:[%s1886 + $0x20] sm:$0xff]
        %v1892 = vld [vmem:[%s1886 + $0x28] sm:$0xff]
        %v1893 = vld [vmem:[%s1886 + $0x30] sm:$0xff]
        %v1894 = vld [vmem:[%s1886 + $0x38] sm:$0xff]
        %v1895 = vld [vmem:[%s1886 + $0x40] sm:$0xff]
        %v1896 = vld [vmem:[%s1886 + $0x48] sm:$0xff]
        %v1897 = vld [vmem:[%s1886 + $0x50] sm:$0xff]
        %v1898 = vld [vmem:[%s1886 + $0x58] sm:$0xff]
        %v1899 = vld [vmem:[%s1886 + $0x60] sm:$0xff]
        %v1900 = vld [vmem:[%s1886 + $0x68] sm:$0xff]
        %v1901 = vld [vmem:[%s1886 + $0x70] sm:$0xff]
        %v1902 = vld [vmem:[%s1886 + $0x78] sm:$0xff]
        %v1903 = vld [vmem:[%s1886 + $0x80] sm:$0xff]
        %v1904 = vld [vmem:[%s1886 + $0x88] sm:$0xff]
        %v1905 = vld [vmem:[%s1886 + $0x90] sm:$0xff]
        %v1906 = vld [vmem:[%s1886 + $0x98] sm:$0xff]
        %v1907 = vld [vmem:[%s1886 + $0xa0] sm:$0xff]
        %v1908 = vld [vmem:[%s1886 + $0xa8] sm:$0xff]
        %v1909 = vld [vmem:[%s1886 + $0xb0] sm:$0xff]
        %v1910 = vld [vmem:[%s1886 + $0xb8] sm:$0xff]
        %v1911 = vld [vmem:[%s1886 + $0xc0] sm:$0xff]
        %v1912 = vld [vmem:[%s1886 + $0xc8] sm:$0xff]
        %v1913 = vld [vmem:[%s1886 + $0xd0] sm:$0xff]
        %v1914 = vld [vmem:[%s1886 + $0xd8] sm:$0xff]
        %v1915 = vld [vmem:[%s1886 + $0xe0] sm:$0xff]
        %v1916 = vld [vmem:[%s1886 + $0xe8] sm:$0xff]
        %v1917 = vld [vmem:[%s1886 + $0xf0] sm:$0xff]
        %v1918 = vld [vmem:[%s1886 + $0xf8] sm:$0xff]
        %v1919 = vld [vmem:[%s1886 + $0x100] sm:$0xff]
        %v1920 = vld [vmem:[%s1886 + $0x108] sm:$0xff]
        %v1921 = vld [vmem:[%s1886 + $0x110] sm:$0xff]
        %v1922 = vld [vmem:[%s1886 + $0x118] sm:$0xff]
        %v1923 = vld [vmem:[%s1886 + $0x120] sm:$0xff]
        %v1924 = vld [vmem:[%s1886 + $0x128] sm:$0xff]
        %v1925 = vld [vmem:[%s1886 + $0x130] sm:$0xff]
        %v1926 = vld [vmem:[%s1886 + $0x138] sm:$0xff]
        %v1927 = vld [vmem:[%s1886 + $0x140] sm:$0xff]
        %v1928 = vld [vmem:[%s1886 + $0x148] sm:$0xff]
        %v1929 = vld [vmem:[%s1886 + $0x150] sm:$0xff]
        %v1930 = vld [vmem:[%s1886 + $0x158] sm:$0xff]
        %v1931 = vld [vmem:[%s1886 + $0x160] sm:$0xff]
        %v1932 = vld [vmem:[%s1886 + $0x168] sm:$0xff]
        %v1933 = vld [vmem:[%s1886 + $0x170] sm:$0xff]
        %v1934 = vld [vmem:[%s1886 + $0x178] sm:$0xff]
        %1935 = vmatprep.subr.mxu0 0.0
        %1936 = vmatpush1.msra.mxu0 %v1887
        %1937 = vmatprep.subr.mxu0 0.0
        %1938 = vmatpush1.msra.mxu0 %v1888
        %1939 = vmatprep.subr.mxu0 0.0
        %1940 = vmatpush1.msra.mxu0 %v1889
        %1941 = vmatprep.subr.mxu0 0.0
        %1942 = vmatpush1.msra.mxu0 %v1890
        %1943 = vmatprep.subr.mxu0 0.0
        %1944 = vmatpush1.msra.mxu0 %v1891
        %1945 = vmatprep.subr.mxu0 0.0
        %1946 = vmatpush1.msra.mxu0 %v1892
        %1947 = vmatprep.subr.mxu0 0.0
        %1948 = vmatpush1.msra.mxu0 %v1893
        %1949 = vmatprep.subr.mxu0 0.0
        %1950 = vmatpush1.msra.mxu0 %v1894
        %1951 = vmatprep.subr.mxu0 0.0
        %1952 = vmatpush1.msra.mxu0 %v1895
        %1953 = vmatprep.subr.mxu0 0.0
        %1954 = vmatpush1.msra.mxu0 %v1896
        %1955 = vmatprep.subr.mxu0 0.0
        %1956 = vmatpush1.msra.mxu0 %v1897
        %1957 = vmatprep.subr.mxu0 0.0
        %1958 = vmatpush1.msra.mxu0 %v1898
        %1959 = vmatprep.subr.mxu0 0.0
        %1960 = vmatpush1.msra.mxu0 %v1899
        %1961 = vmatprep.subr.mxu0 0.0
        %1962 = vmatpush1.msra.mxu0 %v1900
        %1963 = vmatprep.subr.mxu0 0.0
        %1964 = vmatpush1.msra.mxu0 %v1901
        %1965 = vmatprep.subr.mxu0 0.0
        %1966 = vmatpush1.msra.mxu0 %v1902
        %1967 = vmatprep.subr.mxu0 0.0
        %1968 = vmatpush1.msra.mxu0 %v1903
        %1969 = vmatprep.subr.mxu0 0.0
        %1970 = vmatpush1.msra.mxu0 %v1904
        %1971 = vmatprep.subr.mxu0 0.0
        %1972 = vmatpush1.msra.mxu0 %v1905
        %1973 = vmatprep.subr.mxu0 0.0
        %1974 = vmatpush1.msra.mxu0 %v1906
        %1975 = vmatprep.subr.mxu0 0.0
        %1976 = vmatpush1.msra.mxu0 %v1907
        %1977 = vmatprep.subr.mxu0 0.0
        %1978 = vmatpush1.msra.mxu0 %v1908
        %1979 = vmatprep.subr.mxu0 0.0
        %1980 = vmatpush1.msra.mxu0 %v1909
        %1981 = vmatprep.subr.mxu0 0.0
        %1982 = vmatpush1.msra.mxu0 %v1910
        %1983 = vmatprep.subr.mxu0 0.0
        %1984 = vmatpush1.msra.mxu0 %v1911
        %1985 = vmatprep.subr.mxu0 0.0
        %1986 = vmatpush1.msra.mxu0 %v1912
        %1987 = vmatprep.subr.mxu0 0.0
        %1988 = vmatpush1.msra.mxu0 %v1913
        %1989 = vmatprep.subr.mxu0 0.0
        %1990 = vmatpush1.msra.mxu0 %v1914
        %1991 = vmatprep.subr.mxu0 0.0
        %1992 = vmatpush1.msra.mxu0 %v1915
        %1993 = vmatprep.subr.mxu0 0.0
        %1994 = vmatpush1.msra.mxu0 %v1916
        %1995 = vmatprep.subr.mxu0 0.0
        %1996 = vmatpush1.msra.mxu0 %v1917
        %1997 = vmatprep.subr.mxu0 0.0
        %1998 = vmatpush1.msra.mxu0 %v1918
        %1999 = vmatprep.mubr.f32.mxu0 %v659
        %2000 = vmatmul.mubr.f32.gmra.mrb[0].mxu0 %v1854
        %v2001 = vpop.f32.mrb[0].mxu0
        %v2002 = vadd.f32 0.0, %v2001
        %v2003 = vpop.f32.mrb[0].mxu0
        %2004 = vmatprep.mubr.f32.mxu0 %v660
        %2005 = vmatmul.mubr.f32.gmra.mrb[0].mxu0 %v1855
        %v2006 = vpop.f32.mrb[0].mxu0
        %v2007 = vadd.f32 0.0, %v2006
        %v2008 = vpop.f32.mrb[0].mxu0
        %2009 = vmatprep.mubr.f32.mxu0 %v661
        %2010 = vmatmul.mubr.f32.gmra.mrb[0].mxu0 %v1856
        %v2011 = vpop.f32.mrb[0].mxu0
        %v2012 = vadd.f32 0.0, %v2011
        %v2013 = vpop.f32.mrb[0].mxu0
        %2014 = vmatprep.mubr.f32.mxu0 %v662
        %2015 = vmatmul.mubr.f32.gmra.mrb[0].mxu0 %v1857
        %v2016 = vpop.f32.mrb[0].mxu0
        %v2017 = vadd.f32 0.0, %v2016
        %v2018 = vpop.f32.mrb[0].mxu0
        %2019 = vmatprep.mubr.f32.mxu0 %v663
        %2020 = vmatmul.mubr.f32.gmra.mrb[0].mxu0 %v1858
        %v2021 = vpop.f32.mrb[0].mxu0
        %v2022 = vadd.f32 0.0, %v2021
        %v2023 = vpop.f32.mrb[0].mxu0
        %2024 = vmatprep.mubr.f32.mxu0 %v664
        %2025 = vmatmul.mubr.f32.gmra.mrb[0].mxu0 %v1859
        %v2026 = vpop.f32.mrb[0].mxu0
        %v2027 = vadd.f32 0.0, %v2026
        %v2028 = vpop.f32.mrb[0].mxu0
        %2029 = vmatprep.mubr.f32.mxu0 %v665
        %2030 = vmatmul.mubr.f32.gmra.mrb[0].mxu0 %v1860
        %v2031 = vpop.f32.mrb[0].mxu0
        %v2032 = vadd.f32 0.0, %v2031
        %v2033 = vpop.f32.mrb[0].mxu0
        %2034 = vmatprep.mubr.f32.mxu0 %v666
        %2035 = vmatmul.mubr.f32.gmra.mrb[0].mxu0 %v1861
        %v2036 = vpop.f32.mrb[0].mxu0
        %v2037 = vadd.f32 0.0, %v2036
        %v2038 = vpop.f32.mrb[0].mxu0
        %2039 = vmatprep.mubr.f32.mxu0 %v667
        %2040 = vmatmul.mubr.f32.gmra.mrb[0].mxu0 %v1862
        %v2041 = vpop.f32.mrb[0].mxu0
        %v2042 = vadd.f32 0.0, %v2041
        %v2043 = vpop.f32.mrb[0].mxu0
        %2044 = vmatprep.mubr.f32.mxu0 %v668
        %2045 = vmatmul.mubr.f32.gmra.mrb[0].mxu0 %v1863
        %v2046 = vpop.f32.mrb[0].mxu0
        %v2047 = vadd.f32 0.0, %v2046
        %v2048 = vpop.f32.mrb[0].mxu0
        %2049 = vmatprep.mubr.f32.mxu0 %v669
        %2050 = vmatmul.mubr.f32.gmra.mrb[0].mxu0 %v1864
        %v2051 = vpop.f32.mrb[0].mxu0
        %v2052 = vadd.f32 0.0, %v2051
        %v2053 = vpop.f32.mrb[0].mxu0
        %2054 = vmatprep.mubr.f32.mxu0 %v670
        %2055 = vmatmul.mubr.f32.gmra.mrb[0].mxu0 %v1865
        %v2056 = vpop.f32.mrb[0].mxu0
        %v2057 = vadd.f32 0.0, %v2056
        %v2058 = vpop.f32.mrb[0].mxu0
        %2059 = vmatprep.mubr.f32.mxu0 %v671
        %2060 = vmatmul.mubr.f32.gmra.mrb[0].mxu0 %v1866
        %v2061 = vpop.f32.mrb[0].mxu0
        %v2062 = vadd.f32 0.0, %v2061
        %v2063 = vpop.f32.mrb[0].mxu0
        %2064 = vmatprep.mubr.f32.mxu0 %v672
        %2065 = vmatmul.mubr.f32.gmra.mrb[0].mxu0 %v1867
        %v2066 = vpop.f32.mrb[0].mxu0
        %v2067 = vadd.f32 0.0, %v2066
        %v2068 = vpop.f32.mrb[0].mxu0
        %2069 = vmatprep.mubr.f32.mxu0 %v673
        %2070 = vmatmul.mubr.f32.gmra.mrb[0].mxu0 %v1868
        %v2071 = vpop.f32.mrb[0].mxu0
        %v2072 = vadd.f32 0.0, %v2071
        %v2073 = vpop.f32.mrb[0].mxu0
        %2074 = vmatprep.mubr.f32.mxu0 %v674
        %2075 = vmatmul.mubr.f32.gmra.mrb[0].mxu0 %v1869
        %v2076 = vpop.f32.mrb[0].mxu0
        %v2077 = vadd.f32 0.0, %v2076
        %v2078 = vpop.f32.mrb[0].mxu0
        %2079 = vdwg.mxu0
        %2080 = vmatprep.subr.mxu0 0.0
        %2081 = vmatpush1.msra.mxu0 %v1919
        %2082 = vmatprep.subr.mxu0 0.0
        %2083 = vmatpush1.msra.mxu0 %v1920
        %2084 = vmatprep.subr.mxu0 0.0
        %2085 = vmatpush1.msra.mxu0 %v1921
        %2086 = vmatprep.subr.mxu0 0.0
        %2087 = vmatpush1.msra.mxu0 %v1922
        %2088 = vmatprep.subr.mxu0 0.0
        %2089 = vmatpush1.msra.mxu0 %v1923
        %2090 = vmatprep.subr.mxu0 0.0
        %2091 = vmatpush1.msra.mxu0 %v1924
        %2092 = vmatprep.subr.mxu0 0.0
        %2093 = vmatpush1.msra.mxu0 %v1925
        %2094 = vmatprep.subr.mxu0 0.0
        %2095 = vmatpush1.msra.mxu0 %v1926
        %2096 = vmatprep.subr.mxu0 0.0
        %2097 = vmatpush1.msra.mxu0 %v1927
        %2098 = vmatprep.subr.mxu0 0.0
        %2099 = vmatpush1.msra.mxu0 %v1928
        %2100 = vmatprep.subr.mxu0 0.0
        %2101 = vmatpush1.msra.mxu0 %v1929
        %2102 = vmatprep.subr.mxu0 0.0
        %2103 = vmatpush1.msra.mxu0 %v1930
        %2104 = vmatprep.subr.mxu0 0.0
        %2105 = vmatpush1.msra.mxu0 %v1931
        %2106 = vmatprep.subr.mxu0 0.0
        %2107 = vmatpush1.msra.mxu0 %v1932
        %2108 = vmatprep.subr.mxu0 0.0
        %2109 = vmatpush1.msra.mxu0 %v1933
        %2110 = vmatprep.subr.mxu0 0.0
        %2111 = vmatpush1.msra.mxu0 %v1934
        %2112 = vmatprep.subr.mxu0 0.0
        %2113 = vmatpush1.msra.mxu0 0.0
        %2114 = vmatprep.subr.mxu0 0.0
        %2115 = vmatpush1.msra.mxu0 0.0
        %2116 = vmatprep.subr.mxu0 0.0
        %2117 = vmatpush1.msra.mxu0 0.0
        %2118 = vmatprep.subr.mxu0 0.0
        %2119 = vmatpush1.msra.mxu0 0.0
        %2120 = vmatprep.subr.mxu0 0.0
        %2121 = vmatpush1.msra.mxu0 0.0
        %2122 = vmatprep.subr.mxu0 0.0
        %2123 = vmatpush1.msra.mxu0 0.0
        %2124 = vmatprep.subr.mxu0 0.0
        %2125 = vmatpush1.msra.mxu0 0.0
        %2126 = vmatprep.subr.mxu0 0.0
        %2127 = vmatpush1.msra.mxu0 0.0
        %2128 = vmatprep.subr.mxu0 0.0
        %2129 = vmatpush1.msra.mxu0 0.0
        %2130 = vmatprep.subr.mxu0 0.0
        %2131 = vmatpush1.msra.mxu0 0.0
        %2132 = vmatprep.subr.mxu0 0.0
        %2133 = vmatpush1.msra.mxu0 0.0
        %2134 = vmatprep.subr.mxu0 0.0
        %2135 = vmatpush1.msra.mxu0 0.0
        %2136 = vmatprep.subr.mxu0 0.0
        %2137 = vmatpush1.msra.mxu0 0.0
        %2138 = vmatprep.subr.mxu0 0.0
        %2139 = vmatpush1.msra.mxu0 0.0
        %2140 = vmatprep.subr.mxu0 0.0
        %2141 = vmatpush1.msra.mxu0 0.0
        %2142 = vmatprep.subr.mxu0 0.0
        %2143 = vmatpush1.msra.mxu0 0.0
        %2144 = vmatprep.mubr.f32.mxu0 0.0
        %2145 = vmatmul.mubr.f32.gmra.mrb[0].mxu0 %v1870
        %v2146 = vpop.f32.mrb[0].mxu0
        %v2147 = vadd.f32 %v2002, %v2146
        %v2148 = vpop.f32.mrb[0].mxu0
        %2149 = vmatprep.mubr.f32.mxu0 0.0
        %2150 = vmatmul.mubr.f32.gmra.mrb[0].mxu0 %v1871
        %v2151 = vpop.f32.mrb[0].mxu0
        %v2152 = vadd.f32 %v2007, %v2151
        %v2153 = vpop.f32.mrb[0].mxu0
        %2154 = vmatprep.mubr.f32.mxu0 0.0
        %2155 = vmatmul.mubr.f32.gmra.mrb[0].mxu0 %v1872
        %v2156 = vpop.f32.mrb[0].mxu0
        %v2157 = vadd.f32 %v2012, %v2156
        %v2158 = vpop.f32.mrb[0].mxu0
        %2159 = vmatprep.mubr.f32.mxu0 0.0
        %2160 = vmatmul.mubr.f32.gmra.mrb[0].mxu0 %v1873
        %v2161 = vpop.f32.mrb[0].mxu0
        %v2162 = vadd.f32 %v2017, %v2161
        %v2163 = vpop.f32.mrb[0].mxu0
        %2164 = vmatprep.mubr.f32.mxu0 0.0
        %2165 = vmatmul.mubr.f32.gmra.mrb[0].mxu0 %v1874
        %v2166 = vpop.f32.mrb[0].mxu0
        %v2167 = vadd.f32 %v2022, %v2166
        %v2168 = vpop.f32.mrb[0].mxu0
        %2169 = vmatprep.mubr.f32.mxu0 0.0
        %2170 = vmatmul.mubr.f32.gmra.mrb[0].mxu0 %v1875
        %v2171 = vpop.f32.mrb[0].mxu0
        %v2172 = vadd.f32 %v2027, %v2171
        %v2173 = vpop.f32.mrb[0].mxu0
        %2174 = vmatprep.mubr.f32.mxu0 0.0
        %2175 = vmatmul.mubr.f32.gmra.mrb[0].mxu0 %v1876
        %v2176 = vpop.f32.mrb[0].mxu0
        %v2177 = vadd.f32 %v2032, %v2176
        %v2178 = vpop.f32.mrb[0].mxu0
        %2179 = vmatprep.mubr.f32.mxu0 0.0
        %2180 = vmatmul.mubr.f32.gmra.mrb[0].mxu0 %v1877
        %v2181 = vpop.f32.mrb[0].mxu0
        %v2182 = vadd.f32 %v2037, %v2181
        %v2183 = vpop.f32.mrb[0].mxu0
        %2184 = vmatprep.mubr.f32.mxu0 0.0
        %2185 = vmatmul.mubr.f32.gmra.mrb[0].mxu0 %v1878
        %v2186 = vpop.f32.mrb[0].mxu0
        %v2187 = vadd.f32 %v2042, %v2186
        %v2188 = vpop.f32.mrb[0].mxu0
        %2189 = vmatprep.mubr.f32.mxu0 0.0
        %2190 = vmatmul.mubr.f32.gmra.mrb[0].mxu0 %v1879
        %v2191 = vpop.f32.mrb[0].mxu0
        %v2192 = vadd.f32 %v2047, %v2191
        %v2193 = vpop.f32.mrb[0].mxu0
        %2194 = vmatprep.mubr.f32.mxu0 0.0
        %2195 = vmatmul.mubr.f32.gmra.mrb[0].mxu0 %v1880
        %v2196 = vpop.f32.mrb[0].mxu0
        %v2197 = vadd.f32 %v2052, %v2196
        %v2198 = vpop.f32.mrb[0].mxu0
        %2199 = vmatprep.mubr.f32.mxu0 0.0
        %2200 = vmatmul.mubr.f32.gmra.mrb[0].mxu0 %v1881
        %v2201 = vpop.f32.mrb[0].mxu0
        %v2202 = vadd.f32 %v2057, %v2201
        %v2203 = vpop.f32.mrb[0].mxu0
        %2204 = vmatprep.mubr.f32.mxu0 0.0
        %2205 = vmatmul.mubr.f32.gmra.mrb[0].mxu0 %v1882
        %v2206 = vpop.f32.mrb[0].mxu0
        %v2207 = vadd.f32 %v2062, %v2206
        %v2208 = vpop.f32.mrb[0].mxu0
        %2209 = vmatprep.mubr.f32.mxu0 0.0
        %2210 = vmatmul.mubr.f32.gmra.mrb[0].mxu0 %v1883
        %v2211 = vpop.f32.mrb[0].mxu0
        %v2212 = vadd.f32 %v2067, %v2211
        %v2213 = vpop.f32.mrb[0].mxu0
        %2214 = vmatprep.mubr.f32.mxu0 0.0
        %2215 = vmatmul.mubr.f32.gmra.mrb[0].mxu0 %v1884
        %v2216 = vpop.f32.mrb[0].mxu0
        %v2217 = vadd.f32 %v2072, %v2216
        %v2218 = vpop.f32.mrb[0].mxu0
        %2219 = vmatprep.mubr.f32.mxu0 0.0
        %2220 = vmatmul.mubr.f32.gmra.mrb[0].mxu0 %v1885
        %v2221 = vpop.f32.mrb[0].mxu0
        %v2222 = vadd.f32 %v2077, %v2221
        %v2223 = vpop.f32.mrb[0].mxu0
        %2224 = vdwg.mxu0
        %v2225 = vadd.f32 %v1838, %v2147
        %v2226 = vadd.f32 %v1839, %v2152
        %v2227 = vadd.f32 %v1840, %v2157
        %v2228 = vadd.f32 %v1841, %v2162
        %v2229 = vadd.f32 %v1842, %v2167
        %v2230 = vadd.f32 %v1843, %v2172
        %v2231 = vadd.f32 %v1844, %v2177
        %v2232 = vadd.f32 %v1845, %v2182
        %v2233 = vadd.f32 %v1846, %v2187
        %v2234 = vadd.f32 %v1847, %v2192
        %v2235 = vadd.f32 %v1848, %v2197
        %v2236 = vadd.f32 %v1849, %v2202
        %v2237 = vadd.f32 %v1850, %v2207
        %v2238 = vadd.f32 %v1851, %v2212
        %v2239 = vadd.f32 %v1852, %v2217
        %v2240 = vadd.f32 %v1853, %v2222
        %s2241 = scalar_lea.vmem %s200, 144 [#allocation2]
        %v2242 = vld [vmem:[%s2241 + $0x2] sm:$0xff]
        %v2243 = vld [vmem:[%s2241 + $0xa] sm:$0xff]
        %v2244 = vld [vmem:[%s2241 + $0x1a] sm:$0xff]
        %v2245 = vld [vmem:[%s2241 + $0x22] sm:$0xff]
        %v2246 = vld [vmem:[%s2241 + $0x32] sm:$0xff]
        %v2247 = vld [vmem:[%s2241 + $0x3a] sm:$0xff]
        %v2248 = vld [vmem:[%s2241 + $0x4a] sm:$0xff]
        %v2249 = vld [vmem:[%s2241 + $0x52] sm:$0xff]
        %v2250 = vld [vmem:[%s2241 + $0x62] sm:$0xff]
        %v2251 = vld [vmem:[%s2241 + $0x6a] sm:$0xff]
        %v2252 = vld [vmem:[%s2241 + $0x7a] sm:$0xff]
        %v2253 = vld [vmem:[%s2241 + $0x82] sm:$0xff]
        %v2254 = vld [vmem:[%s2241 + $0x92] sm:$0xff]
        %v2255 = vld [vmem:[%s2241 + $0x9a] sm:$0xff]
        %v2256 = vld [vmem:[%s2241 + $0xaa] sm:$0xff]
        %v2257 = vld [vmem:[%s2241 + $0xb2] sm:$0xff]
        %v2258 = vld [vmem:[%s2241 + $0x4] sm:$0xff]
        %v2259 = vld [vmem:[%s2241 + $0xc] sm:$0xff]
        %v2260 = vld [vmem:[%s2241 + $0x1c] sm:$0xff]
        %v2261 = vld [vmem:[%s2241 + $0x24] sm:$0xff]
        %v2262 = vld [vmem:[%s2241 + $0x34] sm:$0xff]
        %v2263 = vld [vmem:[%s2241 + $0x3c] sm:$0xff]
        %v2264 = vld [vmem:[%s2241 + $0x4c] sm:$0xff]
        %v2265 = vld [vmem:[%s2241 + $0x54] sm:$0xff]
        %v2266 = vld [vmem:[%s2241 + $0x64] sm:$0xff]
        %v2267 = vld [vmem:[%s2241 + $0x6c] sm:$0xff]
        %v2268 = vld [vmem:[%s2241 + $0x7c] sm:$0xff]
        %v2269 = vld [vmem:[%s2241 + $0x84] sm:$0xff]
        %v2270 = vld [vmem:[%s2241 + $0x94] sm:$0xff]
        %v2271 = vld [vmem:[%s2241 + $0x9c] sm:$0xff]
        %v2272 = vld [vmem:[%s2241 + $0xac] sm:$0xff]
        %v2273 = vld [vmem:[%s2241 + $0xb4] sm:$0xff]
        %v2274 = vld [vmem:[%s2241 + $0x6] sm:$0xff]
        %v2275 = vld [vmem:[%s2241 + $0xe] sm:$0xff]
        %v2276 = vld [vmem:[%s2241 + $0x1e] sm:$0xff]
        %v2277 = vld [vmem:[%s2241 + $0x26] sm:$0xff]
        %v2278 = vld [vmem:[%s2241 + $0x36] sm:$0xff]
        %v2279 = vld [vmem:[%s2241 + $0x3e] sm:$0xff]
        %v2280 = vld [vmem:[%s2241 + $0x4e] sm:$0xff]
        %v2281 = vld [vmem:[%s2241 + $0x56] sm:$0xff]
        %v2282 = vld [vmem:[%s2241 + $0x66] sm:$0xff]
        %v2283 = vld [vmem:[%s2241 + $0x6e] sm:$0xff]
        %v2284 = vld [vmem:[%s2241 + $0x7e] sm:$0xff]
        %v2285 = vld [vmem:[%s2241 + $0x86] sm:$0xff]
        %v2286 = vld [vmem:[%s2241 + $0x96] sm:$0xff]
        %v2287 = vld [vmem:[%s2241 + $0x9e] sm:$0xff]
        %v2288 = vld [vmem:[%s2241 + $0xae] sm:$0xff]
        %v2289 = vld [vmem:[%s2241 + $0xb6] sm:$0xff]
        %s2290 = scalar_lea.vmem [#allocation4], 1920
        %v2291 = vld [vmem:[%s2290] sm:$0xff]
        %v2292 = vld [vmem:[%s2290 + $0x8] sm:$0xff]
        %v2293 = vld [vmem:[%s2290 + $0x10] sm:$0xff]
        %v2294 = vld [vmem:[%s2290 + $0x18] sm:$0xff]
        %v2295 = vld [vmem:[%s2290 + $0x20] sm:$0xff]
        %v2296 = vld [vmem:[%s2290 + $0x28] sm:$0xff]
        %v2297 = vld [vmem:[%s2290 + $0x30] sm:$0xff]
        %v2298 = vld [vmem:[%s2290 + $0x38] sm:$0xff]
        %v2299 = vld [vmem:[%s2290 + $0x40] sm:$0xff]
        %v2300 = vld [vmem:[%s2290 + $0x48] sm:$0xff]
        %v2301 = vld [vmem:[%s2290 + $0x50] sm:$0xff]
        %v2302 = vld [vmem:[%s2290 + $0x58] sm:$0xff]
        %v2303 = vld [vmem:[%s2290 + $0x60] sm:$0xff]
        %v2304 = vld [vmem:[%s2290 + $0x68] sm:$0xff]
        %v2305 = vld [vmem:[%s2290 + $0x70] sm:$0xff]
        %v2306 = vld [vmem:[%s2290 + $0x78] sm:$0xff]
        %v2307 = vld [vmem:[%s2290 + $0x80] sm:$0xff]
        %v2308 = vld [vmem:[%s2290 + $0x88] sm:$0xff]
        %v2309 = vld [vmem:[%s2290 + $0x90] sm:$0xff]
        %v2310 = vld [vmem:[%s2290 + $0x98] sm:$0xff]
        %v2311 = vld [vmem:[%s2290 + $0xa0] sm:$0xff]
        %v2312 = vld [vmem:[%s2290 + $0xa8] sm:$0xff]
        %v2313 = vld [vmem:[%s2290 + $0xb0] sm:$0xff]
        %v2314 = vld [vmem:[%s2290 + $0xb8] sm:$0xff]
        %v2315 = vld [vmem:[%s2290 + $0xc0] sm:$0xff]
        %v2316 = vld [vmem:[%s2290 + $0xc8] sm:$0xff]
        %v2317 = vld [vmem:[%s2290 + $0xd0] sm:$0xff]
        %v2318 = vld [vmem:[%s2290 + $0xd8] sm:$0xff]
        %v2319 = vld [vmem:[%s2290 + $0xe0] sm:$0xff]
        %v2320 = vld [vmem:[%s2290 + $0xe8] sm:$0xff]
        %v2321 = vld [vmem:[%s2290 + $0xf0] sm:$0xff]
        %v2322 = vld [vmem:[%s2290 + $0xf8] sm:$0xff]
        %v2323 = vld [vmem:[%s2290 + $0x100] sm:$0xff]
        %v2324 = vld [vmem:[%s2290 + $0x108] sm:$0xff]
        %v2325 = vld [vmem:[%s2290 + $0x110] sm:$0xff]
        %v2326 = vld [vmem:[%s2290 + $0x118] sm:$0xff]
        %v2327 = vld [vmem:[%s2290 + $0x120] sm:$0xff]
        %v2328 = vld [vmem:[%s2290 + $0x128] sm:$0xff]
        %v2329 = vld [vmem:[%s2290 + $0x130] sm:$0xff]
        %v2330 = vld [vmem:[%s2290 + $0x138] sm:$0xff]
        %v2331 = vld [vmem:[%s2290 + $0x140] sm:$0xff]
        %v2332 = vld [vmem:[%s2290 + $0x148] sm:$0xff]
        %v2333 = vld [vmem:[%s2290 + $0x150] sm:$0xff]
        %v2334 = vld [vmem:[%s2290 + $0x158] sm:$0xff]
        %v2335 = vld [vmem:[%s2290 + $0x160] sm:$0xff]
        %v2336 = vld [vmem:[%s2290 + $0x168] sm:$0xff]
        %v2337 = vld [vmem:[%s2290 + $0x170] sm:$0xff]
        %v2338 = vld [vmem:[%s2290 + $0x178] sm:$0xff]
        %2339 = vmatprep.subr.mxu0 0.0
        %2340 = vmatpush1.msra.mxu0 %v2291
        %2341 = vmatprep.subr.mxu0 0.0
        %2342 = vmatpush1.msra.mxu0 %v2292
        %2343 = vmatprep.subr.mxu0 0.0
        %2344 = vmatpush1.msra.mxu0 %v2293
        %2345 = vmatprep.subr.mxu0 0.0
        %2346 = vmatpush1.msra.mxu0 %v2294
        %2347 = vmatprep.subr.mxu0 0.0
        %2348 = vmatpush1.msra.mxu0 %v2295
        %2349 = vmatprep.subr.mxu0 0.0
        %2350 = vmatpush1.msra.mxu0 %v2296
        %2351 = vmatprep.subr.mxu0 0.0
        %2352 = vmatpush1.msra.mxu0 %v2297
        %2353 = vmatprep.subr.mxu0 0.0
        %2354 = vmatpush1.msra.mxu0 %v2298
        %2355 = vmatprep.subr.mxu0 0.0
        %2356 = vmatpush1.msra.mxu0 %v2299
        %2357 = vmatprep.subr.mxu0 0.0
        %2358 = vmatpush1.msra.mxu0 %v2300
        %2359 = vmatprep.subr.mxu0 0.0
        %2360 = vmatpush1.msra.mxu0 %v2301
        %2361 = vmatprep.subr.mxu0 0.0
        %2362 = vmatpush1.msra.mxu0 %v2302
        %2363 = vmatprep.subr.mxu0 0.0
        %2364 = vmatpush1.msra.mxu0 %v2303
        %2365 = vmatprep.subr.mxu0 0.0
        %2366 = vmatpush1.msra.mxu0 %v2304
        %2367 = vmatprep.subr.mxu0 0.0
        %2368 = vmatpush1.msra.mxu0 %v2305
        %2369 = vmatprep.subr.mxu0 0.0
        %2370 = vmatpush1.msra.mxu0 %v2306
        %2371 = vmatprep.subr.mxu0 0.0
        %2372 = vmatpush1.msra.mxu0 %v2307
        %2373 = vmatprep.subr.mxu0 0.0
        %2374 = vmatpush1.msra.mxu0 %v2308
        %2375 = vmatprep.subr.mxu0 0.0
        %2376 = vmatpush1.msra.mxu0 %v2309
        %2377 = vmatprep.subr.mxu0 0.0
        %2378 = vmatpush1.msra.mxu0 %v2310
        %2379 = vmatprep.subr.mxu0 0.0
        %2380 = vmatpush1.msra.mxu0 %v2311
        %2381 = vmatprep.subr.mxu0 0.0
        %2382 = vmatpush1.msra.mxu0 %v2312
        %2383 = vmatprep.subr.mxu0 0.0
        %2384 = vmatpush1.msra.mxu0 %v2313
        %2385 = vmatprep.subr.mxu0 0.0
        %2386 = vmatpush1.msra.mxu0 %v2314
        %2387 = vmatprep.subr.mxu0 0.0
        %2388 = vmatpush1.msra.mxu0 %v2315
        %2389 = vmatprep.subr.mxu0 0.0
        %2390 = vmatpush1.msra.mxu0 %v2316
        %2391 = vmatprep.subr.mxu0 0.0
        %2392 = vmatpush1.msra.mxu0 %v2317
        %2393 = vmatprep.subr.mxu0 0.0
        %2394 = vmatpush1.msra.mxu0 %v2318
        %2395 = vmatprep.subr.mxu0 0.0
        %2396 = vmatpush1.msra.mxu0 %v2319
        %2397 = vmatprep.subr.mxu0 0.0
        %2398 = vmatpush1.msra.mxu0 %v2320
        %2399 = vmatprep.subr.mxu0 0.0
        %2400 = vmatpush1.msra.mxu0 %v2321
        %2401 = vmatprep.subr.mxu0 0.0
        %2402 = vmatpush1.msra.mxu0 %v2322
        %2403 = vmatprep.mubr.f32.mxu0 %v2258
        %2404 = vmatmul.mubr.f32.gmra.mrb[0].mxu0 %v2242
        %v2405 = vpop.f32.mrb[0].mxu0
        %v2406 = vadd.f32 0.0, %v2405
        %v2407 = vpop.f32.mrb[0].mxu0
        %2408 = vmatprep.mubr.f32.mxu0 %v2259
        %2409 = vmatmul.mubr.f32.gmra.mrb[0].mxu0 %v2243
        %v2410 = vpop.f32.mrb[0].mxu0
        %v2411 = vadd.f32 0.0, %v2410
        %v2412 = vpop.f32.mrb[0].mxu0
        %2413 = vmatprep.mubr.f32.mxu0 %v2260
        %2414 = vmatmul.mubr.f32.gmra.mrb[0].mxu0 %v2244
        %v2415 = vpop.f32.mrb[0].mxu0
        %v2416 = vadd.f32 0.0, %v2415
        %v2417 = vpop.f32.mrb[0].mxu0
        %2418 = vmatprep.mubr.f32.mxu0 %v2261
        %2419 = vmatmul.mubr.f32.gmra.mrb[0].mxu0 %v2245
        %v2420 = vpop.f32.mrb[0].mxu0
        %v2421 = vadd.f32 0.0, %v2420
        %v2422 = vpop.f32.mrb[0].mxu0
        %2423 = vmatprep.mubr.f32.mxu0 %v2262
        %2424 = vmatmul.mubr.f32.gmra.mrb[0].mxu0 %v2246
        %v2425 = vpop.f32.mrb[0].mxu0
        %v2426 = vadd.f32 0.0, %v2425
        %v2427 = vpop.f32.mrb[0].mxu0
        %2428 = vmatprep.mubr.f32.mxu0 %v2263
        %2429 = vmatmul.mubr.f32.gmra.mrb[0].mxu0 %v2247
        %v2430 = vpop.f32.mrb[0].mxu0
        %v2431 = vadd.f32 0.0, %v2430
        %v2432 = vpop.f32.mrb[0].mxu0
        %2433 = vmatprep.mubr.f32.mxu0 %v2264
        %2434 = vmatmul.mubr.f32.gmra.mrb[0].mxu0 %v2248
        %v2435 = vpop.f32.mrb[0].mxu0
        %v2436 = vadd.f32 0.0, %v2435
        %v2437 = vpop.f32.mrb[0].mxu0
        %2438 = vmatprep.mubr.f32.mxu0 %v2265
        %2439 = vmatmul.mubr.f32.gmra.mrb[0].mxu0 %v2249
        %v2440 = vpop.f32.mrb[0].mxu0
        %v2441 = vadd.f32 0.0, %v2440
        %v2442 = vpop.f32.mrb[0].mxu0
        %2443 = vmatprep.mubr.f32.mxu0 %v2266
        %2444 = vmatmul.mubr.f32.gmra.mrb[0].mxu0 %v2250
        %v2445 = vpop.f32.mrb[0].mxu0
        %v2446 = vadd.f32 0.0, %v2445
        %v2447 = vpop.f32.mrb[0].mxu0
        %2448 = vmatprep.mubr.f32.mxu0 %v2267
        %2449 = vmatmul.mubr.f32.gmra.mrb[0].mxu0 %v2251
        %v2450 = vpop.f32.mrb[0].mxu0
        %v2451 = vadd.f32 0.0, %v2450
        %v2452 = vpop.f32.mrb[0].mxu0
        %2453 = vmatprep.mubr.f32.mxu0 %v2268
        %2454 = vmatmul.mubr.f32.gmra.mrb[0].mxu0 %v2252
        %v2455 = vpop.f32.mrb[0].mxu0
        %v2456 = vadd.f32 0.0, %v2455
        %v2457 = vpop.f32.mrb[0].mxu0
        %2458 = vmatprep.mubr.f32.mxu0 %v2269
        %2459 = vmatmul.mubr.f32.gmra.mrb[0].mxu0 %v2253
        %v2460 = vpop.f32.mrb[0].mxu0
        %v2461 = vadd.f32 0.0, %v2460
        %v2462 = vpop.f32.mrb[0].mxu0
        %2463 = vmatprep.mubr.f32.mxu0 %v2270
        %2464 = vmatmul.mubr.f32.gmra.mrb[0].mxu0 %v2254
        %v2465 = vpop.f32.mrb[0].mxu0
        %v2466 = vadd.f32 0.0, %v2465
        %v2467 = vpop.f32.mrb[0].mxu0
        %2468 = vmatprep.mubr.f32.mxu0 %v2271
        %2469 = vmatmul.mubr.f32.gmra.mrb[0].mxu0 %v2255
        %v2470 = vpop.f32.mrb[0].mxu0
        %v2471 = vadd.f32 0.0, %v2470
        %v2472 = vpop.f32.mrb[0].mxu0
        %2473 = vmatprep.mubr.f32.mxu0 %v2272
        %2474 = vmatmul.mubr.f32.gmra.mrb[0].mxu0 %v2256
        %v2475 = vpop.f32.mrb[0].mxu0
        %v2476 = vadd.f32 0.0, %v2475
        %v2477 = vpop.f32.mrb[0].mxu0
        %2478 = vmatprep.mubr.f32.mxu0 %v2273
        %2479 = vmatmul.mubr.f32.gmra.mrb[0].mxu0 %v2257
        %v2480 = vpop.f32.mrb[0].mxu0
        %v2481 = vadd.f32 0.0, %v2480
        %v2482 = vpop.f32.mrb[0].mxu0
        %2483 = vdwg.mxu0
        %2484 = vmatprep.subr.mxu0 0.0
        %2485 = vmatpush1.msra.mxu0 %v2323
        %2486 = vmatprep.subr.mxu0 0.0
        %2487 = vmatpush1.msra.mxu0 %v2324
        %2488 = vmatprep.subr.mxu0 0.0
        %2489 = vmatpush1.msra.mxu0 %v2325
        %2490 = vmatprep.subr.mxu0 0.0
        %2491 = vmatpush1.msra.mxu0 %v2326
        %2492 = vmatprep.subr.mxu0 0.0
        %2493 = vmatpush1.msra.mxu0 %v2327
        %2494 = vmatprep.subr.mxu0 0.0
        %2495 = vmatpush1.msra.mxu0 %v2328
        %2496 = vmatprep.subr.mxu0 0.0
        %2497 = vmatpush1.msra.mxu0 %v2329
        %2498 = vmatprep.subr.mxu0 0.0
        %2499 = vmatpush1.msra.mxu0 %v2330
        %2500 = vmatprep.subr.mxu0 0.0
        %2501 = vmatpush1.msra.mxu0 %v2331
        %2502 = vmatprep.subr.mxu0 0.0
        %2503 = vmatpush1.msra.mxu0 %v2332
        %2504 = vmatprep.subr.mxu0 0.0
        %2505 = vmatpush1.msra.mxu0 %v2333
        %2506 = vmatprep.subr.mxu0 0.0
        %2507 = vmatpush1.msra.mxu0 %v2334
        %2508 = vmatprep.subr.mxu0 0.0
        %2509 = vmatpush1.msra.mxu0 %v2335
        %2510 = vmatprep.subr.mxu0 0.0
        %2511 = vmatpush1.msra.mxu0 %v2336
        %2512 = vmatprep.subr.mxu0 0.0
        %2513 = vmatpush1.msra.mxu0 %v2337
        %2514 = vmatprep.subr.mxu0 0.0
        %2515 = vmatpush1.msra.mxu0 %v2338
        %2516 = vmatprep.subr.mxu0 0.0
        %2517 = vmatpush1.msra.mxu0 0.0
        %2518 = vmatprep.subr.mxu0 0.0
        %2519 = vmatpush1.msra.mxu0 0.0
        %2520 = vmatprep.subr.mxu0 0.0
        %2521 = vmatpush1.msra.mxu0 0.0
        %2522 = vmatprep.subr.mxu0 0.0
        %2523 = vmatpush1.msra.mxu0 0.0
        %2524 = vmatprep.subr.mxu0 0.0
        %2525 = vmatpush1.msra.mxu0 0.0
        %2526 = vmatprep.subr.mxu0 0.0
        %2527 = vmatpush1.msra.mxu0 0.0
        %2528 = vmatprep.subr.mxu0 0.0
        %2529 = vmatpush1.msra.mxu0 0.0
        %2530 = vmatprep.subr.mxu0 0.0
        %2531 = vmatpush1.msra.mxu0 0.0
        %2532 = vmatprep.subr.mxu0 0.0
        %2533 = vmatpush1.msra.mxu0 0.0
        %2534 = vmatprep.subr.mxu0 0.0
        %2535 = vmatpush1.msra.mxu0 0.0
        %2536 = vmatprep.subr.mxu0 0.0
        %2537 = vmatpush1.msra.mxu0 0.0
        %2538 = vmatprep.subr.mxu0 0.0
        %2539 = vmatpush1.msra.mxu0 0.0
        %2540 = vmatprep.subr.mxu0 0.0
        %2541 = vmatpush1.msra.mxu0 0.0
        %2542 = vmatprep.subr.mxu0 0.0
        %2543 = vmatpush1.msra.mxu0 0.0
        %2544 = vmatprep.subr.mxu0 0.0
        %2545 = vmatpush1.msra.mxu0 0.0
        %2546 = vmatprep.subr.mxu0 0.0
        %2547 = vmatpush1.msra.mxu0 0.0
        %2548 = vmatprep.mubr.f32.mxu0 0.0
        %2549 = vmatmul.mubr.f32.gmra.mrb[0].mxu0 %v2274
        %v2550 = vpop.f32.mrb[0].mxu0
        %v2551 = vadd.f32 %v2406, %v2550
        %v2552 = vpop.f32.mrb[0].mxu0
        %2553 = vmatprep.mubr.f32.mxu0 0.0
        %2554 = vmatmul.mubr.f32.gmra.mrb[0].mxu0 %v2275
        %v2555 = vpop.f32.mrb[0].mxu0
        %v2556 = vadd.f32 %v2411, %v2555
        %v2557 = vpop.f32.mrb[0].mxu0
        %2558 = vmatprep.mubr.f32.mxu0 0.0
        %2559 = vmatmul.mubr.f32.gmra.mrb[0].mxu0 %v2276
        %v2560 = vpop.f32.mrb[0].mxu0
        %v2561 = vadd.f32 %v2416, %v2560
        %v2562 = vpop.f32.mrb[0].mxu0
        %2563 = vmatprep.mubr.f32.mxu0 0.0
        %2564 = vmatmul.mubr.f32.gmra.mrb[0].mxu0 %v2277
        %v2565 = vpop.f32.mrb[0].mxu0
        %v2566 = vadd.f32 %v2421, %v2565
        %v2567 = vpop.f32.mrb[0].mxu0
        %2568 = vmatprep.mubr.f32.mxu0 0.0
        %2569 = vmatmul.mubr.f32.gmra.mrb[0].mxu0 %v2278
        %v2570 = vpop.f32.mrb[0].mxu0
        %v2571 = vadd.f32 %v2426, %v2570
        %v2572 = vpop.f32.mrb[0].mxu0
        %2573 = vmatprep.mubr.f32.mxu0 0.0
        %2574 = vmatmul.mubr.f32.gmra.mrb[0].mxu0 %v2279
        %v2575 = vpop.f32.mrb[0].mxu0
        %v2576 = vadd.f32 %v2431, %v2575
        %v2577 = vpop.f32.mrb[0].mxu0
        %2578 = vmatprep.mubr.f32.mxu0 0.0
        %2579 = vmatmul.mubr.f32.gmra.mrb[0].mxu0 %v2280
        %v2580 = vpop.f32.mrb[0].mxu0
        %v2581 = vadd.f32 %v2436, %v2580
        %v2582 = vpop.f32.mrb[0].mxu0
        %2583 = vmatprep.mubr.f32.mxu0 0.0
        %2584 = vmatmul.mubr.f32.gmra.mrb[0].mxu0 %v2281
        %v2585 = vpop.f32.mrb[0].mxu0
        %v2586 = vadd.f32 %v2441, %v2585
        %v2587 = vpop.f32.mrb[0].mxu0
        %2588 = vmatprep.mubr.f32.mxu0 0.0
        %2589 = vmatmul.mubr.f32.gmra.mrb[0].mxu0 %v2282
        %v2590 = vpop.f32.mrb[0].mxu0
        %v2591 = vadd.f32 %v2446, %v2590
        %v2592 = vpop.f32.mrb[0].mxu0
        %2593 = vmatprep.mubr.f32.mxu0 0.0
        %2594 = vmatmul.mubr.f32.gmra.mrb[0].mxu0 %v2283
        %v2595 = vpop.f32.mrb[0].mxu0
        %v2596 = vadd.f32 %v2451, %v2595
        %v2597 = vpop.f32.mrb[0].mxu0
        %2598 = vmatprep.mubr.f32.mxu0 0.0
        %2599 = vmatmul.mubr.f32.gmra.mrb[0].mxu0 %v2284
        %v2600 = vpop.f32.mrb[0].mxu0
        %v2601 = vadd.f32 %v2456, %v2600
        %v2602 = vpop.f32.mrb[0].mxu0
        %2603 = vmatprep.mubr.f32.mxu0 0.0
        %2604 = vmatmul.mubr.f32.gmra.mrb[0].mxu0 %v2285
        %v2605 = vpop.f32.mrb[0].mxu0
        %v2606 = vadd.f32 %v2461, %v2605
        %v2607 = vpop.f32.mrb[0].mxu0
        %2608 = vmatprep.mubr.f32.mxu0 0.0
        %2609 = vmatmul.mubr.f32.gmra.mrb[0].mxu0 %v2286
        %v2610 = vpop.f32.mrb[0].mxu0
        %v2611 = vadd.f32 %v2466, %v2610
        %v2612 = vpop.f32.mrb[0].mxu0
        %2613 = vmatprep.mubr.f32.mxu0 0.0
        %2614 = vmatmul.mubr.f32.gmra.mrb[0].mxu0 %v2287
        %v2615 = vpop.f32.mrb[0].mxu0
        %v2616 = vadd.f32 %v2471, %v2615
        %v2617 = vpop.f32.mrb[0].mxu0
        %2618 = vmatprep.mubr.f32.mxu0 0.0
        %2619 = vmatmul.mubr.f32.gmra.mrb[0].mxu0 %v2288
        %v2620 = vpop.f32.mrb[0].mxu0
        %v2621 = vadd.f32 %v2476, %v2620
        %v2622 = vpop.f32.mrb[0].mxu0
        %2623 = vmatprep.mubr.f32.mxu0 0.0
        %2624 = vmatmul.mubr.f32.gmra.mrb[0].mxu0 %v2289
        %v2625 = vpop.f32.mrb[0].mxu0
        %v2626 = vadd.f32 %v2481, %v2625
        %v2627 = vpop.f32.mrb[0].mxu0
        %2628 = vdwg.mxu0
        %v2629 = vadd.f32 %v2225, %v2551
        %v2630 = vadd.f32 %v2226, %v2556
        %v2631 = vadd.f32 %v2227, %v2561
        %v2632 = vadd.f32 %v2228, %v2566
        %v2633 = vadd.f32 %v2229, %v2571
        %v2634 = vadd.f32 %v2230, %v2576
        %v2635 = vadd.f32 %v2231, %v2581
        %v2636 = vadd.f32 %v2232, %v2586
        %v2637 = vadd.f32 %v2233, %v2591
        %v2638 = vadd.f32 %v2234, %v2596
        %v2639 = vadd.f32 %v2235, %v2601
        %v2640 = vadd.f32 %v2236, %v2606
        %v2641 = vadd.f32 %v2237, %v2611
        %v2642 = vadd.f32 %v2238, %v2616
        %v2643 = vadd.f32 %v2239, %v2621
        %v2644 = vadd.f32 %v2240, %v2626
        %v2645 = vld [vmem:[%s200] sm:$0xff]
        %v2646 = vld [vmem:[%s200 + $0x8] sm:$0xff]
        %v2647 = vld [vmem:[%s200 + $0x18] sm:$0xff]
        %v2648 = vld [vmem:[%s200 + $0x20] sm:$0xff]
        %v2649 = vld [vmem:[%s200 + $0x30] sm:$0xff]
        %v2650 = vld [vmem:[%s200 + $0x38] sm:$0xff]
        %v2651 = vld [vmem:[%s200 + $0x48] sm:$0xff]
        %v2652 = vld [vmem:[%s200 + $0x50] sm:$0xff]
        %v2653 = vld [vmem:[%s200 + $0x60] sm:$0xff]
        %v2654 = vld [vmem:[%s200 + $0x68] sm:$0xff]
        %v2655 = vld [vmem:[%s200 + $0x78] sm:$0xff]
        %v2656 = vld [vmem:[%s200 + $0x80] sm:$0xff]
        %v2657 = vld [vmem:[%s200 + $0x90] sm:$0xff]
        %v2658 = vld [vmem:[%s200 + $0x98] sm:$0xff]
        %v2659 = vld [vmem:[%s200 + $0xa8] sm:$0xff]
        %v2660 = vld [vmem:[%s200 + $0xb0] sm:$0xff]
        %v2661 = vld [vmem:[%s200 + $0x4] sm:$0xff]
        %v2662 = vld [vmem:[%s200 + $0xc] sm:$0xff]
        %v2663 = vld [vmem:[%s200 + $0x1c] sm:$0xff]
        %v2664 = vld [vmem:[%s200 + $0x24] sm:$0xff]
        %v2665 = vld [vmem:[%s200 + $0x34] sm:$0xff]
        %v2666 = vld [vmem:[%s200 + $0x3c] sm:$0xff]
        %v2667 = vld [vmem:[%s200 + $0x4c] sm:$0xff]
        %v2668 = vld [vmem:[%s200 + $0x54] sm:$0xff]
        %v2669 = vld [vmem:[%s200 + $0x64] sm:$0xff]
        %v2670 = vld [vmem:[%s200 + $0x6c] sm:$0xff]
        %v2671 = vld [vmem:[%s200 + $0x7c] sm:$0xff]
        %v2672 = vld [vmem:[%s200 + $0x84] sm:$0xff]
        %v2673 = vld [vmem:[%s200 + $0x94] sm:$0xff]
        %v2674 = vld [vmem:[%s200 + $0x9c] sm:$0xff]
        %v2675 = vld [vmem:[%s200 + $0xac] sm:$0xff]
        %v2676 = vld [vmem:[%s200 + $0xb4] sm:$0xff]
        %v2677 = vld [vmem:[%s200 + $0x10] sm:$0xff]
        %v2678 = vld [vmem:[%s200 + $0x28] sm:$0xff]
        %v2679 = vld [vmem:[%s200 + $0x40] sm:$0xff]
        %v2680 = vld [vmem:[%s200 + $0x58] sm:$0xff]
        %v2681 = vld [vmem:[%s200 + $0x70] sm:$0xff]
        %v2682 = vld [vmem:[%s200 + $0x88] sm:$0xff]
        %v2683 = vld [vmem:[%s200 + $0xa0] sm:$0xff]
        %v2684 = vld [vmem:[%s200 + $0xb8] sm:$0xff]
        %s2685 = scalar_lea.vmem [#allocation4], 2304
        %v2686 = vld [vmem:[%s2685] sm:$0xff]
        %v2687 = vld [vmem:[%s2685 + $0x8] sm:$0xff]
        %v2688 = vld [vmem:[%s2685 + $0x10] sm:$0xff]
        %v2689 = vld [vmem:[%s2685 + $0x18] sm:$0xff]
        %v2690 = vld [vmem:[%s2685 + $0x20] sm:$0xff]
        %v2691 = vld [vmem:[%s2685 + $0x28] sm:$0xff]
        %v2692 = vld [vmem:[%s2685 + $0x30] sm:$0xff]
        %v2693 = vld [vmem:[%s2685 + $0x38] sm:$0xff]
        %v2694 = vld [vmem:[%s2685 + $0x40] sm:$0xff]
        %v2695 = vld [vmem:[%s2685 + $0x48] sm:$0xff]
        %v2696 = vld [vmem:[%s2685 + $0x50] sm:$0xff]
        %v2697 = vld [vmem:[%s2685 + $0x58] sm:$0xff]
        %v2698 = vld [vmem:[%s2685 + $0x60] sm:$0xff]
        %v2699 = vld [vmem:[%s2685 + $0x68] sm:$0xff]
        %v2700 = vld [vmem:[%s2685 + $0x70] sm:$0xff]
        %v2701 = vld [vmem:[%s2685 + $0x78] sm:$0xff]
        %v2702 = vld [vmem:[%s2685 + $0x80] sm:$0xff]
        %v2703 = vld [vmem:[%s2685 + $0x88] sm:$0xff]
        %v2704 = vld [vmem:[%s2685 + $0x90] sm:$0xff]
        %v2705 = vld [vmem:[%s2685 + $0x98] sm:$0xff]
        %v2706 = vld [vmem:[%s2685 + $0xa0] sm:$0xff]
        %v2707 = vld [vmem:[%s2685 + $0xa8] sm:$0xff]
        %v2708 = vld [vmem:[%s2685 + $0xb0] sm:$0xff]
        %v2709 = vld [vmem:[%s2685 + $0xb8] sm:$0xff]
        %v2710 = vld [vmem:[%s2685 + $0xc0] sm:$0xff]
        %v2711 = vld [vmem:[%s2685 + $0xc8] sm:$0xff]
        %v2712 = vld [vmem:[%s2685 + $0xd0] sm:$0xff]
        %v2713 = vld [vmem:[%s2685 + $0xd8] sm:$0xff]
        %v2714 = vld [vmem:[%s2685 + $0xe0] sm:$0xff]
        %v2715 = vld [vmem:[%s2685 + $0xe8] sm:$0xff]
        %v2716 = vld [vmem:[%s2685 + $0xf0] sm:$0xff]
        %v2717 = vld [vmem:[%s2685 + $0xf8] sm:$0xff]
        %v2718 = vld [vmem:[%s2685 + $0x100] sm:$0xff]
        %v2719 = vld [vmem:[%s2685 + $0x108] sm:$0xff]
        %v2720 = vld [vmem:[%s2685 + $0x110] sm:$0xff]
        %v2721 = vld [vmem:[%s2685 + $0x118] sm:$0xff]
        %v2722 = vld [vmem:[%s2685 + $0x120] sm:$0xff]
        %v2723 = vld [vmem:[%s2685 + $0x128] sm:$0xff]
        %v2724 = vld [vmem:[%s2685 + $0x130] sm:$0xff]
        %v2725 = vld [vmem:[%s2685 + $0x138] sm:$0xff]
        %v2726 = vld [vmem:[%s2685 + $0x140] sm:$0xff]
        %v2727 = vld [vmem:[%s2685 + $0x148] sm:$0xff]
        %v2728 = vld [vmem:[%s2685 + $0x150] sm:$0xff]
        %v2729 = vld [vmem:[%s2685 + $0x158] sm:$0xff]
        %v2730 = vld [vmem:[%s2685 + $0x160] sm:$0xff]
        %v2731 = vld [vmem:[%s2685 + $0x168] sm:$0xff]
        %v2732 = vld [vmem:[%s2685 + $0x170] sm:$0xff]
        %v2733 = vld [vmem:[%s2685 + $0x178] sm:$0xff]
        %2734 = vmatprep.subr.mxu0 0.0
        %2735 = vmatpush1.msra.mxu0 %v2686
        %2736 = vmatprep.subr.mxu0 0.0
        %2737 = vmatpush1.msra.mxu0 %v2687
        %2738 = vmatprep.subr.mxu0 0.0
        %2739 = vmatpush1.msra.mxu0 %v2688
        %2740 = vmatprep.subr.mxu0 0.0
        %2741 = vmatpush1.msra.mxu0 %v2689
        %2742 = vmatprep.subr.mxu0 0.0
        %2743 = vmatpush1.msra.mxu0 %v2690
        %2744 = vmatprep.subr.mxu0 0.0
        %2745 = vmatpush1.msra.mxu0 %v2691
        %2746 = vmatprep.subr.mxu0 0.0
        %2747 = vmatpush1.msra.mxu0 %v2692
        %2748 = vmatprep.subr.mxu0 0.0
        %2749 = vmatpush1.msra.mxu0 %v2693
        %2750 = vmatprep.subr.mxu0 0.0
        %2751 = vmatpush1.msra.mxu0 %v2694
        %2752 = vmatprep.subr.mxu0 0.0
        %2753 = vmatpush1.msra.mxu0 %v2695
        %2754 = vmatprep.subr.mxu0 0.0
        %2755 = vmatpush1.msra.mxu0 %v2696
        %2756 = vmatprep.subr.mxu0 0.0
        %2757 = vmatpush1.msra.mxu0 %v2697
        %2758 = vmatprep.subr.mxu0 0.0
        %2759 = vmatpush1.msra.mxu0 %v2698
        %2760 = vmatprep.subr.mxu0 0.0
        %2761 = vmatpush1.msra.mxu0 %v2699
        %2762 = vmatprep.subr.mxu0 0.0
        %2763 = vmatpush1.msra.mxu0 %v2700
        %2764 = vmatprep.subr.mxu0 0.0
        %2765 = vmatpush1.msra.mxu0 %v2701
        %2766 = vmatprep.subr.mxu0 0.0
        %2767 = vmatpush1.msra.mxu0 %v2702
        %2768 = vmatprep.subr.mxu0 0.0
        %2769 = vmatpush1.msra.mxu0 %v2703
        %2770 = vmatprep.subr.mxu0 0.0
        %2771 = vmatpush1.msra.mxu0 %v2704
        %2772 = vmatprep.subr.mxu0 0.0
        %2773 = vmatpush1.msra.mxu0 %v2705
        %2774 = vmatprep.subr.mxu0 0.0
        %2775 = vmatpush1.msra.mxu0 %v2706
        %2776 = vmatprep.subr.mxu0 0.0
        %2777 = vmatpush1.msra.mxu0 %v2707
        %2778 = vmatprep.subr.mxu0 0.0
        %2779 = vmatpush1.msra.mxu0 %v2708
        %2780 = vmatprep.subr.mxu0 0.0
        %2781 = vmatpush1.msra.mxu0 %v2709
        %2782 = vmatprep.subr.mxu0 0.0
        %2783 = vmatpush1.msra.mxu0 %v2710
        %2784 = vmatprep.subr.mxu0 0.0
        %2785 = vmatpush1.msra.mxu0 %v2711
        %2786 = vmatprep.subr.mxu0 0.0
        %2787 = vmatpush1.msra.mxu0 %v2712
        %2788 = vmatprep.subr.mxu0 0.0
        %2789 = vmatpush1.msra.mxu0 %v2713
        %2790 = vmatprep.subr.mxu0 0.0
        %2791 = vmatpush1.msra.mxu0 %v2714
        %2792 = vmatprep.subr.mxu0 0.0
        %2793 = vmatpush1.msra.mxu0 %v2715
        %2794 = vmatprep.subr.mxu0 0.0
        %2795 = vmatpush1.msra.mxu0 %v2716
        %2796 = vmatprep.subr.mxu0 0.0
        %2797 = vmatpush1.msra.mxu0 %v2717
        %2798 = vmatprep.mubr.f32.mxu0 %v2661
        %2799 = vmatmul.mubr.f32.gmra.mrb[0].mxu0 %v2645
        %v2800 = vpop.f32.mrb[0].mxu0
        %v2801 = vadd.f32 0.0, %v2800
        %v2802 = vpop.f32.mrb[0].mxu0
        %2803 = vmatprep.mubr.f32.mxu0 %v2662
        %2804 = vmatmul.mubr.f32.gmra.mrb[0].mxu0 %v2646
        %v2805 = vpop.f32.mrb[0].mxu0
        %v2806 = vadd.f32 0.0, %v2805
        %v2807 = vpop.f32.mrb[0].mxu0
        %2808 = vmatprep.mubr.f32.mxu0 %v2663
        %2809 = vmatmul.mubr.f32.gmra.mrb[0].mxu0 %v2647
        %v2810 = vpop.f32.mrb[0].mxu0
        %v2811 = vadd.f32 0.0, %v2810
        %v2812 = vpop.f32.mrb[0].mxu0
        %2813 = vmatprep.mubr.f32.mxu0 %v2664
        %2814 = vmatmul.mubr.f32.gmra.mrb[0].mxu0 %v2648
        %v2815 = vpop.f32.mrb[0].mxu0
        %v2816 = vadd.f32 0.0, %v2815
        %v2817 = vpop.f32.mrb[0].mxu0
        %2818 = vmatprep.mubr.f32.mxu0 %v2665
        %2819 = vmatmul.mubr.f32.gmra.mrb[0].mxu0 %v2649
        %v2820 = vpop.f32.mrb[0].mxu0
        %v2821 = vadd.f32 0.0, %v2820
        %v2822 = vpop.f32.mrb[0].mxu0
        %2823 = vmatprep.mubr.f32.mxu0 %v2666
        %2824 = vmatmul.mubr.f32.gmra.mrb[0].mxu0 %v2650
        %v2825 = vpop.f32.mrb[0].mxu0
        %v2826 = vadd.f32 0.0, %v2825
        %v2827 = vpop.f32.mrb[0].mxu0
        %2828 = vmatprep.mubr.f32.mxu0 %v2667
        %2829 = vmatmul.mubr.f32.gmra.mrb[0].mxu0 %v2651
        %v2830 = vpop.f32.mrb[0].mxu0
        %v2831 = vadd.f32 0.0, %v2830
        %v2832 = vpop.f32.mrb[0].mxu0
        %2833 = vmatprep.mubr.f32.mxu0 %v2668
        %2834 = vmatmul.mubr.f32.gmra.mrb[0].mxu0 %v2652
        %v2835 = vpop.f32.mrb[0].mxu0
        %v2836 = vadd.f32 0.0, %v2835
        %v2837 = vpop.f32.mrb[0].mxu0
        %2838 = vmatprep.mubr.f32.mxu0 %v2669
        %2839 = vmatmul.mubr.f32.gmra.mrb[0].mxu0 %v2653
        %v2840 = vpop.f32.mrb[0].mxu0
        %v2841 = vadd.f32 0.0, %v2840
        %v2842 = vpop.f32.mrb[0].mxu0
        %2843 = vmatprep.mubr.f32.mxu0 %v2670
        %2844 = vmatmul.mubr.f32.gmra.mrb[0].mxu0 %v2654
        %v2845 = vpop.f32.mrb[0].mxu0
        %v2846 = vadd.f32 0.0, %v2845
        %v2847 = vpop.f32.mrb[0].mxu0
        %2848 = vmatprep.mubr.f32.mxu0 %v2671
        %2849 = vmatmul.mubr.f32.gmra.mrb[0].mxu0 %v2655
        %v2850 = vpop.f32.mrb[0].mxu0
        %v2851 = vadd.f32 0.0, %v2850
        %v2852 = vpop.f32.mrb[0].mxu0
        %2853 = vmatprep.mubr.f32.mxu0 %v2672
        %2854 = vmatmul.mubr.f32.gmra.mrb[0].mxu0 %v2656
        %v2855 = vpop.f32.mrb[0].mxu0
        %v2856 = vadd.f32 0.0, %v2855
        %v2857 = vpop.f32.mrb[0].mxu0
        %2858 = vmatprep.mubr.f32.mxu0 %v2673
        %2859 = vmatmul.mubr.f32.gmra.mrb[0].mxu0 %v2657
        %v2860 = vpop.f32.mrb[0].mxu0
        %v2861 = vadd.f32 0.0, %v2860
        %v2862 = vpop.f32.mrb[0].mxu0
        %2863 = vmatprep.mubr.f32.mxu0 %v2674
        %2864 = vmatmul.mubr.f32.gmra.mrb[0].mxu0 %v2658
        %v2865 = vpop.f32.mrb[0].mxu0
        %v2866 = vadd.f32 0.0, %v2865
        %v2867 = vpop.f32.mrb[0].mxu0
        %2868 = vmatprep.mubr.f32.mxu0 %v2675
        %2869 = vmatmul.mubr.f32.gmra.mrb[0].mxu0 %v2659
        %v2870 = vpop.f32.mrb[0].mxu0
        %v2871 = vadd.f32 0.0, %v2870
        %v2872 = vpop.f32.mrb[0].mxu0
        %2873 = vmatprep.mubr.f32.mxu0 %v2676
        %2874 = vmatmul.mubr.f32.gmra.mrb[0].mxu0 %v2660
        %v2875 = vpop.f32.mrb[0].mxu0
        %v2876 = vadd.f32 0.0, %v2875
        %v2877 = vpop.f32.mrb[0].mxu0
        %2878 = vdwg.mxu0
        %2879 = vmatprep.subr.mxu0 0.0
        %2880 = vmatpush1.msra.mxu0 %v2718
        %2881 = vmatprep.subr.mxu0 0.0
        %2882 = vmatpush1.msra.mxu0 %v2719
        %2883 = vmatprep.subr.mxu0 0.0
        %2884 = vmatpush1.msra.mxu0 %v2720
        %2885 = vmatprep.subr.mxu0 0.0
        %2886 = vmatpush1.msra.mxu0 %v2721
        %2887 = vmatprep.subr.mxu0 0.0
        %2888 = vmatpush1.msra.mxu0 %v2722
        %2889 = vmatprep.subr.mxu0 0.0
        %2890 = vmatpush1.msra.mxu0 %v2723
        %2891 = vmatprep.subr.mxu0 0.0
        %2892 = vmatpush1.msra.mxu0 %v2724
        %2893 = vmatprep.subr.mxu0 0.0
        %2894 = vmatpush1.msra.mxu0 %v2725
        %2895 = vmatprep.subr.mxu0 0.0
        %2896 = vmatpush1.msra.mxu0 %v2726
        %2897 = vmatprep.subr.mxu0 0.0
        %2898 = vmatpush1.msra.mxu0 %v2727
        %2899 = vmatprep.subr.mxu0 0.0
        %2900 = vmatpush1.msra.mxu0 %v2728
        %2901 = vmatprep.subr.mxu0 0.0
        %2902 = vmatpush1.msra.mxu0 %v2729
        %2903 = vmatprep.subr.mxu0 0.0
        %2904 = vmatpush1.msra.mxu0 %v2730
        %2905 = vmatprep.subr.mxu0 0.0
        %2906 = vmatpush1.msra.mxu0 %v2731
        %2907 = vmatprep.subr.mxu0 0.0
        %2908 = vmatpush1.msra.mxu0 %v2732
        %2909 = vmatprep.subr.mxu0 0.0
        %2910 = vmatpush1.msra.mxu0 %v2733
        %2911 = vmatprep.subr.mxu0 0.0
        %2912 = vmatpush1.msra.mxu0 0.0
        %2913 = vmatprep.subr.mxu0 0.0
        %2914 = vmatpush1.msra.mxu0 0.0
        %2915 = vmatprep.subr.mxu0 0.0
        %2916 = vmatpush1.msra.mxu0 0.0
        %2917 = vmatprep.subr.mxu0 0.0
        %2918 = vmatpush1.msra.mxu0 0.0
        %2919 = vmatprep.subr.mxu0 0.0
        %2920 = vmatpush1.msra.mxu0 0.0
        %2921 = vmatprep.subr.mxu0 0.0
        %2922 = vmatpush1.msra.mxu0 0.0
        %2923 = vmatprep.subr.mxu0 0.0
        %2924 = vmatpush1.msra.mxu0 0.0
        %2925 = vmatprep.subr.mxu0 0.0
        %2926 = vmatpush1.msra.mxu0 0.0
        %2927 = vmatprep.subr.mxu0 0.0
        %2928 = vmatpush1.msra.mxu0 0.0
        %2929 = vmatprep.subr.mxu0 0.0
        %2930 = vmatpush1.msra.mxu0 0.0
        %2931 = vmatprep.subr.mxu0 0.0
        %2932 = vmatpush1.msra.mxu0 0.0
        %2933 = vmatprep.subr.mxu0 0.0
        %2934 = vmatpush1.msra.mxu0 0.0
        %2935 = vmatprep.subr.mxu0 0.0
        %2936 = vmatpush1.msra.mxu0 0.0
        %2937 = vmatprep.subr.mxu0 0.0
        %2938 = vmatpush1.msra.mxu0 0.0
        %2939 = vmatprep.subr.mxu0 0.0
        %2940 = vmatpush1.msra.mxu0 0.0
        %2941 = vmatprep.subr.mxu0 0.0
        %2942 = vmatpush1.msra.mxu0 0.0
        %2943 = vmatprep.mubr.f32.mxu0 0.0
        %2944 = vmatmul.mubr.f32.gmra.mrb[0].mxu0 %v2646
        %v2945 = vpop.f32.mrb[0].mxu0
        %v2946 = vadd.f32 %v2801, %v2945
        %v2947 = vpop.f32.mrb[0].mxu0
        %2948 = vmatprep.mubr.f32.mxu0 0.0
        %2949 = vmatmul.mubr.f32.gmra.mrb[0].mxu0 %v2677
        %v2950 = vpop.f32.mrb[0].mxu0
        %v2951 = vadd.f32 %v2806, %v2950
        %v2952 = vpop.f32.mrb[0].mxu0
        %2953 = vmatprep.mubr.f32.mxu0 0.0
        %2954 = vmatmul.mubr.f32.gmra.mrb[0].mxu0 %v2648
        %v2955 = vpop.f32.mrb[0].mxu0
        %v2956 = vadd.f32 %v2811, %v2955
        %v2957 = vpop.f32.mrb[0].mxu0
        %2958 = vmatprep.mubr.f32.mxu0 0.0
        %2959 = vmatmul.mubr.f32.gmra.mrb[0].mxu0 %v2678
        %v2960 = vpop.f32.mrb[0].mxu0
        %v2961 = vadd.f32 %v2816, %v2960
        %v2962 = vpop.f32.mrb[0].mxu0
        %2963 = vmatprep.mubr.f32.mxu0 0.0
        %2964 = vmatmul.mubr.f32.gmra.mrb[0].mxu0 %v2650
        %v2965 = vpop.f32.mrb[0].mxu0
        %v2966 = vadd.f32 %v2821, %v2965
        %v2967 = vpop.f32.mrb[0].mxu0
        %2968 = vmatprep.mubr.f32.mxu0 0.0
        %2969 = vmatmul.mubr.f32.gmra.mrb[0].mxu0 %v2679
        %v2970 = vpop.f32.mrb[0].mxu0
        %v2971 = vadd.f32 %v2826, %v2970
        %v2972 = vpop.f32.mrb[0].mxu0
        %2973 = vmatprep.mubr.f32.mxu0 0.0
        %2974 = vmatmul.mubr.f32.gmra.mrb[0].mxu0 %v2652
        %v2975 = vpop.f32.mrb[0].mxu0
        %v2976 = vadd.f32 %v2831, %v2975
        %v2977 = vpop.f32.mrb[0].mxu0
        %2978 = vmatprep.mubr.f32.mxu0 0.0
        %2979 = vmatmul.mubr.f32.gmra.mrb[0].mxu0 %v2680
        %v2980 = vpop.f32.mrb[0].mxu0
        %v2981 = vadd.f32 %v2836, %v2980
        %v2982 = vpop.f32.mrb[0].mxu0
        %2983 = vmatprep.mubr.f32.mxu0 0.0
        %2984 = vmatmul.mubr.f32.gmra.mrb[0].mxu0 %v2654
        %v2985 = vpop.f32.mrb[0].mxu0
        %v2986 = vadd.f32 %v2841, %v2985
        %v2987 = vpop.f32.mrb[0].mxu0
        %2988 = vmatprep.mubr.f32.mxu0 0.0
        %2989 = vmatmul.mubr.f32.gmra.mrb[0].mxu0 %v2681
        %v2990 = vpop.f32.mrb[0].mxu0
        %v2991 = vadd.f32 %v2846, %v2990
        %v2992 = vpop.f32.mrb[0].mxu0
        %2993 = vmatprep.mubr.f32.mxu0 0.0
        %2994 = vmatmul.mubr.f32.gmra.mrb[0].mxu0 %v2656
        %v2995 = vpop.f32.mrb[0].mxu0
        %v2996 = vadd.f32 %v2851, %v2995
        %v2997 = vpop.f32.mrb[0].mxu0
        %2998 = vmatprep.mubr.f32.mxu0 0.0
        %2999 = vmatmul.mubr.f32.gmra.mrb[0].mxu0 %v2682
        %v3000 = vpop.f32.mrb[0].mxu0
        %v3001 = vadd.f32 %v2856, %v3000
        %v3002 = vpop.f32.mrb[0].mxu0
        %3003 = vmatprep.mubr.f32.mxu0 0.0
        %3004 = vmatmul.mubr.f32.gmra.mrb[0].mxu0 %v2658
        %v3005 = vpop.f32.mrb[0].mxu0
        %v3006 = vadd.f32 %v2861, %v3005
        %v3007 = vpop.f32.mrb[0].mxu0
        %3008 = vmatprep.mubr.f32.mxu0 0.0
        %3009 = vmatmul.mubr.f32.gmra.mrb[0].mxu0 %v2683
        %v3010 = vpop.f32.mrb[0].mxu0
        %v3011 = vadd.f32 %v2866, %v3010
        %v3012 = vpop.f32.mrb[0].mxu0
        %3013 = vmatprep.mubr.f32.mxu0 0.0
        %3014 = vmatmul.mubr.f32.gmra.mrb[0].mxu0 %v2660
        %v3015 = vpop.f32.mrb[0].mxu0
        %v3016 = vadd.f32 %v2871, %v3015
        %v3017 = vpop.f32.mrb[0].mxu0
        %3018 = vmatprep.mubr.f32.mxu0 0.0
        %3019 = vmatmul.mubr.f32.gmra.mrb[0].mxu0 %v2684
        %v3020 = vpop.f32.mrb[0].mxu0
        %v3021 = vadd.f32 %v2876, %v3020
        %v3022 = vpop.f32.mrb[0].mxu0
        %3023 = vdwg.mxu0
        %v3024 = vadd.f32 %v2629, %v2946
        %v3025 = vadd.f32 %v2630, %v2951
        %v3026 = vadd.f32 %v2631, %v2956
        %v3027 = vadd.f32 %v2632, %v2961
        %v3028 = vadd.f32 %v2633, %v2966
        %v3029 = vadd.f32 %v2634, %v2971
        %v3030 = vadd.f32 %v2635, %v2976
        %v3031 = vadd.f32 %v2636, %v2981
        %v3032 = vadd.f32 %v2637, %v2986
        %v3033 = vadd.f32 %v2638, %v2991
        %v3034 = vadd.f32 %v2639, %v2996
        %v3035 = vadd.f32 %v2640, %v3001
        %v3036 = vadd.f32 %v2641, %v3006
        %v3037 = vadd.f32 %v2642, %v3011
        %v3038 = vadd.f32 %v2643, %v3016
        %v3039 = vadd.f32 %v2644, %v3021
        %v3040 = vld [vmem:[%s642] sm:$0xff]
        %v3041 = vld [vmem:[%s642 + $0x8] sm:$0xff]
        %v3042 = vld [vmem:[%s642 + $0x18] sm:$0xff]
        %v3043 = vld [vmem:[%s642 + $0x20] sm:$0xff]
        %v3044 = vld [vmem:[%s642 + $0x30] sm:$0xff]
        %v3045 = vld [vmem:[%s642 + $0x38] sm:$0xff]
        %v3046 = vld [vmem:[%s642 + $0x48] sm:$0xff]
        %v3047 = vld [vmem:[%s642 + $0x50] sm:$0xff]
        %v3048 = vld [vmem:[%s642 + $0x60] sm:$0xff]
        %v3049 = vld [vmem:[%s642 + $0x68] sm:$0xff]
        %v3050 = vld [vmem:[%s642 + $0x78] sm:$0xff]
        %v3051 = vld [vmem:[%s642 + $0x80] sm:$0xff]
        %v3052 = vld [vmem:[%s642 + $0x90] sm:$0xff]
        %v3053 = vld [vmem:[%s642 + $0x98] sm:$0xff]
        %v3054 = vld [vmem:[%s642 + $0xa8] sm:$0xff]
        %v3055 = vld [vmem:[%s642 + $0xb0] sm:$0xff]
        %v3056 = vld [vmem:[%s642 + $0x10] sm:$0xff]
        %v3057 = vld [vmem:[%s642 + $0x28] sm:$0xff]
        %v3058 = vld [vmem:[%s642 + $0x40] sm:$0xff]
        %v3059 = vld [vmem:[%s642 + $0x58] sm:$0xff]
        %v3060 = vld [vmem:[%s642 + $0x70] sm:$0xff]
        %v3061 = vld [vmem:[%s642 + $0x88] sm:$0xff]
        %v3062 = vld [vmem:[%s642 + $0xa0] sm:$0xff]
        %v3063 = vld [vmem:[%s642 + $0xb8] sm:$0xff]
        %s3064 = scalar_lea.vmem [#allocation4], 2688
        %v3065 = vld [vmem:[%s3064] sm:$0xff]
        %v3066 = vld [vmem:[%s3064 + $0x8] sm:$0xff]
        %v3067 = vld [vmem:[%s3064 + $0x10] sm:$0xff]
        %v3068 = vld [vmem:[%s3064 + $0x18] sm:$0xff]
        %v3069 = vld [vmem:[%s3064 + $0x20] sm:$0xff]
        %v3070 = vld [vmem:[%s3064 + $0x28] sm:$0xff]
        %v3071 = vld [vmem:[%s3064 + $0x30] sm:$0xff]
        %v3072 = vld [vmem:[%s3064 + $0x38] sm:$0xff]
        %v3073 = vld [vmem:[%s3064 + $0x40] sm:$0xff]
        %v3074 = vld [vmem:[%s3064 + $0x48] sm:$0xff]
        %v3075 = vld [vmem:[%s3064 + $0x50] sm:$0xff]
        %v3076 = vld [vmem:[%s3064 + $0x58] sm:$0xff]
        %v3077 = vld [vmem:[%s3064 + $0x60] sm:$0xff]
        %v3078 = vld [vmem:[%s3064 + $0x68] sm:$0xff]
        %v3079 = vld [vmem:[%s3064 + $0x70] sm:$0xff]
        %v3080 = vld [vmem:[%s3064 + $0x78] sm:$0xff]
        %v3081 = vld [vmem:[%s3064 + $0x80] sm:$0xff]
        %v3082 = vld [vmem:[%s3064 + $0x88] sm:$0xff]
        %v3083 = vld [vmem:[%s3064 + $0x90] sm:$0xff]
        %v3084 = vld [vmem:[%s3064 + $0x98] sm:$0xff]
        %v3085 = vld [vmem:[%s3064 + $0xa0] sm:$0xff]
        %v3086 = vld [vmem:[%s3064 + $0xa8] sm:$0xff]
        %v3087 = vld [vmem:[%s3064 + $0xb0] sm:$0xff]
        %v3088 = vld [vmem:[%s3064 + $0xb8] sm:$0xff]
        %v3089 = vld [vmem:[%s3064 + $0xc0] sm:$0xff]
        %v3090 = vld [vmem:[%s3064 + $0xc8] sm:$0xff]
        %v3091 = vld [vmem:[%s3064 + $0xd0] sm:$0xff]
        %v3092 = vld [vmem:[%s3064 + $0xd8] sm:$0xff]
        %v3093 = vld [vmem:[%s3064 + $0xe0] sm:$0xff]
        %v3094 = vld [vmem:[%s3064 + $0xe8] sm:$0xff]
        %v3095 = vld [vmem:[%s3064 + $0xf0] sm:$0xff]
        %v3096 = vld [vmem:[%s3064 + $0xf8] sm:$0xff]
        %v3097 = vld [vmem:[%s3064 + $0x100] sm:$0xff]
        %v3098 = vld [vmem:[%s3064 + $0x108] sm:$0xff]
        %v3099 = vld [vmem:[%s3064 + $0x110] sm:$0xff]
        %v3100 = vld [vmem:[%s3064 + $0x118] sm:$0xff]
        %v3101 = vld [vmem:[%s3064 + $0x120] sm:$0xff]
        %v3102 = vld [vmem:[%s3064 + $0x128] sm:$0xff]
        %v3103 = vld [vmem:[%s3064 + $0x130] sm:$0xff]
        %v3104 = vld [vmem:[%s3064 + $0x138] sm:$0xff]
        %v3105 = vld [vmem:[%s3064 + $0x140] sm:$0xff]
        %v3106 = vld [vmem:[%s3064 + $0x148] sm:$0xff]
        %v3107 = vld [vmem:[%s3064 + $0x150] sm:$0xff]
        %v3108 = vld [vmem:[%s3064 + $0x158] sm:$0xff]
        %v3109 = vld [vmem:[%s3064 + $0x160] sm:$0xff]
        %v3110 = vld [vmem:[%s3064 + $0x168] sm:$0xff]
        %v3111 = vld [vmem:[%s3064 + $0x170] sm:$0xff]
        %v3112 = vld [vmem:[%s3064 + $0x178] sm:$0xff]
        %3113 = vmatprep.subr.mxu0 0.0
        %3114 = vmatpush1.msra.mxu0 %v3065
        %3115 = vmatprep.subr.mxu0 0.0
        %3116 = vmatpush1.msra.mxu0 %v3066
        %3117 = vmatprep.subr.mxu0 0.0
        %3118 = vmatpush1.msra.mxu0 %v3067
        %3119 = vmatprep.subr.mxu0 0.0
        %3120 = vmatpush1.msra.mxu0 %v3068
        %3121 = vmatprep.subr.mxu0 0.0
        %3122 = vmatpush1.msra.mxu0 %v3069
        %3123 = vmatprep.subr.mxu0 0.0
        %3124 = vmatpush1.msra.mxu0 %v3070
        %3125 = vmatprep.subr.mxu0 0.0
        %3126 = vmatpush1.msra.mxu0 %v3071
        %3127 = vmatprep.subr.mxu0 0.0
        %3128 = vmatpush1.msra.mxu0 %v3072
        %3129 = vmatprep.subr.mxu0 0.0
        %3130 = vmatpush1.msra.mxu0 %v3073
        %3131 = vmatprep.subr.mxu0 0.0
        %3132 = vmatpush1.msra.mxu0 %v3074
        %3133 = vmatprep.subr.mxu0 0.0
        %3134 = vmatpush1.msra.mxu0 %v3075
        %3135 = vmatprep.subr.mxu0 0.0
        %3136 = vmatpush1.msra.mxu0 %v3076
        %3137 = vmatprep.subr.mxu0 0.0
        %3138 = vmatpush1.msra.mxu0 %v3077
        %3139 = vmatprep.subr.mxu0 0.0
        %3140 = vmatpush1.msra.mxu0 %v3078
        %3141 = vmatprep.subr.mxu0 0.0
        %3142 = vmatpush1.msra.mxu0 %v3079
        %3143 = vmatprep.subr.mxu0 0.0
        %3144 = vmatpush1.msra.mxu0 %v3080
        %3145 = vmatprep.subr.mxu0 0.0
        %3146 = vmatpush1.msra.mxu0 %v3081
        %3147 = vmatprep.subr.mxu0 0.0
        %3148 = vmatpush1.msra.mxu0 %v3082
        %3149 = vmatprep.subr.mxu0 0.0
        %3150 = vmatpush1.msra.mxu0 %v3083
        %3151 = vmatprep.subr.mxu0 0.0
        %3152 = vmatpush1.msra.mxu0 %v3084
        %3153 = vmatprep.subr.mxu0 0.0
        %3154 = vmatpush1.msra.mxu0 %v3085
        %3155 = vmatprep.subr.mxu0 0.0
        %3156 = vmatpush1.msra.mxu0 %v3086
        %3157 = vmatprep.subr.mxu0 0.0
        %3158 = vmatpush1.msra.mxu0 %v3087
        %3159 = vmatprep.subr.mxu0 0.0
        %3160 = vmatpush1.msra.mxu0 %v3088
        %3161 = vmatprep.subr.mxu0 0.0
        %3162 = vmatpush1.msra.mxu0 %v3089
        %3163 = vmatprep.subr.mxu0 0.0
        %3164 = vmatpush1.msra.mxu0 %v3090
        %3165 = vmatprep.subr.mxu0 0.0
        %3166 = vmatpush1.msra.mxu0 %v3091
        %3167 = vmatprep.subr.mxu0 0.0
        %3168 = vmatpush1.msra.mxu0 %v3092
        %3169 = vmatprep.subr.mxu0 0.0
        %3170 = vmatpush1.msra.mxu0 %v3093
        %3171 = vmatprep.subr.mxu0 0.0
        %3172 = vmatpush1.msra.mxu0 %v3094
        %3173 = vmatprep.subr.mxu0 0.0
        %3174 = vmatpush1.msra.mxu0 %v3095
        %3175 = vmatprep.subr.mxu0 0.0
        %3176 = vmatpush1.msra.mxu0 %v3096
        %3177 = vmatprep.mubr.f32.mxu0 %v659
        %3178 = vmatmul.mubr.f32.gmra.mrb[0].mxu0 %v3040
        %v3179 = vpop.f32.mrb[0].mxu0
        %v3180 = vadd.f32 0.0, %v3179
        %v3181 = vpop.f32.mrb[0].mxu0
        %3182 = vmatprep.mubr.f32.mxu0 %v660
        %3183 = vmatmul.mubr.f32.gmra.mrb[0].mxu0 %v3041
        %v3184 = vpop.f32.mrb[0].mxu0
        %v3185 = vadd.f32 0.0, %v3184
        %v3186 = vpop.f32.mrb[0].mxu0
        %3187 = vmatprep.mubr.f32.mxu0 %v661
        %3188 = vmatmul.mubr.f32.gmra.mrb[0].mxu0 %v3042
        %v3189 = vpop.f32.mrb[0].mxu0
        %v3190 = vadd.f32 0.0, %v3189
        %v3191 = vpop.f32.mrb[0].mxu0
        %3192 = vmatprep.mubr.f32.mxu0 %v662
        %3193 = vmatmul.mubr.f32.gmra.mrb[0].mxu0 %v3043
        %v3194 = vpop.f32.mrb[0].mxu0
        %v3195 = vadd.f32 0.0, %v3194
        %v3196 = vpop.f32.mrb[0].mxu0
        %3197 = vmatprep.mubr.f32.mxu0 %v663
        %3198 = vmatmul.mubr.f32.gmra.mrb[0].mxu0 %v3044
        %v3199 = vpop.f32.mrb[0].mxu0
        %v3200 = vadd.f32 0.0, %v3199
        %v3201 = vpop.f32.mrb[0].mxu0
        %3202 = vmatprep.mubr.f32.mxu0 %v664
        %3203 = vmatmul.mubr.f32.gmra.mrb[0].mxu0 %v3045
        %v3204 = vpop.f32.mrb[0].mxu0
        %v3205 = vadd.f32 0.0, %v3204
        %v3206 = vpop.f32.mrb[0].mxu0
        %3207 = vmatprep.mubr.f32.mxu0 %v665
        %3208 = vmatmul.mubr.f32.gmra.mrb[0].mxu0 %v3046
        %v3209 = vpop.f32.mrb[0].mxu0
        %v3210 = vadd.f32 0.0, %v3209
        %v3211 = vpop.f32.mrb[0].mxu0
        %3212 = vmatprep.mubr.f32.mxu0 %v666
        %3213 = vmatmul.mubr.f32.gmra.mrb[0].mxu0 %v3047
        %v3214 = vpop.f32.mrb[0].mxu0
        %v3215 = vadd.f32 0.0, %v3214
        %v3216 = vpop.f32.mrb[0].mxu0
        %3217 = vmatprep.mubr.f32.mxu0 %v667
        %3218 = vmatmul.mubr.f32.gmra.mrb[0].mxu0 %v3048
        %v3219 = vpop.f32.mrb[0].mxu0
        %v3220 = vadd.f32 0.0, %v3219
        %v3221 = vpop.f32.mrb[0].mxu0
        %3222 = vmatprep.mubr.f32.mxu0 %v668
        %3223 = vmatmul.mubr.f32.gmra.mrb[0].mxu0 %v3049
        %v3224 = vpop.f32.mrb[0].mxu0
        %v3225 = vadd.f32 0.0, %v3224
        %v3226 = vpop.f32.mrb[0].mxu0
        %3227 = vmatprep.mubr.f32.mxu0 %v669
        %3228 = vmatmul.mubr.f32.gmra.mrb[0].mxu0 %v3050
        %v3229 = vpop.f32.mrb[0].mxu0
        %v3230 = vadd.f32 0.0, %v3229
        %v3231 = vpop.f32.mrb[0].mxu0
        %3232 = vmatprep.mubr.f32.mxu0 %v670
        %3233 = vmatmul.mubr.f32.gmra.mrb[0].mxu0 %v3051
        %v3234 = vpop.f32.mrb[0].mxu0
        %v3235 = vadd.f32 0.0, %v3234
        %v3236 = vpop.f32.mrb[0].mxu0
        %3237 = vmatprep.mubr.f32.mxu0 %v671
        %3238 = vmatmul.mubr.f32.gmra.mrb[0].mxu0 %v3052
        %v3239 = vpop.f32.mrb[0].mxu0
        %v3240 = vadd.f32 0.0, %v3239
        %v3241 = vpop.f32.mrb[0].mxu0
        %3242 = vmatprep.mubr.f32.mxu0 %v672
        %3243 = vmatmul.mubr.f32.gmra.mrb[0].mxu0 %v3053
        %v3244 = vpop.f32.mrb[0].mxu0
        %v3245 = vadd.f32 0.0, %v3244
        %v3246 = vpop.f32.mrb[0].mxu0
        %3247 = vmatprep.mubr.f32.mxu0 %v673
        %3248 = vmatmul.mubr.f32.gmra.mrb[0].mxu0 %v3054
        %v3249 = vpop.f32.mrb[0].mxu0
        %v3250 = vadd.f32 0.0, %v3249
        %v3251 = vpop.f32.mrb[0].mxu0
        %3252 = vmatprep.mubr.f32.mxu0 %v674
        %3253 = vmatmul.mubr.f32.gmra.mrb[0].mxu0 %v3055
        %v3254 = vpop.f32.mrb[0].mxu0
        %v3255 = vadd.f32 0.0, %v3254
        %v3256 = vpop.f32.mrb[0].mxu0
        %3257 = vdwg.mxu0
        %3258 = vmatprep.subr.mxu0 0.0
        %3259 = vmatpush1.msra.mxu0 %v3097
        %3260 = vmatprep.subr.mxu0 0.0
        %3261 = vmatpush1.msra.mxu0 %v3098
        %3262 = vmatprep.subr.mxu0 0.0
        %3263 = vmatpush1.msra.mxu0 %v3099
        %3264 = vmatprep.subr.mxu0 0.0
        %3265 = vmatpush1.msra.mxu0 %v3100
        %3266 = vmatprep.subr.mxu0 0.0
        %3267 = vmatpush1.msra.mxu0 %v3101
        %3268 = vmatprep.subr.mxu0 0.0
        %3269 = vmatpush1.msra.mxu0 %v3102
        %3270 = vmatprep.subr.mxu0 0.0
        %3271 = vmatpush1.msra.mxu0 %v3103
        %3272 = vmatprep.subr.mxu0 0.0
        %3273 = vmatpush1.msra.mxu0 %v3104
        %3274 = vmatprep.subr.mxu0 0.0
        %3275 = vmatpush1.msra.mxu0 %v3105
        %3276 = vmatprep.subr.mxu0 0.0
        %3277 = vmatpush1.msra.mxu0 %v3106
        %3278 = vmatprep.subr.mxu0 0.0
        %3279 = vmatpush1.msra.mxu0 %v3107
        %3280 = vmatprep.subr.mxu0 0.0
        %3281 = vmatpush1.msra.mxu0 %v3108
        %3282 = vmatprep.subr.mxu0 0.0
        %3283 = vmatpush1.msra.mxu0 %v3109
        %3284 = vmatprep.subr.mxu0 0.0
        %3285 = vmatpush1.msra.mxu0 %v3110
        %3286 = vmatprep.subr.mxu0 0.0
        %3287 = vmatpush1.msra.mxu0 %v3111
        %3288 = vmatprep.subr.mxu0 0.0
        %3289 = vmatpush1.msra.mxu0 %v3112
        %3290 = vmatprep.subr.mxu0 0.0
        %3291 = vmatpush1.msra.mxu0 0.0
        %3292 = vmatprep.subr.mxu0 0.0
        %3293 = vmatpush1.msra.mxu0 0.0
        %3294 = vmatprep.subr.mxu0 0.0
        %3295 = vmatpush1.msra.mxu0 0.0
        %3296 = vmatprep.subr.mxu0 0.0
        %3297 = vmatpush1.msra.mxu0 0.0
        %3298 = vmatprep.subr.mxu0 0.0
        %3299 = vmatpush1.msra.mxu0 0.0
        %3300 = vmatprep.subr.mxu0 0.0
        %3301 = vmatpush1.msra.mxu0 0.0
        %3302 = vmatprep.subr.mxu0 0.0
        %3303 = vmatpush1.msra.mxu0 0.0
        %3304 = vmatprep.subr.mxu0 0.0
        %3305 = vmatpush1.msra.mxu0 0.0
        %3306 = vmatprep.subr.mxu0 0.0
        %3307 = vmatpush1.msra.mxu0 0.0
        %3308 = vmatprep.subr.mxu0 0.0
        %3309 = vmatpush1.msra.mxu0 0.0
        %3310 = vmatprep.subr.mxu0 0.0
        %3311 = vmatpush1.msra.mxu0 0.0
        %3312 = vmatprep.subr.mxu0 0.0
        %3313 = vmatpush1.msra.mxu0 0.0
        %3314 = vmatprep.subr.mxu0 0.0
        %3315 = vmatpush1.msra.mxu0 0.0
        %3316 = vmatprep.subr.mxu0 0.0
        %3317 = vmatpush1.msra.mxu0 0.0
        %3318 = vmatprep.subr.mxu0 0.0
        %3319 = vmatpush1.msra.mxu0 0.0
        %3320 = vmatprep.subr.mxu0 0.0
        %3321 = vmatpush1.msra.mxu0 0.0
        %3322 = vmatprep.mubr.f32.mxu0 0.0
        %3323 = vmatmul.mubr.f32.gmra.mrb[0].mxu0 %v3041
        %v3324 = vpop.f32.mrb[0].mxu0
        %v3325 = vadd.f32 %v3180, %v3324
        %v3326 = vpop.f32.mrb[0].mxu0
        %3327 = vmatprep.mubr.f32.mxu0 0.0
        %3328 = vmatmul.mubr.f32.gmra.mrb[0].mxu0 %v3056
        %v3329 = vpop.f32.mrb[0].mxu0
        %v3330 = vadd.f32 %v3185, %v3329
        %v3331 = vpop.f32.mrb[0].mxu0
        %3332 = vmatprep.mubr.f32.mxu0 0.0
        %3333 = vmatmul.mubr.f32.gmra.mrb[0].mxu0 %v3043
        %v3334 = vpop.f32.mrb[0].mxu0
        %v3335 = vadd.f32 %v3190, %v3334
        %v3336 = vpop.f32.mrb[0].mxu0
        %3337 = vmatprep.mubr.f32.mxu0 0.0
        %3338 = vmatmul.mubr.f32.gmra.mrb[0].mxu0 %v3057
        %v3339 = vpop.f32.mrb[0].mxu0
        %v3340 = vadd.f32 %v3195, %v3339
        %v3341 = vpop.f32.mrb[0].mxu0
        %3342 = vmatprep.mubr.f32.mxu0 0.0
        %3343 = vmatmul.mubr.f32.gmra.mrb[0].mxu0 %v3045
        %v3344 = vpop.f32.mrb[0].mxu0
        %v3345 = vadd.f32 %v3200, %v3344
        %v3346 = vpop.f32.mrb[0].mxu0
        %3347 = vmatprep.mubr.f32.mxu0 0.0
        %3348 = vmatmul.mubr.f32.gmra.mrb[0].mxu0 %v3058
        %v3349 = vpop.f32.mrb[0].mxu0
        %v3350 = vadd.f32 %v3205, %v3349
        %v3351 = vpop.f32.mrb[0].mxu0
        %3352 = vmatprep.mubr.f32.mxu0 0.0
        %3353 = vmatmul.mubr.f32.gmra.mrb[0].mxu0 %v3047
        %v3354 = vpop.f32.mrb[0].mxu0
        %v3355 = vadd.f32 %v3210, %v3354
        %v3356 = vpop.f32.mrb[0].mxu0
        %3357 = vmatprep.mubr.f32.mxu0 0.0
        %3358 = vmatmul.mubr.f32.gmra.mrb[0].mxu0 %v3059
        %v3359 = vpop.f32.mrb[0].mxu0
        %v3360 = vadd.f32 %v3215, %v3359
        %v3361 = vpop.f32.mrb[0].mxu0
        %3362 = vmatprep.mubr.f32.mxu0 0.0
        %3363 = vmatmul.mubr.f32.gmra.mrb[0].mxu0 %v3049
        %v3364 = vpop.f32.mrb[0].mxu0
        %v3365 = vadd.f32 %v3220, %v3364
        %v3366 = vpop.f32.mrb[0].mxu0
        %3367 = vmatprep.mubr.f32.mxu0 0.0
        %3368 = vmatmul.mubr.f32.gmra.mrb[0].mxu0 %v3060
        %v3369 = vpop.f32.mrb[0].mxu0
        %v3370 = vadd.f32 %v3225, %v3369
        %v3371 = vpop.f32.mrb[0].mxu0
        %3372 = vmatprep.mubr.f32.mxu0 0.0
        %3373 = vmatmul.mubr.f32.gmra.mrb[0].mxu0 %v3051
        %v3374 = vpop.f32.mrb[0].mxu0
        %v3375 = vadd.f32 %v3230, %v3374
        %v3376 = vpop.f32.mrb[0].mxu0
        %3377 = vmatprep.mubr.f32.mxu0 0.0
        %3378 = vmatmul.mubr.f32.gmra.mrb[0].mxu0 %v3061
        %v3379 = vpop.f32.mrb[0].mxu0
        %v3380 = vadd.f32 %v3235, %v3379
        %v3381 = vpop.f32.mrb[0].mxu0
        %3382 = vmatprep.mubr.f32.mxu0 0.0
        %3383 = vmatmul.mubr.f32.gmra.mrb[0].mxu0 %v3053
        %v3384 = vpop.f32.mrb[0].mxu0
        %v3385 = vadd.f32 %v3240, %v3384
        %v3386 = vpop.f32.mrb[0].mxu0
        %3387 = vmatprep.mubr.f32.mxu0 0.0
        %3388 = vmatmul.mubr.f32.gmra.mrb[0].mxu0 %v3062
        %v3389 = vpop.f32.mrb[0].mxu0
        %v3390 = vadd.f32 %v3245, %v3389
        %v3391 = vpop.f32.mrb[0].mxu0
        %3392 = vmatprep.mubr.f32.mxu0 0.0
        %3393 = vmatmul.mubr.f32.gmra.mrb[0].mxu0 %v3055
        %v3394 = vpop.f32.mrb[0].mxu0
        %v3395 = vadd.f32 %v3250, %v3394
        %v3396 = vpop.f32.mrb[0].mxu0
        %3397 = vmatprep.mubr.f32.mxu0 0.0
        %3398 = vmatmul.mubr.f32.gmra.mrb[0].mxu0 %v3063
        %v3399 = vpop.f32.mrb[0].mxu0
        %v3400 = vadd.f32 %v3255, %v3399
        %v3401 = vpop.f32.mrb[0].mxu0
        %3402 = vdwg.mxu0
        %v3403 = vadd.f32 %v3024, %v3325
        %v3404 = vadd.f32 %v3025, %v3330
        %v3405 = vadd.f32 %v3026, %v3335
        %v3406 = vadd.f32 %v3027, %v3340
        %v3407 = vadd.f32 %v3028, %v3345
        %v3408 = vadd.f32 %v3029, %v3350
        %v3409 = vadd.f32 %v3030, %v3355
        %v3410 = vadd.f32 %v3031, %v3360
        %v3411 = vadd.f32 %v3032, %v3365
        %v3412 = vadd.f32 %v3033, %v3370
        %v3413 = vadd.f32 %v3034, %v3375
        %v3414 = vadd.f32 %v3035, %v3380
        %v3415 = vadd.f32 %v3036, %v3385
        %v3416 = vadd.f32 %v3037, %v3390
        %v3417 = vadd.f32 %v3038, %v3395
        %v3418 = vadd.f32 %v3039, %v3400
        %s3419 = scalar_lea.vmem %s200, 192 [#allocation2]
        %v3420 = vld [vmem:[%s3419] sm:$0xff]
        %v3421 = vld [vmem:[%s3419 + $0x8] sm:$0xff]
        %v3422 = vld [vmem:[%s3419 + $0x18] sm:$0xff]
        %v3423 = vld [vmem:[%s3419 + $0x20] sm:$0xff]
        %v3424 = vld [vmem:[%s3419 + $0x30] sm:$0xff]
        %v3425 = vld [vmem:[%s3419 + $0x38] sm:$0xff]
        %v3426 = vld [vmem:[%s3419 + $0x48] sm:$0xff]
        %v3427 = vld [vmem:[%s3419 + $0x50] sm:$0xff]
        %v3428 = vld [vmem:[%s3419 + $0x60] sm:$0xff]
        %v3429 = vld [vmem:[%s3419 + $0x68] sm:$0xff]
        %v3430 = vld [vmem:[%s3419 + $0x78] sm:$0xff]
        %v3431 = vld [vmem:[%s3419 + $0x80] sm:$0xff]
        %v3432 = vld [vmem:[%s3419 + $0x90] sm:$0xff]
        %v3433 = vld [vmem:[%s3419 + $0x98] sm:$0xff]
        %v3434 = vld [vmem:[%s3419 + $0xa8] sm:$0xff]
        %v3435 = vld [vmem:[%s3419 + $0xb0] sm:$0xff]
        %v3436 = vld [vmem:[%s3419 + $0x4] sm:$0xff]
        %v3437 = vld [vmem:[%s3419 + $0xc] sm:$0xff]
        %v3438 = vld [vmem:[%s3419 + $0x1c] sm:$0xff]
        %v3439 = vld [vmem:[%s3419 + $0x24] sm:$0xff]
        %v3440 = vld [vmem:[%s3419 + $0x34] sm:$0xff]
        %v3441 = vld [vmem:[%s3419 + $0x3c] sm:$0xff]
        %v3442 = vld [vmem:[%s3419 + $0x4c] sm:$0xff]
        %v3443 = vld [vmem:[%s3419 + $0x54] sm:$0xff]
        %v3444 = vld [vmem:[%s3419 + $0x64] sm:$0xff]
        %v3445 = vld [vmem:[%s3419 + $0x6c] sm:$0xff]
        %v3446 = vld [vmem:[%s3419 + $0x7c] sm:$0xff]
        %v3447 = vld [vmem:[%s3419 + $0x84] sm:$0xff]
        %v3448 = vld [vmem:[%s3419 + $0x94] sm:$0xff]
        %v3449 = vld [vmem:[%s3419 + $0x9c] sm:$0xff]
        %v3450 = vld [vmem:[%s3419 + $0xac] sm:$0xff]
        %v3451 = vld [vmem:[%s3419 + $0xb4] sm:$0xff]
        %v3452 = vld [vmem:[%s3419 + $0x10] sm:$0xff]
        %v3453 = vld [vmem:[%s3419 + $0x28] sm:$0xff]
        %v3454 = vld [vmem:[%s3419 + $0x40] sm:$0xff]
        %v3455 = vld [vmem:[%s3419 + $0x58] sm:$0xff]
        %v3456 = vld [vmem:[%s3419 + $0x70] sm:$0xff]
        %v3457 = vld [vmem:[%s3419 + $0x88] sm:$0xff]
        %v3458 = vld [vmem:[%s3419 + $0xa0] sm:$0xff]
        %v3459 = vld [vmem:[%s3419 + $0xb8] sm:$0xff]
        %s3460 = scalar_lea.vmem [#allocation4], 3072
        %v3461 = vld [vmem:[%s3460] sm:$0xff]
        %v3462 = vld [vmem:[%s3460 + $0x8] sm:$0xff]
        %v3463 = vld [vmem:[%s3460 + $0x10] sm:$0xff]
        %v3464 = vld [vmem:[%s3460 + $0x18] sm:$0xff]
        %v3465 = vld [vmem:[%s3460 + $0x20] sm:$0xff]
        %v3466 = vld [vmem:[%s3460 + $0x28] sm:$0xff]
        %v3467 = vld [vmem:[%s3460 + $0x30] sm:$0xff]
        %v3468 = vld [vmem:[%s3460 + $0x38] sm:$0xff]
        %v3469 = vld [vmem:[%s3460 + $0x40] sm:$0xff]
        %v3470 = vld [vmem:[%s3460 + $0x48] sm:$0xff]
        %v3471 = vld [vmem:[%s3460 + $0x50] sm:$0xff]
        %v3472 = vld [vmem:[%s3460 + $0x58] sm:$0xff]
        %v3473 = vld [vmem:[%s3460 + $0x60] sm:$0xff]
        %v3474 = vld [vmem:[%s3460 + $0x68] sm:$0xff]
        %v3475 = vld [vmem:[%s3460 + $0x70] sm:$0xff]
        %v3476 = vld [vmem:[%s3460 + $0x78] sm:$0xff]
        %v3477 = vld [vmem:[%s3460 + $0x80] sm:$0xff]
        %v3478 = vld [vmem:[%s3460 + $0x88] sm:$0xff]
        %v3479 = vld [vmem:[%s3460 + $0x90] sm:$0xff]
        %v3480 = vld [vmem:[%s3460 + $0x98] sm:$0xff]
        %v3481 = vld [vmem:[%s3460 + $0xa0] sm:$0xff]
        %v3482 = vld [vmem:[%s3460 + $0xa8] sm:$0xff]
        %v3483 = vld [vmem:[%s3460 + $0xb0] sm:$0xff]
        %v3484 = vld [vmem:[%s3460 + $0xb8] sm:$0xff]
        %v3485 = vld [vmem:[%s3460 + $0xc0] sm:$0xff]
        %v3486 = vld [vmem:[%s3460 + $0xc8] sm:$0xff]
        %v3487 = vld [vmem:[%s3460 + $0xd0] sm:$0xff]
        %v3488 = vld [vmem:[%s3460 + $0xd8] sm:$0xff]
        %v3489 = vld [vmem:[%s3460 + $0xe0] sm:$0xff]
        %v3490 = vld [vmem:[%s3460 + $0xe8] sm:$0xff]
        %v3491 = vld [vmem:[%s3460 + $0xf0] sm:$0xff]
        %v3492 = vld [vmem:[%s3460 + $0xf8] sm:$0xff]
        %v3493 = vld [vmem:[%s3460 + $0x100] sm:$0xff]
        %v3494 = vld [vmem:[%s3460 + $0x108] sm:$0xff]
        %v3495 = vld [vmem:[%s3460 + $0x110] sm:$0xff]
        %v3496 = vld [vmem:[%s3460 + $0x118] sm:$0xff]
        %v3497 = vld [vmem:[%s3460 + $0x120] sm:$0xff]
        %v3498 = vld [vmem:[%s3460 + $0x128] sm:$0xff]
        %v3499 = vld [vmem:[%s3460 + $0x130] sm:$0xff]
        %v3500 = vld [vmem:[%s3460 + $0x138] sm:$0xff]
        %v3501 = vld [vmem:[%s3460 + $0x140] sm:$0xff]
        %v3502 = vld [vmem:[%s3460 + $0x148] sm:$0xff]
        %v3503 = vld [vmem:[%s3460 + $0x150] sm:$0xff]
        %v3504 = vld [vmem:[%s3460 + $0x158] sm:$0xff]
        %v3505 = vld [vmem:[%s3460 + $0x160] sm:$0xff]
        %v3506 = vld [vmem:[%s3460 + $0x168] sm:$0xff]
        %v3507 = vld [vmem:[%s3460 + $0x170] sm:$0xff]
        %v3508 = vld [vmem:[%s3460 + $0x178] sm:$0xff]
        %3509 = vmatprep.subr.mxu0 0.0
        %3510 = vmatpush1.msra.mxu0 %v3461
        %3511 = vmatprep.subr.mxu0 0.0
        %3512 = vmatpush1.msra.mxu0 %v3462
        %3513 = vmatprep.subr.mxu0 0.0
        %3514 = vmatpush1.msra.mxu0 %v3463
        %3515 = vmatprep.subr.mxu0 0.0
        %3516 = vmatpush1.msra.mxu0 %v3464
        %3517 = vmatprep.subr.mxu0 0.0
        %3518 = vmatpush1.msra.mxu0 %v3465
        %3519 = vmatprep.subr.mxu0 0.0
        %3520 = vmatpush1.msra.mxu0 %v3466
        %3521 = vmatprep.subr.mxu0 0.0
        %3522 = vmatpush1.msra.mxu0 %v3467
        %3523 = vmatprep.subr.mxu0 0.0
        %3524 = vmatpush1.msra.mxu0 %v3468
        %3525 = vmatprep.subr.mxu0 0.0
        %3526 = vmatpush1.msra.mxu0 %v3469
        %3527 = vmatprep.subr.mxu0 0.0
        %3528 = vmatpush1.msra.mxu0 %v3470
        %3529 = vmatprep.subr.mxu0 0.0
        %3530 = vmatpush1.msra.mxu0 %v3471
        %3531 = vmatprep.subr.mxu0 0.0
        %3532 = vmatpush1.msra.mxu0 %v3472
        %3533 = vmatprep.subr.mxu0 0.0
        %3534 = vmatpush1.msra.mxu0 %v3473
        %3535 = vmatprep.subr.mxu0 0.0
        %3536 = vmatpush1.msra.mxu0 %v3474
        %3537 = vmatprep.subr.mxu0 0.0
        %3538 = vmatpush1.msra.mxu0 %v3475
        %3539 = vmatprep.subr.mxu0 0.0
        %3540 = vmatpush1.msra.mxu0 %v3476
        %3541 = vmatprep.subr.mxu0 0.0
        %3542 = vmatpush1.msra.mxu0 %v3477
        %3543 = vmatprep.subr.mxu0 0.0
        %3544 = vmatpush1.msra.mxu0 %v3478
        %3545 = vmatprep.subr.mxu0 0.0
        %3546 = vmatpush1.msra.mxu0 %v3479
        %3547 = vmatprep.subr.mxu0 0.0
        %3548 = vmatpush1.msra.mxu0 %v3480
        %3549 = vmatprep.subr.mxu0 0.0
        %3550 = vmatpush1.msra.mxu0 %v3481
        %3551 = vmatprep.subr.mxu0 0.0
        %3552 = vmatpush1.msra.mxu0 %v3482
        %3553 = vmatprep.subr.mxu0 0.0
        %3554 = vmatpush1.msra.mxu0 %v3483
        %3555 = vmatprep.subr.mxu0 0.0
        %3556 = vmatpush1.msra.mxu0 %v3484
        %3557 = vmatprep.subr.mxu0 0.0
        %3558 = vmatpush1.msra.mxu0 %v3485
        %3559 = vmatprep.subr.mxu0 0.0
        %3560 = vmatpush1.msra.mxu0 %v3486
        %3561 = vmatprep.subr.mxu0 0.0
        %3562 = vmatpush1.msra.mxu0 %v3487
        %3563 = vmatprep.subr.mxu0 0.0
        %3564 = vmatpush1.msra.mxu0 %v3488
        %3565 = vmatprep.subr.mxu0 0.0
        %3566 = vmatpush1.msra.mxu0 %v3489
        %3567 = vmatprep.subr.mxu0 0.0
        %3568 = vmatpush1.msra.mxu0 %v3490
        %3569 = vmatprep.subr.mxu0 0.0
        %3570 = vmatpush1.msra.mxu0 %v3491
        %3571 = vmatprep.subr.mxu0 0.0
        %3572 = vmatpush1.msra.mxu0 %v3492
        %3573 = vmatprep.mubr.f32.mxu0 %v3436
        %3574 = vmatmul.mubr.f32.gmra.mrb[0].mxu0 %v3420
        %v3575 = vpop.f32.mrb[0].mxu0
        %v3576 = vadd.f32 0.0, %v3575
        %v3577 = vpop.f32.mrb[0].mxu0
        %3578 = vmatprep.mubr.f32.mxu0 %v3437
        %3579 = vmatmul.mubr.f32.gmra.mrb[0].mxu0 %v3421
        %v3580 = vpop.f32.mrb[0].mxu0
        %v3581 = vadd.f32 0.0, %v3580
        %v3582 = vpop.f32.mrb[0].mxu0
        %3583 = vmatprep.mubr.f32.mxu0 %v3438
        %3584 = vmatmul.mubr.f32.gmra.mrb[0].mxu0 %v3422
        %v3585 = vpop.f32.mrb[0].mxu0
        %v3586 = vadd.f32 0.0, %v3585
        %v3587 = vpop.f32.mrb[0].mxu0
        %3588 = vmatprep.mubr.f32.mxu0 %v3439
        %3589 = vmatmul.mubr.f32.gmra.mrb[0].mxu0 %v3423
        %v3590 = vpop.f32.mrb[0].mxu0
        %v3591 = vadd.f32 0.0, %v3590
        %v3592 = vpop.f32.mrb[0].mxu0
        %3593 = vmatprep.mubr.f32.mxu0 %v3440
        %3594 = vmatmul.mubr.f32.gmra.mrb[0].mxu0 %v3424
        %v3595 = vpop.f32.mrb[0].mxu0
        %v3596 = vadd.f32 0.0, %v3595
        %v3597 = vpop.f32.mrb[0].mxu0
        %3598 = vmatprep.mubr.f32.mxu0 %v3441
        %3599 = vmatmul.mubr.f32.gmra.mrb[0].mxu0 %v3425
        %v3600 = vpop.f32.mrb[0].mxu0
        %v3601 = vadd.f32 0.0, %v3600
        %v3602 = vpop.f32.mrb[0].mxu0
        %3603 = vmatprep.mubr.f32.mxu0 %v3442
        %3604 = vmatmul.mubr.f32.gmra.mrb[0].mxu0 %v3426
        %v3605 = vpop.f32.mrb[0].mxu0
        %v3606 = vadd.f32 0.0, %v3605
        %v3607 = vpop.f32.mrb[0].mxu0
        %3608 = vmatprep.mubr.f32.mxu0 %v3443
        %3609 = vmatmul.mubr.f32.gmra.mrb[0].mxu0 %v3427
        %v3610 = vpop.f32.mrb[0].mxu0
        %v3611 = vadd.f32 0.0, %v3610
        %v3612 = vpop.f32.mrb[0].mxu0
        %3613 = vmatprep.mubr.f32.mxu0 %v3444
        %3614 = vmatmul.mubr.f32.gmra.mrb[0].mxu0 %v3428
        %v3615 = vpop.f32.mrb[0].mxu0
        %v3616 = vadd.f32 0.0, %v3615
        %v3617 = vpop.f32.mrb[0].mxu0
        %3618 = vmatprep.mubr.f32.mxu0 %v3445
        %3619 = vmatmul.mubr.f32.gmra.mrb[0].mxu0 %v3429
        %v3620 = vpop.f32.mrb[0].mxu0
        %v3621 = vadd.f32 0.0, %v3620
        %v3622 = vpop.f32.mrb[0].mxu0
        %3623 = vmatprep.mubr.f32.mxu0 %v3446
        %3624 = vmatmul.mubr.f32.gmra.mrb[0].mxu0 %v3430
        %v3625 = vpop.f32.mrb[0].mxu0
        %v3626 = vadd.f32 0.0, %v3625
        %v3627 = vpop.f32.mrb[0].mxu0
        %3628 = vmatprep.mubr.f32.mxu0 %v3447
        %3629 = vmatmul.mubr.f32.gmra.mrb[0].mxu0 %v3431
        %v3630 = vpop.f32.mrb[0].mxu0
        %v3631 = vadd.f32 0.0, %v3630
        %v3632 = vpop.f32.mrb[0].mxu0
        %3633 = vmatprep.mubr.f32.mxu0 %v3448
        %3634 = vmatmul.mubr.f32.gmra.mrb[0].mxu0 %v3432
        %v3635 = vpop.f32.mrb[0].mxu0
        %v3636 = vadd.f32 0.0, %v3635
        %v3637 = vpop.f32.mrb[0].mxu0
        %3638 = vmatprep.mubr.f32.mxu0 %v3449
        %3639 = vmatmul.mubr.f32.gmra.mrb[0].mxu0 %v3433
        %v3640 = vpop.f32.mrb[0].mxu0
        %v3641 = vadd.f32 0.0, %v3640
        %v3642 = vpop.f32.mrb[0].mxu0
        %3643 = vmatprep.mubr.f32.mxu0 %v3450
        %3644 = vmatmul.mubr.f32.gmra.mrb[0].mxu0 %v3434
        %v3645 = vpop.f32.mrb[0].mxu0
        %v3646 = vadd.f32 0.0, %v3645
        %v3647 = vpop.f32.mrb[0].mxu0
        %3648 = vmatprep.mubr.f32.mxu0 %v3451
        %3649 = vmatmul.mubr.f32.gmra.mrb[0].mxu0 %v3435
        %v3650 = vpop.f32.mrb[0].mxu0
        %v3651 = vadd.f32 0.0, %v3650
        %v3652 = vpop.f32.mrb[0].mxu0
        %3653 = vdwg.mxu0
        %3654 = vmatprep.subr.mxu0 0.0
        %3655 = vmatpush1.msra.mxu0 %v3493
        %3656 = vmatprep.subr.mxu0 0.0
        %3657 = vmatpush1.msra.mxu0 %v3494
        %3658 = vmatprep.subr.mxu0 0.0
        %3659 = vmatpush1.msra.mxu0 %v3495
        %3660 = vmatprep.subr.mxu0 0.0
        %3661 = vmatpush1.msra.mxu0 %v3496
        %3662 = vmatprep.subr.mxu0 0.0
        %3663 = vmatpush1.msra.mxu0 %v3497
        %3664 = vmatprep.subr.mxu0 0.0
        %3665 = vmatpush1.msra.mxu0 %v3498
        %3666 = vmatprep.subr.mxu0 0.0
        %3667 = vmatpush1.msra.mxu0 %v3499
        %3668 = vmatprep.subr.mxu0 0.0
        %3669 = vmatpush1.msra.mxu0 %v3500
        %3670 = vmatprep.subr.mxu0 0.0
        %3671 = vmatpush1.msra.mxu0 %v3501
        %3672 = vmatprep.subr.mxu0 0.0
        %3673 = vmatpush1.msra.mxu0 %v3502
        %3674 = vmatprep.subr.mxu0 0.0
        %3675 = vmatpush1.msra.mxu0 %v3503
        %3676 = vmatprep.subr.mxu0 0.0
        %3677 = vmatpush1.msra.mxu0 %v3504
        %3678 = vmatprep.subr.mxu0 0.0
        %3679 = vmatpush1.msra.mxu0 %v3505
        %3680 = vmatprep.subr.mxu0 0.0
        %3681 = vmatpush1.msra.mxu0 %v3506
        %3682 = vmatprep.subr.mxu0 0.0
        %3683 = vmatpush1.msra.mxu0 %v3507
        %3684 = vmatprep.subr.mxu0 0.0
        %3685 = vmatpush1.msra.mxu0 %v3508
        %3686 = vmatprep.subr.mxu0 0.0
        %3687 = vmatpush1.msra.mxu0 0.0
        %3688 = vmatprep.subr.mxu0 0.0
        %3689 = vmatpush1.msra.mxu0 0.0
        %3690 = vmatprep.subr.mxu0 0.0
        %3691 = vmatpush1.msra.mxu0 0.0
        %3692 = vmatprep.subr.mxu0 0.0
        %3693 = vmatpush1.msra.mxu0 0.0
        %3694 = vmatprep.subr.mxu0 0.0
        %3695 = vmatpush1.msra.mxu0 0.0
        %3696 = vmatprep.subr.mxu0 0.0
        %3697 = vmatpush1.msra.mxu0 0.0
        %3698 = vmatprep.subr.mxu0 0.0
        %3699 = vmatpush1.msra.mxu0 0.0
        %3700 = vmatprep.subr.mxu0 0.0
        %3701 = vmatpush1.msra.mxu0 0.0
        %3702 = vmatprep.subr.mxu0 0.0
        %3703 = vmatpush1.msra.mxu0 0.0
        %3704 = vmatprep.subr.mxu0 0.0
        %3705 = vmatpush1.msra.mxu0 0.0
        %3706 = vmatprep.subr.mxu0 0.0
        %3707 = vmatpush1.msra.mxu0 0.0
        %3708 = vmatprep.subr.mxu0 0.0
        %3709 = vmatpush1.msra.mxu0 0.0
        %3710 = vmatprep.subr.mxu0 0.0
        %3711 = vmatpush1.msra.mxu0 0.0
        %3712 = vmatprep.subr.mxu0 0.0
        %3713 = vmatpush1.msra.mxu0 0.0
        %3714 = vmatprep.subr.mxu0 0.0
        %3715 = vmatpush1.msra.mxu0 0.0
        %3716 = vmatprep.subr.mxu0 0.0
        %3717 = vmatpush1.msra.mxu0 0.0
        %3718 = vmatprep.mubr.f32.mxu0 0.0
        %3719 = vmatmul.mubr.f32.gmra.mrb[0].mxu0 %v3421
        %v3720 = vpop.f32.mrb[0].mxu0
        %v3721 = vadd.f32 %v3576, %v3720
        %v3722 = vpop.f32.mrb[0].mxu0
        %3723 = vmatprep.mubr.f32.mxu0 0.0
        %3724 = vmatmul.mubr.f32.gmra.mrb[0].mxu0 %v3452
        %v3725 = vpop.f32.mrb[0].mxu0
        %v3726 = vadd.f32 %v3581, %v3725
        %v3727 = vpop.f32.mrb[0].mxu0
        %3728 = vmatprep.mubr.f32.mxu0 0.0
        %3729 = vmatmul.mubr.f32.gmra.mrb[0].mxu0 %v3423
        %v3730 = vpop.f32.mrb[0].mxu0
        %v3731 = vadd.f32 %v3586, %v3730
        %v3732 = vpop.f32.mrb[0].mxu0
        %3733 = vmatprep.mubr.f32.mxu0 0.0
        %3734 = vmatmul.mubr.f32.gmra.mrb[0].mxu0 %v3453
        %v3735 = vpop.f32.mrb[0].mxu0
        %v3736 = vadd.f32 %v3591, %v3735
        %v3737 = vpop.f32.mrb[0].mxu0
        %3738 = vmatprep.mubr.f32.mxu0 0.0
        %3739 = vmatmul.mubr.f32.gmra.mrb[0].mxu0 %v3425
        %v3740 = vpop.f32.mrb[0].mxu0
        %v3741 = vadd.f32 %v3596, %v3740
        %v3742 = vpop.f32.mrb[0].mxu0
        %3743 = vmatprep.mubr.f32.mxu0 0.0
        %3744 = vmatmul.mubr.f32.gmra.mrb[0].mxu0 %v3454
        %v3745 = vpop.f32.mrb[0].mxu0
        %v3746 = vadd.f32 %v3601, %v3745
        %v3747 = vpop.f32.mrb[0].mxu0
        %3748 = vmatprep.mubr.f32.mxu0 0.0
        %3749 = vmatmul.mubr.f32.gmra.mrb[0].mxu0 %v3427
        %v3750 = vpop.f32.mrb[0].mxu0
        %v3751 = vadd.f32 %v3606, %v3750
        %v3752 = vpop.f32.mrb[0].mxu0
        %3753 = vmatprep.mubr.f32.mxu0 0.0
        %3754 = vmatmul.mubr.f32.gmra.mrb[0].mxu0 %v3455
        %v3755 = vpop.f32.mrb[0].mxu0
        %v3756 = vadd.f32 %v3611, %v3755
        %v3757 = vpop.f32.mrb[0].mxu0
        %3758 = vmatprep.mubr.f32.mxu0 0.0
        %3759 = vmatmul.mubr.f32.gmra.mrb[0].mxu0 %v3429
        %v3760 = vpop.f32.mrb[0].mxu0
        %v3761 = vadd.f32 %v3616, %v3760
        %v3762 = vpop.f32.mrb[0].mxu0
        %3763 = vmatprep.mubr.f32.mxu0 0.0
        %3764 = vmatmul.mubr.f32.gmra.mrb[0].mxu0 %v3456
        %v3765 = vpop.f32.mrb[0].mxu0
        %v3766 = vadd.f32 %v3621, %v3765
        %v3767 = vpop.f32.mrb[0].mxu0
        %3768 = vmatprep.mubr.f32.mxu0 0.0
        %3769 = vmatmul.mubr.f32.gmra.mrb[0].mxu0 %v3431
        %v3770 = vpop.f32.mrb[0].mxu0
        %v3771 = vadd.f32 %v3626, %v3770
        %v3772 = vpop.f32.mrb[0].mxu0
        %3773 = vmatprep.mubr.f32.mxu0 0.0
        %3774 = vmatmul.mubr.f32.gmra.mrb[0].mxu0 %v3457
        %v3775 = vpop.f32.mrb[0].mxu0
        %v3776 = vadd.f32 %v3631, %v3775
        %v3777 = vpop.f32.mrb[0].mxu0
        %3778 = vmatprep.mubr.f32.mxu0 0.0
        %3779 = vmatmul.mubr.f32.gmra.mrb[0].mxu0 %v3433
        %v3780 = vpop.f32.mrb[0].mxu0
        %v3781 = vadd.f32 %v3636, %v3780
        %v3782 = vpop.f32.mrb[0].mxu0
        %3783 = vmatprep.mubr.f32.mxu0 0.0
        %3784 = vmatmul.mubr.f32.gmra.mrb[0].mxu0 %v3458
        %v3785 = vpop.f32.mrb[0].mxu0
        %v3786 = vadd.f32 %v3641, %v3785
        %v3787 = vpop.f32.mrb[0].mxu0
        %3788 = vmatprep.mubr.f32.mxu0 0.0
        %3789 = vmatmul.mubr.f32.gmra.mrb[0].mxu0 %v3435
        %v3790 = vpop.f32.mrb[0].mxu0
        %v3791 = vadd.f32 %v3646, %v3790
        %v3792 = vpop.f32.mrb[0].mxu0
        %3793 = vmatprep.mubr.f32.mxu0 0.0
        %3794 = vmatmul.mubr.f32.gmra.mrb[0].mxu0 %v3459
        %v3795 = vpop.f32.mrb[0].mxu0
        %v3796 = vadd.f32 %v3651, %v3795
        %v3797 = vpop.f32.mrb[0].mxu0
        %3798 = vdwg.mxu0
        %v3799 = vadd.f32 %v3403, %v3721
        %v3800 = vadd.f32 %v3404, %v3726
        %v3801 = vadd.f32 %v3405, %v3731
        %v3802 = vadd.f32 %v3406, %v3736
        %v3803 = vadd.f32 %v3407, %v3741
        %v3804 = vadd.f32 %v3408, %v3746
        %v3805 = vadd.f32 %v3409, %v3751
        %v3806 = vadd.f32 %v3410, %v3756
        %v3807 = vadd.f32 %v3411, %v3761
        %v3808 = vadd.f32 %v3412, %v3766
        %v3809 = vadd.f32 %v3413, %v3771
        %v3810 = vadd.f32 %v3414, %v3776
        %v3811 = vadd.f32 %v3415, %v3781
        %v3812 = vadd.f32 %v3416, %v3786
        %v3813 = vadd.f32 %v3417, %v3791
        %v3814 = vadd.f32 %v3418, %v3796
        %3815 = vst [vmem:[%s164] sm:$0xff] %v3799
        %3816 = vst [vmem:[%s164 + $0x8] sm:$0xff] %v3800
        %3817 = vst [vmem:[%s164 + $0x10] sm:$0xff] %v3801
        %3818 = vst [vmem:[%s164 + $0x18] sm:$0xff] %v3802
        %3819 = vst [vmem:[%s164 + $0x20] sm:$0xff] %v3803
        %3820 = vst [vmem:[%s164 + $0x28] sm:$0xff] %v3804
        %3821 = vst [vmem:[%s164 + $0x30] sm:$0xff] %v3805
        %3822 = vst [vmem:[%s164 + $0x38] sm:$0xff] %v3806
        %3823 = vst [vmem:[%s164 + $0x40] sm:$0xff] %v3807
        %3824 = vst [vmem:[%s164 + $0x48] sm:$0xff] %v3808
        %3825 = vst [vmem:[%s164 + $0x50] sm:$0xff] %v3809
        %3826 = vst [vmem:[%s164 + $0x58] sm:$0xff] %v3810
        %3827 = vst [vmem:[%s164 + $0x60] sm:$0xff] %v3811
        %3828 = vst [vmem:[%s164 + $0x68] sm:$0xff] %v3812
        %3829 = vst [vmem:[%s164 + $0x70] sm:$0xff] %v3813
        %3830 = vst [vmem:[%s164 + $0x78] sm:$0xff] %v3814
        %s3831 = sand.u32 %s83, 1
        %s3832 = scalar_lea.sflag [#allocation6], %s3831
        %s3833 = sand.u32 %s83, 1
        %s3834 = smul.addr %s3833, 128
        %s3835 = scalar_lea.vmem [#allocation9], %s3834
        // Predicated region
        $region53: #{tpu_custom_call.1} parent=27 // pred_check
          %p3836 = pneg %p93
        $region54: #{tpu_custom_call.1} parent=27 // pred_check_branch
          %3838 = sbr.rel (%p3836) target = $region56
        $region55: #{tpu_custom_call.1} parent=27 // pred_region
          %s3839 = smul.u32 16, %s24
          %s3841 = ssub.s32 2048, 2048
          %3842 = vsyncadd %s3832, %s3841
          %s3843 = smul.addr %s23, 32
          %s3844 = sadd.s32 %s3839, %s3843
          %s3845 = smul.addr %s3844, 128
          %s3846 = scalar_lea.hbm %s3, %s3845
          %s3847 = sshll.u32 %s3835, 4
          %s3848 = int_to_ptr.vmem [resolvable:$true] %s3847
          %3853 = dma.vmem_to_hbm [thread:$0]  %s3848, 2048, %s3846, %s3832, 128, 128, 8
        $region56: #{tpu_custom_call.1} parent=27 // pred_fallthru
          _
      $region28: #{tpu_custom_call.1} parent=5 // pred_fallthru
        _
      %p3854 = scmp.le.s32.totalorder 2, %s14
      // Predicated region
      $region57: #{tpu_custom_call.1} parent=5 // pred_check
        %p3855 = pneg %p3854
      $region58: #{tpu_custom_call.1} parent=5 // pred_check_branch
        %3857 = sbr.rel (%p3855) target = $region60
      $region59: #{tpu_custom_call.1} parent=5 // pred_region
        %s3858 = ssub.s32 %s14, 2
        // Predicated region
        $region61: #{tpu_custom_call.1} parent=59 // pred_check
          %p3859 = pneg %p99
        $region62: #{tpu_custom_call.1} parent=59 // pred_check_branch
          %3861 = sbr.rel (%p3859) target = $region64
        $region63: #{tpu_custom_call.1} parent=59 // pred_region
          %s3862 = sand.u32 %s84, 1
          %s3863 = scalar_lea.sflag [#allocation6], %s3862
          %s3864 = sand.u32 %s84, 1
          %s3865 = smul.addr %s3864, 128
          %s3866 = scalar_lea.vmem [#allocation9], %s3865
          %3867 = dma.done %s3863, 2048
        $region64: #{tpu_custom_call.1} parent=59 // pred_fallthru
          _
      $region60: #{tpu_custom_call.1} parent=5 // pred_fallthru
        _
    $region6: #{tpu_custom_call.1} parent=1 // loop_footer
      %s18 = sadd.s32 1, %s14
    $region7: #{tpu_custom_call.1} parent=1 // loop_footer_branch
      %13 = sbr.rel target = $region3
    $region8: #{tpu_custom_call.1} parent=1 // loop_exit
      _
    %3868 = vsyncpa [#allocation5], 1
    %s3869 = scalar_lea.sflag [#allocation5], 1
    %3870 = vsyncpa %s3869, 1
    %3871 = vsyncpa [#allocation8], 1
    %3872 = vsyncpa [#allocation6], 1
    %s3873 = scalar_lea.sflag [#allocation6], 1
    %3874 = vsyncpa %s3873, 1
  %3875 = vsyncmov [#allocation3]
  %s3876 = vpop.sfrf %3875
  %p3877 = scmp.eq.s32.totalorder %s3876, 0
  %p3878 = pneg %p3877
  %3880 = shalt.err (%p3878)
  %s3881 = scalar_lea.sflag [#allocation3], 1
  %3882 = vsyncmov %s3881
  %s3883 = vpop.sfrf %3882
  %p3884 = scmp.eq.s32.totalorder %s3883, 0
  %p3885 = pneg %p3884
  %3887 = shalt.err (%p3885)

// kernel: tpu_custom_call.1
$region0: #{tpu_custom_call.1}
  #allocation0 [shape = 'u32[]', space=smem, size = 0x4, offset = 0x4, fixed_abs, tag = 'smem constant byte address 0x4 - core index']
  #allocation1 [shape = 'u32[144,128]{1,0:T(1,128)}', space=vmem, size = 0x12000, scoped, tag = 'internal scratch']
  #allocation2 [shape = 'f32[2,16,24,128]{3,2,1,0:T(8,128)}', space=vmem, size = 0x60000, scoped, tag = 'scratch operand']
  #allocation3 [shape = 's32[2]{0}', space=sflag, size = 0x8, scoped, tag = 'scratch operand']
  #allocation10 [shape = 's32[]', space=sflag, size = 0x4, offset = 0, fixed_abs, tag = 'sflag constant byte address 0x0 - dummy sync flag']
  #allocation11 [shape = 's32[]', space=sflag, size = 0x4, offset = 0, fixed_abs, tag = 'sflag constant byte address 0x0 - dummy sync flag']
  #allocation12 [shape = 'u32[]', space=smem, size = 0x4, offset = 0x44, fixed_abs, tag = 'smem constant byte address 0x44 - assertion arg 0']
  #allocation13 [shape = 'u32[]', space=smem, size = 0x4, offset = 0x48, fixed_abs, tag = 'smem constant byte address 0x48 - assertion arg 1']
  #allocation14 [shape = 's32[]', space=sflag, size = 0x4, offset = 0, fixed_abs, tag = 'sflag constant byte address 0x0 - dummy sync flag']
  #allocation15 [shape = 's32[]', space=sflag, size = 0x4, offset = 0, fixed_abs, tag = 'sflag constant byte address 0x0 - dummy sync flag']
  %s0 = inlined_call_operand.hbm [shape: f32[2,24,24,128], index: 0, kind: input, shape index: {}]
  %s1 = inlined_call_operand.hbm [shape: f32[9,384,128], index: 1, kind: input, shape index: {}]
  %s2 = inlined_call_operand.hbm [shape: f32[1,128], index: 2, kind: input, shape index: {}]
  %s3 = inlined_call_operand.hbm [shape: f32[2,256,128], index: 3, kind: output, shape index: {}]
  %s4 = sld [smem:[#allocation0]]
  $region65: #{tpu_custom_call.1} parent=0
    _
  %s6 = ssub.s32 1, %s4
  %s7 = scalar_select 0, %s6, %s4
  $region1: #{tpu_custom_call.1} parent=0
    #allocation4 [shape = 'u8[1769472]{0}', space=vmem, size = 0x1b0000, scoped, tag = 'input window, operand 1, single buffered']
    #allocation5 [shape = 's32[2]{0}', space=sflag, size = 0x8, scoped, tag = 'scoped memory for tpu_custom_call.1']
    #allocation6 [shape = 's32[2]{0}', space=sflag, size = 0x8, scoped, tag = 'scoped memory for tpu_custom_call.1']
    #allocation7 [shape = 'u8[512]{0}', space=vmem, size = 0x400, scoped, tag = 'input window, operand 2, single buffered']
    #allocation8 [shape = 's32[1]{0}', space=sflag, size = 0x4, scoped, tag = 'scoped memory for tpu_custom_call.1']
    #allocation9 [shape = 'u8[131072]{0}', space=vmem, size = 0x20000, scoped, tag = 'output window, operand 0']
    %8 = vsyncpa [#allocation5], 0
    %9 = vsyncpa [#allocation8], 0
    %10 = vsyncpa [#allocation6], 0
    %s11 = scalar_lea.sflag [#allocation6], 1
    %12 = vsyncpa %s11, 0
    loop: start=0, step=1, limit=6
    $region2: #{tpu_custom_call.1} parent=1 // loop_pre_header
      _
    $region3: #{tpu_custom_call.1} parent=1 // loop_header
      %s14 = sphi 0, %s18
      %p15 = scmp.ge.s32.totalorder %s14, 6
      %s21 = sphi 0, %s33
      %s22 = sphi 0, %s29
      %s23 = sphi 0, %s21
      %s24 = sphi 0, %s22
      %s25 = sphi 0, %s23
      %s26 = sphi 0, %s24
      %s34 = sphi 0, %s34
      %s36 = sphi 0, %s34
      %s37 = sphi 0, %s36
      %s51 = sphi 0, %s37
      %s55 = sphi 0, %s55
      %s57 = sphi 0, %s55
      %s58 = sphi 0, %s57
      %s72 = sphi 0, %s58
      %s80 = sphi 0, %s82
      %s83 = sphi 0, %s80
      %s84 = sphi 0, %s83
      %s100 = sphi 0, %s84
    $region4: #{tpu_custom_call.1} parent=1 // loop_header_branch
      %17 = sbr.rel (%p15) target = $region8
    $region5: #{tpu_custom_call.1} parent=1 // loop_body
      %s19 = ssub.s32 %s14, 1
      %s20 = ssub.s32 %s14, 2
      %s27 = sadd.s32 1, %s22
      %p28 = scmp.ge.s32.totalorder %s27, 2
      %s29 = scalar_select %p28, 0, %s27
      %s30 = sadd.s32 1, %s21
      %s31 = scalar_select %p28, %s30, %s21
      %p32 = scmp.ge.s32.totalorder %s31, 2
      %s33 = scalar_select %p32, 0, %s31
      %s35 = sadd.s32 %s34, 1
      %p38 = scmp.eq.s32.totalorder %s14, 3
      %p39 = scmp.ne.s32.totalorder %s34, %s36
      %p40 = scmp.eq.s32.totalorder %s14, 0
      %p41 = por %p39, %p40
      %p42 = scmp.ne.s32.totalorder %s34, %s36
      %p43 = scmp.eq.s32.totalorder %s19, 3
      %p44 = por %p42, %p43
      %p45 = scmp.ne.s32.totalorder %s36, %s37
      %p46 = scmp.eq.s32.totalorder %s19, 0
      %p47 = por %p45, %p46
      %p48 = scmp.ne.s32.totalorder %s36, %s37
      %p49 = scmp.eq.s32.totalorder %s20, 3
      %p50 = por %p48, %p49
      %p52 = scmp.ne.s32.totalorder %s37, %s51
      %p53 = scmp.eq.s32.totalorder %s20, 0
      %p54 = por %p52, %p53
      %s56 = sadd.s32 %s55, 1
      %p59 = scmp.eq.s32.totalorder %s14, 3
      %p60 = scmp.ne.s32.totalorder %s55, %s57
      %p61 = scmp.eq.s32.totalorder %s14, 0
      %p62 = por %p60, %p61
      %p63 = scmp.ne.s32.totalorder %s55, %s57
      %p64 = scmp.eq.s32.totalorder %s19, 3
      %p65 = por %p63, %p64
      %p66 = scmp.ne.s32.totalorder %s57, %s58
      %p67 = scmp.eq.s32.totalorder %s19, 0
      %p68 = por %p66, %p67
      %p69 = scmp.ne.s32.totalorder %s57, %s58
      %p70 = scmp.eq.s32.totalorder %s20, 3
      %p71 = por %p69, %p70
      %p73 = scmp.ne.s32.totalorder %s58, %s72
      %p74 = scmp.eq.s32.totalorder %s20, 0
      %p75 = por %p73, %p74
      %s76 = ssub.s32 %s21, %s33
      %s77 = ssub.s32 %s22, %s29
      %s78 = sor.u32 %s76, %s77
      %p79 = scmp.eq.s32.totalorder %s78, 0
      %s81 = sadd.s32 %s80, 1
      %s82 = scalar_select %p79, %s80, %s81
      %p85 = pneg %p79
      %p86 = scmp.eq.s32.totalorder %s14, 3
      %p87 = por %p85, %p86
      %p88 = scmp.ne.s32.totalorder %s80, %s83
      %p89 = scmp.eq.s32.totalorder %s14, 0
      %p90 = por %p88, %p89
      %p91 = scmp.ne.s32.totalorder %s80, %s83
      %p92 = scmp.eq.s32.totalorder %s19, 3
      %p93 = por %p91, %p92
      %p94 = scmp.ne.s32.totalorder %s83, %s84
      %p95 = scmp.eq.s32.totalorder %s19, 0
      %p96 = por %p94, %p95
      %p97 = scmp.ne.s32.totalorder %s83, %s84
      %p98 = scmp.eq.s32.totalorder %s20, 3
      %p99 = por %p97, %p98
      %p101 = scmp.ne.s32.totalorder %s84, %s100
      %p102 = scmp.eq.s32.totalorder %s20, 0
      %p103 = por %p101, %p102
      %p104 = scmp.le.s32.totalorder 1, %s14
      %p105 = scmp.lt.s32.totalorder %s14, 5
      %p106 = pnand %p104, %p105
      %p107 = pneg %p106
      // Predicated region
      $region9: #{tpu_custom_call.1} parent=5 // pred_check
        _
      $region10: #{tpu_custom_call.1} parent=5 // pred_check_branch
        %109 = sbr.rel (%p106) target = $region12
      $region11: #{tpu_custom_call.1} parent=5 // pred_region
        %s110 = ssub.s32 %s14, 1
        // Predicated region
        $region13: #{tpu_custom_call.1} parent=11 // pred_check
          %p111 = pneg %p47
        $region14: #{tpu_custom_call.1} parent=11 // pred_check_branch
          %113 = sbr.rel (%p111) target = $region16
        $region15: #{tpu_custom_call.1} parent=11 // pred_region
          %s115 = ssub.s32 55296, 55296
          %116 = vsyncadd [#allocation5], %s115
          %s117 = sshll.u32 [#allocation4], 4
          %s118 = int_to_ptr.vmem [resolvable:$true] %s117
          %123 = dma.hbm_to_vmem [thread:$0]  %s1, 55296, %s118, [#allocation5], 128, 128, 8
        $region16: #{tpu_custom_call.1} parent=11 // pred_fallthru
          _
        // Predicated region
        $region17: #{tpu_custom_call.1} parent=11 // pred_check
          %p124 = pneg %p68
        $region18: #{tpu_custom_call.1} parent=11 // pred_check_branch
          %126 = sbr.rel (%p124) target = $region20
        $region19: #{tpu_custom_call.1} parent=11 // pred_region
          %s128 = ssub.s32 16, 16
          %129 = vsyncadd [#allocation8], %s128
          %s131 = sshll.u32 [#allocation7], 4
          %s132 = int_to_ptr.vmem [resolvable:$true] %s131
          %134 = dma.hbm_to_vmem [thread:$0]  %s2, 16, %s132, [#allocation8]
        $region20: #{tpu_custom_call.1} parent=11 // pred_fallthru
          _
      $region12: #{tpu_custom_call.1} parent=5 // pred_fallthru
        _
      %p135 = scmp.lt.s32.totalorder %s14, 4
      // Predicated region
      $region21: #{tpu_custom_call.1} parent=5 // pred_check
        %p136 = pneg %p135
      $region22: #{tpu_custom_call.1} parent=5 // pred_check_branch
        %138 = sbr.rel (%p136) target = $region24
      $region23: #{tpu_custom_call.1} parent=5 // pred_region
        _
      $region24: #{tpu_custom_call.1} parent=5 // pred_fallthru
        _
      %p139 = scmp.le.s32.totalorder 1, %s14
      %p140 = scmp.lt.s32.totalorder %s14, 5
      %p141 = pnand %p139, %p140
      %p142 = pneg %p141
      // Predicated region
      $region25: #{tpu_custom_call.1} parent=5 // pred_check
        _
      $region26: #{tpu_custom_call.1} parent=5 // pred_check_branch
        %144 = sbr.rel (%p141) target = $region28
      $region27: #{tpu_custom_call.1} parent=5 // pred_region
        %s145 = ssub.s32 %s14, 1
        // Predicated region
        $region29: #{tpu_custom_call.1} parent=27 // pred_check
          %p146 = pneg %p47
        $region30: #{tpu_custom_call.1} parent=27 // pred_check_branch
          %148 = sbr.rel (%p146) target = $region32
        $region31: #{tpu_custom_call.1} parent=27 // pred_region
          %149 = dma.done [#allocation5], 55296
        $region32: #{tpu_custom_call.1} parent=27 // pred_fallthru
          _
        // Predicated region
        $region33: #{tpu_custom_call.1} parent=27 // pred_check
          %p150 = pneg %p68
        $region34: #{tpu_custom_call.1} parent=27 // pred_check_branch
          %152 = sbr.rel (%p150) target = $region36
        $region35: #{tpu_custom_call.1} parent=27 // pred_region
          %153 = dma.done [#allocation8], 16
        $region36: #{tpu_custom_call.1} parent=27 // pred_fallthru
          _
        %p154 = pneg %p47
        %p155 = pneg %p44
        %p156 = pneg %p68
        %p157 = pneg %p65
        %p158 = pneg %p96
        %p159 = pneg %p93
        %s160 = sand.u32 %s83, 1
        %s161 = scalar_lea.sflag [#allocation6], %s160
        %s162 = sand.u32 %s83, 1
        %s163 = smul.addr %s162, 128
        %s164 = scalar_lea.vmem [#allocation9], %s163
        %s165 = smul.u32 16, %s24
        %p166 = scmp.lt.s32.totalorder %s24, 0
        %s167 = ssub.s32 0, %s24
        %s168 = scalar_select %p166, %s167, %s24
        %s169 = sand.u32 %s168, 1
        %s170 = ssub.s32 0, %s169
        %s171 = scalar_select %p166, %s170, %s169
        %p172 = scmp.ne.s32.totalorder %s171, 0
        %p173 = scmp.lt.s32.totalorder %s171, 0
        %p174 = pnand %p173, %p172
        %p175 = pneg %p174
        %s176 = sadd.s32 %s171, 2
        %s177 = scalar_select %p175, %s176, %s171
        %p178 = scmp.eq.s32.totalorder %s24, 0
        // Predicated region
        $region37: #{tpu_custom_call.1} parent=27 // pred_check
          %p179 = pneg %p178
        $region38: #{tpu_custom_call.1} parent=27 // pred_check_branch
          %181 = sbr.rel (%p179) target = $region40
        $region39: #{tpu_custom_call.1} parent=27 // pred_region
          %s182 = smul.u32 0, 24
          %s183 = smul.u32 %s23, 576
          %s184 = sadd.s32 %s182, %s183
          %s185 = smul.addr %s184, 16
          %s186 = scalar_lea.hbm %s0, %s185
          // Predicated region
          $region41: #{tpu_custom_call.1} parent=39 // pred_check
            _
          $region42: #{tpu_custom_call.1} parent=39 // pred_check_branch
            %188 = sbr.rel target = $region44
          $region43: #{tpu_custom_call.1} parent=39 // pred_region
            %189 = sst [smem:[#allocation12]] [#allocation11]
            %190 = sst [smem:[#allocation13]] [#allocation10]
          $region44: #{tpu_custom_call.1} parent=39 // pred_fallthru
            _
          %192 = shalt.err (0)
          %s194 = sshll.u32 [#allocation2], 4
          %s195 = int_to_ptr.vmem [resolvable:$true] %s194
          %197 = dma.hbm_to_vmem [thread:$0]  %s186, 6144, %s195, [#allocation3]
        $region40: #{tpu_custom_call.1} parent=27 // pred_fallthru
          _
        %s198 = smul.u32 %s24, 8
        %s199 = smul.u32 %s177, 384
        %s200 = scalar_lea.vmem [#allocation2], %s199
        %s201 = scalar_lea.sflag [#allocation3], %s177
        %s202 = smul.u32 16, 24
        %s203 = smul.u32 %s202, 1
        %s204 = sshll.u32 %s203, 4
        %205 = dma.done %s201, %s204
        %s206 = sadd.s32 %s24, 1
        %p207 = scmp.lt.s32.totalorder %s206, 2
        // Predicated region
        $region45: #{tpu_custom_call.1} parent=27 // pred_check
          %p208 = pneg %p207
        $region46: #{tpu_custom_call.1} parent=27 // pred_check_branch
          %210 = sbr.rel (%p208) target = $region48
        $region47: #{tpu_custom_call.1} parent=27 // pred_region
          %s211 = ssub.s32 1, %s177
          %s212 = smul.u32 %s206, 8
          %s213 = smul.u32 %s212, 24
          %s214 = smul.u32 %s23, 576
          %s215 = sadd.s32 %s213, %s214
          %s216 = smul.addr %s215, 16
          %s217 = scalar_lea.hbm %s0, %s216
          %s218 = smul.u32 %s211, 384
          %s219 = scalar_lea.vmem [#allocation2], %s218
          %s220 = scalar_lea.sflag [#allocation3], %s211
          // Predicated region
          $region49: #{tpu_custom_call.1} parent=47 // pred_check
            _
          $region50: #{tpu_custom_call.1} parent=47 // pred_check_branch
            %222 = sbr.rel target = $region52
          $region51: #{tpu_custom_call.1} parent=47 // pred_region
            %223 = sst [smem:[#allocation12]] [#allocation15]
            %224 = sst [smem:[#allocation13]] [#allocation14]
          $region52: #{tpu_custom_call.1} parent=47 // pred_fallthru
            _
          %226 = shalt.err (0)
          %s228 = sshll.u32 %s219, 4
          %s229 = int_to_ptr.vmem [resolvable:$true] %s228
          %231 = dma.hbm_to_vmem [thread:$0]  %s217, 6144, %s229, %s220
        $region48: #{tpu_custom_call.1} parent=27 // pred_fallthru
          _
        %v232 = vld [vmem:[#allocation7] sm:$0x1]
        %v234 = vlaneseq
        %v235 = vshrl.u32 %v234, 7
        %v236 = vsub.s32 0, %v235
        %v237 = vrot.slane %v232, %v236
        %s239 = scalar_lea.vmem %s200, 72 [#allocation2]
        %v240 = vld [vmem:[%s239 + $0x3] sm:$0xff]
        %v241 = vld [vmem:[%s239 + $0xb] sm:$0xff]
        %v242 = vld [vmem:[%s239 + $0x1b] sm:$0xff]
        %v243 = vld [vmem:[%s239 + $0x23] sm:$0xff]
        %v244 = vld [vmem:[%s239 + $0x33] sm:$0xff]
        %v245 = vld [vmem:[%s239 + $0x3b] sm:$0xff]
        %v246 = vld [vmem:[%s239 + $0x4b] sm:$0xff]
        %v247 = vld [vmem:[%s239 + $0x53] sm:$0xff]
        %v248 = vld [vmem:[%s239 + $0x63] sm:$0xff]
        %v249 = vld [vmem:[%s239 + $0x6b] sm:$0xff]
        %v250 = vld [vmem:[%s239 + $0x7b] sm:$0xff]
        %v251 = vld [vmem:[%s239 + $0x83] sm:$0xff]
        %v252 = vld [vmem:[%s239 + $0x93] sm:$0xff]
        %v253 = vld [vmem:[%s239 + $0x9b] sm:$0xff]
        %v254 = vld [vmem:[%s239 + $0xab] sm:$0xff]
        %v255 = vld [vmem:[%s239 + $0xb3] sm:$0xff]
        %v256 = vld [vmem:[%s239 + $0x4] sm:$0xff]
        %v257 = vld [vmem:[%s239 + $0xc] sm:$0xff]
        %v258 = vld [vmem:[%s239 + $0x1c] sm:$0xff]
        %v259 = vld [vmem:[%s239 + $0x24] sm:$0xff]
        %v260 = vld [vmem:[%s239 + $0x34] sm:$0xff]
        %v261 = vld [vmem:[%s239 + $0x3c] sm:$0xff]
        %v262 = vld [vmem:[%s239 + $0x4c] sm:$0xff]
        %v263 = vld [vmem:[%s239 + $0x54] sm:$0xff]
        %v264 = vld [vmem:[%s239 + $0x64] sm:$0xff]
        %v265 = vld [vmem:[%s239 + $0x6c] sm:$0xff]
        %v266 = vld [vmem:[%s239 + $0x7c] sm:$0xff]
        %v267 = vld [vmem:[%s239 + $0x84] sm:$0xff]
        %v268 = vld [vmem:[%s239 + $0x94] sm:$0xff]
        %v269 = vld [vmem:[%s239 + $0x9c] sm:$0xff]
        %v270 = vld [vmem:[%s239 + $0xac] sm:$0xff]
        %v271 = vld [vmem:[%s239 + $0xb4] sm:$0xff]
        %v272 = vld [vmem:[%s239 + $0x5] sm:$0xff]
        %v273 = vld [vmem:[%s239 + $0xd] sm:$0xff]
        %v274 = vld [vmem:[%s239 + $0x1d] sm:$0xff]
        %v275 = vld [vmem:[%s239 + $0x25] sm:$0xff]
        %v276 = vld [vmem:[%s239 + $0x35] sm:$0xff]
        %v277 = vld [vmem:[%s239 + $0x3d] sm:$0xff]
        %v278 = vld [vmem:[%s239 + $0x4d] sm:$0xff]
        %v279 = vld [vmem:[%s239 + $0x55] sm:$0xff]
        %v280 = vld [vmem:[%s239 + $0x65] sm:$0xff]
        %v281 = vld [vmem:[%s239 + $0x6d] sm:$0xff]
        %v282 = vld [vmem:[%s239 + $0x7d] sm:$0xff]
        %v283 = vld [vmem:[%s239 + $0x85] sm:$0xff]
        %v284 = vld [vmem:[%s239 + $0x95] sm:$0xff]
        %v285 = vld [vmem:[%s239 + $0x9d] sm:$0xff]
        %v286 = vld [vmem:[%s239 + $0xad] sm:$0xff]
        %v287 = vld [vmem:[%s239 + $0xb5] sm:$0xff]
        %v288 = vld [vmem:[#allocation4] sm:$0xff]
        %v289 = vld [vmem:[#allocation4 + $0x8] sm:$0xff]
        %v290 = vld [vmem:[#allocation4 + $0x10] sm:$0xff]
        %v291 = vld [vmem:[#allocation4 + $0x18] sm:$0xff]
        %v292 = vld [vmem:[#allocation4 + $0x20] sm:$0xff]
        %v293 = vld [vmem:[#allocation4 + $0x28] sm:$0xff]
        %v294 = vld [vmem:[#allocation4 + $0x30] sm:$0xff]
        %v295 = vld [vmem:[#allocation4 + $0x38] sm:$0xff]
        %v296 = vld [vmem:[#allocation4 + $0x40] sm:$0xff]
        %v297 = vld [vmem:[#allocation4 + $0x48] sm:$0xff]
        %v298 = vld [vmem:[#allocation4 + $0x50] sm:$0xff]
        %v299 = vld [vmem:[#allocation4 + $0x58] sm:$0xff]
        %v300 = vld [vmem:[#allocation4 + $0x60] sm:$0xff]
        %v301 = vld [vmem:[#allocation4 + $0x68] sm:$0xff]
        %v302 = vld [vmem:[#allocation4 + $0x70] sm:$0xff]
        %v303 = vld [vmem:[#allocation4 + $0x78] sm:$0xff]
        %v304 = vld [vmem:[#allocation4 + $0x80] sm:$0xff]
        %v305 = vld [vmem:[#allocation4 + $0x88] sm:$0xff]
        %v306 = vld [vmem:[#allocation4 + $0x90] sm:$0xff]
        %v307 = vld [vmem:[#allocation4 + $0x98] sm:$0xff]
        %v308 = vld [vmem:[#allocation4 + $0xa0] sm:$0xff]
        %v309 = vld [vmem:[#allocation4 + $0xa8] sm:$0xff]
        %v310 = vld [vmem:[#allocation4 + $0xb0] sm:$0xff]
        %v311 = vld [vmem:[#allocation4 + $0xb8] sm:$0xff]
        %v312 = vld [vmem:[#allocation4 + $0xc0] sm:$0xff]
        %v313 = vld [vmem:[#allocation4 + $0xc8] sm:$0xff]
        %v314 = vld [vmem:[#allocation4 + $0xd0] sm:$0xff]
        %v315 = vld [vmem:[#allocation4 + $0xd8] sm:$0xff]
        %v316 = vld [vmem:[#allocation4 + $0xe0] sm:$0xff]
        %v317 = vld [vmem:[#allocation4 + $0xe8] sm:$0xff]
        %v318 = vld [vmem:[#allocation4 + $0xf0] sm:$0xff]
        %v319 = vld [vmem:[#allocation4 + $0xf8] sm:$0xff]
        %v320 = vld [vmem:[#allocation4 + $0x100] sm:$0xff]
        %v321 = vld [vmem:[#allocation4 + $0x108] sm:$0xff]
        %v322 = vld [vmem:[#allocation4 + $0x110] sm:$0xff]
        %v323 = vld [vmem:[#allocation4 + $0x118] sm:$0xff]
        %v324 = vld [vmem:[#allocation4 + $0x120] sm:$0xff]
        %v325 = vld [vmem:[#allocation4 + $0x128] sm:$0xff]
        %v326 = vld [vmem:[#allocation4 + $0x130] sm:$0xff]
        %v327 = vld [vmem:[#allocation4 + $0x138] sm:$0xff]
        %v328 = vld [vmem:[#allocation4 + $0x140] sm:$0xff]
        %v329 = vld [vmem:[#allocation4 + $0x148] sm:$0xff]
        %v330 = vld [vmem:[#allocation4 + $0x150] sm:$0xff]
        %v331 = vld [vmem:[#allocation4 + $0x158] sm:$0xff]
        %v332 = vld [vmem:[#allocation4 + $0x160] sm:$0xff]
        %v333 = vld [vmem:[#allocation4 + $0x168] sm:$0xff]
        %v334 = vld [vmem:[#allocation4 + $0x170] sm:$0xff]
        %v335 = vld [vmem:[#allocation4 + $0x178] sm:$0xff]
        %336 = vmatprep.subr.mxu0 0.0
        %337 = vmatpush1.msra.mxu0 %v288
        %338 = vmatprep.subr.mxu0 0.0
        %339 = vmatpush1.msra.mxu0 %v289
        %340 = vmatprep.subr.mxu0 0.0
        %341 = vmatpush1.msra.mxu0 %v290
        %342 = vmatprep.subr.mxu0 0.0
        %343 = vmatpush1.msra.mxu0 %v291
        %344 = vmatprep.subr.mxu0 0.0
        %345 = vmatpush1.msra.mxu0 %v292
        %346 = vmatprep.subr.mxu0 0.0
        %347 = vmatpush1.msra.mxu0 %v293
        %348 = vmatprep.subr.mxu0 0.0
        %349 = vmatpush1.msra.mxu0 %v294
        %350 = vmatprep.subr.mxu0 0.0
        %351 = vmatpush1.msra.mxu0 %v295
        %352 = vmatprep.subr.mxu0 0.0
        %353 = vmatpush1.msra.mxu0 %v296
        %354 = vmatprep.subr.mxu0 0.0
        %355 = vmatpush1.msra.mxu0 %v297
        %356 = vmatprep.subr.mxu0 0.0
        %357 = vmatpush1.msra.mxu0 %v298
        %358 = vmatprep.subr.mxu0 0.0
        %359 = vmatpush1.msra.mxu0 %v299
        %360 = vmatprep.subr.mxu0 0.0
        %361 = vmatpush1.msra.mxu0 %v300
        %362 = vmatprep.subr.mxu0 0.0
        %363 = vmatpush1.msra.mxu0 %v301
        %364 = vmatprep.subr.mxu0 0.0
        %365 = vmatpush1.msra.mxu0 %v302
        %366 = vmatprep.subr.mxu0 0.0
        %367 = vmatpush1.msra.mxu0 %v303
        %368 = vmatprep.subr.mxu0 0.0
        %369 = vmatpush1.msra.mxu0 %v304
        %370 = vmatprep.subr.mxu0 0.0
        %371 = vmatpush1.msra.mxu0 %v305
        %372 = vmatprep.subr.mxu0 0.0
        %373 = vmatpush1.msra.mxu0 %v306
        %374 = vmatprep.subr.mxu0 0.0
        %375 = vmatpush1.msra.mxu0 %v307
        %376 = vmatprep.subr.mxu0 0.0
        %377 = vmatpush1.msra.mxu0 %v308
        %378 = vmatprep.subr.mxu0 0.0
        %379 = vmatpush1.msra.mxu0 %v309
        %380 = vmatprep.subr.mxu0 0.0
        %381 = vmatpush1.msra.mxu0 %v310
        %382 = vmatprep.subr.mxu0 0.0
        %383 = vmatpush1.msra.mxu0 %v311
        %384 = vmatprep.subr.mxu0 0.0
        %385 = vmatpush1.msra.mxu0 %v312
        %386 = vmatprep.subr.mxu0 0.0
        %387 = vmatpush1.msra.mxu0 %v313
        %388 = vmatprep.subr.mxu0 0.0
        %389 = vmatpush1.msra.mxu0 %v314
        %390 = vmatprep.subr.mxu0 0.0
        %391 = vmatpush1.msra.mxu0 %v315
        %392 = vmatprep.subr.mxu0 0.0
        %393 = vmatpush1.msra.mxu0 %v316
        %394 = vmatprep.subr.mxu0 0.0
        %395 = vmatpush1.msra.mxu0 %v317
        %396 = vmatprep.subr.mxu0 0.0
        %397 = vmatpush1.msra.mxu0 %v318
        %398 = vmatprep.subr.mxu0 0.0
        %399 = vmatpush1.msra.mxu0 %v319
        %400 = vmatprep.mubr.f32.mxu0 %v256
        %401 = vmatmul.mubr.f32.gmra.mrb[0].mxu0 %v240
        %v402 = vpop.f32.mrb[0].mxu0
        %v403 = vadd.f32 0.0, %v402
        %v404 = vpop.f32.mrb[0].mxu0
        %405 = vmatprep.mubr.f32.mxu0 %v257
        %406 = vmatmul.mubr.f32.gmra.mrb[0].mxu0 %v241
        %v407 = vpop.f32.mrb[0].mxu0
        %v408 = vadd.f32 0.0, %v407
        %v409 = vpop.f32.mrb[0].mxu0
        %410 = vmatprep.mubr.f32.mxu0 %v258
        %411 = vmatmul.mubr.f32.gmra.mrb[0].mxu0 %v242
        %v412 = vpop.f32.mrb[0].mxu0
        %v413 = vadd.f32 0.0, %v412
        %v414 = vpop.f32.mrb[0].mxu0
        %415 = vmatprep.mubr.f32.mxu0 %v259
        %416 = vmatmul.mubr.f32.gmra.mrb[0].mxu0 %v243
        %v417 = vpop.f32.mrb[0].mxu0
        %v418 = vadd.f32 0.0, %v417
        %v419 = vpop.f32.mrb[0].mxu0
        %420 = vmatprep.mubr.f32.mxu0 %v260
        %421 = vmatmul.mubr.f32.gmra.mrb[0].mxu0 %v244
        %v422 = vpop.f32.mrb[0].mxu0
        %v423 = vadd.f32 0.0, %v422
        %v424 = vpop.f32.mrb[0].mxu0
        %425 = vmatprep.mubr.f32.mxu0 %v261
        %426 = vmatmul.mubr.f32.gmra.mrb[0].mxu0 %v245
        %v427 = vpop.f32.mrb[0].mxu0
        %v428 = vadd.f32 0.0, %v427
        %v429 = vpop.f32.mrb[0].mxu0
        %430 = vmatprep.mubr.f32.mxu0 %v262
        %431 = vmatmul.mubr.f32.gmra.mrb[0].mxu0 %v246
        %v432 = vpop.f32.mrb[0].mxu0
        %v433 = vadd.f32 0.0, %v432
        %v434 = vpop.f32.mrb[0].mxu0
        %435 = vmatprep.mubr.f32.mxu0 %v263
        %436 = vmatmul.mubr.f32.gmra.mrb[0].mxu0 %v247
        %v437 = vpop.f32.mrb[0].mxu0
        %v438 = vadd.f32 0.0, %v437
        %v439 = vpop.f32.mrb[0].mxu0
        %440 = vmatprep.mubr.f32.mxu0 %v264
        %441 = vmatmul.mubr.f32.gmra.mrb[0].mxu0 %v248
        %v442 = vpop.f32.mrb[0].mxu0
        %v443 = vadd.f32 0.0, %v442
        %v444 = vpop.f32.mrb[0].mxu0
        %445 = vmatprep.mubr.f32.mxu0 %v265
        %446 = vmatmul.mubr.f32.gmra.mrb[0].mxu0 %v249
        %v447 = vpop.f32.mrb[0].mxu0
        %v448 = vadd.f32 0.0, %v447
        %v449 = vpop.f32.mrb[0].mxu0
        %450 = vmatprep.mubr.f32.mxu0 %v266
        %451 = vmatmul.mubr.f32.gmra.mrb[0].mxu0 %v250
        %v452 = vpop.f32.mrb[0].mxu0
        %v453 = vadd.f32 0.0, %v452
        %v454 = vpop.f32.mrb[0].mxu0
        %455 = vmatprep.mubr.f32.mxu0 %v267
        %456 = vmatmul.mubr.f32.gmra.mrb[0].mxu0 %v251
        %v457 = vpop.f32.mrb[0].mxu0
        %v458 = vadd.f32 0.0, %v457
        %v459 = vpop.f32.mrb[0].mxu0
        %460 = vmatprep.mubr.f32.mxu0 %v268
        %461 = vmatmul.mubr.f32.gmra.mrb[0].mxu0 %v252
        %v462 = vpop.f32.mrb[0].mxu0
        %v463 = vadd.f32 0.0, %v462
        %v464 = vpop.f32.mrb[0].mxu0
        %465 = vmatprep.mubr.f32.mxu0 %v269
        %466 = vmatmul.mubr.f32.gmra.mrb[0].mxu0 %v253
        %v467 = vpop.f32.mrb[0].mxu0
        %v468 = vadd.f32 0.0, %v467
        %v469 = vpop.f32.mrb[0].mxu0
        %470 = vmatprep.mubr.f32.mxu0 %v270
        %471 = vmatmul.mubr.f32.gmra.mrb[0].mxu0 %v254
        %v472 = vpop.f32.mrb[0].mxu0
        %v473 = vadd.f32 0.0, %v472
        %v474 = vpop.f32.mrb[0].mxu0
        %475 = vmatprep.mubr.f32.mxu0 %v271
        %476 = vmatmul.mubr.f32.gmra.mrb[0].mxu0 %v255
        %v477 = vpop.f32.mrb[0].mxu0
        %v478 = vadd.f32 0.0, %v477
        %v479 = vpop.f32.mrb[0].mxu0
        %480 = vdwg.mxu0
        %481 = vmatprep.subr.mxu0 0.0
        %482 = vmatpush1.msra.mxu0 %v320
        %483 = vmatprep.subr.mxu0 0.0
        %484 = vmatpush1.msra.mxu0 %v321
        %485 = vmatprep.subr.mxu0 0.0
        %486 = vmatpush1.msra.mxu0 %v322
        %487 = vmatprep.subr.mxu0 0.0
        %488 = vmatpush1.msra.mxu0 %v323
        %489 = vmatprep.subr.mxu0 0.0
        %490 = vmatpush1.msra.mxu0 %v324
        %491 = vmatprep.subr.mxu0 0.0
        %492 = vmatpush1.msra.mxu0 %v325
        %493 = vmatprep.subr.mxu0 0.0
        %494 = vmatpush1.msra.mxu0 %v326
        %495 = vmatprep.subr.mxu0 0.0
        %496 = vmatpush1.msra.mxu0 %v327
        %497 = vmatprep.subr.mxu0 0.0
        %498 = vmatpush1.msra.mxu0 %v328
        %499 = vmatprep.subr.mxu0 0.0
        %500 = vmatpush1.msra.mxu0 %v329
        %501 = vmatprep.subr.mxu0 0.0
        %502 = vmatpush1.msra.mxu0 %v330
        %503 = vmatprep.subr.mxu0 0.0
        %504 = vmatpush1.msra.mxu0 %v331
        %505 = vmatprep.subr.mxu0 0.0
        %506 = vmatpush1.msra.mxu0 %v332
        %507 = vmatprep.subr.mxu0 0.0
        %508 = vmatpush1.msra.mxu0 %v333
        %509 = vmatprep.subr.mxu0 0.0
        %510 = vmatpush1.msra.mxu0 %v334
        %511 = vmatprep.subr.mxu0 0.0
        %512 = vmatpush1.msra.mxu0 %v335
        %513 = vmatprep.subr.mxu0 0.0
        %514 = vmatpush1.msra.mxu0 0.0
        %515 = vmatprep.subr.mxu0 0.0
        %516 = vmatpush1.msra.mxu0 0.0
        %517 = vmatprep.subr.mxu0 0.0
        %518 = vmatpush1.msra.mxu0 0.0
        %519 = vmatprep.subr.mxu0 0.0
        %520 = vmatpush1.msra.mxu0 0.0
        %521 = vmatprep.subr.mxu0 0.0
        %522 = vmatpush1.msra.mxu0 0.0
        %523 = vmatprep.subr.mxu0 0.0
        %524 = vmatpush1.msra.mxu0 0.0
        %525 = vmatprep.subr.mxu0 0.0
        %526 = vmatpush1.msra.mxu0 0.0
        %527 = vmatprep.subr.mxu0 0.0
        %528 = vmatpush1.msra.mxu0 0.0
        %529 = vmatprep.subr.mxu0 0.0
        %530 = vmatpush1.msra.mxu0 0.0
        %531 = vmatprep.subr.mxu0 0.0
        %532 = vmatpush1.msra.mxu0 0.0
        %533 = vmatprep.subr.mxu0 0.0
        %534 = vmatpush1.msra.mxu0 0.0
        %535 = vmatprep.subr.mxu0 0.0
        %536 = vmatpush1.msra.mxu0 0.0
        %537 = vmatprep.subr.mxu0 0.0
        %538 = vmatpush1.msra.mxu0 0.0
        %539 = vmatprep.subr.mxu0 0.0
        %540 = vmatpush1.msra.mxu0 0.0
        %541 = vmatprep.subr.mxu0 0.0
        %542 = vmatpush1.msra.mxu0 0.0
        %543 = vmatprep.subr.mxu0 0.0
        %544 = vmatpush1.msra.mxu0 0.0
        %545 = vmatprep.mubr.f32.mxu0 0.0
        %546 = vmatmul.mubr.f32.gmra.mrb[0].mxu0 %v272
        %v547 = vpop.f32.mrb[0].mxu0
        %v548 = vadd.f32 %v403, %v547
        %v549 = vpop.f32.mrb[0].mxu0
        %550 = vmatprep.mubr.f32.mxu0 0.0
        %551 = vmatmul.mubr.f32.gmra.mrb[0].mxu0 %v273
        %v552 = vpop.f32.mrb[0].mxu0
        %v553 = vadd.f32 %v408, %v552
        %v554 = vpop.f32.mrb[0].mxu0
        %555 = vmatprep.mubr.f32.mxu0 0.0
        %556 = vmatmul.mubr.f32.gmra.mrb[0].mxu0 %v274
        %v557 = vpop.f32.mrb[0].mxu0
        %v558 = vadd.f32 %v413, %v557
        %v559 = vpop.f32.mrb[0].mxu0
        %560 = vmatprep.mubr.f32.mxu0 0.0
        %561 = vmatmul.mubr.f32.gmra.mrb[0].mxu0 %v275
        %v562 = vpop.f32.mrb[0].mxu0
        %v563 = vadd.f32 %v418, %v562
        %v564 = vpop.f32.mrb[0].mxu0
        %565 = vmatprep.mubr.f32.mxu0 0.0
        %566 = vmatmul.mubr.f32.gmra.mrb[0].mxu0 %v276
        %v567 = vpop.f32.mrb[0].mxu0
        %v568 = vadd.f32 %v423, %v567
        %v569 = vpop.f32.mrb[0].mxu0
        %570 = vmatprep.mubr.f32.mxu0 0.0
        %571 = vmatmul.mubr.f32.gmra.mrb[0].mxu0 %v277
        %v572 = vpop.f32.mrb[0].mxu0
        %v573 = vadd.f32 %v428, %v572
        %v574 = vpop.f32.mrb[0].mxu0
        %575 = vmatprep.mubr.f32.mxu0 0.0
        %576 = vmatmul.mubr.f32.gmra.mrb[0].mxu0 %v278
        %v577 = vpop.f32.mrb[0].mxu0
        %v578 = vadd.f32 %v433, %v577
        %v579 = vpop.f32.mrb[0].mxu0
        %580 = vmatprep.mubr.f32.mxu0 0.0
        %581 = vmatmul.mubr.f32.gmra.mrb[0].mxu0 %v279
        %v582 = vpop.f32.mrb[0].mxu0
        %v583 = vadd.f32 %v438, %v582
        %v584 = vpop.f32.mrb[0].mxu0
        %585 = vmatprep.mubr.f32.mxu0 0.0
        %586 = vmatmul.mubr.f32.gmra.mrb[0].mxu0 %v280
        %v587 = vpop.f32.mrb[0].mxu0
        %v588 = vadd.f32 %v443, %v587
        %v589 = vpop.f32.mrb[0].mxu0
        %590 = vmatprep.mubr.f32.mxu0 0.0
        %591 = vmatmul.mubr.f32.gmra.mrb[0].mxu0 %v281
        %v592 = vpop.f32.mrb[0].mxu0
        %v593 = vadd.f32 %v448, %v592
        %v594 = vpop.f32.mrb[0].mxu0
        %595 = vmatprep.mubr.f32.mxu0 0.0
        %596 = vmatmul.mubr.f32.gmra.mrb[0].mxu0 %v282
        %v597 = vpop.f32.mrb[0].mxu0
        %v598 = vadd.f32 %v453, %v597
        %v599 = vpop.f32.mrb[0].mxu0
        %600 = vmatprep.mubr.f32.mxu0 0.0
        %601 = vmatmul.mubr.f32.gmra.mrb[0].mxu0 %v283
        %v602 = vpop.f32.mrb[0].mxu0
        %v603 = vadd.f32 %v458, %v602
        %v604 = vpop.f32.mrb[0].mxu0
        %605 = vmatprep.mubr.f32.mxu0 0.0
        %606 = vmatmul.mubr.f32.gmra.mrb[0].mxu0 %v284
        %v607 = vpop.f32.mrb[0].mxu0
        %v608 = vadd.f32 %v463, %v607
        %v609 = vpop.f32.mrb[0].mxu0
        %610 = vmatprep.mubr.f32.mxu0 0.0
        %611 = vmatmul.mubr.f32.gmra.mrb[0].mxu0 %v285
        %v612 = vpop.f32.mrb[0].mxu0
        %v613 = vadd.f32 %v468, %v612
        %v614 = vpop.f32.mrb[0].mxu0
        %615 = vmatprep.mubr.f32.mxu0 0.0
        %616 = vmatmul.mubr.f32.gmra.mrb[0].mxu0 %v286
        %v617 = vpop.f32.mrb[0].mxu0
        %v618 = vadd.f32 %v473, %v617
        %v619 = vpop.f32.mrb[0].mxu0
        %620 = vmatprep.mubr.f32.mxu0 0.0
        %621 = vmatmul.mubr.f32.gmra.mrb[0].mxu0 %v287
        %v622 = vpop.f32.mrb[0].mxu0
        %v623 = vadd.f32 %v478, %v622
        %v624 = vpop.f32.mrb[0].mxu0
        %625 = vdwg.mxu0
        %v626 = vadd.f32 %v237, %v548
        %v627 = vadd.f32 %v237, %v553
        %v628 = vadd.f32 %v237, %v558
        %v629 = vadd.f32 %v237, %v563
        %v630 = vadd.f32 %v237, %v568
        %v631 = vadd.f32 %v237, %v573
        %v632 = vadd.f32 %v237, %v578
        %v633 = vadd.f32 %v237, %v583
        %v634 = vadd.f32 %v237, %v588
        %v635 = vadd.f32 %v237, %v593
        %v636 = vadd.f32 %v237, %v598
        %v637 = vadd.f32 %v237, %v603
        %v638 = vadd.f32 %v237, %v608
        %v639 = vadd.f32 %v237, %v613
        %v640 = vadd.f32 %v237, %v618
        %v641 = vadd.f32 %v237, %v623
        %s642 = scalar_lea.vmem %s200, 96 [#allocation2]
        %v643 = vld [vmem:[%s642 + $0x3] sm:$0xff]
        %v644 = vld [vmem:[%s642 + $0xb] sm:$0xff]
        %v645 = vld [vmem:[%s642 + $0x1b] sm:$0xff]
        %v646 = vld [vmem:[%s642 + $0x23] sm:$0xff]
        %v647 = vld [vmem:[%s642 + $0x33] sm:$0xff]
        %v648 = vld [vmem:[%s642 + $0x3b] sm:$0xff]
        %v649 = vld [vmem:[%s642 + $0x4b] sm:$0xff]
        %v650 = vld [vmem:[%s642 + $0x53] sm:$0xff]
        %v651 = vld [vmem:[%s642 + $0x63] sm:$0xff]
        %v652 = vld [vmem:[%s642 + $0x6b] sm:$0xff]
        %v653 = vld [vmem:[%s642 + $0x7b] sm:$0xff]
        %v654 = vld [vmem:[%s642 + $0x83] sm:$0xff]
        %v655 = vld [vmem:[%s642 + $0x93] sm:$0xff]
        %v656 = vld [vmem:[%s642 + $0x9b] sm:$0xff]
        %v657 = vld [vmem:[%s642 + $0xab] sm:$0xff]
        %v658 = vld [vmem:[%s642 + $0xb3] sm:$0xff]
        %v659 = vld [vmem:[%s642 + $0x4] sm:$0xff]
        %v660 = vld [vmem:[%s642 + $0xc] sm:$0xff]
        %v661 = vld [vmem:[%s642 + $0x1c] sm:$0xff]
        %v662 = vld [vmem:[%s642 + $0x24] sm:$0xff]
        %v663 = vld [vmem:[%s642 + $0x34] sm:$0xff]
        %v664 = vld [vmem:[%s642 + $0x3c] sm:$0xff]
        %v665 = vld [vmem:[%s642 + $0x4c] sm:$0xff]
        %v666 = vld [vmem:[%s642 + $0x54] sm:$0xff]
        %v667 = vld [vmem:[%s642 + $0x64] sm:$0xff]
        %v668 = vld [vmem:[%s642 + $0x6c] sm:$0xff]
        %v669 = vld [vmem:[%s642 + $0x7c] sm:$0xff]
        %v670 = vld [vmem:[%s642 + $0x84] sm:$0xff]
        %v671 = vld [vmem:[%s642 + $0x94] sm:$0xff]
        %v672 = vld [vmem:[%s642 + $0x9c] sm:$0xff]
        %v673 = vld [vmem:[%s642 + $0xac] sm:$0xff]
        %v674 = vld [vmem:[%s642 + $0xb4] sm:$0xff]
        %v675 = vld [vmem:[%s642 + $0x5] sm:$0xff]
        %v676 = vld [vmem:[%s642 + $0xd] sm:$0xff]
        %v677 = vld [vmem:[%s642 + $0x1d] sm:$0xff]
        %v678 = vld [vmem:[%s642 + $0x25] sm:$0xff]
        %v679 = vld [vmem:[%s642 + $0x35] sm:$0xff]
        %v680 = vld [vmem:[%s642 + $0x3d] sm:$0xff]
        %v681 = vld [vmem:[%s642 + $0x4d] sm:$0xff]
        %v682 = vld [vmem:[%s642 + $0x55] sm:$0xff]
        %v683 = vld [vmem:[%s642 + $0x65] sm:$0xff]
        %v684 = vld [vmem:[%s642 + $0x6d] sm:$0xff]
        %v685 = vld [vmem:[%s642 + $0x7d] sm:$0xff]
        %v686 = vld [vmem:[%s642 + $0x85] sm:$0xff]
        %v687 = vld [vmem:[%s642 + $0x95] sm:$0xff]
        %v688 = vld [vmem:[%s642 + $0x9d] sm:$0xff]
        %v689 = vld [vmem:[%s642 + $0xad] sm:$0xff]
        %v690 = vld [vmem:[%s642 + $0xb5] sm:$0xff]
        %s691 = scalar_lea.vmem [#allocation4], 384
        %v692 = vld [vmem:[%s691] sm:$0xff]
        %v693 = vld [vmem:[%s691 + $0x8] sm:$0xff]
        %v694 = vld [vmem:[%s691 + $0x10] sm:$0xff]
        %v695 = vld [vmem:[%s691 + $0x18] sm:$0xff]
        %v696 = vld [vmem:[%s691 + $0x20] sm:$0xff]
        %v697 = vld [vmem:[%s691 + $0x28] sm:$0xff]
        %v698 = vld [vmem:[%s691 + $0x30] sm:$0xff]
        %v699 = vld [vmem:[%s691 + $0x38] sm:$0xff]
        %v700 = vld [vmem:[%s691 + $0x40] sm:$0xff]
        %v701 = vld [vmem:[%s691 + $0x48] sm:$0xff]
        %v702 = vld [vmem:[%s691 + $0x50] sm:$0xff]
        %v703 = vld [vmem:[%s691 + $0x58] sm:$0xff]
        %v704 = vld [vmem:[%s691 + $0x60] sm:$0xff]
        %v705 = vld [vmem:[%s691 + $0x68] sm:$0xff]
        %v706 = vld [vmem:[%s691 + $0x70] sm:$0xff]
        %v707 = vld [vmem:[%s691 + $0x78] sm:$0xff]
        %v708 = vld [vmem:[%s691 + $0x80] sm:$0xff]
        %v709 = vld [vmem:[%s691 + $0x88] sm:$0xff]
        %v710 = vld [vmem:[%s691 + $0x90] sm:$0xff]
        %v711 = vld [vmem:[%s691 + $0x98] sm:$0xff]
        %v712 = vld [vmem:[%s691 + $0xa0] sm:$0xff]
        %v713 = vld [vmem:[%s691 + $0xa8] sm:$0xff]
        %v714 = vld [vmem:[%s691 + $0xb0] sm:$0xff]
        %v715 = vld [vmem:[%s691 + $0xb8] sm:$0xff]
        %v716 = vld [vmem:[%s691 + $0xc0] sm:$0xff]
        %v717 = vld [vmem:[%s691 + $0xc8] sm:$0xff]
        %v718 = vld [vmem:[%s691 + $0xd0] sm:$0xff]
        %v719 = vld [vmem:[%s691 + $0xd8] sm:$0xff]
        %v720 = vld [vmem:[%s691 + $0xe0] sm:$0xff]
        %v721 = vld [vmem:[%s691 + $0xe8] sm:$0xff]
        %v722 = vld [vmem:[%s691 + $0xf0] sm:$0xff]
        %v723 = vld [vmem:[%s691 + $0xf8] sm:$0xff]
        %v724 = vld [vmem:[%s691 + $0x100] sm:$0xff]
        %v725 = vld [vmem:[%s691 + $0x108] sm:$0xff]
        %v726 = vld [vmem:[%s691 + $0x110] sm:$0xff]
        %v727 = vld [vmem:[%s691 + $0x118] sm:$0xff]
        %v728 = vld [vmem:[%s691 + $0x120] sm:$0xff]
        %v729 = vld [vmem:[%s691 + $0x128] sm:$0xff]
        %v730 = vld [vmem:[%s691 + $0x130] sm:$0xff]
        %v731 = vld [vmem:[%s691 + $0x138] sm:$0xff]
        %v732 = vld [vmem:[%s691 + $0x140] sm:$0xff]
        %v733 = vld [vmem:[%s691 + $0x148] sm:$0xff]
        %v734 = vld [vmem:[%s691 + $0x150] sm:$0xff]
        %v735 = vld [vmem:[%s691 + $0x158] sm:$0xff]
        %v736 = vld [vmem:[%s691 + $0x160] sm:$0xff]
        %v737 = vld [vmem:[%s691 + $0x168] sm:$0xff]
        %v738 = vld [vmem:[%s691 + $0x170] sm:$0xff]
        %v739 = vld [vmem:[%s691 + $0x178] sm:$0xff]
        %740 = vmatprep.subr.mxu0 0.0
        %741 = vmatpush1.msra.mxu0 %v692
        %742 = vmatprep.subr.mxu0 0.0
        %743 = vmatpush1.msra.mxu0 %v693
        %744 = vmatprep.subr.mxu0 0.0
        %745 = vmatpush1.msra.mxu0 %v694
        %746 = vmatprep.subr.mxu0 0.0
        %747 = vmatpush1.msra.mxu0 %v695
        %748 = vmatprep.subr.mxu0 0.0
        %749 = vmatpush1.msra.mxu0 %v696
        %750 = vmatprep.subr.mxu0 0.0
        %751 = vmatpush1.msra.mxu0 %v697
        %752 = vmatprep.subr.mxu0 0.0
        %753 = vmatpush1.msra.mxu0 %v698
        %754 = vmatprep.subr.mxu0 0.0
        %755 = vmatpush1.msra.mxu0 %v699
        %756 = vmatprep.subr.mxu0 0.0
        %757 = vmatpush1.msra.mxu0 %v700
        %758 = vmatprep.subr.mxu0 0.0
        %759 = vmatpush1.msra.mxu0 %v701
        %760 = vmatprep.subr.mxu0 0.0
        %761 = vmatpush1.msra.mxu0 %v702
        %762 = vmatprep.subr.mxu0 0.0
        %763 = vmatpush1.msra.mxu0 %v703
        %764 = vmatprep.subr.mxu0 0.0
        %765 = vmatpush1.msra.mxu0 %v704
        %766 = vmatprep.subr.mxu0 0.0
        %767 = vmatpush1.msra.mxu0 %v705
        %768 = vmatprep.subr.mxu0 0.0
        %769 = vmatpush1.msra.mxu0 %v706
        %770 = vmatprep.subr.mxu0 0.0
        %771 = vmatpush1.msra.mxu0 %v707
        %772 = vmatprep.subr.mxu0 0.0
        %773 = vmatpush1.msra.mxu0 %v708
        %774 = vmatprep.subr.mxu0 0.0
        %775 = vmatpush1.msra.mxu0 %v709
        %776 = vmatprep.subr.mxu0 0.0
        %777 = vmatpush1.msra.mxu0 %v710
        %778 = vmatprep.subr.mxu0 0.0
        %779 = vmatpush1.msra.mxu0 %v711
        %780 = vmatprep.subr.mxu0 0.0
        %781 = vmatpush1.msra.mxu0 %v712
        %782 = vmatprep.subr.mxu0 0.0
        %783 = vmatpush1.msra.mxu0 %v713
        %784 = vmatprep.subr.mxu0 0.0
        %785 = vmatpush1.msra.mxu0 %v714
        %786 = vmatprep.subr.mxu0 0.0
        %787 = vmatpush1.msra.mxu0 %v715
        %788 = vmatprep.subr.mxu0 0.0
        %789 = vmatpush1.msra.mxu0 %v716
        %790 = vmatprep.subr.mxu0 0.0
        %791 = vmatpush1.msra.mxu0 %v717
        %792 = vmatprep.subr.mxu0 0.0
        %793 = vmatpush1.msra.mxu0 %v718
        %794 = vmatprep.subr.mxu0 0.0
        %795 = vmatpush1.msra.mxu0 %v719
        %796 = vmatprep.subr.mxu0 0.0
        %797 = vmatpush1.msra.mxu0 %v720
        %798 = vmatprep.subr.mxu0 0.0
        %799 = vmatpush1.msra.mxu0 %v721
        %800 = vmatprep.subr.mxu0 0.0
        %801 = vmatpush1.msra.mxu0 %v722
        %802 = vmatprep.subr.mxu0 0.0
        %803 = vmatpush1.msra.mxu0 %v723
        %804 = vmatprep.mubr.f32.mxu0 %v659
        %805 = vmatmul.mubr.f32.gmra.mrb[0].mxu0 %v643
        %v806 = vpop.f32.mrb[0].mxu0
        %v807 = vadd.f32 0.0, %v806
        %v808 = vpop.f32.mrb[0].mxu0
        %809 = vmatprep.mubr.f32.mxu0 %v660
        %810 = vmatmul.mubr.f32.gmra.mrb[0].mxu0 %v644
        %v811 = vpop.f32.mrb[0].mxu0
        %v812 = vadd.f32 0.0, %v811
        %v813 = vpop.f32.mrb[0].mxu0
        %814 = vmatprep.mubr.f32.mxu0 %v661
        %815 = vmatmul.mubr.f32.gmra.mrb[0].mxu0 %v645
        %v816 = vpop.f32.mrb[0].mxu0
        %v817 = vadd.f32 0.0, %v816
        %v818 = vpop.f32.mrb[0].mxu0
        %819 = vmatprep.mubr.f32.mxu0 %v662
        %820 = vmatmul.mubr.f32.gmra.mrb[0].mxu0 %v646
        %v821 = vpop.f32.mrb[0].mxu0
        %v822 = vadd.f32 0.0, %v821
        %v823 = vpop.f32.mrb[0].mxu0
        %824 = vmatprep.mubr.f32.mxu0 %v663
        %825 = vmatmul.mubr.f32.gmra.mrb[0].mxu0 %v647
        %v826 = vpop.f32.mrb[0].mxu0
        %v827 = vadd.f32 0.0, %v826
        %v828 = vpop.f32.mrb[0].mxu0
        %829 = vmatprep.mubr.f32.mxu0 %v664
        %830 = vmatmul.mubr.f32.gmra.mrb[0].mxu0 %v648
        %v831 = vpop.f32.mrb[0].mxu0
        %v832 = vadd.f32 0.0, %v831
        %v833 = vpop.f32.mrb[0].mxu0
        %834 = vmatprep.mubr.f32.mxu0 %v665
        %835 = vmatmul.mubr.f32.gmra.mrb[0].mxu0 %v649
        %v836 = vpop.f32.mrb[0].mxu0
        %v837 = vadd.f32 0.0, %v836
        %v838 = vpop.f32.mrb[0].mxu0
        %839 = vmatprep.mubr.f32.mxu0 %v666
        %840 = vmatmul.mubr.f32.gmra.mrb[0].mxu0 %v650
        %v841 = vpop.f32.mrb[0].mxu0
        %v842 = vadd.f32 0.0, %v841
        %v843 = vpop.f32.mrb[0].mxu0
        %844 = vmatprep.mubr.f32.mxu0 %v667
        %845 = vmatmul.mubr.f32.gmra.mrb[0].mxu0 %v651
        %v846 = vpop.f32.mrb[0].mxu0
        %v847 = vadd.f32 0.0, %v846
        %v848 = vpop.f32.mrb[0].mxu0
        %849 = vmatprep.mubr.f32.mxu0 %v668
        %850 = vmatmul.mubr.f32.gmra.mrb[0].mxu0 %v652
        %v851 = vpop.f32.mrb[0].mxu0
        %v852 = vadd.f32 0.0, %v851
        %v853 = vpop.f32.mrb[0].mxu0
        %854 = vmatprep.mubr.f32.mxu0 %v669
        %855 = vmatmul.mubr.f32.gmra.mrb[0].mxu0 %v653
        %v856 = vpop.f32.mrb[0].mxu0
        %v857 = vadd.f32 0.0, %v856
        %v858 = vpop.f32.mrb[0].mxu0
        %859 = vmatprep.mubr.f32.mxu0 %v670
        %860 = vmatmul.mubr.f32.gmra.mrb[0].mxu0 %v654
        %v861 = vpop.f32.mrb[0].mxu0
        %v862 = vadd.f32 0.0, %v861
        %v863 = vpop.f32.mrb[0].mxu0
        %864 = vmatprep.mubr.f32.mxu0 %v671
        %865 = vmatmul.mubr.f32.gmra.mrb[0].mxu0 %v655
        %v866 = vpop.f32.mrb[0].mxu0
        %v867 = vadd.f32 0.0, %v866
        %v868 = vpop.f32.mrb[0].mxu0
        %869 = vmatprep.mubr.f32.mxu0 %v672
        %870 = vmatmul.mubr.f32.gmra.mrb[0].mxu0 %v656
        %v871 = vpop.f32.mrb[0].mxu0
        %v872 = vadd.f32 0.0, %v871
        %v873 = vpop.f32.mrb[0].mxu0
        %874 = vmatprep.mubr.f32.mxu0 %v673
        %875 = vmatmul.mubr.f32.gmra.mrb[0].mxu0 %v657
        %v876 = vpop.f32.mrb[0].mxu0
        %v877 = vadd.f32 0.0, %v876
        %v878 = vpop.f32.mrb[0].mxu0
        %879 = vmatprep.mubr.f32.mxu0 %v674
        %880 = vmatmul.mubr.f32.gmra.mrb[0].mxu0 %v658
        %v881 = vpop.f32.mrb[0].mxu0
        %v882 = vadd.f32 0.0, %v881
        %v883 = vpop.f32.mrb[0].mxu0
        %884 = vdwg.mxu0
        %885 = vmatprep.subr.mxu0 0.0
        %886 = vmatpush1.msra.mxu0 %v724
        %887 = vmatprep.subr.mxu0 0.0
        %888 = vmatpush1.msra.mxu0 %v725
        %889 = vmatprep.subr.mxu0 0.0
        %890 = vmatpush1.msra.mxu0 %v726
        %891 = vmatprep.subr.mxu0 0.0
        %892 = vmatpush1.msra.mxu0 %v727
        %893 = vmatprep.subr.mxu0 0.0
        %894 = vmatpush1.msra.mxu0 %v728
        %895 = vmatprep.subr.mxu0 0.0
        %896 = vmatpush1.msra.mxu0 %v729
        %897 = vmatprep.subr.mxu0 0.0
        %898 = vmatpush1.msra.mxu0 %v730
        %899 = vmatprep.subr.mxu0 0.0
        %900 = vmatpush1.msra.mxu0 %v731
        %901 = vmatprep.subr.mxu0 0.0
        %902 = vmatpush1.msra.mxu0 %v732
        %903 = vmatprep.subr.mxu0 0.0
        %904 = vmatpush1.msra.mxu0 %v733
        %905 = vmatprep.subr.mxu0 0.0
        %906 = vmatpush1.msra.mxu0 %v734
        %907 = vmatprep.subr.mxu0 0.0
        %908 = vmatpush1.msra.mxu0 %v735
        %909 = vmatprep.subr.mxu0 0.0
        %910 = vmatpush1.msra.mxu0 %v736
        %911 = vmatprep.subr.mxu0 0.0
        %912 = vmatpush1.msra.mxu0 %v737
        %913 = vmatprep.subr.mxu0 0.0
        %914 = vmatpush1.msra.mxu0 %v738
        %915 = vmatprep.subr.mxu0 0.0
        %916 = vmatpush1.msra.mxu0 %v739
        %917 = vmatprep.subr.mxu0 0.0
        %918 = vmatpush1.msra.mxu0 0.0
        %919 = vmatprep.subr.mxu0 0.0
        %920 = vmatpush1.msra.mxu0 0.0
        %921 = vmatprep.subr.mxu0 0.0
        %922 = vmatpush1.msra.mxu0 0.0
        %923 = vmatprep.subr.mxu0 0.0
        %924 = vmatpush1.msra.mxu0 0.0
        %925 = vmatprep.subr.mxu0 0.0
        %926 = vmatpush1.msra.mxu0 0.0
        %927 = vmatprep.subr.mxu0 0.0
        %928 = vmatpush1.msra.mxu0 0.0
        %929 = vmatprep.subr.mxu0 0.0
        %930 = vmatpush1.msra.mxu0 0.0
        %931 = vmatprep.subr.mxu0 0.0
        %932 = vmatpush1.msra.mxu0 0.0
        %933 = vmatprep.subr.mxu0 0.0
        %934 = vmatpush1.msra.mxu0 0.0
        %935 = vmatprep.subr.mxu0 0.0
        %936 = vmatpush1.msra.mxu0 0.0
        %937 = vmatprep.subr.mxu0 0.0
        %938 = vmatpush1.msra.mxu0 0.0
        %939 = vmatprep.subr.mxu0 0.0
        %940 = vmatpush1.msra.mxu0 0.0
        %941 = vmatprep.subr.mxu0 0.0
        %942 = vmatpush1.msra.mxu0 0.0
        %943 = vmatprep.subr.mxu0 0.0
        %944 = vmatpush1.msra.mxu0 0.0
        %945 = vmatprep.subr.mxu0 0.0
        %946 = vmatpush1.msra.mxu0 0.0
        %947 = vmatprep.subr.mxu0 0.0
        %948 = vmatpush1.msra.mxu0 0.0
        %949 = vmatprep.mubr.f32.mxu0 0.0
        %950 = vmatmul.mubr.f32.gmra.mrb[0].mxu0 %v675
        %v951 = vpop.f32.mrb[0].mxu0
        %v952 = vadd.f32 %v807, %v951
        %v953 = vpop.f32.mrb[0].mxu0
        %954 = vmatprep.mubr.f32.mxu0 0.0
        %955 = vmatmul.mubr.f32.gmra.mrb[0].mxu0 %v676
        %v956 = vpop.f32.mrb[0].mxu0
        %v957 = vadd.f32 %v812, %v956
        %v958 = vpop.f32.mrb[0].mxu0
        %959 = vmatprep.mubr.f32.mxu0 0.0
        %960 = vmatmul.mubr.f32.gmra.mrb[0].mxu0 %v677
        %v961 = vpop.f32.mrb[0].mxu0
        %v962 = vadd.f32 %v817, %v961
        %v963 = vpop.f32.mrb[0].mxu0
        %964 = vmatprep.mubr.f32.mxu0 0.0
        %965 = vmatmul.mubr.f32.gmra.mrb[0].mxu0 %v678
        %v966 = vpop.f32.mrb[0].mxu0
        %v967 = vadd.f32 %v822, %v966
        %v968 = vpop.f32.mrb[0].mxu0
        %969 = vmatprep.mubr.f32.mxu0 0.0
        %970 = vmatmul.mubr.f32.gmra.mrb[0].mxu0 %v679
        %v971 = vpop.f32.mrb[0].mxu0
        %v972 = vadd.f32 %v827, %v971
        %v973 = vpop.f32.mrb[0].mxu0
        %974 = vmatprep.mubr.f32.mxu0 0.0
        %975 = vmatmul.mubr.f32.gmra.mrb[0].mxu0 %v680
        %v976 = vpop.f32.mrb[0].mxu0
        %v977 = vadd.f32 %v832, %v976
        %v978 = vpop.f32.mrb[0].mxu0
        %979 = vmatprep.mubr.f32.mxu0 0.0
        %980 = vmatmul.mubr.f32.gmra.mrb[0].mxu0 %v681
        %v981 = vpop.f32.mrb[0].mxu0
        %v982 = vadd.f32 %v837, %v981
        %v983 = vpop.f32.mrb[0].mxu0
        %984 = vmatprep.mubr.f32.mxu0 0.0
        %985 = vmatmul.mubr.f32.gmra.mrb[0].mxu0 %v682
        %v986 = vpop.f32.mrb[0].mxu0
        %v987 = vadd.f32 %v842, %v986
        %v988 = vpop.f32.mrb[0].mxu0
        %989 = vmatprep.mubr.f32.mxu0 0.0
        %990 = vmatmul.mubr.f32.gmra.mrb[0].mxu0 %v683
        %v991 = vpop.f32.mrb[0].mxu0
        %v992 = vadd.f32 %v847, %v991
        %v993 = vpop.f32.mrb[0].mxu0
        %994 = vmatprep.mubr.f32.mxu0 0.0
        %995 = vmatmul.mubr.f32.gmra.mrb[0].mxu0 %v684
        %v996 = vpop.f32.mrb[0].mxu0
        %v997 = vadd.f32 %v852, %v996
        %v998 = vpop.f32.mrb[0].mxu0
        %999 = vmatprep.mubr.f32.mxu0 0.0
        %1000 = vmatmul.mubr.f32.gmra.mrb[0].mxu0 %v685
        %v1001 = vpop.f32.mrb[0].mxu0
        %v1002 = vadd.f32 %v857, %v1001
        %v1003 = vpop.f32.mrb[0].mxu0
        %1004 = vmatprep.mubr.f32.mxu0 0.0
        %1005 = vmatmul.mubr.f32.gmra.mrb[0].mxu0 %v686
        %v1006 = vpop.f32.mrb[0].mxu0
        %v1007 = vadd.f32 %v862, %v1006
        %v1008 = vpop.f32.mrb[0].mxu0
        %1009 = vmatprep.mubr.f32.mxu0 0.0
        %1010 = vmatmul.mubr.f32.gmra.mrb[0].mxu0 %v687
        %v1011 = vpop.f32.mrb[0].mxu0
        %v1012 = vadd.f32 %v867, %v1011
        %v1013 = vpop.f32.mrb[0].mxu0
        %1014 = vmatprep.mubr.f32.mxu0 0.0
        %1015 = vmatmul.mubr.f32.gmra.mrb[0].mxu0 %v688
        %v1016 = vpop.f32.mrb[0].mxu0
        %v1017 = vadd.f32 %v872, %v1016
        %v1018 = vpop.f32.mrb[0].mxu0
        %1019 = vmatprep.mubr.f32.mxu0 0.0
        %1020 = vmatmul.mubr.f32.gmra.mrb[0].mxu0 %v689
        %v1021 = vpop.f32.mrb[0].mxu0
        %v1022 = vadd.f32 %v877, %v1021
        %v1023 = vpop.f32.mrb[0].mxu0
        %1024 = vmatprep.mubr.f32.mxu0 0.0
        %1025 = vmatmul.mubr.f32.gmra.mrb[0].mxu0 %v690
        %v1026 = vpop.f32.mrb[0].mxu0
        %v1027 = vadd.f32 %v882, %v1026
        %v1028 = vpop.f32.mrb[0].mxu0
        %1029 = vdwg.mxu0
        %v1030 = vadd.f32 %v626, %v952
        %v1031 = vadd.f32 %v627, %v957
        %v1032 = vadd.f32 %v628, %v962
        %v1033 = vadd.f32 %v629, %v967
        %v1034 = vadd.f32 %v630, %v972
        %v1035 = vadd.f32 %v631, %v977
        %v1036 = vadd.f32 %v632, %v982
        %v1037 = vadd.f32 %v633, %v987
        %v1038 = vadd.f32 %v634, %v992
        %v1039 = vadd.f32 %v635, %v997
        %v1040 = vadd.f32 %v636, %v1002
        %v1041 = vadd.f32 %v637, %v1007
        %v1042 = vadd.f32 %v638, %v1012
        %v1043 = vadd.f32 %v639, %v1017
        %v1044 = vadd.f32 %v640, %v1022
        %v1045 = vadd.f32 %v641, %v1027
        %s1046 = scalar_lea.vmem %s200, 120 [#allocation2]
        %v1047 = vld [vmem:[%s1046 + $0x3] sm:$0xff]
        %v1048 = vld [vmem:[%s1046 + $0xb] sm:$0xff]
        %v1049 = vld [vmem:[%s1046 + $0x1b] sm:$0xff]
        %v1050 = vld [vmem:[%s1046 + $0x23] sm:$0xff]
        %v1051 = vld [vmem:[%s1046 + $0x33] sm:$0xff]
        %v1052 = vld [vmem:[%s1046 + $0x3b] sm:$0xff]
        %v1053 = vld [vmem:[%s1046 + $0x4b] sm:$0xff]
        %v1054 = vld [vmem:[%s1046 + $0x53] sm:$0xff]
        %v1055 = vld [vmem:[%s1046 + $0x63] sm:$0xff]
        %v1056 = vld [vmem:[%s1046 + $0x6b] sm:$0xff]
        %v1057 = vld [vmem:[%s1046 + $0x7b] sm:$0xff]
        %v1058 = vld [vmem:[%s1046 + $0x83] sm:$0xff]
        %v1059 = vld [vmem:[%s1046 + $0x93] sm:$0xff]
        %v1060 = vld [vmem:[%s1046 + $0x9b] sm:$0xff]
        %v1061 = vld [vmem:[%s1046 + $0xab] sm:$0xff]
        %v1062 = vld [vmem:[%s1046 + $0xb3] sm:$0xff]
        %v1063 = vld [vmem:[%s1046 + $0x4] sm:$0xff]
        %v1064 = vld [vmem:[%s1046 + $0xc] sm:$0xff]
        %v1065 = vld [vmem:[%s1046 + $0x1c] sm:$0xff]
        %v1066 = vld [vmem:[%s1046 + $0x24] sm:$0xff]
        %v1067 = vld [vmem:[%s1046 + $0x34] sm:$0xff]
        %v1068 = vld [vmem:[%s1046 + $0x3c] sm:$0xff]
        %v1069 = vld [vmem:[%s1046 + $0x4c] sm:$0xff]
        %v1070 = vld [vmem:[%s1046 + $0x54] sm:$0xff]
        %v1071 = vld [vmem:[%s1046 + $0x64] sm:$0xff]
        %v1072 = vld [vmem:[%s1046 + $0x6c] sm:$0xff]
        %v1073 = vld [vmem:[%s1046 + $0x7c] sm:$0xff]
        %v1074 = vld [vmem:[%s1046 + $0x84] sm:$0xff]
        %v1075 = vld [vmem:[%s1046 + $0x94] sm:$0xff]
        %v1076 = vld [vmem:[%s1046 + $0x9c] sm:$0xff]
        %v1077 = vld [vmem:[%s1046 + $0xac] sm:$0xff]
        %v1078 = vld [vmem:[%s1046 + $0xb4] sm:$0xff]
        %v1079 = vld [vmem:[%s1046 + $0x5] sm:$0xff]
        %v1080 = vld [vmem:[%s1046 + $0xd] sm:$0xff]
        %v1081 = vld [vmem:[%s1046 + $0x1d] sm:$0xff]
        %v1082 = vld [vmem:[%s1046 + $0x25] sm:$0xff]
        %v1083 = vld [vmem:[%s1046 + $0x35] sm:$0xff]
        %v1084 = vld [vmem:[%s1046 + $0x3d] sm:$0xff]
        %v1085 = vld [vmem:[%s1046 + $0x4d] sm:$0xff]
        %v1086 = vld [vmem:[%s1046 + $0x55] sm:$0xff]
        %v1087 = vld [vmem:[%s1046 + $0x65] sm:$0xff]
        %v1088 = vld [vmem:[%s1046 + $0x6d] sm:$0xff]
        %v1089 = vld [vmem:[%s1046 + $0x7d] sm:$0xff]
        %v1090 = vld [vmem:[%s1046 + $0x85] sm:$0xff]
        %v1091 = vld [vmem:[%s1046 + $0x95] sm:$0xff]
        %v1092 = vld [vmem:[%s1046 + $0x9d] sm:$0xff]
        %v1093 = vld [vmem:[%s1046 + $0xad] sm:$0xff]
        %v1094 = vld [vmem:[%s1046 + $0xb5] sm:$0xff]
        %s1095 = scalar_lea.vmem [#allocation4], 768
        %v1096 = vld [vmem:[%s1095] sm:$0xff]
        %v1097 = vld [vmem:[%s1095 + $0x8] sm:$0xff]
        %v1098 = vld [vmem:[%s1095 + $0x10] sm:$0xff]
        %v1099 = vld [vmem:[%s1095 + $0x18] sm:$0xff]
        %v1100 = vld [vmem:[%s1095 + $0x20] sm:$0xff]
        %v1101 = vld [vmem:[%s1095 + $0x28] sm:$0xff]
        %v1102 = vld [vmem:[%s1095 + $0x30] sm:$0xff]
        %v1103 = vld [vmem:[%s1095 + $0x38] sm:$0xff]
        %v1104 = vld [vmem:[%s1095 + $0x40] sm:$0xff]
        %v1105 = vld [vmem:[%s1095 + $0x48] sm:$0xff]
        %v1106 = vld [vmem:[%s1095 + $0x50] sm:$0xff]
        %v1107 = vld [vmem:[%s1095 + $0x58] sm:$0xff]
        %v1108 = vld [vmem:[%s1095 + $0x60] sm:$0xff]
        %v1109 = vld [vmem:[%s1095 + $0x68] sm:$0xff]
        %v1110 = vld [vmem:[%s1095 + $0x70] sm:$0xff]
        %v1111 = vld [vmem:[%s1095 + $0x78] sm:$0xff]
        %v1112 = vld [vmem:[%s1095 + $0x80] sm:$0xff]
        %v1113 = vld [vmem:[%s1095 + $0x88] sm:$0xff]
        %v1114 = vld [vmem:[%s1095 + $0x90] sm:$0xff]
        %v1115 = vld [vmem:[%s1095 + $0x98] sm:$0xff]
        %v1116 = vld [vmem:[%s1095 + $0xa0] sm:$0xff]
        %v1117 = vld [vmem:[%s1095 + $0xa8] sm:$0xff]
        %v1118 = vld [vmem:[%s1095 + $0xb0] sm:$0xff]
        %v1119 = vld [vmem:[%s1095 + $0xb8] sm:$0xff]
        %v1120 = vld [vmem:[%s1095 + $0xc0] sm:$0xff]
        %v1121 = vld [vmem:[%s1095 + $0xc8] sm:$0xff]
        %v1122 = vld [vmem:[%s1095 + $0xd0] sm:$0xff]
        %v1123 = vld [vmem:[%s1095 + $0xd8] sm:$0xff]
        %v1124 = vld [vmem:[%s1095 + $0xe0] sm:$0xff]
        %v1125 = vld [vmem:[%s1095 + $0xe8] sm:$0xff]
        %v1126 = vld [vmem:[%s1095 + $0xf0] sm:$0xff]
        %v1127 = vld [vmem:[%s1095 + $0xf8] sm:$0xff]
        %v1128 = vld [vmem:[%s1095 + $0x100] sm:$0xff]
        %v1129 = vld [vmem:[%s1095 + $0x108] sm:$0xff]
        %v1130 = vld [vmem:[%s1095 + $0x110] sm:$0xff]
        %v1131 = vld [vmem:[%s1095 + $0x118] sm:$0xff]
        %v1132 = vld [vmem:[%s1095 + $0x120] sm:$0xff]
        %v1133 = vld [vmem:[%s1095 + $0x128] sm:$0xff]
        %v1134 = vld [vmem:[%s1095 + $0x130] sm:$0xff]
        %v1135 = vld [vmem:[%s1095 + $0x138] sm:$0xff]
        %v1136 = vld [vmem:[%s1095 + $0x140] sm:$0xff]
        %v1137 = vld [vmem:[%s1095 + $0x148] sm:$0xff]
        %v1138 = vld [vmem:[%s1095 + $0x150] sm:$0xff]
        %v1139 = vld [vmem:[%s1095 + $0x158] sm:$0xff]
        %v1140 = vld [vmem:[%s1095 + $0x160] sm:$0xff]
        %v1141 = vld [vmem:[%s1095 + $0x168] sm:$0xff]
        %v1142 = vld [vmem:[%s1095 + $0x170] sm:$0xff]
        %v1143 = vld [vmem:[%s1095 + $0x178] sm:$0xff]
        %1144 = vmatprep.subr.mxu0 0.0
        %1145 = vmatpush1.msra.mxu0 %v1096
        %1146 = vmatprep.subr.mxu0 0.0
        %1147 = vmatpush1.msra.mxu0 %v1097
        %1148 = vmatprep.subr.mxu0 0.0
        %1149 = vmatpush1.msra.mxu0 %v1098
        %1150 = vmatprep.subr.mxu0 0.0
        %1151 = vmatpush1.msra.mxu0 %v1099
        %1152 = vmatprep.subr.mxu0 0.0
        %1153 = vmatpush1.msra.mxu0 %v1100
        %1154 = vmatprep.subr.mxu0 0.0
        %1155 = vmatpush1.msra.mxu0 %v1101
        %1156 = vmatprep.subr.mxu0 0.0
        %1157 = vmatpush1.msra.mxu0 %v1102
        %1158 = vmatprep.subr.mxu0 0.0
        %1159 = vmatpush1.msra.mxu0 %v1103
        %1160 = vmatprep.subr.mxu0 0.0
        %1161 = vmatpush1.msra.mxu0 %v1104
        %1162 = vmatprep.subr.mxu0 0.0
        %1163 = vmatpush1.msra.mxu0 %v1105
        %1164 = vmatprep.subr.mxu0 0.0
        %1165 = vmatpush1.msra.mxu0 %v1106
        %1166 = vmatprep.subr.mxu0 0.0
        %1167 = vmatpush1.msra.mxu0 %v1107
        %1168 = vmatprep.subr.mxu0 0.0
        %1169 = vmatpush1.msra.mxu0 %v1108
        %1170 = vmatprep.subr.mxu0 0.0
        %1171 = vmatpush1.msra.mxu0 %v1109
        %1172 = vmatprep.subr.mxu0 0.0
        %1173 = vmatpush1.msra.mxu0 %v1110
        %1174 = vmatprep.subr.mxu0 0.0
        %1175 = vmatpush1.msra.mxu0 %v1111
        %1176 = vmatprep.subr.mxu0 0.0
        %1177 = vmatpush1.msra.mxu0 %v1112
        %1178 = vmatprep.subr.mxu0 0.0
        %1179 = vmatpush1.msra.mxu0 %v1113
        %1180 = vmatprep.subr.mxu0 0.0
        %1181 = vmatpush1.msra.mxu0 %v1114
        %1182 = vmatprep.subr.mxu0 0.0
        %1183 = vmatpush1.msra.mxu0 %v1115
        %1184 = vmatprep.subr.mxu0 0.0
        %1185 = vmatpush1.msra.mxu0 %v1116
        %1186 = vmatprep.subr.mxu0 0.0
        %1187 = vmatpush1.msra.mxu0 %v1117
        %1188 = vmatprep.subr.mxu0 0.0
        %1189 = vmatpush1.msra.mxu0 %v1118
        %1190 = vmatprep.subr.mxu0 0.0
        %1191 = vmatpush1.msra.mxu0 %v1119
        %1192 = vmatprep.subr.mxu0 0.0
        %1193 = vmatpush1.msra.mxu0 %v1120
        %1194 = vmatprep.subr.mxu0 0.0
        %1195 = vmatpush1.msra.mxu0 %v1121
        %1196 = vmatprep.subr.mxu0 0.0
        %1197 = vmatpush1.msra.mxu0 %v1122
        %1198 = vmatprep.subr.mxu0 0.0
        %1199 = vmatpush1.msra.mxu0 %v1123
        %1200 = vmatprep.subr.mxu0 0.0
        %1201 = vmatpush1.msra.mxu0 %v1124
        %1202 = vmatprep.subr.mxu0 0.0
        %1203 = vmatpush1.msra.mxu0 %v1125
        %1204 = vmatprep.subr.mxu0 0.0
        %1205 = vmatpush1.msra.mxu0 %v1126
        %1206 = vmatprep.subr.mxu0 0.0
        %1207 = vmatpush1.msra.mxu0 %v1127
        %1208 = vmatprep.mubr.f32.mxu0 %v1063
        %1209 = vmatmul.mubr.f32.gmra.mrb[0].mxu0 %v1047
        %v1210 = vpop.f32.mrb[0].mxu0
        %v1211 = vadd.f32 0.0, %v1210
        %v1212 = vpop.f32.mrb[0].mxu0
        %1213 = vmatprep.mubr.f32.mxu0 %v1064
        %1214 = vmatmul.mubr.f32.gmra.mrb[0].mxu0 %v1048
        %v1215 = vpop.f32.mrb[0].mxu0
        %v1216 = vadd.f32 0.0, %v1215
        %v1217 = vpop.f32.mrb[0].mxu0
        %1218 = vmatprep.mubr.f32.mxu0 %v1065
        %1219 = vmatmul.mubr.f32.gmra.mrb[0].mxu0 %v1049
        %v1220 = vpop.f32.mrb[0].mxu0
        %v1221 = vadd.f32 0.0, %v1220
        %v1222 = vpop.f32.mrb[0].mxu0
        %1223 = vmatprep.mubr.f32.mxu0 %v1066
        %1224 = vmatmul.mubr.f32.gmra.mrb[0].mxu0 %v1050
        %v1225 = vpop.f32.mrb[0].mxu0
        %v1226 = vadd.f32 0.0, %v1225
        %v1227 = vpop.f32.mrb[0].mxu0
        %1228 = vmatprep.mubr.f32.mxu0 %v1067
        %1229 = vmatmul.mubr.f32.gmra.mrb[0].mxu0 %v1051
        %v1230 = vpop.f32.mrb[0].mxu0
        %v1231 = vadd.f32 0.0, %v1230
        %v1232 = vpop.f32.mrb[0].mxu0
        %1233 = vmatprep.mubr.f32.mxu0 %v1068
        %1234 = vmatmul.mubr.f32.gmra.mrb[0].mxu0 %v1052
        %v1235 = vpop.f32.mrb[0].mxu0
        %v1236 = vadd.f32 0.0, %v1235
        %v1237 = vpop.f32.mrb[0].mxu0
        %1238 = vmatprep.mubr.f32.mxu0 %v1069
        %1239 = vmatmul.mubr.f32.gmra.mrb[0].mxu0 %v1053
        %v1240 = vpop.f32.mrb[0].mxu0
        %v1241 = vadd.f32 0.0, %v1240
        %v1242 = vpop.f32.mrb[0].mxu0
        %1243 = vmatprep.mubr.f32.mxu0 %v1070
        %1244 = vmatmul.mubr.f32.gmra.mrb[0].mxu0 %v1054
        %v1245 = vpop.f32.mrb[0].mxu0
        %v1246 = vadd.f32 0.0, %v1245
        %v1247 = vpop.f32.mrb[0].mxu0
        %1248 = vmatprep.mubr.f32.mxu0 %v1071
        %1249 = vmatmul.mubr.f32.gmra.mrb[0].mxu0 %v1055
        %v1250 = vpop.f32.mrb[0].mxu0
        %v1251 = vadd.f32 0.0, %v1250
        %v1252 = vpop.f32.mrb[0].mxu0
        %1253 = vmatprep.mubr.f32.mxu0 %v1072
        %1254 = vmatmul.mubr.f32.gmra.mrb[0].mxu0 %v1056
        %v1255 = vpop.f32.mrb[0].mxu0
        %v1256 = vadd.f32 0.0, %v1255
        %v1257 = vpop.f32.mrb[0].mxu0
        %1258 = vmatprep.mubr.f32.mxu0 %v1073
        %1259 = vmatmul.mubr.f32.gmra.mrb[0].mxu0 %v1057
        %v1260 = vpop.f32.mrb[0].mxu0
        %v1261 = vadd.f32 0.0, %v1260
        %v1262 = vpop.f32.mrb[0].mxu0
        %1263 = vmatprep.mubr.f32.mxu0 %v1074
        %1264 = vmatmul.mubr.f32.gmra.mrb[0].mxu0 %v1058
        %v1265 = vpop.f32.mrb[0].mxu0
        %v1266 = vadd.f32 0.0, %v1265
        %v1267 = vpop.f32.mrb[0].mxu0
        %1268 = vmatprep.mubr.f32.mxu0 %v1075
        %1269 = vmatmul.mubr.f32.gmra.mrb[0].mxu0 %v1059
        %v1270 = vpop.f32.mrb[0].mxu0
        %v1271 = vadd.f32 0.0, %v1270
        %v1272 = vpop.f32.mrb[0].mxu0
        %1273 = vmatprep.mubr.f32.mxu0 %v1076
        %1274 = vmatmul.mubr.f32.gmra.mrb[0].mxu0 %v1060
        %v1275 = vpop.f32.mrb[0].mxu0
        %v1276 = vadd.f32 0.0, %v1275
        %v1277 = vpop.f32.mrb[0].mxu0
        %1278 = vmatprep.mubr.f32.mxu0 %v1077
        %1279 = vmatmul.mubr.f32.gmra.mrb[0].mxu0 %v1061
        %v1280 = vpop.f32.mrb[0].mxu0
        %v1281 = vadd.f32 0.0, %v1280
        %v1282 = vpop.f32.mrb[0].mxu0
        %1283 = vmatprep.mubr.f32.mxu0 %v1078
        %1284 = vmatmul.mubr.f32.gmra.mrb[0].mxu0 %v1062
        %v1285 = vpop.f32.mrb[0].mxu0
        %v1286 = vadd.f32 0.0, %v1285
        %v1287 = vpop.f32.mrb[0].mxu0
        %1288 = vdwg.mxu0
        %1289 = vmatprep.subr.mxu0 0.0
        %1290 = vmatpush1.msra.mxu0 %v1128
        %1291 = vmatprep.subr.mxu0 0.0
        %1292 = vmatpush1.msra.mxu0 %v1129
        %1293 = vmatprep.subr.mxu0 0.0
        %1294 = vmatpush1.msra.mxu0 %v1130
        %1295 = vmatprep.subr.mxu0 0.0
        %1296 = vmatpush1.msra.mxu0 %v1131
        %1297 = vmatprep.subr.mxu0 0.0
        %1298 = vmatpush1.msra.mxu0 %v1132
        %1299 = vmatprep.subr.mxu0 0.0
        %1300 = vmatpush1.msra.mxu0 %v1133
        %1301 = vmatprep.subr.mxu0 0.0
        %1302 = vmatpush1.msra.mxu0 %v1134
        %1303 = vmatprep.subr.mxu0 0.0
        %1304 = vmatpush1.msra.mxu0 %v1135
        %1305 = vmatprep.subr.mxu0 0.0
        %1306 = vmatpush1.msra.mxu0 %v1136
        %1307 = vmatprep.subr.mxu0 0.0
        %1308 = vmatpush1.msra.mxu0 %v1137
        %1309 = vmatprep.subr.mxu0 0.0
        %1310 = vmatpush1.msra.mxu0 %v1138
        %1311 = vmatprep.subr.mxu0 0.0
        %1312 = vmatpush1.msra.mxu0 %v1139
        %1313 = vmatprep.subr.mxu0 0.0
        %1314 = vmatpush1.msra.mxu0 %v1140
        %1315 = vmatprep.subr.mxu0 0.0
        %1316 = vmatpush1.msra.mxu0 %v1141
        %1317 = vmatprep.subr.mxu0 0.0
        %1318 = vmatpush1.msra.mxu0 %v1142
        %1319 = vmatprep.subr.mxu0 0.0
        %1320 = vmatpush1.msra.mxu0 %v1143
        %1321 = vmatprep.subr.mxu0 0.0
        %1322 = vmatpush1.msra.mxu0 0.0
        %1323 = vmatprep.subr.mxu0 0.0
        %1324 = vmatpush1.msra.mxu0 0.0
        %1325 = vmatprep.subr.mxu0 0.0
        %1326 = vmatpush1.msra.mxu0 0.0
        %1327 = vmatprep.subr.mxu0 0.0
        %1328 = vmatpush1.msra.mxu0 0.0
        %1329 = vmatprep.subr.mxu0 0.0
        %1330 = vmatpush1.msra.mxu0 0.0
        %1331 = vmatprep.subr.mxu0 0.0
        %1332 = vmatpush1.msra.mxu0 0.0
        %1333 = vmatprep.subr.mxu0 0.0
        %1334 = vmatpush1.msra.mxu0 0.0
        %1335 = vmatprep.subr.mxu0 0.0
        %1336 = vmatpush1.msra.mxu0 0.0
        %1337 = vmatprep.subr.mxu0 0.0
        %1338 = vmatpush1.msra.mxu0 0.0
        %1339 = vmatprep.subr.mxu0 0.0
        %1340 = vmatpush1.msra.mxu0 0.0
        %1341 = vmatprep.subr.mxu0 0.0
        %1342 = vmatpush1.msra.mxu0 0.0
        %1343 = vmatprep.subr.mxu0 0.0
        %1344 = vmatpush1.msra.mxu0 0.0
        %1345 = vmatprep.subr.mxu0 0.0
        %1346 = vmatpush1.msra.mxu0 0.0
        %1347 = vmatprep.subr.mxu0 0.0
        %1348 = vmatpush1.msra.mxu0 0.0
        %1349 = vmatprep.subr.mxu0 0.0
        %1350 = vmatpush1.msra.mxu0 0.0
        %1351 = vmatprep.subr.mxu0 0.0
        %1352 = vmatpush1.msra.mxu0 0.0
        %1353 = vmatprep.mubr.f32.mxu0 0.0
        %1354 = vmatmul.mubr.f32.gmra.mrb[0].mxu0 %v1079
        %v1355 = vpop.f32.mrb[0].mxu0
        %v1356 = vadd.f32 %v1211, %v1355
        %v1357 = vpop.f32.mrb[0].mxu0
        %1358 = vmatprep.mubr.f32.mxu0 0.0
        %1359 = vmatmul.mubr.f32.gmra.mrb[0].mxu0 %v1080
        %v1360 = vpop.f32.mrb[0].mxu0
        %v1361 = vadd.f32 %v1216, %v1360
        %v1362 = vpop.f32.mrb[0].mxu0
        %1363 = vmatprep.mubr.f32.mxu0 0.0
        %1364 = vmatmul.mubr.f32.gmra.mrb[0].mxu0 %v1081
        %v1365 = vpop.f32.mrb[0].mxu0
        %v1366 = vadd.f32 %v1221, %v1365
        %v1367 = vpop.f32.mrb[0].mxu0
        %1368 = vmatprep.mubr.f32.mxu0 0.0
        %1369 = vmatmul.mubr.f32.gmra.mrb[0].mxu0 %v1082
        %v1370 = vpop.f32.mrb[0].mxu0
        %v1371 = vadd.f32 %v1226, %v1370
        %v1372 = vpop.f32.mrb[0].mxu0
        %1373 = vmatprep.mubr.f32.mxu0 0.0
        %1374 = vmatmul.mubr.f32.gmra.mrb[0].mxu0 %v1083
        %v1375 = vpop.f32.mrb[0].mxu0
        %v1376 = vadd.f32 %v1231, %v1375
        %v1377 = vpop.f32.mrb[0].mxu0
        %1378 = vmatprep.mubr.f32.mxu0 0.0
        %1379 = vmatmul.mubr.f32.gmra.mrb[0].mxu0 %v1084
        %v1380 = vpop.f32.mrb[0].mxu0
        %v1381 = vadd.f32 %v1236, %v1380
        %v1382 = vpop.f32.mrb[0].mxu0
        %1383 = vmatprep.mubr.f32.mxu0 0.0
        %1384 = vmatmul.mubr.f32.gmra.mrb[0].mxu0 %v1085
        %v1385 = vpop.f32.mrb[0].mxu0
        %v1386 = vadd.f32 %v1241, %v1385
        %v1387 = vpop.f32.mrb[0].mxu0
        %1388 = vmatprep.mubr.f32.mxu0 0.0
        %1389 = vmatmul.mubr.f32.gmra.mrb[0].mxu0 %v1086
        %v1390 = vpop.f32.mrb[0].mxu0
        %v1391 = vadd.f32 %v1246, %v1390
        %v1392 = vpop.f32.mrb[0].mxu0
        %1393 = vmatprep.mubr.f32.mxu0 0.0
        %1394 = vmatmul.mubr.f32.gmra.mrb[0].mxu0 %v1087
        %v1395 = vpop.f32.mrb[0].mxu0
        %v1396 = vadd.f32 %v1251, %v1395
        %v1397 = vpop.f32.mrb[0].mxu0
        %1398 = vmatprep.mubr.f32.mxu0 0.0
        %1399 = vmatmul.mubr.f32.gmra.mrb[0].mxu0 %v1088
        %v1400 = vpop.f32.mrb[0].mxu0
        %v1401 = vadd.f32 %v1256, %v1400
        %v1402 = vpop.f32.mrb[0].mxu0
        %1403 = vmatprep.mubr.f32.mxu0 0.0
        %1404 = vmatmul.mubr.f32.gmra.mrb[0].mxu0 %v1089
        %v1405 = vpop.f32.mrb[0].mxu0
        %v1406 = vadd.f32 %v1261, %v1405
        %v1407 = vpop.f32.mrb[0].mxu0
        %1408 = vmatprep.mubr.f32.mxu0 0.0
        %1409 = vmatmul.mubr.f32.gmra.mrb[0].mxu0 %v1090
        %v1410 = vpop.f32.mrb[0].mxu0
        %v1411 = vadd.f32 %v1266, %v1410
        %v1412 = vpop.f32.mrb[0].mxu0
        %1413 = vmatprep.mubr.f32.mxu0 0.0
        %1414 = vmatmul.mubr.f32.gmra.mrb[0].mxu0 %v1091
        %v1415 = vpop.f32.mrb[0].mxu0
        %v1416 = vadd.f32 %v1271, %v1415
        %v1417 = vpop.f32.mrb[0].mxu0
        %1418 = vmatprep.mubr.f32.mxu0 0.0
        %1419 = vmatmul.mubr.f32.gmra.mrb[0].mxu0 %v1092
        %v1420 = vpop.f32.mrb[0].mxu0
        %v1421 = vadd.f32 %v1276, %v1420
        %v1422 = vpop.f32.mrb[0].mxu0
        %1423 = vmatprep.mubr.f32.mxu0 0.0
        %1424 = vmatmul.mubr.f32.gmra.mrb[0].mxu0 %v1093
        %v1425 = vpop.f32.mrb[0].mxu0
        %v1426 = vadd.f32 %v1281, %v1425
        %v1427 = vpop.f32.mrb[0].mxu0
        %1428 = vmatprep.mubr.f32.mxu0 0.0
        %1429 = vmatmul.mubr.f32.gmra.mrb[0].mxu0 %v1094
        %v1430 = vpop.f32.mrb[0].mxu0
        %v1431 = vadd.f32 %v1286, %v1430
        %v1432 = vpop.f32.mrb[0].mxu0
        %1433 = vdwg.mxu0
        %v1434 = vadd.f32 %v1030, %v1356
        %v1435 = vadd.f32 %v1031, %v1361
        %v1436 = vadd.f32 %v1032, %v1366
        %v1437 = vadd.f32 %v1033, %v1371
        %v1438 = vadd.f32 %v1034, %v1376
        %v1439 = vadd.f32 %v1035, %v1381
        %v1440 = vadd.f32 %v1036, %v1386
        %v1441 = vadd.f32 %v1037, %v1391
        %v1442 = vadd.f32 %v1038, %v1396
        %v1443 = vadd.f32 %v1039, %v1401
        %v1444 = vadd.f32 %v1040, %v1406
        %v1445 = vadd.f32 %v1041, %v1411
        %v1446 = vadd.f32 %v1042, %v1416
        %v1447 = vadd.f32 %v1043, %v1421
        %v1448 = vadd.f32 %v1044, %v1426
        %v1449 = vadd.f32 %v1045, %v1431
        %s1450 = scalar_lea.vmem %s200, 48 [#allocation2]
        %v1451 = vld [vmem:[%s1450 + $0x2] sm:$0xff]
        %v1452 = vld [vmem:[%s1450 + $0xa] sm:$0xff]
        %v1453 = vld [vmem:[%s1450 + $0x1a] sm:$0xff]
        %v1454 = vld [vmem:[%s1450 + $0x22] sm:$0xff]
        %v1455 = vld [vmem:[%s1450 + $0x32] sm:$0xff]
        %v1456 = vld [vmem:[%s1450 + $0x3a] sm:$0xff]
        %v1457 = vld [vmem:[%s1450 + $0x4a] sm:$0xff]
        %v1458 = vld [vmem:[%s1450 + $0x52] sm:$0xff]
        %v1459 = vld [vmem:[%s1450 + $0x62] sm:$0xff]
        %v1460 = vld [vmem:[%s1450 + $0x6a] sm:$0xff]
        %v1461 = vld [vmem:[%s1450 + $0x7a] sm:$0xff]
        %v1462 = vld [vmem:[%s1450 + $0x82] sm:$0xff]
        %v1463 = vld [vmem:[%s1450 + $0x92] sm:$0xff]
        %v1464 = vld [vmem:[%s1450 + $0x9a] sm:$0xff]
        %v1465 = vld [vmem:[%s1450 + $0xaa] sm:$0xff]
        %v1466 = vld [vmem:[%s1450 + $0xb2] sm:$0xff]
        %v1467 = vld [vmem:[%s1450 + $0x4] sm:$0xff]
        %v1468 = vld [vmem:[%s1450 + $0xc] sm:$0xff]
        %v1469 = vld [vmem:[%s1450 + $0x1c] sm:$0xff]
        %v1470 = vld [vmem:[%s1450 + $0x24] sm:$0xff]
        %v1471 = vld [vmem:[%s1450 + $0x34] sm:$0xff]
        %v1472 = vld [vmem:[%s1450 + $0x3c] sm:$0xff]
        %v1473 = vld [vmem:[%s1450 + $0x4c] sm:$0xff]
        %v1474 = vld [vmem:[%s1450 + $0x54] sm:$0xff]
        %v1475 = vld [vmem:[%s1450 + $0x64] sm:$0xff]
        %v1476 = vld [vmem:[%s1450 + $0x6c] sm:$0xff]
        %v1477 = vld [vmem:[%s1450 + $0x7c] sm:$0xff]
        %v1478 = vld [vmem:[%s1450 + $0x84] sm:$0xff]
        %v1479 = vld [vmem:[%s1450 + $0x94] sm:$0xff]
        %v1480 = vld [vmem:[%s1450 + $0x9c] sm:$0xff]
        %v1481 = vld [vmem:[%s1450 + $0xac] sm:$0xff]
        %v1482 = vld [vmem:[%s1450 + $0xb4] sm:$0xff]
        %v1483 = vld [vmem:[%s1450 + $0x6] sm:$0xff]
        %v1484 = vld [vmem:[%s1450 + $0xe] sm:$0xff]
        %v1485 = vld [vmem:[%s1450 + $0x1e] sm:$0xff]
        %v1486 = vld [vmem:[%s1450 + $0x26] sm:$0xff]
        %v1487 = vld [vmem:[%s1450 + $0x36] sm:$0xff]
        %v1488 = vld [vmem:[%s1450 + $0x3e] sm:$0xff]
        %v1489 = vld [vmem:[%s1450 + $0x4e] sm:$0xff]
        %v1490 = vld [vmem:[%s1450 + $0x56] sm:$0xff]
        %v1491 = vld [vmem:[%s1450 + $0x66] sm:$0xff]
        %v1492 = vld [vmem:[%s1450 + $0x6e] sm:$0xff]
        %v1493 = vld [vmem:[%s1450 + $0x7e] sm:$0xff]
        %v1494 = vld [vmem:[%s1450 + $0x86] sm:$0xff]
        %v1495 = vld [vmem:[%s1450 + $0x96] sm:$0xff]
        %v1496 = vld [vmem:[%s1450 + $0x9e] sm:$0xff]
        %v1497 = vld [vmem:[%s1450 + $0xae] sm:$0xff]
        %v1498 = vld [vmem:[%s1450 + $0xb6] sm:$0xff]
        %s1499 = scalar_lea.vmem [#allocation4], 1152
        %v1500 = vld [vmem:[%s1499] sm:$0xff]
        %v1501 = vld [vmem:[%s1499 + $0x8] sm:$0xff]
        %v1502 = vld [vmem:[%s1499 + $0x10] sm:$0xff]
        %v1503 = vld [vmem:[%s1499 + $0x18] sm:$0xff]
        %v1504 = vld [vmem:[%s1499 + $0x20] sm:$0xff]
        %v1505 = vld [vmem:[%s1499 + $0x28] sm:$0xff]
        %v1506 = vld [vmem:[%s1499 + $0x30] sm:$0xff]
        %v1507 = vld [vmem:[%s1499 + $0x38] sm:$0xff]
        %v1508 = vld [vmem:[%s1499 + $0x40] sm:$0xff]
        %v1509 = vld [vmem:[%s1499 + $0x48] sm:$0xff]
        %v1510 = vld [vmem:[%s1499 + $0x50] sm:$0xff]
        %v1511 = vld [vmem:[%s1499 + $0x58] sm:$0xff]
        %v1512 = vld [vmem:[%s1499 + $0x60] sm:$0xff]
        %v1513 = vld [vmem:[%s1499 + $0x68] sm:$0xff]
        %v1514 = vld [vmem:[%s1499 + $0x70] sm:$0xff]
        %v1515 = vld [vmem:[%s1499 + $0x78] sm:$0xff]
        %v1516 = vld [vmem:[%s1499 + $0x80] sm:$0xff]
        %v1517 = vld [vmem:[%s1499 + $0x88] sm:$0xff]
        %v1518 = vld [vmem:[%s1499 + $0x90] sm:$0xff]
        %v1519 = vld [vmem:[%s1499 + $0x98] sm:$0xff]
        %v1520 = vld [vmem:[%s1499 + $0xa0] sm:$0xff]
        %v1521 = vld [vmem:[%s1499 + $0xa8] sm:$0xff]
        %v1522 = vld [vmem:[%s1499 + $0xb0] sm:$0xff]
        %v1523 = vld [vmem:[%s1499 + $0xb8] sm:$0xff]
        %v1524 = vld [vmem:[%s1499 + $0xc0] sm:$0xff]
        %v1525 = vld [vmem:[%s1499 + $0xc8] sm:$0xff]
        %v1526 = vld [vmem:[%s1499 + $0xd0] sm:$0xff]
        %v1527 = vld [vmem:[%s1499 + $0xd8] sm:$0xff]
        %v1528 = vld [vmem:[%s1499 + $0xe0] sm:$0xff]
        %v1529 = vld [vmem:[%s1499 + $0xe8] sm:$0xff]
        %v1530 = vld [vmem:[%s1499 + $0xf0] sm:$0xff]
        %v1531 = vld [vmem:[%s1499 + $0xf8] sm:$0xff]
        %v1532 = vld [vmem:[%s1499 + $0x100] sm:$0xff]
        %v1533 = vld [vmem:[%s1499 + $0x108] sm:$0xff]
        %v1534 = vld [vmem:[%s1499 + $0x110] sm:$0xff]
        %v1535 = vld [vmem:[%s1499 + $0x118] sm:$0xff]
        %v1536 = vld [vmem:[%s1499 + $0x120] sm:$0xff]
        %v1537 = vld [vmem:[%s1499 + $0x128] sm:$0xff]
        %v1538 = vld [vmem:[%s1499 + $0x130] sm:$0xff]
        %v1539 = vld [vmem:[%s1499 + $0x138] sm:$0xff]
        %v1540 = vld [vmem:[%s1499 + $0x140] sm:$0xff]
        %v1541 = vld [vmem:[%s1499 + $0x148] sm:$0xff]
        %v1542 = vld [vmem:[%s1499 + $0x150] sm:$0xff]
        %v1543 = vld [vmem:[%s1499 + $0x158] sm:$0xff]
        %v1544 = vld [vmem:[%s1499 + $0x160] sm:$0xff]
        %v1545 = vld [vmem:[%s1499 + $0x168] sm:$0xff]
        %v1546 = vld [vmem:[%s1499 + $0x170] sm:$0xff]
        %v1547 = vld [vmem:[%s1499 + $0x178] sm:$0xff]
        %1548 = vmatprep.subr.mxu0 0.0
        %1549 = vmatpush1.msra.mxu0 %v1500
        %1550 = vmatprep.subr.mxu0 0.0
        %1551 = vmatpush1.msra.mxu0 %v1501
        %1552 = vmatprep.subr.mxu0 0.0
        %1553 = vmatpush1.msra.mxu0 %v1502
        %1554 = vmatprep.subr.mxu0 0.0
        %1555 = vmatpush1.msra.mxu0 %v1503
        %1556 = vmatprep.subr.mxu0 0.0
        %1557 = vmatpush1.msra.mxu0 %v1504
        %1558 = vmatprep.subr.mxu0 0.0
        %1559 = vmatpush1.msra.mxu0 %v1505
        %1560 = vmatprep.subr.mxu0 0.0
        %1561 = vmatpush1.msra.mxu0 %v1506
        %1562 = vmatprep.subr.mxu0 0.0
        %1563 = vmatpush1.msra.mxu0 %v1507
        %1564 = vmatprep.subr.mxu0 0.0
        %1565 = vmatpush1.msra.mxu0 %v1508
        %1566 = vmatprep.subr.mxu0 0.0
        %1567 = vmatpush1.msra.mxu0 %v1509
        %1568 = vmatprep.subr.mxu0 0.0
        %1569 = vmatpush1.msra.mxu0 %v1510
        %1570 = vmatprep.subr.mxu0 0.0
        %1571 = vmatpush1.msra.mxu0 %v1511
        %1572 = vmatprep.subr.mxu0 0.0
        %1573 = vmatpush1.msra.mxu0 %v1512
        %1574 = vmatprep.subr.mxu0 0.0
        %1575 = vmatpush1.msra.mxu0 %v1513
        %1576 = vmatprep.subr.mxu0 0.0
        %1577 = vmatpush1.msra.mxu0 %v1514
        %1578 = vmatprep.subr.mxu0 0.0
        %1579 = vmatpush1.msra.mxu0 %v1515
        %1580 = vmatprep.subr.mxu0 0.0
        %1581 = vmatpush1.msra.mxu0 %v1516
        %1582 = vmatprep.subr.mxu0 0.0
        %1583 = vmatpush1.msra.mxu0 %v1517
        %1584 = vmatprep.subr.mxu0 0.0
        %1585 = vmatpush1.msra.mxu0 %v1518
        %1586 = vmatprep.subr.mxu0 0.0
        %1587 = vmatpush1.msra.mxu0 %v1519
        %1588 = vmatprep.subr.mxu0 0.0
        %1589 = vmatpush1.msra.mxu0 %v1520
        %1590 = vmatprep.subr.mxu0 0.0
        %1591 = vmatpush1.msra.mxu0 %v1521
        %1592 = vmatprep.subr.mxu0 0.0
        %1593 = vmatpush1.msra.mxu0 %v1522
        %1594 = vmatprep.subr.mxu0 0.0
        %1595 = vmatpush1.msra.mxu0 %v1523
        %1596 = vmatprep.subr.mxu0 0.0
        %1597 = vmatpush1.msra.mxu0 %v1524
        %1598 = vmatprep.subr.mxu0 0.0
        %1599 = vmatpush1.msra.mxu0 %v1525
        %1600 = vmatprep.subr.mxu0 0.0
        %1601 = vmatpush1.msra.mxu0 %v1526
        %1602 = vmatprep.subr.mxu0 0.0
        %1603 = vmatpush1.msra.mxu0 %v1527
        %1604 = vmatprep.subr.mxu0 0.0
        %1605 = vmatpush1.msra.mxu0 %v1528
        %1606 = vmatprep.subr.mxu0 0.0
        %1607 = vmatpush1.msra.mxu0 %v1529
        %1608 = vmatprep.subr.mxu0 0.0
        %1609 = vmatpush1.msra.mxu0 %v1530
        %1610 = vmatprep.subr.mxu0 0.0
        %1611 = vmatpush1.msra.mxu0 %v1531
        %1612 = vmatprep.mubr.f32.mxu0 %v1467
        %1613 = vmatmul.mubr.f32.gmra.mrb[0].mxu0 %v1451
        %v1614 = vpop.f32.mrb[0].mxu0
        %v1615 = vadd.f32 0.0, %v1614
        %v1616 = vpop.f32.mrb[0].mxu0
        %1617 = vmatprep.mubr.f32.mxu0 %v1468
        %1618 = vmatmul.mubr.f32.gmra.mrb[0].mxu0 %v1452
        %v1619 = vpop.f32.mrb[0].mxu0
        %v1620 = vadd.f32 0.0, %v1619
        %v1621 = vpop.f32.mrb[0].mxu0
        %1622 = vmatprep.mubr.f32.mxu0 %v1469
        %1623 = vmatmul.mubr.f32.gmra.mrb[0].mxu0 %v1453
        %v1624 = vpop.f32.mrb[0].mxu0
        %v1625 = vadd.f32 0.0, %v1624
        %v1626 = vpop.f32.mrb[0].mxu0
        %1627 = vmatprep.mubr.f32.mxu0 %v1470
        %1628 = vmatmul.mubr.f32.gmra.mrb[0].mxu0 %v1454
        %v1629 = vpop.f32.mrb[0].mxu0
        %v1630 = vadd.f32 0.0, %v1629
        %v1631 = vpop.f32.mrb[0].mxu0
        %1632 = vmatprep.mubr.f32.mxu0 %v1471
        %1633 = vmatmul.mubr.f32.gmra.mrb[0].mxu0 %v1455
        %v1634 = vpop.f32.mrb[0].mxu0
        %v1635 = vadd.f32 0.0, %v1634
        %v1636 = vpop.f32.mrb[0].mxu0
        %1637 = vmatprep.mubr.f32.mxu0 %v1472
        %1638 = vmatmul.mubr.f32.gmra.mrb[0].mxu0 %v1456
        %v1639 = vpop.f32.mrb[0].mxu0
        %v1640 = vadd.f32 0.0, %v1639
        %v1641 = vpop.f32.mrb[0].mxu0
        %1642 = vmatprep.mubr.f32.mxu0 %v1473
        %1643 = vmatmul.mubr.f32.gmra.mrb[0].mxu0 %v1457
        %v1644 = vpop.f32.mrb[0].mxu0
        %v1645 = vadd.f32 0.0, %v1644
        %v1646 = vpop.f32.mrb[0].mxu0
        %1647 = vmatprep.mubr.f32.mxu0 %v1474
        %1648 = vmatmul.mubr.f32.gmra.mrb[0].mxu0 %v1458
        %v1649 = vpop.f32.mrb[0].mxu0
        %v1650 = vadd.f32 0.0, %v1649
        %v1651 = vpop.f32.mrb[0].mxu0
        %1652 = vmatprep.mubr.f32.mxu0 %v1475
        %1653 = vmatmul.mubr.f32.gmra.mrb[0].mxu0 %v1459
        %v1654 = vpop.f32.mrb[0].mxu0
        %v1655 = vadd.f32 0.0, %v1654
        %v1656 = vpop.f32.mrb[0].mxu0
        %1657 = vmatprep.mubr.f32.mxu0 %v1476
        %1658 = vmatmul.mubr.f32.gmra.mrb[0].mxu0 %v1460
        %v1659 = vpop.f32.mrb[0].mxu0
        %v1660 = vadd.f32 0.0, %v1659
        %v1661 = vpop.f32.mrb[0].mxu0
        %1662 = vmatprep.mubr.f32.mxu0 %v1477
        %1663 = vmatmul.mubr.f32.gmra.mrb[0].mxu0 %v1461
        %v1664 = vpop.f32.mrb[0].mxu0
        %v1665 = vadd.f32 0.0, %v1664
        %v1666 = vpop.f32.mrb[0].mxu0
        %1667 = vmatprep.mubr.f32.mxu0 %v1478
        %1668 = vmatmul.mubr.f32.gmra.mrb[0].mxu0 %v1462
        %v1669 = vpop.f32.mrb[0].mxu0
        %v1670 = vadd.f32 0.0, %v1669
        %v1671 = vpop.f32.mrb[0].mxu0
        %1672 = vmatprep.mubr.f32.mxu0 %v1479
        %1673 = vmatmul.mubr.f32.gmra.mrb[0].mxu0 %v1463
        %v1674 = vpop.f32.mrb[0].mxu0
        %v1675 = vadd.f32 0.0, %v1674
        %v1676 = vpop.f32.mrb[0].mxu0
        %1677 = vmatprep.mubr.f32.mxu0 %v1480
        %1678 = vmatmul.mubr.f32.gmra.mrb[0].mxu0 %v1464
        %v1679 = vpop.f32.mrb[0].mxu0
        %v1680 = vadd.f32 0.0, %v1679
        %v1681 = vpop.f32.mrb[0].mxu0
        %1682 = vmatprep.mubr.f32.mxu0 %v1481
        %1683 = vmatmul.mubr.f32.gmra.mrb[0].mxu0 %v1465
        %v1684 = vpop.f32.mrb[0].mxu0
        %v1685 = vadd.f32 0.0, %v1684
        %v1686 = vpop.f32.mrb[0].mxu0
        %1687 = vmatprep.mubr.f32.mxu0 %v1482
        %1688 = vmatmul.mubr.f32.gmra.mrb[0].mxu0 %v1466
        %v1689 = vpop.f32.mrb[0].mxu0
        %v1690 = vadd.f32 0.0, %v1689
        %v1691 = vpop.f32.mrb[0].mxu0
        %1692 = vdwg.mxu0
        %1693 = vmatprep.subr.mxu0 0.0
        %1694 = vmatpush1.msra.mxu0 %v1532
        %1695 = vmatprep.subr.mxu0 0.0
        %1696 = vmatpush1.msra.mxu0 %v1533
        %1697 = vmatprep.subr.mxu0 0.0
        %1698 = vmatpush1.msra.mxu0 %v1534
        %1699 = vmatprep.subr.mxu0 0.0
        %1700 = vmatpush1.msra.mxu0 %v1535
        %1701 = vmatprep.subr.mxu0 0.0
        %1702 = vmatpush1.msra.mxu0 %v1536
        %1703 = vmatprep.subr.mxu0 0.0
        %1704 = vmatpush1.msra.mxu0 %v1537
        %1705 = vmatprep.subr.mxu0 0.0
        %1706 = vmatpush1.msra.mxu0 %v1538
        %1707 = vmatprep.subr.mxu0 0.0
        %1708 = vmatpush1.msra.mxu0 %v1539
        %1709 = vmatprep.subr.mxu0 0.0
        %1710 = vmatpush1.msra.mxu0 %v1540
        %1711 = vmatprep.subr.mxu0 0.0
        %1712 = vmatpush1.msra.mxu0 %v1541
        %1713 = vmatprep.subr.mxu0 0.0
        %1714 = vmatpush1.msra.mxu0 %v1542
        %1715 = vmatprep.subr.mxu0 0.0
        %1716 = vmatpush1.msra.mxu0 %v1543
        %1717 = vmatprep.subr.mxu0 0.0
        %1718 = vmatpush1.msra.mxu0 %v1544
        %1719 = vmatprep.subr.mxu0 0.0
        %1720 = vmatpush1.msra.mxu0 %v1545
        %1721 = vmatprep.subr.mxu0 0.0
        %1722 = vmatpush1.msra.mxu0 %v1546
        %1723 = vmatprep.subr.mxu0 0.0
        %1724 = vmatpush1.msra.mxu0 %v1547
        %1725 = vmatprep.subr.mxu0 0.0
        %1726 = vmatpush1.msra.mxu0 0.0
        %1727 = vmatprep.subr.mxu0 0.0
        %1728 = vmatpush1.msra.mxu0 0.0
        %1729 = vmatprep.subr.mxu0 0.0
        %1730 = vmatpush1.msra.mxu0 0.0
        %1731 = vmatprep.subr.mxu0 0.0
        %1732 = vmatpush1.msra.mxu0 0.0
        %1733 = vmatprep.subr.mxu0 0.0
        %1734 = vmatpush1.msra.mxu0 0.0
        %1735 = vmatprep.subr.mxu0 0.0
        %1736 = vmatpush1.msra.mxu0 0.0
        %1737 = vmatprep.subr.mxu0 0.0
        %1738 = vmatpush1.msra.mxu0 0.0
        %1739 = vmatprep.subr.mxu0 0.0
        %1740 = vmatpush1.msra.mxu0 0.0
        %1741 = vmatprep.subr.mxu0 0.0
        %1742 = vmatpush1.msra.mxu0 0.0
        %1743 = vmatprep.subr.mxu0 0.0
        %1744 = vmatpush1.msra.mxu0 0.0
        %1745 = vmatprep.subr.mxu0 0.0
        %1746 = vmatpush1.msra.mxu0 0.0
        %1747 = vmatprep.subr.mxu0 0.0
        %1748 = vmatpush1.msra.mxu0 0.0
        %1749 = vmatprep.subr.mxu0 0.0
        %1750 = vmatpush1.msra.mxu0 0.0
        %1751 = vmatprep.subr.mxu0 0.0
        %1752 = vmatpush1.msra.mxu0 0.0
        %1753 = vmatprep.subr.mxu0 0.0
        %1754 = vmatpush1.msra.mxu0 0.0
        %1755 = vmatprep.subr.mxu0 0.0
        %1756 = vmatpush1.msra.mxu0 0.0
        %1757 = vmatprep.mubr.f32.mxu0 0.0
        %1758 = vmatmul.mubr.f32.gmra.mrb[0].mxu0 %v1483
        %v1759 = vpop.f32.mrb[0].mxu0
        %v1760 = vadd.f32 %v1615, %v1759
        %v1761 = vpop.f32.mrb[0].mxu0
        %1762 = vmatprep.mubr.f32.mxu0 0.0
        %1763 = vmatmul.mubr.f32.gmra.mrb[0].mxu0 %v1484
        %v1764 = vpop.f32.mrb[0].mxu0
        %v1765 = vadd.f32 %v1620, %v1764
        %v1766 = vpop.f32.mrb[0].mxu0
        %1767 = vmatprep.mubr.f32.mxu0 0.0
        %1768 = vmatmul.mubr.f32.gmra.mrb[0].mxu0 %v1485
        %v1769 = vpop.f32.mrb[0].mxu0
        %v1770 = vadd.f32 %v1625, %v1769
        %v1771 = vpop.f32.mrb[0].mxu0
        %1772 = vmatprep.mubr.f32.mxu0 0.0
        %1773 = vmatmul.mubr.f32.gmra.mrb[0].mxu0 %v1486
        %v1774 = vpop.f32.mrb[0].mxu0
        %v1775 = vadd.f32 %v1630, %v1774
        %v1776 = vpop.f32.mrb[0].mxu0
        %1777 = vmatprep.mubr.f32.mxu0 0.0
        %1778 = vmatmul.mubr.f32.gmra.mrb[0].mxu0 %v1487
        %v1779 = vpop.f32.mrb[0].mxu0
        %v1780 = vadd.f32 %v1635, %v1779
        %v1781 = vpop.f32.mrb[0].mxu0
        %1782 = vmatprep.mubr.f32.mxu0 0.0
        %1783 = vmatmul.mubr.f32.gmra.mrb[0].mxu0 %v1488
        %v1784 = vpop.f32.mrb[0].mxu0
        %v1785 = vadd.f32 %v1640, %v1784
        %v1786 = vpop.f32.mrb[0].mxu0
        %1787 = vmatprep.mubr.f32.mxu0 0.0
        %1788 = vmatmul.mubr.f32.gmra.mrb[0].mxu0 %v1489
        %v1789 = vpop.f32.mrb[0].mxu0
        %v1790 = vadd.f32 %v1645, %v1789
        %v1791 = vpop.f32.mrb[0].mxu0
        %1792 = vmatprep.mubr.f32.mxu0 0.0
        %1793 = vmatmul.mubr.f32.gmra.mrb[0].mxu0 %v1490
        %v1794 = vpop.f32.mrb[0].mxu0
        %v1795 = vadd.f32 %v1650, %v1794
        %v1796 = vpop.f32.mrb[0].mxu0
        %1797 = vmatprep.mubr.f32.mxu0 0.0
        %1798 = vmatmul.mubr.f32.gmra.mrb[0].mxu0 %v1491
        %v1799 = vpop.f32.mrb[0].mxu0
        %v1800 = vadd.f32 %v1655, %v1799
        %v1801 = vpop.f32.mrb[0].mxu0
        %1802 = vmatprep.mubr.f32.mxu0 0.0
        %1803 = vmatmul.mubr.f32.gmra.mrb[0].mxu0 %v1492
        %v1804 = vpop.f32.mrb[0].mxu0
        %v1805 = vadd.f32 %v1660, %v1804
        %v1806 = vpop.f32.mrb[0].mxu0
        %1807 = vmatprep.mubr.f32.mxu0 0.0
        %1808 = vmatmul.mubr.f32.gmra.mrb[0].mxu0 %v1493
        %v1809 = vpop.f32.mrb[0].mxu0
        %v1810 = vadd.f32 %v1665, %v1809
        %v1811 = vpop.f32.mrb[0].mxu0
        %1812 = vmatprep.mubr.f32.mxu0 0.0
        %1813 = vmatmul.mubr.f32.gmra.mrb[0].mxu0 %v1494
        %v1814 = vpop.f32.mrb[0].mxu0
        %v1815 = vadd.f32 %v1670, %v1814
        %v1816 = vpop.f32.mrb[0].mxu0
        %1817 = vmatprep.mubr.f32.mxu0 0.0
        %1818 = vmatmul.mubr.f32.gmra.mrb[0].mxu0 %v1495
        %v1819 = vpop.f32.mrb[0].mxu0
        %v1820 = vadd.f32 %v1675, %v1819
        %v1821 = vpop.f32.mrb[0].mxu0
        %1822 = vmatprep.mubr.f32.mxu0 0.0
        %1823 = vmatmul.mubr.f32.gmra.mrb[0].mxu0 %v1496
        %v1824 = vpop.f32.mrb[0].mxu0
        %v1825 = vadd.f32 %v1680, %v1824
        %v1826 = vpop.f32.mrb[0].mxu0
        %1827 = vmatprep.mubr.f32.mxu0 0.0
        %1828 = vmatmul.mubr.f32.gmra.mrb[0].mxu0 %v1497
        %v1829 = vpop.f32.mrb[0].mxu0
        %v1830 = vadd.f32 %v1685, %v1829
        %v1831 = vpop.f32.mrb[0].mxu0
        %1832 = vmatprep.mubr.f32.mxu0 0.0
        %1833 = vmatmul.mubr.f32.gmra.mrb[0].mxu0 %v1498
        %v1834 = vpop.f32.mrb[0].mxu0
        %v1835 = vadd.f32 %v1690, %v1834
        %v1836 = vpop.f32.mrb[0].mxu0
        %1837 = vdwg.mxu0
        %v1838 = vadd.f32 %v1434, %v1760
        %v1839 = vadd.f32 %v1435, %v1765
        %v1840 = vadd.f32 %v1436, %v1770
        %v1841 = vadd.f32 %v1437, %v1775
        %v1842 = vadd.f32 %v1438, %v1780
        %v1843 = vadd.f32 %v1439, %v1785
        %v1844 = vadd.f32 %v1440, %v1790
        %v1845 = vadd.f32 %v1441, %v1795
        %v1846 = vadd.f32 %v1442, %v1800
        %v1847 = vadd.f32 %v1443, %v1805
        %v1848 = vadd.f32 %v1444, %v1810
        %v1849 = vadd.f32 %v1445, %v1815
        %v1850 = vadd.f32 %v1446, %v1820
        %v1851 = vadd.f32 %v1447, %v1825
        %v1852 = vadd.f32 %v1448, %v1830
        %v1853 = vadd.f32 %v1449, %v1835
        %v1854 = vld [vmem:[%s642 + $0x2] sm:$0xff]
        %v1855 = vld [vmem:[%s642 + $0xa] sm:$0xff]
        %v1856 = vld [vmem:[%s642 + $0x1a] sm:$0xff]
        %v1857 = vld [vmem:[%s642 + $0x22] sm:$0xff]
        %v1858 = vld [vmem:[%s642 + $0x32] sm:$0xff]
        %v1859 = vld [vmem:[%s642 + $0x3a] sm:$0xff]
        %v1860 = vld [vmem:[%s642 + $0x4a] sm:$0xff]
        %v1861 = vld [vmem:[%s642 + $0x52] sm:$0xff]
        %v1862 = vld [vmem:[%s642 + $0x62] sm:$0xff]
        %v1863 = vld [vmem:[%s642 + $0x6a] sm:$0xff]
        %v1864 = vld [vmem:[%s642 + $0x7a] sm:$0xff]
        %v1865 = vld [vmem:[%s642 + $0x82] sm:$0xff]
        %v1866 = vld [vmem:[%s642 + $0x92] sm:$0xff]
        %v1867 = vld [vmem:[%s642 + $0x9a] sm:$0xff]
        %v1868 = vld [vmem:[%s642 + $0xaa] sm:$0xff]
        %v1869 = vld [vmem:[%s642 + $0xb2] sm:$0xff]
        %v1870 = vld [vmem:[%s642 + $0x6] sm:$0xff]
        %v1871 = vld [vmem:[%s642 + $0xe] sm:$0xff]
        %v1872 = vld [vmem:[%s642 + $0x1e] sm:$0xff]
        %v1873 = vld [vmem:[%s642 + $0x26] sm:$0xff]
        %v1874 = vld [vmem:[%s642 + $0x36] sm:$0xff]
        %v1875 = vld [vmem:[%s642 + $0x3e] sm:$0xff]
        %v1876 = vld [vmem:[%s642 + $0x4e] sm:$0xff]
        %v1877 = vld [vmem:[%s642 + $0x56] sm:$0xff]
        %v1878 = vld [vmem:[%s642 + $0x66] sm:$0xff]
        %v1879 = vld [vmem:[%s642 + $0x6e] sm:$0xff]
        %v1880 = vld [vmem:[%s642 + $0x7e] sm:$0xff]
        %v1881 = vld [vmem:[%s642 + $0x86] sm:$0xff]
        %v1882 = vld [vmem:[%s642 + $0x96] sm:$0xff]
        %v1883 = vld [vmem:[%s642 + $0x9e] sm:$0xff]
        %v1884 = vld [vmem:[%s642 + $0xae] sm:$0xff]
        %v1885 = vld [vmem:[%s642 + $0xb6] sm:$0xff]
        %s1886 = scalar_lea.vmem [#allocation4], 1536
        %v1887 = vld [vmem:[%s1886] sm:$0xff]
        %v1888 = vld [vmem:[%s1886 + $0x8] sm:$0xff]
        %v1889 = vld [vmem:[%s1886 + $0x10] sm:$0xff]
        %v1890 = vld [vmem:[%s1886 + $0x18] sm:$0xff]
        %v1891 = vld [vmem:[%s1886 + $0x20] sm:$0xff]
        %v1892 = vld [vmem:[%s1886 + $0x28] sm:$0xff]
        %v1893 = vld [vmem:[%s1886 + $0x30] sm:$0xff]
        %v1894 = vld [vmem:[%s1886 + $0x38] sm:$0xff]
        %v1895 = vld [vmem:[%s1886 + $0x40] sm:$0xff]
        %v1896 = vld [vmem:[%s1886 + $0x48] sm:$0xff]
        %v1897 = vld [vmem:[%s1886 + $0x50] sm:$0xff]
        %v1898 = vld [vmem:[%s1886 + $0x58] sm:$0xff]
        %v1899 = vld [vmem:[%s1886 + $0x60] sm:$0xff]
        %v1900 = vld [vmem:[%s1886 + $0x68] sm:$0xff]
        %v1901 = vld [vmem:[%s1886 + $0x70] sm:$0xff]
        %v1902 = vld [vmem:[%s1886 + $0x78] sm:$0xff]
        %v1903 = vld [vmem:[%s1886 + $0x80] sm:$0xff]
        %v1904 = vld [vmem:[%s1886 + $0x88] sm:$0xff]
        %v1905 = vld [vmem:[%s1886 + $0x90] sm:$0xff]
        %v1906 = vld [vmem:[%s1886 + $0x98] sm:$0xff]
        %v1907 = vld [vmem:[%s1886 + $0xa0] sm:$0xff]
        %v1908 = vld [vmem:[%s1886 + $0xa8] sm:$0xff]
        %v1909 = vld [vmem:[%s1886 + $0xb0] sm:$0xff]
        %v1910 = vld [vmem:[%s1886 + $0xb8] sm:$0xff]
        %v1911 = vld [vmem:[%s1886 + $0xc0] sm:$0xff]
        %v1912 = vld [vmem:[%s1886 + $0xc8] sm:$0xff]
        %v1913 = vld [vmem:[%s1886 + $0xd0] sm:$0xff]
        %v1914 = vld [vmem:[%s1886 + $0xd8] sm:$0xff]
        %v1915 = vld [vmem:[%s1886 + $0xe0] sm:$0xff]
        %v1916 = vld [vmem:[%s1886 + $0xe8] sm:$0xff]
        %v1917 = vld [vmem:[%s1886 + $0xf0] sm:$0xff]
        %v1918 = vld [vmem:[%s1886 + $0xf8] sm:$0xff]
        %v1919 = vld [vmem:[%s1886 + $0x100] sm:$0xff]
        %v1920 = vld [vmem:[%s1886 + $0x108] sm:$0xff]
        %v1921 = vld [vmem:[%s1886 + $0x110] sm:$0xff]
        %v1922 = vld [vmem:[%s1886 + $0x118] sm:$0xff]
        %v1923 = vld [vmem:[%s1886 + $0x120] sm:$0xff]
        %v1924 = vld [vmem:[%s1886 + $0x128] sm:$0xff]
        %v1925 = vld [vmem:[%s1886 + $0x130] sm:$0xff]
        %v1926 = vld [vmem:[%s1886 + $0x138] sm:$0xff]
        %v1927 = vld [vmem:[%s1886 + $0x140] sm:$0xff]
        %v1928 = vld [vmem:[%s1886 + $0x148] sm:$0xff]
        %v1929 = vld [vmem:[%s1886 + $0x150] sm:$0xff]
        %v1930 = vld [vmem:[%s1886 + $0x158] sm:$0xff]
        %v1931 = vld [vmem:[%s1886 + $0x160] sm:$0xff]
        %v1932 = vld [vmem:[%s1886 + $0x168] sm:$0xff]
        %v1933 = vld [vmem:[%s1886 + $0x170] sm:$0xff]
        %v1934 = vld [vmem:[%s1886 + $0x178] sm:$0xff]
        %1935 = vmatprep.subr.mxu0 0.0
        %1936 = vmatpush1.msra.mxu0 %v1887
        %1937 = vmatprep.subr.mxu0 0.0
        %1938 = vmatpush1.msra.mxu0 %v1888
        %1939 = vmatprep.subr.mxu0 0.0
        %1940 = vmatpush1.msra.mxu0 %v1889
        %1941 = vmatprep.subr.mxu0 0.0
        %1942 = vmatpush1.msra.mxu0 %v1890
        %1943 = vmatprep.subr.mxu0 0.0
        %1944 = vmatpush1.msra.mxu0 %v1891
        %1945 = vmatprep.subr.mxu0 0.0
        %1946 = vmatpush1.msra.mxu0 %v1892
        %1947 = vmatprep.subr.mxu0 0.0
        %1948 = vmatpush1.msra.mxu0 %v1893
        %1949 = vmatprep.subr.mxu0 0.0
        %1950 = vmatpush1.msra.mxu0 %v1894
        %1951 = vmatprep.subr.mxu0 0.0
        %1952 = vmatpush1.msra.mxu0 %v1895
        %1953 = vmatprep.subr.mxu0 0.0
        %1954 = vmatpush1.msra.mxu0 %v1896
        %1955 = vmatprep.subr.mxu0 0.0
        %1956 = vmatpush1.msra.mxu0 %v1897
        %1957 = vmatprep.subr.mxu0 0.0
        %1958 = vmatpush1.msra.mxu0 %v1898
        %1959 = vmatprep.subr.mxu0 0.0
        %1960 = vmatpush1.msra.mxu0 %v1899
        %1961 = vmatprep.subr.mxu0 0.0
        %1962 = vmatpush1.msra.mxu0 %v1900
        %1963 = vmatprep.subr.mxu0 0.0
        %1964 = vmatpush1.msra.mxu0 %v1901
        %1965 = vmatprep.subr.mxu0 0.0
        %1966 = vmatpush1.msra.mxu0 %v1902
        %1967 = vmatprep.subr.mxu0 0.0
        %1968 = vmatpush1.msra.mxu0 %v1903
        %1969 = vmatprep.subr.mxu0 0.0
        %1970 = vmatpush1.msra.mxu0 %v1904
        %1971 = vmatprep.subr.mxu0 0.0
        %1972 = vmatpush1.msra.mxu0 %v1905
        %1973 = vmatprep.subr.mxu0 0.0
        %1974 = vmatpush1.msra.mxu0 %v1906
        %1975 = vmatprep.subr.mxu0 0.0
        %1976 = vmatpush1.msra.mxu0 %v1907
        %1977 = vmatprep.subr.mxu0 0.0
        %1978 = vmatpush1.msra.mxu0 %v1908
        %1979 = vmatprep.subr.mxu0 0.0
        %1980 = vmatpush1.msra.mxu0 %v1909
        %1981 = vmatprep.subr.mxu0 0.0
        %1982 = vmatpush1.msra.mxu0 %v1910
        %1983 = vmatprep.subr.mxu0 0.0
        %1984 = vmatpush1.msra.mxu0 %v1911
        %1985 = vmatprep.subr.mxu0 0.0
        %1986 = vmatpush1.msra.mxu0 %v1912
        %1987 = vmatprep.subr.mxu0 0.0
        %1988 = vmatpush1.msra.mxu0 %v1913
        %1989 = vmatprep.subr.mxu0 0.0
        %1990 = vmatpush1.msra.mxu0 %v1914
        %1991 = vmatprep.subr.mxu0 0.0
        %1992 = vmatpush1.msra.mxu0 %v1915
        %1993 = vmatprep.subr.mxu0 0.0
        %1994 = vmatpush1.msra.mxu0 %v1916
        %1995 = vmatprep.subr.mxu0 0.0
        %1996 = vmatpush1.msra.mxu0 %v1917
        %1997 = vmatprep.subr.mxu0 0.0
        %1998 = vmatpush1.msra.mxu0 %v1918
        %1999 = vmatprep.mubr.f32.mxu0 %v659
        %2000 = vmatmul.mubr.f32.gmra.mrb[0].mxu0 %v1854
        %v2001 = vpop.f32.mrb[0].mxu0
        %v2002 = vadd.f32 0.0, %v2001
        %v2003 = vpop.f32.mrb[0].mxu0
        %2004 = vmatprep.mubr.f32.mxu0 %v660
        %2005 = vmatmul.mubr.f32.gmra.mrb[0].mxu0 %v1855
        %v2006 = vpop.f32.mrb[0].mxu0
        %v2007 = vadd.f32 0.0, %v2006
        %v2008 = vpop.f32.mrb[0].mxu0
        %2009 = vmatprep.mubr.f32.mxu0 %v661
        %2010 = vmatmul.mubr.f32.gmra.mrb[0].mxu0 %v1856
        %v2011 = vpop.f32.mrb[0].mxu0
        %v2012 = vadd.f32 0.0, %v2011
        %v2013 = vpop.f32.mrb[0].mxu0
        %2014 = vmatprep.mubr.f32.mxu0 %v662
        %2015 = vmatmul.mubr.f32.gmra.mrb[0].mxu0 %v1857
        %v2016 = vpop.f32.mrb[0].mxu0
        %v2017 = vadd.f32 0.0, %v2016
        %v2018 = vpop.f32.mrb[0].mxu0
        %2019 = vmatprep.mubr.f32.mxu0 %v663
        %2020 = vmatmul.mubr.f32.gmra.mrb[0].mxu0 %v1858
        %v2021 = vpop.f32.mrb[0].mxu0
        %v2022 = vadd.f32 0.0, %v2021
        %v2023 = vpop.f32.mrb[0].mxu0
        %2024 = vmatprep.mubr.f32.mxu0 %v664
        %2025 = vmatmul.mubr.f32.gmra.mrb[0].mxu0 %v1859
        %v2026 = vpop.f32.mrb[0].mxu0
        %v2027 = vadd.f32 0.0, %v2026
        %v2028 = vpop.f32.mrb[0].mxu0
        %2029 = vmatprep.mubr.f32.mxu0 %v665
        %2030 = vmatmul.mubr.f32.gmra.mrb[0].mxu0 %v1860
        %v2031 = vpop.f32.mrb[0].mxu0
        %v2032 = vadd.f32 0.0, %v2031
        %v2033 = vpop.f32.mrb[0].mxu0
        %2034 = vmatprep.mubr.f32.mxu0 %v666
        %2035 = vmatmul.mubr.f32.gmra.mrb[0].mxu0 %v1861
        %v2036 = vpop.f32.mrb[0].mxu0
        %v2037 = vadd.f32 0.0, %v2036
        %v2038 = vpop.f32.mrb[0].mxu0
        %2039 = vmatprep.mubr.f32.mxu0 %v667
        %2040 = vmatmul.mubr.f32.gmra.mrb[0].mxu0 %v1862
        %v2041 = vpop.f32.mrb[0].mxu0
        %v2042 = vadd.f32 0.0, %v2041
        %v2043 = vpop.f32.mrb[0].mxu0
        %2044 = vmatprep.mubr.f32.mxu0 %v668
        %2045 = vmatmul.mubr.f32.gmra.mrb[0].mxu0 %v1863
        %v2046 = vpop.f32.mrb[0].mxu0
        %v2047 = vadd.f32 0.0, %v2046
        %v2048 = vpop.f32.mrb[0].mxu0
        %2049 = vmatprep.mubr.f32.mxu0 %v669
        %2050 = vmatmul.mubr.f32.gmra.mrb[0].mxu0 %v1864
        %v2051 = vpop.f32.mrb[0].mxu0
        %v2052 = vadd.f32 0.0, %v2051
        %v2053 = vpop.f32.mrb[0].mxu0
        %2054 = vmatprep.mubr.f32.mxu0 %v670
        %2055 = vmatmul.mubr.f32.gmra.mrb[0].mxu0 %v1865
        %v2056 = vpop.f32.mrb[0].mxu0
        %v2057 = vadd.f32 0.0, %v2056
        %v2058 = vpop.f32.mrb[0].mxu0
        %2059 = vmatprep.mubr.f32.mxu0 %v671
        %2060 = vmatmul.mubr.f32.gmra.mrb[0].mxu0 %v1866
        %v2061 = vpop.f32.mrb[0].mxu0
        %v2062 = vadd.f32 0.0, %v2061
        %v2063 = vpop.f32.mrb[0].mxu0
        %2064 = vmatprep.mubr.f32.mxu0 %v672
        %2065 = vmatmul.mubr.f32.gmra.mrb[0].mxu0 %v1867
        %v2066 = vpop.f32.mrb[0].mxu0
        %v2067 = vadd.f32 0.0, %v2066
        %v2068 = vpop.f32.mrb[0].mxu0
        %2069 = vmatprep.mubr.f32.mxu0 %v673
        %2070 = vmatmul.mubr.f32.gmra.mrb[0].mxu0 %v1868
        %v2071 = vpop.f32.mrb[0].mxu0
        %v2072 = vadd.f32 0.0, %v2071
        %v2073 = vpop.f32.mrb[0].mxu0
        %2074 = vmatprep.mubr.f32.mxu0 %v674
        %2075 = vmatmul.mubr.f32.gmra.mrb[0].mxu0 %v1869
        %v2076 = vpop.f32.mrb[0].mxu0
        %v2077 = vadd.f32 0.0, %v2076
        %v2078 = vpop.f32.mrb[0].mxu0
        %2079 = vdwg.mxu0
        %2080 = vmatprep.subr.mxu0 0.0
        %2081 = vmatpush1.msra.mxu0 %v1919
        %2082 = vmatprep.subr.mxu0 0.0
        %2083 = vmatpush1.msra.mxu0 %v1920
        %2084 = vmatprep.subr.mxu0 0.0
        %2085 = vmatpush1.msra.mxu0 %v1921
        %2086 = vmatprep.subr.mxu0 0.0
        %2087 = vmatpush1.msra.mxu0 %v1922
        %2088 = vmatprep.subr.mxu0 0.0
        %2089 = vmatpush1.msra.mxu0 %v1923
        %2090 = vmatprep.subr.mxu0 0.0
        %2091 = vmatpush1.msra.mxu0 %v1924
        %2092 = vmatprep.subr.mxu0 0.0
        %2093 = vmatpush1.msra.mxu0 %v1925
        %2094 = vmatprep.subr.mxu0 0.0
        %2095 = vmatpush1.msra.mxu0 %v1926
        %2096 = vmatprep.subr.mxu0 0.0
        %2097 = vmatpush1.msra.mxu0 %v1927
        %2098 = vmatprep.subr.mxu0 0.0
        %2099 = vmatpush1.msra.mxu0 %v1928
        %2100 = vmatprep.subr.mxu0 0.0
        %2101 = vmatpush1.msra.mxu0 %v1929
        %2102 = vmatprep.subr.mxu0 0.0
        %2103 = vmatpush1.msra.mxu0 %v1930
        %2104 = vmatprep.subr.mxu0 0.0
        %2105 = vmatpush1.msra.mxu0 %v1931
        %2106 = vmatprep.subr.mxu0 0.0
        %2107 = vmatpush1.msra.mxu0 %v1932
        %2108 = vmatprep.subr.mxu0 0.0
        %2109 = vmatpush1.msra.mxu0 %v1933
        %2110 = vmatprep.subr.mxu0 0.0
        %2111 = vmatpush1.msra.mxu0 %v1934
        %2112 = vmatprep.subr.mxu0 0.0
        %2113 = vmatpush1.msra.mxu0 0.0
        %2114 = vmatprep.subr.mxu0 0.0
        %2115 = vmatpush1.msra.mxu0 0.0
        %2116 = vmatprep.subr.mxu0 0.0
        %2117 = vmatpush1.msra.mxu0 0.0
        %2118 = vmatprep.subr.mxu0 0.0
        %2119 = vmatpush1.msra.mxu0 0.0
        %2120 = vmatprep.subr.mxu0 0.0
        %2121 = vmatpush1.msra.mxu0 0.0
        %2122 = vmatprep.subr.mxu0 0.0
        %2123 = vmatpush1.msra.mxu0 0.0
        %2124 = vmatprep.subr.mxu0 0.0
        %2125 = vmatpush1.msra.mxu0 0.0
        %2126 = vmatprep.subr.mxu0 0.0
        %2127 = vmatpush1.msra.mxu0 0.0
        %2128 = vmatprep.subr.mxu0 0.0
        %2129 = vmatpush1.msra.mxu0 0.0
        %2130 = vmatprep.subr.mxu0 0.0
        %2131 = vmatpush1.msra.mxu0 0.0
        %2132 = vmatprep.subr.mxu0 0.0
        %2133 = vmatpush1.msra.mxu0 0.0
        %2134 = vmatprep.subr.mxu0 0.0
        %2135 = vmatpush1.msra.mxu0 0.0
        %2136 = vmatprep.subr.mxu0 0.0
        %2137 = vmatpush1.msra.mxu0 0.0
        %2138 = vmatprep.subr.mxu0 0.0
        %2139 = vmatpush1.msra.mxu0 0.0
        %2140 = vmatprep.subr.mxu0 0.0
        %2141 = vmatpush1.msra.mxu0 0.0
        %2142 = vmatprep.subr.mxu0 0.0
        %2143 = vmatpush1.msra.mxu0 0.0
        %2144 = vmatprep.mubr.f32.mxu0 0.0
        %2145 = vmatmul.mubr.f32.gmra.mrb[0].mxu0 %v1870
        %v2146 = vpop.f32.mrb[0].mxu0
        %v2147 = vadd.f32 %v2002, %v2146
        %v2148 = vpop.f32.mrb[0].mxu0
        %2149 = vmatprep.mubr.f32.mxu0 0.0
        %2150 = vmatmul.mubr.f32.gmra.mrb[0].mxu0 %v1871
        %v2151 = vpop.f32.mrb[0].mxu0
        %v2152 = vadd.f32 %v2007, %v2151
        %v2153 = vpop.f32.mrb[0].mxu0
        %2154 = vmatprep.mubr.f32.mxu0 0.0
        %2155 = vmatmul.mubr.f32.gmra.mrb[0].mxu0 %v1872
        %v2156 = vpop.f32.mrb[0].mxu0
        %v2157 = vadd.f32 %v2012, %v2156
        %v2158 = vpop.f32.mrb[0].mxu0
        %2159 = vmatprep.mubr.f32.mxu0 0.0
        %2160 = vmatmul.mubr.f32.gmra.mrb[0].mxu0 %v1873
        %v2161 = vpop.f32.mrb[0].mxu0
        %v2162 = vadd.f32 %v2017, %v2161
        %v2163 = vpop.f32.mrb[0].mxu0
        %2164 = vmatprep.mubr.f32.mxu0 0.0
        %2165 = vmatmul.mubr.f32.gmra.mrb[0].mxu0 %v1874
        %v2166 = vpop.f32.mrb[0].mxu0
        %v2167 = vadd.f32 %v2022, %v2166
        %v2168 = vpop.f32.mrb[0].mxu0
        %2169 = vmatprep.mubr.f32.mxu0 0.0
        %2170 = vmatmul.mubr.f32.gmra.mrb[0].mxu0 %v1875
        %v2171 = vpop.f32.mrb[0].mxu0
        %v2172 = vadd.f32 %v2027, %v2171
        %v2173 = vpop.f32.mrb[0].mxu0
        %2174 = vmatprep.mubr.f32.mxu0 0.0
        %2175 = vmatmul.mubr.f32.gmra.mrb[0].mxu0 %v1876
        %v2176 = vpop.f32.mrb[0].mxu0
        %v2177 = vadd.f32 %v2032, %v2176
        %v2178 = vpop.f32.mrb[0].mxu0
        %2179 = vmatprep.mubr.f32.mxu0 0.0
        %2180 = vmatmul.mubr.f32.gmra.mrb[0].mxu0 %v1877
        %v2181 = vpop.f32.mrb[0].mxu0
        %v2182 = vadd.f32 %v2037, %v2181
        %v2183 = vpop.f32.mrb[0].mxu0
        %2184 = vmatprep.mubr.f32.mxu0 0.0
        %2185 = vmatmul.mubr.f32.gmra.mrb[0].mxu0 %v1878
        %v2186 = vpop.f32.mrb[0].mxu0
        %v2187 = vadd.f32 %v2042, %v2186
        %v2188 = vpop.f32.mrb[0].mxu0
        %2189 = vmatprep.mubr.f32.mxu0 0.0
        %2190 = vmatmul.mubr.f32.gmra.mrb[0].mxu0 %v1879
        %v2191 = vpop.f32.mrb[0].mxu0
        %v2192 = vadd.f32 %v2047, %v2191
        %v2193 = vpop.f32.mrb[0].mxu0
        %2194 = vmatprep.mubr.f32.mxu0 0.0
        %2195 = vmatmul.mubr.f32.gmra.mrb[0].mxu0 %v1880
        %v2196 = vpop.f32.mrb[0].mxu0
        %v2197 = vadd.f32 %v2052, %v2196
        %v2198 = vpop.f32.mrb[0].mxu0
        %2199 = vmatprep.mubr.f32.mxu0 0.0
        %2200 = vmatmul.mubr.f32.gmra.mrb[0].mxu0 %v1881
        %v2201 = vpop.f32.mrb[0].mxu0
        %v2202 = vadd.f32 %v2057, %v2201
        %v2203 = vpop.f32.mrb[0].mxu0
        %2204 = vmatprep.mubr.f32.mxu0 0.0
        %2205 = vmatmul.mubr.f32.gmra.mrb[0].mxu0 %v1882
        %v2206 = vpop.f32.mrb[0].mxu0
        %v2207 = vadd.f32 %v2062, %v2206
        %v2208 = vpop.f32.mrb[0].mxu0
        %2209 = vmatprep.mubr.f32.mxu0 0.0
        %2210 = vmatmul.mubr.f32.gmra.mrb[0].mxu0 %v1883
        %v2211 = vpop.f32.mrb[0].mxu0
        %v2212 = vadd.f32 %v2067, %v2211
        %v2213 = vpop.f32.mrb[0].mxu0
        %2214 = vmatprep.mubr.f32.mxu0 0.0
        %2215 = vmatmul.mubr.f32.gmra.mrb[0].mxu0 %v1884
        %v2216 = vpop.f32.mrb[0].mxu0
        %v2217 = vadd.f32 %v2072, %v2216
        %v2218 = vpop.f32.mrb[0].mxu0
        %2219 = vmatprep.mubr.f32.mxu0 0.0
        %2220 = vmatmul.mubr.f32.gmra.mrb[0].mxu0 %v1885
        %v2221 = vpop.f32.mrb[0].mxu0
        %v2222 = vadd.f32 %v2077, %v2221
        %v2223 = vpop.f32.mrb[0].mxu0
        %2224 = vdwg.mxu0
        %v2225 = vadd.f32 %v1838, %v2147
        %v2226 = vadd.f32 %v1839, %v2152
        %v2227 = vadd.f32 %v1840, %v2157
        %v2228 = vadd.f32 %v1841, %v2162
        %v2229 = vadd.f32 %v1842, %v2167
        %v2230 = vadd.f32 %v1843, %v2172
        %v2231 = vadd.f32 %v1844, %v2177
        %v2232 = vadd.f32 %v1845, %v2182
        %v2233 = vadd.f32 %v1846, %v2187
        %v2234 = vadd.f32 %v1847, %v2192
        %v2235 = vadd.f32 %v1848, %v2197
        %v2236 = vadd.f32 %v1849, %v2202
        %v2237 = vadd.f32 %v1850, %v2207
        %v2238 = vadd.f32 %v1851, %v2212
        %v2239 = vadd.f32 %v1852, %v2217
        %v2240 = vadd.f32 %v1853, %v2222
        %s2241 = scalar_lea.vmem %s200, 144 [#allocation2]
        %v2242 = vld [vmem:[%s2241 + $0x2] sm:$0xff]
        %v2243 = vld [vmem:[%s2241 + $0xa] sm:$0xff]
        %v2244 = vld [vmem:[%s2241 + $0x1a] sm:$0xff]
        %v2245 = vld [vmem:[%s2241 + $0x22] sm:$0xff]
        %v2246 = vld [vmem:[%s2241 + $0x32] sm:$0xff]
        %v2247 = vld [vmem:[%s2241 + $0x3a] sm:$0xff]
        %v2248 = vld [vmem:[%s2241 + $0x4a] sm:$0xff]
        %v2249 = vld [vmem:[%s2241 + $0x52] sm:$0xff]
        %v2250 = vld [vmem:[%s2241 + $0x62] sm:$0xff]
        %v2251 = vld [vmem:[%s2241 + $0x6a] sm:$0xff]
        %v2252 = vld [vmem:[%s2241 + $0x7a] sm:$0xff]
        %v2253 = vld [vmem:[%s2241 + $0x82] sm:$0xff]
        %v2254 = vld [vmem:[%s2241 + $0x92] sm:$0xff]
        %v2255 = vld [vmem:[%s2241 + $0x9a] sm:$0xff]
        %v2256 = vld [vmem:[%s2241 + $0xaa] sm:$0xff]
        %v2257 = vld [vmem:[%s2241 + $0xb2] sm:$0xff]
        %v2258 = vld [vmem:[%s2241 + $0x4] sm:$0xff]
        %v2259 = vld [vmem:[%s2241 + $0xc] sm:$0xff]
        %v2260 = vld [vmem:[%s2241 + $0x1c] sm:$0xff]
        %v2261 = vld [vmem:[%s2241 + $0x24] sm:$0xff]
        %v2262 = vld [vmem:[%s2241 + $0x34] sm:$0xff]
        %v2263 = vld [vmem:[%s2241 + $0x3c] sm:$0xff]
        %v2264 = vld [vmem:[%s2241 + $0x4c] sm:$0xff]
        %v2265 = vld [vmem:[%s2241 + $0x54] sm:$0xff]
        %v2266 = vld [vmem:[%s2241 + $0x64] sm:$0xff]
        %v2267 = vld [vmem:[%s2241 + $0x6c] sm:$0xff]
        %v2268 = vld [vmem:[%s2241 + $0x7c] sm:$0xff]
        %v2269 = vld [vmem:[%s2241 + $0x84] sm:$0xff]
        %v2270 = vld [vmem:[%s2241 + $0x94] sm:$0xff]
        %v2271 = vld [vmem:[%s2241 + $0x9c] sm:$0xff]
        %v2272 = vld [vmem:[%s2241 + $0xac] sm:$0xff]
        %v2273 = vld [vmem:[%s2241 + $0xb4] sm:$0xff]
        %v2274 = vld [vmem:[%s2241 + $0x6] sm:$0xff]
        %v2275 = vld [vmem:[%s2241 + $0xe] sm:$0xff]
        %v2276 = vld [vmem:[%s2241 + $0x1e] sm:$0xff]
        %v2277 = vld [vmem:[%s2241 + $0x26] sm:$0xff]
        %v2278 = vld [vmem:[%s2241 + $0x36] sm:$0xff]
        %v2279 = vld [vmem:[%s2241 + $0x3e] sm:$0xff]
        %v2280 = vld [vmem:[%s2241 + $0x4e] sm:$0xff]
        %v2281 = vld [vmem:[%s2241 + $0x56] sm:$0xff]
        %v2282 = vld [vmem:[%s2241 + $0x66] sm:$0xff]
        %v2283 = vld [vmem:[%s2241 + $0x6e] sm:$0xff]
        %v2284 = vld [vmem:[%s2241 + $0x7e] sm:$0xff]
        %v2285 = vld [vmem:[%s2241 + $0x86] sm:$0xff]
        %v2286 = vld [vmem:[%s2241 + $0x96] sm:$0xff]
        %v2287 = vld [vmem:[%s2241 + $0x9e] sm:$0xff]
        %v2288 = vld [vmem:[%s2241 + $0xae] sm:$0xff]
        %v2289 = vld [vmem:[%s2241 + $0xb6] sm:$0xff]
        %s2290 = scalar_lea.vmem [#allocation4], 1920
        %v2291 = vld [vmem:[%s2290] sm:$0xff]
        %v2292 = vld [vmem:[%s2290 + $0x8] sm:$0xff]
        %v2293 = vld [vmem:[%s2290 + $0x10] sm:$0xff]
        %v2294 = vld [vmem:[%s2290 + $0x18] sm:$0xff]
        %v2295 = vld [vmem:[%s2290 + $0x20] sm:$0xff]
        %v2296 = vld [vmem:[%s2290 + $0x28] sm:$0xff]
        %v2297 = vld [vmem:[%s2290 + $0x30] sm:$0xff]
        %v2298 = vld [vmem:[%s2290 + $0x38] sm:$0xff]
        %v2299 = vld [vmem:[%s2290 + $0x40] sm:$0xff]
        %v2300 = vld [vmem:[%s2290 + $0x48] sm:$0xff]
        %v2301 = vld [vmem:[%s2290 + $0x50] sm:$0xff]
        %v2302 = vld [vmem:[%s2290 + $0x58] sm:$0xff]
        %v2303 = vld [vmem:[%s2290 + $0x60] sm:$0xff]
        %v2304 = vld [vmem:[%s2290 + $0x68] sm:$0xff]
        %v2305 = vld [vmem:[%s2290 + $0x70] sm:$0xff]
        %v2306 = vld [vmem:[%s2290 + $0x78] sm:$0xff]
        %v2307 = vld [vmem:[%s2290 + $0x80] sm:$0xff]
        %v2308 = vld [vmem:[%s2290 + $0x88] sm:$0xff]
        %v2309 = vld [vmem:[%s2290 + $0x90] sm:$0xff]
        %v2310 = vld [vmem:[%s2290 + $0x98] sm:$0xff]
        %v2311 = vld [vmem:[%s2290 + $0xa0] sm:$0xff]
        %v2312 = vld [vmem:[%s2290 + $0xa8] sm:$0xff]
        %v2313 = vld [vmem:[%s2290 + $0xb0] sm:$0xff]
        %v2314 = vld [vmem:[%s2290 + $0xb8] sm:$0xff]
        %v2315 = vld [vmem:[%s2290 + $0xc0] sm:$0xff]
        %v2316 = vld [vmem:[%s2290 + $0xc8] sm:$0xff]
        %v2317 = vld [vmem:[%s2290 + $0xd0] sm:$0xff]
        %v2318 = vld [vmem:[%s2290 + $0xd8] sm:$0xff]
        %v2319 = vld [vmem:[%s2290 + $0xe0] sm:$0xff]
        %v2320 = vld [vmem:[%s2290 + $0xe8] sm:$0xff]
        %v2321 = vld [vmem:[%s2290 + $0xf0] sm:$0xff]
        %v2322 = vld [vmem:[%s2290 + $0xf8] sm:$0xff]
        %v2323 = vld [vmem:[%s2290 + $0x100] sm:$0xff]
        %v2324 = vld [vmem:[%s2290 + $0x108] sm:$0xff]
        %v2325 = vld [vmem:[%s2290 + $0x110] sm:$0xff]
        %v2326 = vld [vmem:[%s2290 + $0x118] sm:$0xff]
        %v2327 = vld [vmem:[%s2290 + $0x120] sm:$0xff]
        %v2328 = vld [vmem:[%s2290 + $0x128] sm:$0xff]
        %v2329 = vld [vmem:[%s2290 + $0x130] sm:$0xff]
        %v2330 = vld [vmem:[%s2290 + $0x138] sm:$0xff]
        %v2331 = vld [vmem:[%s2290 + $0x140] sm:$0xff]
        %v2332 = vld [vmem:[%s2290 + $0x148] sm:$0xff]
        %v2333 = vld [vmem:[%s2290 + $0x150] sm:$0xff]
        %v2334 = vld [vmem:[%s2290 + $0x158] sm:$0xff]
        %v2335 = vld [vmem:[%s2290 + $0x160] sm:$0xff]
        %v2336 = vld [vmem:[%s2290 + $0x168] sm:$0xff]
        %v2337 = vld [vmem:[%s2290 + $0x170] sm:$0xff]
        %v2338 = vld [vmem:[%s2290 + $0x178] sm:$0xff]
        %2339 = vmatprep.subr.mxu0 0.0
        %2340 = vmatpush1.msra.mxu0 %v2291
        %2341 = vmatprep.subr.mxu0 0.0
        %2342 = vmatpush1.msra.mxu0 %v2292
        %2343 = vmatprep.subr.mxu0 0.0
        %2344 = vmatpush1.msra.mxu0 %v2293
        %2345 = vmatprep.subr.mxu0 0.0
        %2346 = vmatpush1.msra.mxu0 %v2294
        %2347 = vmatprep.subr.mxu0 0.0
        %2348 = vmatpush1.msra.mxu0 %v2295
        %2349 = vmatprep.subr.mxu0 0.0
        %2350 = vmatpush1.msra.mxu0 %v2296
        %2351 = vmatprep.subr.mxu0 0.0
        %2352 = vmatpush1.msra.mxu0 %v2297
        %2353 = vmatprep.subr.mxu0 0.0
        %2354 = vmatpush1.msra.mxu0 %v2298
        %2355 = vmatprep.subr.mxu0 0.0
        %2356 = vmatpush1.msra.mxu0 %v2299
        %2357 = vmatprep.subr.mxu0 0.0
        %2358 = vmatpush1.msra.mxu0 %v2300
        %2359 = vmatprep.subr.mxu0 0.0
        %2360 = vmatpush1.msra.mxu0 %v2301
        %2361 = vmatprep.subr.mxu0 0.0
        %2362 = vmatpush1.msra.mxu0 %v2302
        %2363 = vmatprep.subr.mxu0 0.0
        %2364 = vmatpush1.msra.mxu0 %v2303
        %2365 = vmatprep.subr.mxu0 0.0
        %2366 = vmatpush1.msra.mxu0 %v2304
        %2367 = vmatprep.subr.mxu0 0.0
        %2368 = vmatpush1.msra.mxu0 %v2305
        %2369 = vmatprep.subr.mxu0 0.0
        %2370 = vmatpush1.msra.mxu0 %v2306
        %2371 = vmatprep.subr.mxu0 0.0
        %2372 = vmatpush1.msra.mxu0 %v2307
        %2373 = vmatprep.subr.mxu0 0.0
        %2374 = vmatpush1.msra.mxu0 %v2308
        %2375 = vmatprep.subr.mxu0 0.0
        %2376 = vmatpush1.msra.mxu0 %v2309
        %2377 = vmatprep.subr.mxu0 0.0
        %2378 = vmatpush1.msra.mxu0 %v2310
        %2379 = vmatprep.subr.mxu0 0.0
        %2380 = vmatpush1.msra.mxu0 %v2311
        %2381 = vmatprep.subr.mxu0 0.0
        %2382 = vmatpush1.msra.mxu0 %v2312
        %2383 = vmatprep.subr.mxu0 0.0
        %2384 = vmatpush1.msra.mxu0 %v2313
        %2385 = vmatprep.subr.mxu0 0.0
        %2386 = vmatpush1.msra.mxu0 %v2314
        %2387 = vmatprep.subr.mxu0 0.0
        %2388 = vmatpush1.msra.mxu0 %v2315
        %2389 = vmatprep.subr.mxu0 0.0
        %2390 = vmatpush1.msra.mxu0 %v2316
        %2391 = vmatprep.subr.mxu0 0.0
        %2392 = vmatpush1.msra.mxu0 %v2317
        %2393 = vmatprep.subr.mxu0 0.0
        %2394 = vmatpush1.msra.mxu0 %v2318
        %2395 = vmatprep.subr.mxu0 0.0
        %2396 = vmatpush1.msra.mxu0 %v2319
        %2397 = vmatprep.subr.mxu0 0.0
        %2398 = vmatpush1.msra.mxu0 %v2320
        %2399 = vmatprep.subr.mxu0 0.0
        %2400 = vmatpush1.msra.mxu0 %v2321
        %2401 = vmatprep.subr.mxu0 0.0
        %2402 = vmatpush1.msra.mxu0 %v2322
        %2403 = vmatprep.mubr.f32.mxu0 %v2258
        %2404 = vmatmul.mubr.f32.gmra.mrb[0].mxu0 %v2242
        %v2405 = vpop.f32.mrb[0].mxu0
        %v2406 = vadd.f32 0.0, %v2405
        %v2407 = vpop.f32.mrb[0].mxu0
        %2408 = vmatprep.mubr.f32.mxu0 %v2259
        %2409 = vmatmul.mubr.f32.gmra.mrb[0].mxu0 %v2243
        %v2410 = vpop.f32.mrb[0].mxu0
        %v2411 = vadd.f32 0.0, %v2410
        %v2412 = vpop.f32.mrb[0].mxu0
        %2413 = vmatprep.mubr.f32.mxu0 %v2260
        %2414 = vmatmul.mubr.f32.gmra.mrb[0].mxu0 %v2244
        %v2415 = vpop.f32.mrb[0].mxu0
        %v2416 = vadd.f32 0.0, %v2415
        %v2417 = vpop.f32.mrb[0].mxu0
        %2418 = vmatprep.mubr.f32.mxu0 %v2261
        %2419 = vmatmul.mubr.f32.gmra.mrb[0].mxu0 %v2245
        %v2420 = vpop.f32.mrb[0].mxu0
        %v2421 = vadd.f32 0.0, %v2420
        %v2422 = vpop.f32.mrb[0].mxu0
        %2423 = vmatprep.mubr.f32.mxu0 %v2262
        %2424 = vmatmul.mubr.f32.gmra.mrb[0].mxu0 %v2246
        %v2425 = vpop.f32.mrb[0].mxu0
        %v2426 = vadd.f32 0.0, %v2425
        %v2427 = vpop.f32.mrb[0].mxu0
        %2428 = vmatprep.mubr.f32.mxu0 %v2263
        %2429 = vmatmul.mubr.f32.gmra.mrb[0].mxu0 %v2247
        %v2430 = vpop.f32.mrb[0].mxu0
        %v2431 = vadd.f32 0.0, %v2430
        %v2432 = vpop.f32.mrb[0].mxu0
        %2433 = vmatprep.mubr.f32.mxu0 %v2264
        %2434 = vmatmul.mubr.f32.gmra.mrb[0].mxu0 %v2248
        %v2435 = vpop.f32.mrb[0].mxu0
        %v2436 = vadd.f32 0.0, %v2435
        %v2437 = vpop.f32.mrb[0].mxu0
        %2438 = vmatprep.mubr.f32.mxu0 %v2265
        %2439 = vmatmul.mubr.f32.gmra.mrb[0].mxu0 %v2249
        %v2440 = vpop.f32.mrb[0].mxu0
        %v2441 = vadd.f32 0.0, %v2440
        %v2442 = vpop.f32.mrb[0].mxu0
        %2443 = vmatprep.mubr.f32.mxu0 %v2266
        %2444 = vmatmul.mubr.f32.gmra.mrb[0].mxu0 %v2250
        %v2445 = vpop.f32.mrb[0].mxu0
        %v2446 = vadd.f32 0.0, %v2445
        %v2447 = vpop.f32.mrb[0].mxu0
        %2448 = vmatprep.mubr.f32.mxu0 %v2267
        %2449 = vmatmul.mubr.f32.gmra.mrb[0].mxu0 %v2251
        %v2450 = vpop.f32.mrb[0].mxu0
        %v2451 = vadd.f32 0.0, %v2450
        %v2452 = vpop.f32.mrb[0].mxu0
        %2453 = vmatprep.mubr.f32.mxu0 %v2268
        %2454 = vmatmul.mubr.f32.gmra.mrb[0].mxu0 %v2252
        %v2455 = vpop.f32.mrb[0].mxu0
        %v2456 = vadd.f32 0.0, %v2455
        %v2457 = vpop.f32.mrb[0].mxu0
        %2458 = vmatprep.mubr.f32.mxu0 %v2269
        %2459 = vmatmul.mubr.f32.gmra.mrb[0].mxu0 %v2253
        %v2460 = vpop.f32.mrb[0].mxu0
        %v2461 = vadd.f32 0.0, %v2460
        %v2462 = vpop.f32.mrb[0].mxu0
        %2463 = vmatprep.mubr.f32.mxu0 %v2270
        %2464 = vmatmul.mubr.f32.gmra.mrb[0].mxu0 %v2254
        %v2465 = vpop.f32.mrb[0].mxu0
        %v2466 = vadd.f32 0.0, %v2465
        %v2467 = vpop.f32.mrb[0].mxu0
        %2468 = vmatprep.mubr.f32.mxu0 %v2271
        %2469 = vmatmul.mubr.f32.gmra.mrb[0].mxu0 %v2255
        %v2470 = vpop.f32.mrb[0].mxu0
        %v2471 = vadd.f32 0.0, %v2470
        %v2472 = vpop.f32.mrb[0].mxu0
        %2473 = vmatprep.mubr.f32.mxu0 %v2272
        %2474 = vmatmul.mubr.f32.gmra.mrb[0].mxu0 %v2256
        %v2475 = vpop.f32.mrb[0].mxu0
        %v2476 = vadd.f32 0.0, %v2475
        %v2477 = vpop.f32.mrb[0].mxu0
        %2478 = vmatprep.mubr.f32.mxu0 %v2273
        %2479 = vmatmul.mubr.f32.gmra.mrb[0].mxu0 %v2257
        %v2480 = vpop.f32.mrb[0].mxu0
        %v2481 = vadd.f32 0.0, %v2480
        %v2482 = vpop.f32.mrb[0].mxu0
        %2483 = vdwg.mxu0
        %2484 = vmatprep.subr.mxu0 0.0
        %2485 = vmatpush1.msra.mxu0 %v2323
        %2486 = vmatprep.subr.mxu0 0.0
        %2487 = vmatpush1.msra.mxu0 %v2324
        %2488 = vmatprep.subr.mxu0 0.0
        %2489 = vmatpush1.msra.mxu0 %v2325
        %2490 = vmatprep.subr.mxu0 0.0
        %2491 = vmatpush1.msra.mxu0 %v2326
        %2492 = vmatprep.subr.mxu0 0.0
        %2493 = vmatpush1.msra.mxu0 %v2327
        %2494 = vmatprep.subr.mxu0 0.0
        %2495 = vmatpush1.msra.mxu0 %v2328
        %2496 = vmatprep.subr.mxu0 0.0
        %2497 = vmatpush1.msra.mxu0 %v2329
        %2498 = vmatprep.subr.mxu0 0.0
        %2499 = vmatpush1.msra.mxu0 %v2330
        %2500 = vmatprep.subr.mxu0 0.0
        %2501 = vmatpush1.msra.mxu0 %v2331
        %2502 = vmatprep.subr.mxu0 0.0
        %2503 = vmatpush1.msra.mxu0 %v2332
        %2504 = vmatprep.subr.mxu0 0.0
        %2505 = vmatpush1.msra.mxu0 %v2333
        %2506 = vmatprep.subr.mxu0 0.0
        %2507 = vmatpush1.msra.mxu0 %v2334
        %2508 = vmatprep.subr.mxu0 0.0
        %2509 = vmatpush1.msra.mxu0 %v2335
        %2510 = vmatprep.subr.mxu0 0.0
        %2511 = vmatpush1.msra.mxu0 %v2336
        %2512 = vmatprep.subr.mxu0 0.0
        %2513 = vmatpush1.msra.mxu0 %v2337
        %2514 = vmatprep.subr.mxu0 0.0
        %2515 = vmatpush1.msra.mxu0 %v2338
        %2516 = vmatprep.subr.mxu0 0.0
        %2517 = vmatpush1.msra.mxu0 0.0
        %2518 = vmatprep.subr.mxu0 0.0
        %2519 = vmatpush1.msra.mxu0 0.0
        %2520 = vmatprep.subr.mxu0 0.0
        %2521 = vmatpush1.msra.mxu0 0.0
        %2522 = vmatprep.subr.mxu0 0.0
        %2523 = vmatpush1.msra.mxu0 0.0
        %2524 = vmatprep.subr.mxu0 0.0
        %2525 = vmatpush1.msra.mxu0 0.0
        %2526 = vmatprep.subr.mxu0 0.0
        %2527 = vmatpush1.msra.mxu0 0.0
        %2528 = vmatprep.subr.mxu0 0.0
        %2529 = vmatpush1.msra.mxu0 0.0
        %2530 = vmatprep.subr.mxu0 0.0
        %2531 = vmatpush1.msra.mxu0 0.0
        %2532 = vmatprep.subr.mxu0 0.0
        %2533 = vmatpush1.msra.mxu0 0.0
        %2534 = vmatprep.subr.mxu0 0.0
        %2535 = vmatpush1.msra.mxu0 0.0
        %2536 = vmatprep.subr.mxu0 0.0
        %2537 = vmatpush1.msra.mxu0 0.0
        %2538 = vmatprep.subr.mxu0 0.0
        %2539 = vmatpush1.msra.mxu0 0.0
        %2540 = vmatprep.subr.mxu0 0.0
        %2541 = vmatpush1.msra.mxu0 0.0
        %2542 = vmatprep.subr.mxu0 0.0
        %2543 = vmatpush1.msra.mxu0 0.0
        %2544 = vmatprep.subr.mxu0 0.0
        %2545 = vmatpush1.msra.mxu0 0.0
        %2546 = vmatprep.subr.mxu0 0.0
        %2547 = vmatpush1.msra.mxu0 0.0
        %2548 = vmatprep.mubr.f32.mxu0 0.0
        %2549 = vmatmul.mubr.f32.gmra.mrb[0].mxu0 %v2274
        %v2550 = vpop.f32.mrb[0].mxu0
        %v2551 = vadd.f32 %v2406, %v2550
        %v2552 = vpop.f32.mrb[0].mxu0
        %2553 = vmatprep.mubr.f32.mxu0 0.0
        %2554 = vmatmul.mubr.f32.gmra.mrb[0].mxu0 %v2275
        %v2555 = vpop.f32.mrb[0].mxu0
        %v2556 = vadd.f32 %v2411, %v2555
        %v2557 = vpop.f32.mrb[0].mxu0
        %2558 = vmatprep.mubr.f32.mxu0 0.0
        %2559 = vmatmul.mubr.f32.gmra.mrb[0].mxu0 %v2276
        %v2560 = vpop.f32.mrb[0].mxu0
        %v2561 = vadd.f32 %v2416, %v2560
        %v2562 = vpop.f32.mrb[0].mxu0
        %2563 = vmatprep.mubr.f32.mxu0 0.0
        %2564 = vmatmul.mubr.f32.gmra.mrb[0].mxu0 %v2277
        %v2565 = vpop.f32.mrb[0].mxu0
        %v2566 = vadd.f32 %v2421, %v2565
        %v2567 = vpop.f32.mrb[0].mxu0
        %2568 = vmatprep.mubr.f32.mxu0 0.0
        %2569 = vmatmul.mubr.f32.gmra.mrb[0].mxu0 %v2278
        %v2570 = vpop.f32.mrb[0].mxu0
        %v2571 = vadd.f32 %v2426, %v2570
        %v2572 = vpop.f32.mrb[0].mxu0
        %2573 = vmatprep.mubr.f32.mxu0 0.0
        %2574 = vmatmul.mubr.f32.gmra.mrb[0].mxu0 %v2279
        %v2575 = vpop.f32.mrb[0].mxu0
        %v2576 = vadd.f32 %v2431, %v2575
        %v2577 = vpop.f32.mrb[0].mxu0
        %2578 = vmatprep.mubr.f32.mxu0 0.0
        %2579 = vmatmul.mubr.f32.gmra.mrb[0].mxu0 %v2280
        %v2580 = vpop.f32.mrb[0].mxu0
        %v2581 = vadd.f32 %v2436, %v2580
        %v2582 = vpop.f32.mrb[0].mxu0
        %2583 = vmatprep.mubr.f32.mxu0 0.0
        %2584 = vmatmul.mubr.f32.gmra.mrb[0].mxu0 %v2281
        %v2585 = vpop.f32.mrb[0].mxu0
        %v2586 = vadd.f32 %v2441, %v2585
        %v2587 = vpop.f32.mrb[0].mxu0
        %2588 = vmatprep.mubr.f32.mxu0 0.0
        %2589 = vmatmul.mubr.f32.gmra.mrb[0].mxu0 %v2282
        %v2590 = vpop.f32.mrb[0].mxu0
        %v2591 = vadd.f32 %v2446, %v2590
        %v2592 = vpop.f32.mrb[0].mxu0
        %2593 = vmatprep.mubr.f32.mxu0 0.0
        %2594 = vmatmul.mubr.f32.gmra.mrb[0].mxu0 %v2283
        %v2595 = vpop.f32.mrb[0].mxu0
        %v2596 = vadd.f32 %v2451, %v2595
        %v2597 = vpop.f32.mrb[0].mxu0
        %2598 = vmatprep.mubr.f32.mxu0 0.0
        %2599 = vmatmul.mubr.f32.gmra.mrb[0].mxu0 %v2284
        %v2600 = vpop.f32.mrb[0].mxu0
        %v2601 = vadd.f32 %v2456, %v2600
        %v2602 = vpop.f32.mrb[0].mxu0
        %2603 = vmatprep.mubr.f32.mxu0 0.0
        %2604 = vmatmul.mubr.f32.gmra.mrb[0].mxu0 %v2285
        %v2605 = vpop.f32.mrb[0].mxu0
        %v2606 = vadd.f32 %v2461, %v2605
        %v2607 = vpop.f32.mrb[0].mxu0
        %2608 = vmatprep.mubr.f32.mxu0 0.0
        %2609 = vmatmul.mubr.f32.gmra.mrb[0].mxu0 %v2286
        %v2610 = vpop.f32.mrb[0].mxu0
        %v2611 = vadd.f32 %v2466, %v2610
        %v2612 = vpop.f32.mrb[0].mxu0
        %2613 = vmatprep.mubr.f32.mxu0 0.0
        %2614 = vmatmul.mubr.f32.gmra.mrb[0].mxu0 %v2287
        %v2615 = vpop.f32.mrb[0].mxu0
        %v2616 = vadd.f32 %v2471, %v2615
        %v2617 = vpop.f32.mrb[0].mxu0
        %2618 = vmatprep.mubr.f32.mxu0 0.0
        %2619 = vmatmul.mubr.f32.gmra.mrb[0].mxu0 %v2288
        %v2620 = vpop.f32.mrb[0].mxu0
        %v2621 = vadd.f32 %v2476, %v2620
        %v2622 = vpop.f32.mrb[0].mxu0
        %2623 = vmatprep.mubr.f32.mxu0 0.0
        %2624 = vmatmul.mubr.f32.gmra.mrb[0].mxu0 %v2289
        %v2625 = vpop.f32.mrb[0].mxu0
        %v2626 = vadd.f32 %v2481, %v2625
        %v2627 = vpop.f32.mrb[0].mxu0
        %2628 = vdwg.mxu0
        %v2629 = vadd.f32 %v2225, %v2551
        %v2630 = vadd.f32 %v2226, %v2556
        %v2631 = vadd.f32 %v2227, %v2561
        %v2632 = vadd.f32 %v2228, %v2566
        %v2633 = vadd.f32 %v2229, %v2571
        %v2634 = vadd.f32 %v2230, %v2576
        %v2635 = vadd.f32 %v2231, %v2581
        %v2636 = vadd.f32 %v2232, %v2586
        %v2637 = vadd.f32 %v2233, %v2591
        %v2638 = vadd.f32 %v2234, %v2596
        %v2639 = vadd.f32 %v2235, %v2601
        %v2640 = vadd.f32 %v2236, %v2606
        %v2641 = vadd.f32 %v2237, %v2611
        %v2642 = vadd.f32 %v2238, %v2616
        %v2643 = vadd.f32 %v2239, %v2621
        %v2644 = vadd.f32 %v2240, %v2626
        %v2645 = vld [vmem:[%s200] sm:$0xff]
        %v2646 = vld [vmem:[%s200 + $0x8] sm:$0xff]
        %v2647 = vld [vmem:[%s200 + $0x18] sm:$0xff]
        %v2648 = vld [vmem:[%s200 + $0x20] sm:$0xff]
        %v2649 = vld [vmem:[%s200 + $0x30] sm:$0xff]
        %v2650 = vld [vmem:[%s200 + $0x38] sm:$0xff]
        %v2651 = vld [vmem:[%s200 + $0x48] sm:$0xff]
        %v2652 = vld [vmem:[%s200 + $0x50] sm:$0xff]
        %v2653 = vld [vmem:[%s200 + $0x60] sm:$0xff]
        %v2654 = vld [vmem:[%s200 + $0x68] sm:$0xff]
        %v2655 = vld [vmem:[%s200 + $0x78] sm:$0xff]
        %v2656 = vld [vmem:[%s200 + $0x80] sm:$0xff]
        %v2657 = vld [vmem:[%s200 + $0x90] sm:$0xff]
        %v2658 = vld [vmem:[%s200 + $0x98] sm:$0xff]
        %v2659 = vld [vmem:[%s200 + $0xa8] sm:$0xff]
        %v2660 = vld [vmem:[%s200 + $0xb0] sm:$0xff]
        %v2661 = vld [vmem:[%s200 + $0x4] sm:$0xff]
        %v2662 = vld [vmem:[%s200 + $0xc] sm:$0xff]
        %v2663 = vld [vmem:[%s200 + $0x1c] sm:$0xff]
        %v2664 = vld [vmem:[%s200 + $0x24] sm:$0xff]
        %v2665 = vld [vmem:[%s200 + $0x34] sm:$0xff]
        %v2666 = vld [vmem:[%s200 + $0x3c] sm:$0xff]
        %v2667 = vld [vmem:[%s200 + $0x4c] sm:$0xff]
        %v2668 = vld [vmem:[%s200 + $0x54] sm:$0xff]
        %v2669 = vld [vmem:[%s200 + $0x64] sm:$0xff]
        %v2670 = vld [vmem:[%s200 + $0x6c] sm:$0xff]
        %v2671 = vld [vmem:[%s200 + $0x7c] sm:$0xff]
        %v2672 = vld [vmem:[%s200 + $0x84] sm:$0xff]
        %v2673 = vld [vmem:[%s200 + $0x94] sm:$0xff]
        %v2674 = vld [vmem:[%s200 + $0x9c] sm:$0xff]
        %v2675 = vld [vmem:[%s200 + $0xac] sm:$0xff]
        %v2676 = vld [vmem:[%s200 + $0xb4] sm:$0xff]
        %v2677 = vld [vmem:[%s200 + $0x10] sm:$0xff]
        %v2678 = vld [vmem:[%s200 + $0x28] sm:$0xff]
        %v2679 = vld [vmem:[%s200 + $0x40] sm:$0xff]
        %v2680 = vld [vmem:[%s200 + $0x58] sm:$0xff]
        %v2681 = vld [vmem:[%s200 + $0x70] sm:$0xff]
        %v2682 = vld [vmem:[%s200 + $0x88] sm:$0xff]
        %v2683 = vld [vmem:[%s200 + $0xa0] sm:$0xff]
        %v2684 = vld [vmem:[%s200 + $0xb8] sm:$0xff]
        %s2685 = scalar_lea.vmem [#allocation4], 2304
        %v2686 = vld [vmem:[%s2685] sm:$0xff]
        %v2687 = vld [vmem:[%s2685 + $0x8] sm:$0xff]
        %v2688 = vld [vmem:[%s2685 + $0x10] sm:$0xff]
        %v2689 = vld [vmem:[%s2685 + $0x18] sm:$0xff]
        %v2690 = vld [vmem:[%s2685 + $0x20] sm:$0xff]
        %v2691 = vld [vmem:[%s2685 + $0x28] sm:$0xff]
        %v2692 = vld [vmem:[%s2685 + $0x30] sm:$0xff]
        %v2693 = vld [vmem:[%s2685 + $0x38] sm:$0xff]
        %v2694 = vld [vmem:[%s2685 + $0x40] sm:$0xff]
        %v2695 = vld [vmem:[%s2685 + $0x48] sm:$0xff]
        %v2696 = vld [vmem:[%s2685 + $0x50] sm:$0xff]
        %v2697 = vld [vmem:[%s2685 + $0x58] sm:$0xff]
        %v2698 = vld [vmem:[%s2685 + $0x60] sm:$0xff]
        %v2699 = vld [vmem:[%s2685 + $0x68] sm:$0xff]
        %v2700 = vld [vmem:[%s2685 + $0x70] sm:$0xff]
        %v2701 = vld [vmem:[%s2685 + $0x78] sm:$0xff]
        %v2702 = vld [vmem:[%s2685 + $0x80] sm:$0xff]
        %v2703 = vld [vmem:[%s2685 + $0x88] sm:$0xff]
        %v2704 = vld [vmem:[%s2685 + $0x90] sm:$0xff]
        %v2705 = vld [vmem:[%s2685 + $0x98] sm:$0xff]
        %v2706 = vld [vmem:[%s2685 + $0xa0] sm:$0xff]
        %v2707 = vld [vmem:[%s2685 + $0xa8] sm:$0xff]
        %v2708 = vld [vmem:[%s2685 + $0xb0] sm:$0xff]
        %v2709 = vld [vmem:[%s2685 + $0xb8] sm:$0xff]
        %v2710 = vld [vmem:[%s2685 + $0xc0] sm:$0xff]
        %v2711 = vld [vmem:[%s2685 + $0xc8] sm:$0xff]
        %v2712 = vld [vmem:[%s2685 + $0xd0] sm:$0xff]
        %v2713 = vld [vmem:[%s2685 + $0xd8] sm:$0xff]
        %v2714 = vld [vmem:[%s2685 + $0xe0] sm:$0xff]
        %v2715 = vld [vmem:[%s2685 + $0xe8] sm:$0xff]
        %v2716 = vld [vmem:[%s2685 + $0xf0] sm:$0xff]
        %v2717 = vld [vmem:[%s2685 + $0xf8] sm:$0xff]
        %v2718 = vld [vmem:[%s2685 + $0x100] sm:$0xff]
        %v2719 = vld [vmem:[%s2685 + $0x108] sm:$0xff]
        %v2720 = vld [vmem:[%s2685 + $0x110] sm:$0xff]
        %v2721 = vld [vmem:[%s2685 + $0x118] sm:$0xff]
        %v2722 = vld [vmem:[%s2685 + $0x120] sm:$0xff]
        %v2723 = vld [vmem:[%s2685 + $0x128] sm:$0xff]
        %v2724 = vld [vmem:[%s2685 + $0x130] sm:$0xff]
        %v2725 = vld [vmem:[%s2685 + $0x138] sm:$0xff]
        %v2726 = vld [vmem:[%s2685 + $0x140] sm:$0xff]
        %v2727 = vld [vmem:[%s2685 + $0x148] sm:$0xff]
        %v2728 = vld [vmem:[%s2685 + $0x150] sm:$0xff]
        %v2729 = vld [vmem:[%s2685 + $0x158] sm:$0xff]
        %v2730 = vld [vmem:[%s2685 + $0x160] sm:$0xff]
        %v2731 = vld [vmem:[%s2685 + $0x168] sm:$0xff]
        %v2732 = vld [vmem:[%s2685 + $0x170] sm:$0xff]
        %v2733 = vld [vmem:[%s2685 + $0x178] sm:$0xff]
        %2734 = vmatprep.subr.mxu0 0.0
        %2735 = vmatpush1.msra.mxu0 %v2686
        %2736 = vmatprep.subr.mxu0 0.0
        %2737 = vmatpush1.msra.mxu0 %v2687
        %2738 = vmatprep.subr.mxu0 0.0
        %2739 = vmatpush1.msra.mxu0 %v2688
        %2740 = vmatprep.subr.mxu0 0.0
        %2741 = vmatpush1.msra.mxu0 %v2689
        %2742 = vmatprep.subr.mxu0 0.0
        %2743 = vmatpush1.msra.mxu0 %v2690
        %2744 = vmatprep.subr.mxu0 0.0
        %2745 = vmatpush1.msra.mxu0 %v2691
        %2746 = vmatprep.subr.mxu0 0.0
        %2747 = vmatpush1.msra.mxu0 %v2692
        %2748 = vmatprep.subr.mxu0 0.0
        %2749 = vmatpush1.msra.mxu0 %v2693
        %2750 = vmatprep.subr.mxu0 0.0
        %2751 = vmatpush1.msra.mxu0 %v2694
        %2752 = vmatprep.subr.mxu0 0.0
        %2753 = vmatpush1.msra.mxu0 %v2695
        %2754 = vmatprep.subr.mxu0 0.0
        %2755 = vmatpush1.msra.mxu0 %v2696
        %2756 = vmatprep.subr.mxu0 0.0
        %2757 = vmatpush1.msra.mxu0 %v2697
        %2758 = vmatprep.subr.mxu0 0.0
        %2759 = vmatpush1.msra.mxu0 %v2698
        %2760 = vmatprep.subr.mxu0 0.0
        %2761 = vmatpush1.msra.mxu0 %v2699
        %2762 = vmatprep.subr.mxu0 0.0
        %2763 = vmatpush1.msra.mxu0 %v2700
        %2764 = vmatprep.subr.mxu0 0.0
        %2765 = vmatpush1.msra.mxu0 %v2701
        %2766 = vmatprep.subr.mxu0 0.0
        %2767 = vmatpush1.msra.mxu0 %v2702
        %2768 = vmatprep.subr.mxu0 0.0
        %2769 = vmatpush1.msra.mxu0 %v2703
        %2770 = vmatprep.subr.mxu0 0.0
        %2771 = vmatpush1.msra.mxu0 %v2704
        %2772 = vmatprep.subr.mxu0 0.0
        %2773 = vmatpush1.msra.mxu0 %v2705
        %2774 = vmatprep.subr.mxu0 0.0
        %2775 = vmatpush1.msra.mxu0 %v2706
        %2776 = vmatprep.subr.mxu0 0.0
        %2777 = vmatpush1.msra.mxu0 %v2707
        %2778 = vmatprep.subr.mxu0 0.0
        %2779 = vmatpush1.msra.mxu0 %v2708
        %2780 = vmatprep.subr.mxu0 0.0
        %2781 = vmatpush1.msra.mxu0 %v2709
        %2782 = vmatprep.subr.mxu0 0.0
        %2783 = vmatpush1.msra.mxu0 %v2710
        %2784 = vmatprep.subr.mxu0 0.0
        %2785 = vmatpush1.msra.mxu0 %v2711
        %2786 = vmatprep.subr.mxu0 0.0
        %2787 = vmatpush1.msra.mxu0 %v2712
        %2788 = vmatprep.subr.mxu0 0.0
        %2789 = vmatpush1.msra.mxu0 %v2713
        %2790 = vmatprep.subr.mxu0 0.0
        %2791 = vmatpush1.msra.mxu0 %v2714
        %2792 = vmatprep.subr.mxu0 0.0
        %2793 = vmatpush1.msra.mxu0 %v2715
        %2794 = vmatprep.subr.mxu0 0.0
        %2795 = vmatpush1.msra.mxu0 %v2716
        %2796 = vmatprep.subr.mxu0 0.0
        %2797 = vmatpush1.msra.mxu0 %v2717
        %2798 = vmatprep.mubr.f32.mxu0 %v2661
        %2799 = vmatmul.mubr.f32.gmra.mrb[0].mxu0 %v2645
        %v2800 = vpop.f32.mrb[0].mxu0
        %v2801 = vadd.f32 0.0, %v2800
        %v2802 = vpop.f32.mrb[0].mxu0
        %2803 = vmatprep.mubr.f32.mxu0 %v2662
        %2804 = vmatmul.mubr.f32.gmra.mrb[0].mxu0 %v2646
        %v2805 = vpop.f32.mrb[0].mxu0
        %v2806 = vadd.f32 0.0, %v2805
        %v2807 = vpop.f32.mrb[0].mxu0
        %2808 = vmatprep.mubr.f32.mxu0 %v2663
        %2809 = vmatmul.mubr.f32.gmra.mrb[0].mxu0 %v2647
        %v2810 = vpop.f32.mrb[0].mxu0
        %v2811 = vadd.f32 0.0, %v2810
        %v2812 = vpop.f32.mrb[0].mxu0
        %2813 = vmatprep.mubr.f32.mxu0 %v2664
        %2814 = vmatmul.mubr.f32.gmra.mrb[0].mxu0 %v2648
        %v2815 = vpop.f32.mrb[0].mxu0
        %v2816 = vadd.f32 0.0, %v2815
        %v2817 = vpop.f32.mrb[0].mxu0
        %2818 = vmatprep.mubr.f32.mxu0 %v2665
        %2819 = vmatmul.mubr.f32.gmra.mrb[0].mxu0 %v2649
        %v2820 = vpop.f32.mrb[0].mxu0
        %v2821 = vadd.f32 0.0, %v2820
        %v2822 = vpop.f32.mrb[0].mxu0
        %2823 = vmatprep.mubr.f32.mxu0 %v2666
        %2824 = vmatmul.mubr.f32.gmra.mrb[0].mxu0 %v2650
        %v2825 = vpop.f32.mrb[0].mxu0
        %v2826 = vadd.f32 0.0, %v2825
        %v2827 = vpop.f32.mrb[0].mxu0
        %2828 = vmatprep.mubr.f32.mxu0 %v2667
        %2829 = vmatmul.mubr.f32.gmra.mrb[0].mxu0 %v2651
        %v2830 = vpop.f32.mrb[0].mxu0
        %v2831 = vadd.f32 0.0, %v2830
        %v2832 = vpop.f32.mrb[0].mxu0
        %2833 = vmatprep.mubr.f32.mxu0 %v2668
        %2834 = vmatmul.mubr.f32.gmra.mrb[0].mxu0 %v2652
        %v2835 = vpop.f32.mrb[0].mxu0
        %v2836 = vadd.f32 0.0, %v2835
        %v2837 = vpop.f32.mrb[0].mxu0
        %2838 = vmatprep.mubr.f32.mxu0 %v2669
        %2839 = vmatmul.mubr.f32.gmra.mrb[0].mxu0 %v2653
        %v2840 = vpop.f32.mrb[0].mxu0
        %v2841 = vadd.f32 0.0, %v2840
        %v2842 = vpop.f32.mrb[0].mxu0
        %2843 = vmatprep.mubr.f32.mxu0 %v2670
        %2844 = vmatmul.mubr.f32.gmra.mrb[0].mxu0 %v2654
        %v2845 = vpop.f32.mrb[0].mxu0
        %v2846 = vadd.f32 0.0, %v2845
        %v2847 = vpop.f32.mrb[0].mxu0
        %2848 = vmatprep.mubr.f32.mxu0 %v2671
        %2849 = vmatmul.mubr.f32.gmra.mrb[0].mxu0 %v2655
        %v2850 = vpop.f32.mrb[0].mxu0
        %v2851 = vadd.f32 0.0, %v2850
        %v2852 = vpop.f32.mrb[0].mxu0
        %2853 = vmatprep.mubr.f32.mxu0 %v2672
        %2854 = vmatmul.mubr.f32.gmra.mrb[0].mxu0 %v2656
        %v2855 = vpop.f32.mrb[0].mxu0
        %v2856 = vadd.f32 0.0, %v2855
        %v2857 = vpop.f32.mrb[0].mxu0
        %2858 = vmatprep.mubr.f32.mxu0 %v2673
        %2859 = vmatmul.mubr.f32.gmra.mrb[0].mxu0 %v2657
        %v2860 = vpop.f32.mrb[0].mxu0
        %v2861 = vadd.f32 0.0, %v2860
        %v2862 = vpop.f32.mrb[0].mxu0
        %2863 = vmatprep.mubr.f32.mxu0 %v2674
        %2864 = vmatmul.mubr.f32.gmra.mrb[0].mxu0 %v2658
        %v2865 = vpop.f32.mrb[0].mxu0
        %v2866 = vadd.f32 0.0, %v2865
        %v2867 = vpop.f32.mrb[0].mxu0
        %2868 = vmatprep.mubr.f32.mxu0 %v2675
        %2869 = vmatmul.mubr.f32.gmra.mrb[0].mxu0 %v2659
        %v2870 = vpop.f32.mrb[0].mxu0
        %v2871 = vadd.f32 0.0, %v2870
        %v2872 = vpop.f32.mrb[0].mxu0
        %2873 = vmatprep.mubr.f32.mxu0 %v2676
        %2874 = vmatmul.mubr.f32.gmra.mrb[0].mxu0 %v2660
        %v2875 = vpop.f32.mrb[0].mxu0
        %v2876 = vadd.f32 0.0, %v2875
        %v2877 = vpop.f32.mrb[0].mxu0
        %2878 = vdwg.mxu0
        %2879 = vmatprep.subr.mxu0 0.0
        %2880 = vmatpush1.msra.mxu0 %v2718
        %2881 = vmatprep.subr.mxu0 0.0
        %2882 = vmatpush1.msra.mxu0 %v2719
        %2883 = vmatprep.subr.mxu0 0.0
        %2884 = vmatpush1.msra.mxu0 %v2720
        %2885 = vmatprep.subr.mxu0 0.0
        %2886 = vmatpush1.msra.mxu0 %v2721
        %2887 = vmatprep.subr.mxu0 0.0
        %2888 = vmatpush1.msra.mxu0 %v2722
        %2889 = vmatprep.subr.mxu0 0.0
        %2890 = vmatpush1.msra.mxu0 %v2723
        %2891 = vmatprep.subr.mxu0 0.0
        %2892 = vmatpush1.msra.mxu0 %v2724
        %2893 = vmatprep.subr.mxu0 0.0
        %2894 = vmatpush1.msra.mxu0 %v2725
        %2895 = vmatprep.subr.mxu0 0.0
        %2896 = vmatpush1.msra.mxu0 %v2726
        %2897 = vmatprep.subr.mxu0 0.0
        %2898 = vmatpush1.msra.mxu0 %v2727
        %2899 = vmatprep.subr.mxu0 0.0
        %2900 = vmatpush1.msra.mxu0 %v2728
        %2901 = vmatprep.subr.mxu0 0.0
        %2902 = vmatpush1.msra.mxu0 %v2729
        %2903 = vmatprep.subr.mxu0 0.0
        %2904 = vmatpush1.msra.mxu0 %v2730
        %2905 = vmatprep.subr.mxu0 0.0
        %2906 = vmatpush1.msra.mxu0 %v2731
        %2907 = vmatprep.subr.mxu0 0.0
        %2908 = vmatpush1.msra.mxu0 %v2732
        %2909 = vmatprep.subr.mxu0 0.0
        %2910 = vmatpush1.msra.mxu0 %v2733
        %2911 = vmatprep.subr.mxu0 0.0
        %2912 = vmatpush1.msra.mxu0 0.0
        %2913 = vmatprep.subr.mxu0 0.0
        %2914 = vmatpush1.msra.mxu0 0.0
        %2915 = vmatprep.subr.mxu0 0.0
        %2916 = vmatpush1.msra.mxu0 0.0
        %2917 = vmatprep.subr.mxu0 0.0
        %2918 = vmatpush1.msra.mxu0 0.0
        %2919 = vmatprep.subr.mxu0 0.0
        %2920 = vmatpush1.msra.mxu0 0.0
        %2921 = vmatprep.subr.mxu0 0.0
        %2922 = vmatpush1.msra.mxu0 0.0
        %2923 = vmatprep.subr.mxu0 0.0
        %2924 = vmatpush1.msra.mxu0 0.0
        %2925 = vmatprep.subr.mxu0 0.0
        %2926 = vmatpush1.msra.mxu0 0.0
        %2927 = vmatprep.subr.mxu0 0.0
        %2928 = vmatpush1.msra.mxu0 0.0
        %2929 = vmatprep.subr.mxu0 0.0
        %2930 = vmatpush1.msra.mxu0 0.0
        %2931 = vmatprep.subr.mxu0 0.0
        %2932 = vmatpush1.msra.mxu0 0.0
        %2933 = vmatprep.subr.mxu0 0.0
        %2934 = vmatpush1.msra.mxu0 0.0
        %2935 = vmatprep.subr.mxu0 0.0
        %2936 = vmatpush1.msra.mxu0 0.0
        %2937 = vmatprep.subr.mxu0 0.0
        %2938 = vmatpush1.msra.mxu0 0.0
        %2939 = vmatprep.subr.mxu0 0.0
        %2940 = vmatpush1.msra.mxu0 0.0
        %2941 = vmatprep.subr.mxu0 0.0
        %2942 = vmatpush1.msra.mxu0 0.0
        %2943 = vmatprep.mubr.f32.mxu0 0.0
        %2944 = vmatmul.mubr.f32.gmra.mrb[0].mxu0 %v2646
        %v2945 = vpop.f32.mrb[0].mxu0
        %v2946 = vadd.f32 %v2801, %v2945
        %v2947 = vpop.f32.mrb[0].mxu0
        %2948 = vmatprep.mubr.f32.mxu0 0.0
        %2949 = vmatmul.mubr.f32.gmra.mrb[0].mxu0 %v2677
        %v2950 = vpop.f32.mrb[0].mxu0
        %v2951 = vadd.f32 %v2806, %v2950
        %v2952 = vpop.f32.mrb[0].mxu0
        %2953 = vmatprep.mubr.f32.mxu0 0.0
        %2954 = vmatmul.mubr.f32.gmra.mrb[0].mxu0 %v2648
        %v2955 = vpop.f32.mrb[0].mxu0
        %v2956 = vadd.f32 %v2811, %v2955
        %v2957 = vpop.f32.mrb[0].mxu0
        %2958 = vmatprep.mubr.f32.mxu0 0.0
        %2959 = vmatmul.mubr.f32.gmra.mrb[0].mxu0 %v2678
        %v2960 = vpop.f32.mrb[0].mxu0
        %v2961 = vadd.f32 %v2816, %v2960
        %v2962 = vpop.f32.mrb[0].mxu0
        %2963 = vmatprep.mubr.f32.mxu0 0.0
        %2964 = vmatmul.mubr.f32.gmra.mrb[0].mxu0 %v2650
        %v2965 = vpop.f32.mrb[0].mxu0
        %v2966 = vadd.f32 %v2821, %v2965
        %v2967 = vpop.f32.mrb[0].mxu0
        %2968 = vmatprep.mubr.f32.mxu0 0.0
        %2969 = vmatmul.mubr.f32.gmra.mrb[0].mxu0 %v2679
        %v2970 = vpop.f32.mrb[0].mxu0
        %v2971 = vadd.f32 %v2826, %v2970
        %v2972 = vpop.f32.mrb[0].mxu0
        %2973 = vmatprep.mubr.f32.mxu0 0.0
        %2974 = vmatmul.mubr.f32.gmra.mrb[0].mxu0 %v2652
        %v2975 = vpop.f32.mrb[0].mxu0
        %v2976 = vadd.f32 %v2831, %v2975
        %v2977 = vpop.f32.mrb[0].mxu0
        %2978 = vmatprep.mubr.f32.mxu0 0.0
        %2979 = vmatmul.mubr.f32.gmra.mrb[0].mxu0 %v2680
        %v2980 = vpop.f32.mrb[0].mxu0
        %v2981 = vadd.f32 %v2836, %v2980
        %v2982 = vpop.f32.mrb[0].mxu0
        %2983 = vmatprep.mubr.f32.mxu0 0.0
        %2984 = vmatmul.mubr.f32.gmra.mrb[0].mxu0 %v2654
        %v2985 = vpop.f32.mrb[0].mxu0
        %v2986 = vadd.f32 %v2841, %v2985
        %v2987 = vpop.f32.mrb[0].mxu0
        %2988 = vmatprep.mubr.f32.mxu0 0.0
        %2989 = vmatmul.mubr.f32.gmra.mrb[0].mxu0 %v2681
        %v2990 = vpop.f32.mrb[0].mxu0
        %v2991 = vadd.f32 %v2846, %v2990
        %v2992 = vpop.f32.mrb[0].mxu0
        %2993 = vmatprep.mubr.f32.mxu0 0.0
        %2994 = vmatmul.mubr.f32.gmra.mrb[0].mxu0 %v2656
        %v2995 = vpop.f32.mrb[0].mxu0
        %v2996 = vadd.f32 %v2851, %v2995
        %v2997 = vpop.f32.mrb[0].mxu0
        %2998 = vmatprep.mubr.f32.mxu0 0.0
        %2999 = vmatmul.mubr.f32.gmra.mrb[0].mxu0 %v2682
        %v3000 = vpop.f32.mrb[0].mxu0
        %v3001 = vadd.f32 %v2856, %v3000
        %v3002 = vpop.f32.mrb[0].mxu0
        %3003 = vmatprep.mubr.f32.mxu0 0.0
        %3004 = vmatmul.mubr.f32.gmra.mrb[0].mxu0 %v2658
        %v3005 = vpop.f32.mrb[0].mxu0
        %v3006 = vadd.f32 %v2861, %v3005
        %v3007 = vpop.f32.mrb[0].mxu0
        %3008 = vmatprep.mubr.f32.mxu0 0.0
        %3009 = vmatmul.mubr.f32.gmra.mrb[0].mxu0 %v2683
        %v3010 = vpop.f32.mrb[0].mxu0
        %v3011 = vadd.f32 %v2866, %v3010
        %v3012 = vpop.f32.mrb[0].mxu0
        %3013 = vmatprep.mubr.f32.mxu0 0.0
        %3014 = vmatmul.mubr.f32.gmra.mrb[0].mxu0 %v2660
        %v3015 = vpop.f32.mrb[0].mxu0
        %v3016 = vadd.f32 %v2871, %v3015
        %v3017 = vpop.f32.mrb[0].mxu0
        %3018 = vmatprep.mubr.f32.mxu0 0.0
        %3019 = vmatmul.mubr.f32.gmra.mrb[0].mxu0 %v2684
        %v3020 = vpop.f32.mrb[0].mxu0
        %v3021 = vadd.f32 %v2876, %v3020
        %v3022 = vpop.f32.mrb[0].mxu0
        %3023 = vdwg.mxu0
        %v3024 = vadd.f32 %v2629, %v2946
        %v3025 = vadd.f32 %v2630, %v2951
        %v3026 = vadd.f32 %v2631, %v2956
        %v3027 = vadd.f32 %v2632, %v2961
        %v3028 = vadd.f32 %v2633, %v2966
        %v3029 = vadd.f32 %v2634, %v2971
        %v3030 = vadd.f32 %v2635, %v2976
        %v3031 = vadd.f32 %v2636, %v2981
        %v3032 = vadd.f32 %v2637, %v2986
        %v3033 = vadd.f32 %v2638, %v2991
        %v3034 = vadd.f32 %v2639, %v2996
        %v3035 = vadd.f32 %v2640, %v3001
        %v3036 = vadd.f32 %v2641, %v3006
        %v3037 = vadd.f32 %v2642, %v3011
        %v3038 = vadd.f32 %v2643, %v3016
        %v3039 = vadd.f32 %v2644, %v3021
        %v3040 = vld [vmem:[%s642] sm:$0xff]
        %v3041 = vld [vmem:[%s642 + $0x8] sm:$0xff]
        %v3042 = vld [vmem:[%s642 + $0x18] sm:$0xff]
        %v3043 = vld [vmem:[%s642 + $0x20] sm:$0xff]
        %v3044 = vld [vmem:[%s642 + $0x30] sm:$0xff]
        %v3045 = vld [vmem:[%s642 + $0x38] sm:$0xff]
        %v3046 = vld [vmem:[%s642 + $0x48] sm:$0xff]
        %v3047 = vld [vmem:[%s642 + $0x50] sm:$0xff]
        %v3048 = vld [vmem:[%s642 + $0x60] sm:$0xff]
        %v3049 = vld [vmem:[%s642 + $0x68] sm:$0xff]
        %v3050 = vld [vmem:[%s642 + $0x78] sm:$0xff]
        %v3051 = vld [vmem:[%s642 + $0x80] sm:$0xff]
        %v3052 = vld [vmem:[%s642 + $0x90] sm:$0xff]
        %v3053 = vld [vmem:[%s642 + $0x98] sm:$0xff]
        %v3054 = vld [vmem:[%s642 + $0xa8] sm:$0xff]
        %v3055 = vld [vmem:[%s642 + $0xb0] sm:$0xff]
        %v3056 = vld [vmem:[%s642 + $0x10] sm:$0xff]
        %v3057 = vld [vmem:[%s642 + $0x28] sm:$0xff]
        %v3058 = vld [vmem:[%s642 + $0x40] sm:$0xff]
        %v3059 = vld [vmem:[%s642 + $0x58] sm:$0xff]
        %v3060 = vld [vmem:[%s642 + $0x70] sm:$0xff]
        %v3061 = vld [vmem:[%s642 + $0x88] sm:$0xff]
        %v3062 = vld [vmem:[%s642 + $0xa0] sm:$0xff]
        %v3063 = vld [vmem:[%s642 + $0xb8] sm:$0xff]
        %s3064 = scalar_lea.vmem [#allocation4], 2688
        %v3065 = vld [vmem:[%s3064] sm:$0xff]
        %v3066 = vld [vmem:[%s3064 + $0x8] sm:$0xff]
        %v3067 = vld [vmem:[%s3064 + $0x10] sm:$0xff]
        %v3068 = vld [vmem:[%s3064 + $0x18] sm:$0xff]
        %v3069 = vld [vmem:[%s3064 + $0x20] sm:$0xff]
        %v3070 = vld [vmem:[%s3064 + $0x28] sm:$0xff]
        %v3071 = vld [vmem:[%s3064 + $0x30] sm:$0xff]
        %v3072 = vld [vmem:[%s3064 + $0x38] sm:$0xff]
        %v3073 = vld [vmem:[%s3064 + $0x40] sm:$0xff]
        %v3074 = vld [vmem:[%s3064 + $0x48] sm:$0xff]
        %v3075 = vld [vmem:[%s3064 + $0x50] sm:$0xff]
        %v3076 = vld [vmem:[%s3064 + $0x58] sm:$0xff]
        %v3077 = vld [vmem:[%s3064 + $0x60] sm:$0xff]
        %v3078 = vld [vmem:[%s3064 + $0x68] sm:$0xff]
        %v3079 = vld [vmem:[%s3064 + $0x70] sm:$0xff]
        %v3080 = vld [vmem:[%s3064 + $0x78] sm:$0xff]
        %v3081 = vld [vmem:[%s3064 + $0x80] sm:$0xff]
        %v3082 = vld [vmem:[%s3064 + $0x88] sm:$0xff]
        %v3083 = vld [vmem:[%s3064 + $0x90] sm:$0xff]
        %v3084 = vld [vmem:[%s3064 + $0x98] sm:$0xff]
        %v3085 = vld [vmem:[%s3064 + $0xa0] sm:$0xff]
        %v3086 = vld [vmem:[%s3064 + $0xa8] sm:$0xff]
        %v3087 = vld [vmem:[%s3064 + $0xb0] sm:$0xff]
        %v3088 = vld [vmem:[%s3064 + $0xb8] sm:$0xff]
        %v3089 = vld [vmem:[%s3064 + $0xc0] sm:$0xff]
        %v3090 = vld [vmem:[%s3064 + $0xc8] sm:$0xff]
        %v3091 = vld [vmem:[%s3064 + $0xd0] sm:$0xff]
        %v3092 = vld [vmem:[%s3064 + $0xd8] sm:$0xff]
        %v3093 = vld [vmem:[%s3064 + $0xe0] sm:$0xff]
        %v3094 = vld [vmem:[%s3064 + $0xe8] sm:$0xff]
        %v3095 = vld [vmem:[%s3064 + $0xf0] sm:$0xff]
        %v3096 = vld [vmem:[%s3064 + $0xf8] sm:$0xff]
        %v3097 = vld [vmem:[%s3064 + $0x100] sm:$0xff]
        %v3098 = vld [vmem:[%s3064 + $0x108] sm:$0xff]
        %v3099 = vld [vmem:[%s3064 + $0x110] sm:$0xff]
        %v3100 = vld [vmem:[%s3064 + $0x118] sm:$0xff]
        %v3101 = vld [vmem:[%s3064 + $0x120] sm:$0xff]
        %v3102 = vld [vmem:[%s3064 + $0x128] sm:$0xff]
        %v3103 = vld [vmem:[%s3064 + $0x130] sm:$0xff]
        %v3104 = vld [vmem:[%s3064 + $0x138] sm:$0xff]
        %v3105 = vld [vmem:[%s3064 + $0x140] sm:$0xff]
        %v3106 = vld [vmem:[%s3064 + $0x148] sm:$0xff]
        %v3107 = vld [vmem:[%s3064 + $0x150] sm:$0xff]
        %v3108 = vld [vmem:[%s3064 + $0x158] sm:$0xff]
        %v3109 = vld [vmem:[%s3064 + $0x160] sm:$0xff]
        %v3110 = vld [vmem:[%s3064 + $0x168] sm:$0xff]
        %v3111 = vld [vmem:[%s3064 + $0x170] sm:$0xff]
        %v3112 = vld [vmem:[%s3064 + $0x178] sm:$0xff]
        %3113 = vmatprep.subr.mxu0 0.0
        %3114 = vmatpush1.msra.mxu0 %v3065
        %3115 = vmatprep.subr.mxu0 0.0
        %3116 = vmatpush1.msra.mxu0 %v3066
        %3117 = vmatprep.subr.mxu0 0.0
        %3118 = vmatpush1.msra.mxu0 %v3067
        %3119 = vmatprep.subr.mxu0 0.0
        %3120 = vmatpush1.msra.mxu0 %v3068
        %3121 = vmatprep.subr.mxu0 0.0
        %3122 = vmatpush1.msra.mxu0 %v3069
        %3123 = vmatprep.subr.mxu0 0.0
        %3124 = vmatpush1.msra.mxu0 %v3070
        %3125 = vmatprep.subr.mxu0 0.0
        %3126 = vmatpush1.msra.mxu0 %v3071
        %3127 = vmatprep.subr.mxu0 0.0
        %3128 = vmatpush1.msra.mxu0 %v3072
        %3129 = vmatprep.subr.mxu0 0.0
        %3130 = vmatpush1.msra.mxu0 %v3073
        %3131 = vmatprep.subr.mxu0 0.0
        %3132 = vmatpush1.msra.mxu0 %v3074
        %3133 = vmatprep.subr.mxu0 0.0
        %3134 = vmatpush1.msra.mxu0 %v3075
        %3135 = vmatprep.subr.mxu0 0.0
        %3136 = vmatpush1.msra.mxu0 %v3076
        %3137 = vmatprep.subr.mxu0 0.0
        %3138 = vmatpush1.msra.mxu0 %v3077
        %3139 = vmatprep.subr.mxu0 0.0
        %3140 = vmatpush1.msra.mxu0 %v3078
        %3141 = vmatprep.subr.mxu0 0.0
        %3142 = vmatpush1.msra.mxu0 %v3079
        %3143 = vmatprep.subr.mxu0 0.0
        %3144 = vmatpush1.msra.mxu0 %v3080
        %3145 = vmatprep.subr.mxu0 0.0
        %3146 = vmatpush1.msra.mxu0 %v3081
        %3147 = vmatprep.subr.mxu0 0.0
        %3148 = vmatpush1.msra.mxu0 %v3082
        %3149 = vmatprep.subr.mxu0 0.0
        %3150 = vmatpush1.msra.mxu0 %v3083
        %3151 = vmatprep.subr.mxu0 0.0
        %3152 = vmatpush1.msra.mxu0 %v3084
        %3153 = vmatprep.subr.mxu0 0.0
        %3154 = vmatpush1.msra.mxu0 %v3085
        %3155 = vmatprep.subr.mxu0 0.0
        %3156 = vmatpush1.msra.mxu0 %v3086
        %3157 = vmatprep.subr.mxu0 0.0
        %3158 = vmatpush1.msra.mxu0 %v3087
        %3159 = vmatprep.subr.mxu0 0.0
        %3160 = vmatpush1.msra.mxu0 %v3088
        %3161 = vmatprep.subr.mxu0 0.0
        %3162 = vmatpush1.msra.mxu0 %v3089
        %3163 = vmatprep.subr.mxu0 0.0
        %3164 = vmatpush1.msra.mxu0 %v3090
        %3165 = vmatprep.subr.mxu0 0.0
        %3166 = vmatpush1.msra.mxu0 %v3091
        %3167 = vmatprep.subr.mxu0 0.0
        %3168 = vmatpush1.msra.mxu0 %v3092
        %3169 = vmatprep.subr.mxu0 0.0
        %3170 = vmatpush1.msra.mxu0 %v3093
        %3171 = vmatprep.subr.mxu0 0.0
        %3172 = vmatpush1.msra.mxu0 %v3094
        %3173 = vmatprep.subr.mxu0 0.0
        %3174 = vmatpush1.msra.mxu0 %v3095
        %3175 = vmatprep.subr.mxu0 0.0
        %3176 = vmatpush1.msra.mxu0 %v3096
        %3177 = vmatprep.mubr.f32.mxu0 %v659
        %3178 = vmatmul.mubr.f32.gmra.mrb[0].mxu0 %v3040
        %v3179 = vpop.f32.mrb[0].mxu0
        %v3180 = vadd.f32 0.0, %v3179
        %v3181 = vpop.f32.mrb[0].mxu0
        %3182 = vmatprep.mubr.f32.mxu0 %v660
        %3183 = vmatmul.mubr.f32.gmra.mrb[0].mxu0 %v3041
        %v3184 = vpop.f32.mrb[0].mxu0
        %v3185 = vadd.f32 0.0, %v3184
        %v3186 = vpop.f32.mrb[0].mxu0
        %3187 = vmatprep.mubr.f32.mxu0 %v661
        %3188 = vmatmul.mubr.f32.gmra.mrb[0].mxu0 %v3042
        %v3189 = vpop.f32.mrb[0].mxu0
        %v3190 = vadd.f32 0.0, %v3189
        %v3191 = vpop.f32.mrb[0].mxu0
        %3192 = vmatprep.mubr.f32.mxu0 %v662
        %3193 = vmatmul.mubr.f32.gmra.mrb[0].mxu0 %v3043
        %v3194 = vpop.f32.mrb[0].mxu0
        %v3195 = vadd.f32 0.0, %v3194
        %v3196 = vpop.f32.mrb[0].mxu0
        %3197 = vmatprep.mubr.f32.mxu0 %v663
        %3198 = vmatmul.mubr.f32.gmra.mrb[0].mxu0 %v3044
        %v3199 = vpop.f32.mrb[0].mxu0
        %v3200 = vadd.f32 0.0, %v3199
        %v3201 = vpop.f32.mrb[0].mxu0
        %3202 = vmatprep.mubr.f32.mxu0 %v664
        %3203 = vmatmul.mubr.f32.gmra.mrb[0].mxu0 %v3045
        %v3204 = vpop.f32.mrb[0].mxu0
        %v3205 = vadd.f32 0.0, %v3204
        %v3206 = vpop.f32.mrb[0].mxu0
        %3207 = vmatprep.mubr.f32.mxu0 %v665
        %3208 = vmatmul.mubr.f32.gmra.mrb[0].mxu0 %v3046
        %v3209 = vpop.f32.mrb[0].mxu0
        %v3210 = vadd.f32 0.0, %v3209
        %v3211 = vpop.f32.mrb[0].mxu0
        %3212 = vmatprep.mubr.f32.mxu0 %v666
        %3213 = vmatmul.mubr.f32.gmra.mrb[0].mxu0 %v3047
        %v3214 = vpop.f32.mrb[0].mxu0
        %v3215 = vadd.f32 0.0, %v3214
        %v3216 = vpop.f32.mrb[0].mxu0
        %3217 = vmatprep.mubr.f32.mxu0 %v667
        %3218 = vmatmul.mubr.f32.gmra.mrb[0].mxu0 %v3048
        %v3219 = vpop.f32.mrb[0].mxu0
        %v3220 = vadd.f32 0.0, %v3219
        %v3221 = vpop.f32.mrb[0].mxu0
        %3222 = vmatprep.mubr.f32.mxu0 %v668
        %3223 = vmatmul.mubr.f32.gmra.mrb[0].mxu0 %v3049
        %v3224 = vpop.f32.mrb[0].mxu0
        %v3225 = vadd.f32 0.0, %v3224
        %v3226 = vpop.f32.mrb[0].mxu0
        %3227 = vmatprep.mubr.f32.mxu0 %v669
        %3228 = vmatmul.mubr.f32.gmra.mrb[0].mxu0 %v3050
        %v3229 = vpop.f32.mrb[0].mxu0
        %v3230 = vadd.f32 0.0, %v3229
        %v3231 = vpop.f32.mrb[0].mxu0
        %3232 = vmatprep.mubr.f32.mxu0 %v670
        %3233 = vmatmul.mubr.f32.gmra.mrb[0].mxu0 %v3051
        %v3234 = vpop.f32.mrb[0].mxu0
        %v3235 = vadd.f32 0.0, %v3234
        %v3236 = vpop.f32.mrb[0].mxu0
        %3237 = vmatprep.mubr.f32.mxu0 %v671
        %3238 = vmatmul.mubr.f32.gmra.mrb[0].mxu0 %v3052
        %v3239 = vpop.f32.mrb[0].mxu0
        %v3240 = vadd.f32 0.0, %v3239
        %v3241 = vpop.f32.mrb[0].mxu0
        %3242 = vmatprep.mubr.f32.mxu0 %v672
        %3243 = vmatmul.mubr.f32.gmra.mrb[0].mxu0 %v3053
        %v3244 = vpop.f32.mrb[0].mxu0
        %v3245 = vadd.f32 0.0, %v3244
        %v3246 = vpop.f32.mrb[0].mxu0
        %3247 = vmatprep.mubr.f32.mxu0 %v673
        %3248 = vmatmul.mubr.f32.gmra.mrb[0].mxu0 %v3054
        %v3249 = vpop.f32.mrb[0].mxu0
        %v3250 = vadd.f32 0.0, %v3249
        %v3251 = vpop.f32.mrb[0].mxu0
        %3252 = vmatprep.mubr.f32.mxu0 %v674
        %3253 = vmatmul.mubr.f32.gmra.mrb[0].mxu0 %v3055
        %v3254 = vpop.f32.mrb[0].mxu0
        %v3255 = vadd.f32 0.0, %v3254
        %v3256 = vpop.f32.mrb[0].mxu0
        %3257 = vdwg.mxu0
        %3258 = vmatprep.subr.mxu0 0.0
        %3259 = vmatpush1.msra.mxu0 %v3097
        %3260 = vmatprep.subr.mxu0 0.0
        %3261 = vmatpush1.msra.mxu0 %v3098
        %3262 = vmatprep.subr.mxu0 0.0
        %3263 = vmatpush1.msra.mxu0 %v3099
        %3264 = vmatprep.subr.mxu0 0.0
        %3265 = vmatpush1.msra.mxu0 %v3100
        %3266 = vmatprep.subr.mxu0 0.0
        %3267 = vmatpush1.msra.mxu0 %v3101
        %3268 = vmatprep.subr.mxu0 0.0
        %3269 = vmatpush1.msra.mxu0 %v3102
        %3270 = vmatprep.subr.mxu0 0.0
        %3271 = vmatpush1.msra.mxu0 %v3103
        %3272 = vmatprep.subr.mxu0 0.0
        %3273 = vmatpush1.msra.mxu0 %v3104
        %3274 = vmatprep.subr.mxu0 0.0
        %3275 = vmatpush1.msra.mxu0 %v3105
        %3276 = vmatprep.subr.mxu0 0.0
        %3277 = vmatpush1.msra.mxu0 %v3106
        %3278 = vmatprep.subr.mxu0 0.0
        %3279 = vmatpush1.msra.mxu0 %v3107
        %3280 = vmatprep.subr.mxu0 0.0
        %3281 = vmatpush1.msra.mxu0 %v3108
        %3282 = vmatprep.subr.mxu0 0.0
        %3283 = vmatpush1.msra.mxu0 %v3109
        %3284 = vmatprep.subr.mxu0 0.0
        %3285 = vmatpush1.msra.mxu0 %v3110
        %3286 = vmatprep.subr.mxu0 0.0
        %3287 = vmatpush1.msra.mxu0 %v3111
        %3288 = vmatprep.subr.mxu0 0.0
        %3289 = vmatpush1.msra.mxu0 %v3112
        %3290 = vmatprep.subr.mxu0 0.0
        %3291 = vmatpush1.msra.mxu0 0.0
        %3292 = vmatprep.subr.mxu0 0.0
        %3293 = vmatpush1.msra.mxu0 0.0
        %3294 = vmatprep.subr.mxu0 0.0
        %3295 = vmatpush1.msra.mxu0 0.0
        %3296 = vmatprep.subr.mxu0 0.0
        %3297 = vmatpush1.msra.mxu0 0.0
        %3298 = vmatprep.subr.mxu0 0.0
        %3299 = vmatpush1.msra.mxu0 0.0
        %3300 = vmatprep.subr.mxu0 0.0
        %3301 = vmatpush1.msra.mxu0 0.0
        %3302 = vmatprep.subr.mxu0 0.0
        %3303 = vmatpush1.msra.mxu0 0.0
        %3304 = vmatprep.subr.mxu0 0.0
        %3305 = vmatpush1.msra.mxu0 0.0
        %3306 = vmatprep.subr.mxu0 0.0
        %3307 = vmatpush1.msra.mxu0 0.0
        %3308 = vmatprep.subr.mxu0 0.0
        %3309 = vmatpush1.msra.mxu0 0.0
        %3310 = vmatprep.subr.mxu0 0.0
        %3311 = vmatpush1.msra.mxu0 0.0
        %3312 = vmatprep.subr.mxu0 0.0
        %3313 = vmatpush1.msra.mxu0 0.0
        %3314 = vmatprep.subr.mxu0 0.0
        %3315 = vmatpush1.msra.mxu0 0.0
        %3316 = vmatprep.subr.mxu0 0.0
        %3317 = vmatpush1.msra.mxu0 0.0
        %3318 = vmatprep.subr.mxu0 0.0
        %3319 = vmatpush1.msra.mxu0 0.0
        %3320 = vmatprep.subr.mxu0 0.0
        %3321 = vmatpush1.msra.mxu0 0.0
        %3322 = vmatprep.mubr.f32.mxu0 0.0
        %3323 = vmatmul.mubr.f32.gmra.mrb[0].mxu0 %v3041
        %v3324 = vpop.f32.mrb[0].mxu0
        %v3325 = vadd.f32 %v3180, %v3324
        %v3326 = vpop.f32.mrb[0].mxu0
        %3327 = vmatprep.mubr.f32.mxu0 0.0
        %3328 = vmatmul.mubr.f32.gmra.mrb[0].mxu0 %v3056
        %v3329 = vpop.f32.mrb[0].mxu0
        %v3330 = vadd.f32 %v3185, %v3329
        %v3331 = vpop.f32.mrb[0].mxu0
        %3332 = vmatprep.mubr.f32.mxu0 0.0
        %3333 = vmatmul.mubr.f32.gmra.mrb[0].mxu0 %v3043
        %v3334 = vpop.f32.mrb[0].mxu0
        %v3335 = vadd.f32 %v3190, %v3334
        %v3336 = vpop.f32.mrb[0].mxu0
        %3337 = vmatprep.mubr.f32.mxu0 0.0
        %3338 = vmatmul.mubr.f32.gmra.mrb[0].mxu0 %v3057
        %v3339 = vpop.f32.mrb[0].mxu0
        %v3340 = vadd.f32 %v3195, %v3339
        %v3341 = vpop.f32.mrb[0].mxu0
        %3342 = vmatprep.mubr.f32.mxu0 0.0
        %3343 = vmatmul.mubr.f32.gmra.mrb[0].mxu0 %v3045
        %v3344 = vpop.f32.mrb[0].mxu0
        %v3345 = vadd.f32 %v3200, %v3344
        %v3346 = vpop.f32.mrb[0].mxu0
        %3347 = vmatprep.mubr.f32.mxu0 0.0
        %3348 = vmatmul.mubr.f32.gmra.mrb[0].mxu0 %v3058
        %v3349 = vpop.f32.mrb[0].mxu0
        %v3350 = vadd.f32 %v3205, %v3349
        %v3351 = vpop.f32.mrb[0].mxu0
        %3352 = vmatprep.mubr.f32.mxu0 0.0
        %3353 = vmatmul.mubr.f32.gmra.mrb[0].mxu0 %v3047
        %v3354 = vpop.f32.mrb[0].mxu0
        %v3355 = vadd.f32 %v3210, %v3354
        %v3356 = vpop.f32.mrb[0].mxu0
        %3357 = vmatprep.mubr.f32.mxu0 0.0
        %3358 = vmatmul.mubr.f32.gmra.mrb[0].mxu0 %v3059
        %v3359 = vpop.f32.mrb[0].mxu0
        %v3360 = vadd.f32 %v3215, %v3359
        %v3361 = vpop.f32.mrb[0].mxu0
        %3362 = vmatprep.mubr.f32.mxu0 0.0
        %3363 = vmatmul.mubr.f32.gmra.mrb[0].mxu0 %v3049
        %v3364 = vpop.f32.mrb[0].mxu0
        %v3365 = vadd.f32 %v3220, %v3364
        %v3366 = vpop.f32.mrb[0].mxu0
        %3367 = vmatprep.mubr.f32.mxu0 0.0
        %3368 = vmatmul.mubr.f32.gmra.mrb[0].mxu0 %v3060
        %v3369 = vpop.f32.mrb[0].mxu0
        %v3370 = vadd.f32 %v3225, %v3369
        %v3371 = vpop.f32.mrb[0].mxu0
        %3372 = vmatprep.mubr.f32.mxu0 0.0
        %3373 = vmatmul.mubr.f32.gmra.mrb[0].mxu0 %v3051
        %v3374 = vpop.f32.mrb[0].mxu0
        %v3375 = vadd.f32 %v3230, %v3374
        %v3376 = vpop.f32.mrb[0].mxu0
        %3377 = vmatprep.mubr.f32.mxu0 0.0
        %3378 = vmatmul.mubr.f32.gmra.mrb[0].mxu0 %v3061
        %v3379 = vpop.f32.mrb[0].mxu0
        %v3380 = vadd.f32 %v3235, %v3379
        %v3381 = vpop.f32.mrb[0].mxu0
        %3382 = vmatprep.mubr.f32.mxu0 0.0
        %3383 = vmatmul.mubr.f32.gmra.mrb[0].mxu0 %v3053
        %v3384 = vpop.f32.mrb[0].mxu0
        %v3385 = vadd.f32 %v3240, %v3384
        %v3386 = vpop.f32.mrb[0].mxu0
        %3387 = vmatprep.mubr.f32.mxu0 0.0
        %3388 = vmatmul.mubr.f32.gmra.mrb[0].mxu0 %v3062
        %v3389 = vpop.f32.mrb[0].mxu0
        %v3390 = vadd.f32 %v3245, %v3389
        %v3391 = vpop.f32.mrb[0].mxu0
        %3392 = vmatprep.mubr.f32.mxu0 0.0
        %3393 = vmatmul.mubr.f32.gmra.mrb[0].mxu0 %v3055
        %v3394 = vpop.f32.mrb[0].mxu0
        %v3395 = vadd.f32 %v3250, %v3394
        %v3396 = vpop.f32.mrb[0].mxu0
        %3397 = vmatprep.mubr.f32.mxu0 0.0
        %3398 = vmatmul.mubr.f32.gmra.mrb[0].mxu0 %v3063
        %v3399 = vpop.f32.mrb[0].mxu0
        %v3400 = vadd.f32 %v3255, %v3399
        %v3401 = vpop.f32.mrb[0].mxu0
        %3402 = vdwg.mxu0
        %v3403 = vadd.f32 %v3024, %v3325
        %v3404 = vadd.f32 %v3025, %v3330
        %v3405 = vadd.f32 %v3026, %v3335
        %v3406 = vadd.f32 %v3027, %v3340
        %v3407 = vadd.f32 %v3028, %v3345
        %v3408 = vadd.f32 %v3029, %v3350
        %v3409 = vadd.f32 %v3030, %v3355
        %v3410 = vadd.f32 %v3031, %v3360
        %v3411 = vadd.f32 %v3032, %v3365
        %v3412 = vadd.f32 %v3033, %v3370
        %v3413 = vadd.f32 %v3034, %v3375
        %v3414 = vadd.f32 %v3035, %v3380
        %v3415 = vadd.f32 %v3036, %v3385
        %v3416 = vadd.f32 %v3037, %v3390
        %v3417 = vadd.f32 %v3038, %v3395
        %v3418 = vadd.f32 %v3039, %v3400
        %s3419 = scalar_lea.vmem %s200, 192 [#allocation2]
        %v3420 = vld [vmem:[%s3419] sm:$0xff]
        %v3421 = vld [vmem:[%s3419 + $0x8] sm:$0xff]
        %v3422 = vld [vmem:[%s3419 + $0x18] sm:$0xff]
        %v3423 = vld [vmem:[%s3419 + $0x20] sm:$0xff]
        %v3424 = vld [vmem:[%s3419 + $0x30] sm:$0xff]
        %v3425 = vld [vmem:[%s3419 + $0x38] sm:$0xff]
        %v3426 = vld [vmem:[%s3419 + $0x48] sm:$0xff]
        %v3427 = vld [vmem:[%s3419 + $0x50] sm:$0xff]
        %v3428 = vld [vmem:[%s3419 + $0x60] sm:$0xff]
        %v3429 = vld [vmem:[%s3419 + $0x68] sm:$0xff]
        %v3430 = vld [vmem:[%s3419 + $0x78] sm:$0xff]
        %v3431 = vld [vmem:[%s3419 + $0x80] sm:$0xff]
        %v3432 = vld [vmem:[%s3419 + $0x90] sm:$0xff]
        %v3433 = vld [vmem:[%s3419 + $0x98] sm:$0xff]
        %v3434 = vld [vmem:[%s3419 + $0xa8] sm:$0xff]
        %v3435 = vld [vmem:[%s3419 + $0xb0] sm:$0xff]
        %v3436 = vld [vmem:[%s3419 + $0x4] sm:$0xff]
        %v3437 = vld [vmem:[%s3419 + $0xc] sm:$0xff]
        %v3438 = vld [vmem:[%s3419 + $0x1c] sm:$0xff]
        %v3439 = vld [vmem:[%s3419 + $0x24] sm:$0xff]
        %v3440 = vld [vmem:[%s3419 + $0x34] sm:$0xff]
        %v3441 = vld [vmem:[%s3419 + $0x3c] sm:$0xff]
        %v3442 = vld [vmem:[%s3419 + $0x4c] sm:$0xff]
        %v3443 = vld [vmem:[%s3419 + $0x54] sm:$0xff]
        %v3444 = vld [vmem:[%s3419 + $0x64] sm:$0xff]
        %v3445 = vld [vmem:[%s3419 + $0x6c] sm:$0xff]
        %v3446 = vld [vmem:[%s3419 + $0x7c] sm:$0xff]
        %v3447 = vld [vmem:[%s3419 + $0x84] sm:$0xff]
        %v3448 = vld [vmem:[%s3419 + $0x94] sm:$0xff]
        %v3449 = vld [vmem:[%s3419 + $0x9c] sm:$0xff]
        %v3450 = vld [vmem:[%s3419 + $0xac] sm:$0xff]
        %v3451 = vld [vmem:[%s3419 + $0xb4] sm:$0xff]
        %v3452 = vld [vmem:[%s3419 + $0x10] sm:$0xff]
        %v3453 = vld [vmem:[%s3419 + $0x28] sm:$0xff]
        %v3454 = vld [vmem:[%s3419 + $0x40] sm:$0xff]
        %v3455 = vld [vmem:[%s3419 + $0x58] sm:$0xff]
        %v3456 = vld [vmem:[%s3419 + $0x70] sm:$0xff]
        %v3457 = vld [vmem:[%s3419 + $0x88] sm:$0xff]
        %v3458 = vld [vmem:[%s3419 + $0xa0] sm:$0xff]
        %v3459 = vld [vmem:[%s3419 + $0xb8] sm:$0xff]
        %s3460 = scalar_lea.vmem [#allocation4], 3072
        %v3461 = vld [vmem:[%s3460] sm:$0xff]
        %v3462 = vld [vmem:[%s3460 + $0x8] sm:$0xff]
        %v3463 = vld [vmem:[%s3460 + $0x10] sm:$0xff]
        %v3464 = vld [vmem:[%s3460 + $0x18] sm:$0xff]
        %v3465 = vld [vmem:[%s3460 + $0x20] sm:$0xff]
        %v3466 = vld [vmem:[%s3460 + $0x28] sm:$0xff]
        %v3467 = vld [vmem:[%s3460 + $0x30] sm:$0xff]
        %v3468 = vld [vmem:[%s3460 + $0x38] sm:$0xff]
        %v3469 = vld [vmem:[%s3460 + $0x40] sm:$0xff]
        %v3470 = vld [vmem:[%s3460 + $0x48] sm:$0xff]
        %v3471 = vld [vmem:[%s3460 + $0x50] sm:$0xff]
        %v3472 = vld [vmem:[%s3460 + $0x58] sm:$0xff]
        %v3473 = vld [vmem:[%s3460 + $0x60] sm:$0xff]
        %v3474 = vld [vmem:[%s3460 + $0x68] sm:$0xff]
        %v3475 = vld [vmem:[%s3460 + $0x70] sm:$0xff]
        %v3476 = vld [vmem:[%s3460 + $0x78] sm:$0xff]
        %v3477 = vld [vmem:[%s3460 + $0x80] sm:$0xff]
        %v3478 = vld [vmem:[%s3460 + $0x88] sm:$0xff]
        %v3479 = vld [vmem:[%s3460 + $0x90] sm:$0xff]
        %v3480 = vld [vmem:[%s3460 + $0x98] sm:$0xff]
        %v3481 = vld [vmem:[%s3460 + $0xa0] sm:$0xff]
        %v3482 = vld [vmem:[%s3460 + $0xa8] sm:$0xff]
        %v3483 = vld [vmem:[%s3460 + $0xb0] sm:$0xff]
        %v3484 = vld [vmem:[%s3460 + $0xb8] sm:$0xff]
        %v3485 = vld [vmem:[%s3460 + $0xc0] sm:$0xff]
        %v3486 = vld [vmem:[%s3460 + $0xc8] sm:$0xff]
        %v3487 = vld [vmem:[%s3460 + $0xd0] sm:$0xff]
        %v3488 = vld [vmem:[%s3460 + $0xd8] sm:$0xff]
        %v3489 = vld [vmem:[%s3460 + $0xe0] sm:$0xff]
        %v3490 = vld [vmem:[%s3460 + $0xe8] sm:$0xff]
        %v3491 = vld [vmem:[%s3460 + $0xf0] sm:$0xff]
        %v3492 = vld [vmem:[%s3460 + $0xf8] sm:$0xff]
        %v3493 = vld [vmem:[%s3460 + $0x100] sm:$0xff]
        %v3494 = vld [vmem:[%s3460 + $0x108] sm:$0xff]
        %v3495 = vld [vmem:[%s3460 + $0x110] sm:$0xff]
        %v3496 = vld [vmem:[%s3460 + $0x118] sm:$0xff]
        %v3497 = vld [vmem:[%s3460 + $0x120] sm:$0xff]
        %v3498 = vld [vmem:[%s3460 + $0x128] sm:$0xff]
        %v3499 = vld [vmem:[%s3460 + $0x130] sm:$0xff]
        %v3500 = vld [vmem:[%s3460 + $0x138] sm:$0xff]
        %v3501 = vld [vmem:[%s3460 + $0x140] sm:$0xff]
        %v3502 = vld [vmem:[%s3460 + $0x148] sm:$0xff]
        %v3503 = vld [vmem:[%s3460 + $0x150] sm:$0xff]
        %v3504 = vld [vmem:[%s3460 + $0x158] sm:$0xff]
        %v3505 = vld [vmem:[%s3460 + $0x160] sm:$0xff]
        %v3506 = vld [vmem:[%s3460 + $0x168] sm:$0xff]
        %v3507 = vld [vmem:[%s3460 + $0x170] sm:$0xff]
        %v3508 = vld [vmem:[%s3460 + $0x178] sm:$0xff]
        %3509 = vmatprep.subr.mxu0 0.0
        %3510 = vmatpush1.msra.mxu0 %v3461
        %3511 = vmatprep.subr.mxu0 0.0
        %3512 = vmatpush1.msra.mxu0 %v3462
        %3513 = vmatprep.subr.mxu0 0.0
        %3514 = vmatpush1.msra.mxu0 %v3463
        %3515 = vmatprep.subr.mxu0 0.0
        %3516 = vmatpush1.msra.mxu0 %v3464
        %3517 = vmatprep.subr.mxu0 0.0
        %3518 = vmatpush1.msra.mxu0 %v3465
        %3519 = vmatprep.subr.mxu0 0.0
        %3520 = vmatpush1.msra.mxu0 %v3466
        %3521 = vmatprep.subr.mxu0 0.0
        %3522 = vmatpush1.msra.mxu0 %v3467
        %3523 = vmatprep.subr.mxu0 0.0
        %3524 = vmatpush1.msra.mxu0 %v3468
        %3525 = vmatprep.subr.mxu0 0.0
        %3526 = vmatpush1.msra.mxu0 %v3469
        %3527 = vmatprep.subr.mxu0 0.0
        %3528 = vmatpush1.msra.mxu0 %v3470
        %3529 = vmatprep.subr.mxu0 0.0
        %3530 = vmatpush1.msra.mxu0 %v3471
        %3531 = vmatprep.subr.mxu0 0.0
        %3532 = vmatpush1.msra.mxu0 %v3472
        %3533 = vmatprep.subr.mxu0 0.0
        %3534 = vmatpush1.msra.mxu0 %v3473
        %3535 = vmatprep.subr.mxu0 0.0
        %3536 = vmatpush1.msra.mxu0 %v3474
        %3537 = vmatprep.subr.mxu0 0.0
        %3538 = vmatpush1.msra.mxu0 %v3475
        %3539 = vmatprep.subr.mxu0 0.0
        %3540 = vmatpush1.msra.mxu0 %v3476
        %3541 = vmatprep.subr.mxu0 0.0
        %3542 = vmatpush1.msra.mxu0 %v3477
        %3543 = vmatprep.subr.mxu0 0.0
        %3544 = vmatpush1.msra.mxu0 %v3478
        %3545 = vmatprep.subr.mxu0 0.0
        %3546 = vmatpush1.msra.mxu0 %v3479
        %3547 = vmatprep.subr.mxu0 0.0
        %3548 = vmatpush1.msra.mxu0 %v3480
        %3549 = vmatprep.subr.mxu0 0.0
        %3550 = vmatpush1.msra.mxu0 %v3481
        %3551 = vmatprep.subr.mxu0 0.0
        %3552 = vmatpush1.msra.mxu0 %v3482
        %3553 = vmatprep.subr.mxu0 0.0
        %3554 = vmatpush1.msra.mxu0 %v3483
        %3555 = vmatprep.subr.mxu0 0.0
        %3556 = vmatpush1.msra.mxu0 %v3484
        %3557 = vmatprep.subr.mxu0 0.0
        %3558 = vmatpush1.msra.mxu0 %v3485
        %3559 = vmatprep.subr.mxu0 0.0
        %3560 = vmatpush1.msra.mxu0 %v3486
        %3561 = vmatprep.subr.mxu0 0.0
        %3562 = vmatpush1.msra.mxu0 %v3487
        %3563 = vmatprep.subr.mxu0 0.0
        %3564 = vmatpush1.msra.mxu0 %v3488
        %3565 = vmatprep.subr.mxu0 0.0
        %3566 = vmatpush1.msra.mxu0 %v3489
        %3567 = vmatprep.subr.mxu0 0.0
        %3568 = vmatpush1.msra.mxu0 %v3490
        %3569 = vmatprep.subr.mxu0 0.0
        %3570 = vmatpush1.msra.mxu0 %v3491
        %3571 = vmatprep.subr.mxu0 0.0
        %3572 = vmatpush1.msra.mxu0 %v3492
        %3573 = vmatprep.mubr.f32.mxu0 %v3436
        %3574 = vmatmul.mubr.f32.gmra.mrb[0].mxu0 %v3420
        %v3575 = vpop.f32.mrb[0].mxu0
        %v3576 = vadd.f32 0.0, %v3575
        %v3577 = vpop.f32.mrb[0].mxu0
        %3578 = vmatprep.mubr.f32.mxu0 %v3437
        %3579 = vmatmul.mubr.f32.gmra.mrb[0].mxu0 %v3421
        %v3580 = vpop.f32.mrb[0].mxu0
        %v3581 = vadd.f32 0.0, %v3580
        %v3582 = vpop.f32.mrb[0].mxu0
        %3583 = vmatprep.mubr.f32.mxu0 %v3438
        %3584 = vmatmul.mubr.f32.gmra.mrb[0].mxu0 %v3422
        %v3585 = vpop.f32.mrb[0].mxu0
        %v3586 = vadd.f32 0.0, %v3585
        %v3587 = vpop.f32.mrb[0].mxu0
        %3588 = vmatprep.mubr.f32.mxu0 %v3439
        %3589 = vmatmul.mubr.f32.gmra.mrb[0].mxu0 %v3423
        %v3590 = vpop.f32.mrb[0].mxu0
        %v3591 = vadd.f32 0.0, %v3590
        %v3592 = vpop.f32.mrb[0].mxu0
        %3593 = vmatprep.mubr.f32.mxu0 %v3440
        %3594 = vmatmul.mubr.f32.gmra.mrb[0].mxu0 %v3424
        %v3595 = vpop.f32.mrb[0].mxu0
        %v3596 = vadd.f32 0.0, %v3595
        %v3597 = vpop.f32.mrb[0].mxu0
        %3598 = vmatprep.mubr.f32.mxu0 %v3441
        %3599 = vmatmul.mubr.f32.gmra.mrb[0].mxu0 %v3425
        %v3600 = vpop.f32.mrb[0].mxu0
        %v3601 = vadd.f32 0.0, %v3600
        %v3602 = vpop.f32.mrb[0].mxu0
        %3603 = vmatprep.mubr.f32.mxu0 %v3442
        %3604 = vmatmul.mubr.f32.gmra.mrb[0].mxu0 %v3426
        %v3605 = vpop.f32.mrb[0].mxu0
        %v3606 = vadd.f32 0.0, %v3605
        %v3607 = vpop.f32.mrb[0].mxu0
        %3608 = vmatprep.mubr.f32.mxu0 %v3443
        %3609 = vmatmul.mubr.f32.gmra.mrb[0].mxu0 %v3427
        %v3610 = vpop.f32.mrb[0].mxu0
        %v3611 = vadd.f32 0.0, %v3610
        %v3612 = vpop.f32.mrb[0].mxu0
        %3613 = vmatprep.mubr.f32.mxu0 %v3444
        %3614 = vmatmul.mubr.f32.gmra.mrb[0].mxu0 %v3428
        %v3615 = vpop.f32.mrb[0].mxu0
        %v3616 = vadd.f32 0.0, %v3615
        %v3617 = vpop.f32.mrb[0].mxu0
        %3618 = vmatprep.mubr.f32.mxu0 %v3445
        %3619 = vmatmul.mubr.f32.gmra.mrb[0].mxu0 %v3429
        %v3620 = vpop.f32.mrb[0].mxu0
        %v3621 = vadd.f32 0.0, %v3620
        %v3622 = vpop.f32.mrb[0].mxu0
        %3623 = vmatprep.mubr.f32.mxu0 %v3446
        %3624 = vmatmul.mubr.f32.gmra.mrb[0].mxu0 %v3430
        %v3625 = vpop.f32.mrb[0].mxu0
        %v3626 = vadd.f32 0.0, %v3625
        %v3627 = vpop.f32.mrb[0].mxu0
        %3628 = vmatprep.mubr.f32.mxu0 %v3447
        %3629 = vmatmul.mubr.f32.gmra.mrb[0].mxu0 %v3431
        %v3630 = vpop.f32.mrb[0].mxu0
        %v3631 = vadd.f32 0.0, %v3630
        %v3632 = vpop.f32.mrb[0].mxu0
        %3633 = vmatprep.mubr.f32.mxu0 %v3448
        %3634 = vmatmul.mubr.f32.gmra.mrb[0].mxu0 %v3432
        %v3635 = vpop.f32.mrb[0].mxu0
        %v3636 = vadd.f32 0.0, %v3635
        %v3637 = vpop.f32.mrb[0].mxu0
        %3638 = vmatprep.mubr.f32.mxu0 %v3449
        %3639 = vmatmul.mubr.f32.gmra.mrb[0].mxu0 %v3433
        %v3640 = vpop.f32.mrb[0].mxu0
        %v3641 = vadd.f32 0.0, %v3640
        %v3642 = vpop.f32.mrb[0].mxu0
        %3643 = vmatprep.mubr.f32.mxu0 %v3450
        %3644 = vmatmul.mubr.f32.gmra.mrb[0].mxu0 %v3434
        %v3645 = vpop.f32.mrb[0].mxu0
        %v3646 = vadd.f32 0.0, %v3645
        %v3647 = vpop.f32.mrb[0].mxu0
        %3648 = vmatprep.mubr.f32.mxu0 %v3451
        %3649 = vmatmul.mubr.f32.gmra.mrb[0].mxu0 %v3435
        %v3650 = vpop.f32.mrb[0].mxu0
        %v3651 = vadd.f32 0.0, %v3650
        %v3652 = vpop.f32.mrb[0].mxu0
        %3653 = vdwg.mxu0
        %3654 = vmatprep.subr.mxu0 0.0
        %3655 = vmatpush1.msra.mxu0 %v3493
        %3656 = vmatprep.subr.mxu0 0.0
        %3657 = vmatpush1.msra.mxu0 %v3494
        %3658 = vmatprep.subr.mxu0 0.0
        %3659 = vmatpush1.msra.mxu0 %v3495
        %3660 = vmatprep.subr.mxu0 0.0
        %3661 = vmatpush1.msra.mxu0 %v3496
        %3662 = vmatprep.subr.mxu0 0.0
        %3663 = vmatpush1.msra.mxu0 %v3497
        %3664 = vmatprep.subr.mxu0 0.0
        %3665 = vmatpush1.msra.mxu0 %v3498
        %3666 = vmatprep.subr.mxu0 0.0
        %3667 = vmatpush1.msra.mxu0 %v3499
        %3668 = vmatprep.subr.mxu0 0.0
        %3669 = vmatpush1.msra.mxu0 %v3500
        %3670 = vmatprep.subr.mxu0 0.0
        %3671 = vmatpush1.msra.mxu0 %v3501
        %3672 = vmatprep.subr.mxu0 0.0
        %3673 = vmatpush1.msra.mxu0 %v3502
        %3674 = vmatprep.subr.mxu0 0.0
        %3675 = vmatpush1.msra.mxu0 %v3503
        %3676 = vmatprep.subr.mxu0 0.0
        %3677 = vmatpush1.msra.mxu0 %v3504
        %3678 = vmatprep.subr.mxu0 0.0
        %3679 = vmatpush1.msra.mxu0 %v3505
        %3680 = vmatprep.subr.mxu0 0.0
        %3681 = vmatpush1.msra.mxu0 %v3506
        %3682 = vmatprep.subr.mxu0 0.0
        %3683 = vmatpush1.msra.mxu0 %v3507
        %3684 = vmatprep.subr.mxu0 0.0
        %3685 = vmatpush1.msra.mxu0 %v3508
        %3686 = vmatprep.subr.mxu0 0.0
        %3687 = vmatpush1.msra.mxu0 0.0
        %3688 = vmatprep.subr.mxu0 0.0
        %3689 = vmatpush1.msra.mxu0 0.0
        %3690 = vmatprep.subr.mxu0 0.0
        %3691 = vmatpush1.msra.mxu0 0.0
        %3692 = vmatprep.subr.mxu0 0.0
        %3693 = vmatpush1.msra.mxu0 0.0
        %3694 = vmatprep.subr.mxu0 0.0
        %3695 = vmatpush1.msra.mxu0 0.0
        %3696 = vmatprep.subr.mxu0 0.0
        %3697 = vmatpush1.msra.mxu0 0.0
        %3698 = vmatprep.subr.mxu0 0.0
        %3699 = vmatpush1.msra.mxu0 0.0
        %3700 = vmatprep.subr.mxu0 0.0
        %3701 = vmatpush1.msra.mxu0 0.0
        %3702 = vmatprep.subr.mxu0 0.0
        %3703 = vmatpush1.msra.mxu0 0.0
        %3704 = vmatprep.subr.mxu0 0.0
        %3705 = vmatpush1.msra.mxu0 0.0
        %3706 = vmatprep.subr.mxu0 0.0
        %3707 = vmatpush1.msra.mxu0 0.0
        %3708 = vmatprep.subr.mxu0 0.0
        %3709 = vmatpush1.msra.mxu0 0.0
        %3710 = vmatprep.subr.mxu0 0.0
        %3711 = vmatpush1.msra.mxu0 0.0
        %3712 = vmatprep.subr.mxu0 0.0
        %3713 = vmatpush1.msra.mxu0 0.0
        %3714 = vmatprep.subr.mxu0 0.0
        %3715 = vmatpush1.msra.mxu0 0.0
        %3716 = vmatprep.subr.mxu0 0.0
        %3717 = vmatpush1.msra.mxu0 0.0
        %3718 = vmatprep.mubr.f32.mxu0 0.0
        %3719 = vmatmul.mubr.f32.gmra.mrb[0].mxu0 %v3421
        %v3720 = vpop.f32.mrb[0].mxu0
        %v3721 = vadd.f32 %v3576, %v3720
        %v3722 = vpop.f32.mrb[0].mxu0
        %3723 = vmatprep.mubr.f32.mxu0 0.0
        %3724 = vmatmul.mubr.f32.gmra.mrb[0].mxu0 %v3452
        %v3725 = vpop.f32.mrb[0].mxu0
        %v3726 = vadd.f32 %v3581, %v3725
        %v3727 = vpop.f32.mrb[0].mxu0
        %3728 = vmatprep.mubr.f32.mxu0 0.0
        %3729 = vmatmul.mubr.f32.gmra.mrb[0].mxu0 %v3423
        %v3730 = vpop.f32.mrb[0].mxu0
        %v3731 = vadd.f32 %v3586, %v3730
        %v3732 = vpop.f32.mrb[0].mxu0
        %3733 = vmatprep.mubr.f32.mxu0 0.0
        %3734 = vmatmul.mubr.f32.gmra.mrb[0].mxu0 %v3453
        %v3735 = vpop.f32.mrb[0].mxu0
        %v3736 = vadd.f32 %v3591, %v3735
        %v3737 = vpop.f32.mrb[0].mxu0
        %3738 = vmatprep.mubr.f32.mxu0 0.0
        %3739 = vmatmul.mubr.f32.gmra.mrb[0].mxu0 %v3425
        %v3740 = vpop.f32.mrb[0].mxu0
        %v3741 = vadd.f32 %v3596, %v3740
        %v3742 = vpop.f32.mrb[0].mxu0
        %3743 = vmatprep.mubr.f32.mxu0 0.0
        %3744 = vmatmul.mubr.f32.gmra.mrb[0].mxu0 %v3454
        %v3745 = vpop.f32.mrb[0].mxu0
        %v3746 = vadd.f32 %v3601, %v3745
        %v3747 = vpop.f32.mrb[0].mxu0
        %3748 = vmatprep.mubr.f32.mxu0 0.0
        %3749 = vmatmul.mubr.f32.gmra.mrb[0].mxu0 %v3427
        %v3750 = vpop.f32.mrb[0].mxu0
        %v3751 = vadd.f32 %v3606, %v3750
        %v3752 = vpop.f32.mrb[0].mxu0
        %3753 = vmatprep.mubr.f32.mxu0 0.0
        %3754 = vmatmul.mubr.f32.gmra.mrb[0].mxu0 %v3455
        %v3755 = vpop.f32.mrb[0].mxu0
        %v3756 = vadd.f32 %v3611, %v3755
        %v3757 = vpop.f32.mrb[0].mxu0
        %3758 = vmatprep.mubr.f32.mxu0 0.0
        %3759 = vmatmul.mubr.f32.gmra.mrb[0].mxu0 %v3429
        %v3760 = vpop.f32.mrb[0].mxu0
        %v3761 = vadd.f32 %v3616, %v3760
        %v3762 = vpop.f32.mrb[0].mxu0
        %3763 = vmatprep.mubr.f32.mxu0 0.0
        %3764 = vmatmul.mubr.f32.gmra.mrb[0].mxu0 %v3456
        %v3765 = vpop.f32.mrb[0].mxu0
        %v3766 = vadd.f32 %v3621, %v3765
        %v3767 = vpop.f32.mrb[0].mxu0
        %3768 = vmatprep.mubr.f32.mxu0 0.0
        %3769 = vmatmul.mubr.f32.gmra.mrb[0].mxu0 %v3431
        %v3770 = vpop.f32.mrb[0].mxu0
        %v3771 = vadd.f32 %v3626, %v3770
        %v3772 = vpop.f32.mrb[0].mxu0
        %3773 = vmatprep.mubr.f32.mxu0 0.0
        %3774 = vmatmul.mubr.f32.gmra.mrb[0].mxu0 %v3457
        %v3775 = vpop.f32.mrb[0].mxu0
        %v3776 = vadd.f32 %v3631, %v3775
        %v3777 = vpop.f32.mrb[0].mxu0
        %3778 = vmatprep.mubr.f32.mxu0 0.0
        %3779 = vmatmul.mubr.f32.gmra.mrb[0].mxu0 %v3433
        %v3780 = vpop.f32.mrb[0].mxu0
        %v3781 = vadd.f32 %v3636, %v3780
        %v3782 = vpop.f32.mrb[0].mxu0
        %3783 = vmatprep.mubr.f32.mxu0 0.0
        %3784 = vmatmul.mubr.f32.gmra.mrb[0].mxu0 %v3458
        %v3785 = vpop.f32.mrb[0].mxu0
        %v3786 = vadd.f32 %v3641, %v3785
        %v3787 = vpop.f32.mrb[0].mxu0
        %3788 = vmatprep.mubr.f32.mxu0 0.0
        %3789 = vmatmul.mubr.f32.gmra.mrb[0].mxu0 %v3435
        %v3790 = vpop.f32.mrb[0].mxu0
        %v3791 = vadd.f32 %v3646, %v3790
        %v3792 = vpop.f32.mrb[0].mxu0
        %3793 = vmatprep.mubr.f32.mxu0 0.0
        %3794 = vmatmul.mubr.f32.gmra.mrb[0].mxu0 %v3459
        %v3795 = vpop.f32.mrb[0].mxu0
        %v3796 = vadd.f32 %v3651, %v3795
        %v3797 = vpop.f32.mrb[0].mxu0
        %3798 = vdwg.mxu0
        %v3799 = vadd.f32 %v3403, %v3721
        %v3800 = vadd.f32 %v3404, %v3726
        %v3801 = vadd.f32 %v3405, %v3731
        %v3802 = vadd.f32 %v3406, %v3736
        %v3803 = vadd.f32 %v3407, %v3741
        %v3804 = vadd.f32 %v3408, %v3746
        %v3805 = vadd.f32 %v3409, %v3751
        %v3806 = vadd.f32 %v3410, %v3756
        %v3807 = vadd.f32 %v3411, %v3761
        %v3808 = vadd.f32 %v3412, %v3766
        %v3809 = vadd.f32 %v3413, %v3771
        %v3810 = vadd.f32 %v3414, %v3776
        %v3811 = vadd.f32 %v3415, %v3781
        %v3812 = vadd.f32 %v3416, %v3786
        %v3813 = vadd.f32 %v3417, %v3791
        %v3814 = vadd.f32 %v3418, %v3796
        %3815 = vst [vmem:[%s164] sm:$0xff] %v3799
        %3816 = vst [vmem:[%s164 + $0x8] sm:$0xff] %v3800
        %3817 = vst [vmem:[%s164 + $0x10] sm:$0xff] %v3801
        %3818 = vst [vmem:[%s164 + $0x18] sm:$0xff] %v3802
        %3819 = vst [vmem:[%s164 + $0x20] sm:$0xff] %v3803
        %3820 = vst [vmem:[%s164 + $0x28] sm:$0xff] %v3804
        %3821 = vst [vmem:[%s164 + $0x30] sm:$0xff] %v3805
        %3822 = vst [vmem:[%s164 + $0x38] sm:$0xff] %v3806
        %3823 = vst [vmem:[%s164 + $0x40] sm:$0xff] %v3807
        %3824 = vst [vmem:[%s164 + $0x48] sm:$0xff] %v3808
        %3825 = vst [vmem:[%s164 + $0x50] sm:$0xff] %v3809
        %3826 = vst [vmem:[%s164 + $0x58] sm:$0xff] %v3810
        %3827 = vst [vmem:[%s164 + $0x60] sm:$0xff] %v3811
        %3828 = vst [vmem:[%s164 + $0x68] sm:$0xff] %v3812
        %3829 = vst [vmem:[%s164 + $0x70] sm:$0xff] %v3813
        %3830 = vst [vmem:[%s164 + $0x78] sm:$0xff] %v3814
        %s3831 = sand.u32 %s83, 1
        %s3832 = scalar_lea.sflag [#allocation6], %s3831
        %s3833 = sand.u32 %s83, 1
        %s3834 = smul.addr %s3833, 128
        %s3835 = scalar_lea.vmem [#allocation9], %s3834
        // Predicated region
        $region53: #{tpu_custom_call.1} parent=27 // pred_check
          %p3836 = pneg %p93
        $region54: #{tpu_custom_call.1} parent=27 // pred_check_branch
          %3838 = sbr.rel (%p3836) target = $region56
        $region55: #{tpu_custom_call.1} parent=27 // pred_region
          %s3839 = smul.u32 16, %s24
          %s3841 = ssub.s32 2048, 2048
          %3842 = vsyncadd %s3832, %s3841
          %s3843 = smul.addr %s23, 32
          %s3844 = sadd.s32 %s3839, %s3843
          %s3845 = smul.addr %s3844, 128
          %s3846 = scalar_lea.hbm %s3, %s3845
          %s3847 = sshll.u32 %s3835, 4
          %s3848 = int_to_ptr.vmem [resolvable:$true] %s3847
          %3853 = dma.vmem_to_hbm [thread:$0]  %s3848, 2048, %s3846, %s3832, 128, 128, 8
        $region56: #{tpu_custom_call.1} parent=27 // pred_fallthru
          _
      $region28: #{tpu_custom_call.1} parent=5 // pred_fallthru
        _
      %p3854 = scmp.le.s32.totalorder 2, %s14
      // Predicated region
      $region57: #{tpu_custom_call.1} parent=5 // pred_check
        %p3855 = pneg %p3854
      $region58: #{tpu_custom_call.1} parent=5 // pred_check_branch
        %3857 = sbr.rel (%p3855) target = $region60
      $region59: #{tpu_custom_call.1} parent=5 // pred_region
        %s3858 = ssub.s32 %s14, 2
        // Predicated region
        $region61: #{tpu_custom_call.1} parent=59 // pred_check
          %p3859 = pneg %p99
        $region62: #{tpu_custom_call.1} parent=59 // pred_check_branch
          %3861 = sbr.rel (%p3859) target = $region64
        $region63: #{tpu_custom_call.1} parent=59 // pred_region
          %s3862 = sand.u32 %s84, 1
          %s3863 = scalar_lea.sflag [#allocation6], %s3862
          %s3864 = sand.u32 %s84, 1
          %s3865 = smul.addr %s3864, 128
          %s3866 = scalar_lea.vmem [#allocation9], %s3865
          %3867 = dma.done %s3863, 2048
        $region64: #{tpu_custom_call.1} parent=59 // pred_fallthru
          _
      $region60: #{tpu_custom_call.1} parent=5 // pred_fallthru
        _
    $region6: #{tpu_custom_call.1} parent=1 // loop_footer
      %s18 = sadd.s32 1, %s14
    $region7: #{tpu_custom_call.1} parent=1 // loop_footer_branch
      %13 = sbr.rel target = $region3
    $region8: #{tpu_custom_call.1} parent=1 // loop_exit
      _
    %3868 = vsyncpa [#allocation5], 1
    %s3869 = scalar_lea.sflag [#allocation5], 1
    %3870 = vsyncpa %s3869, 1
    %3871 = vsyncpa [#allocation8], 1
    %3872 = vsyncpa [#allocation6], 1
    %s3873 = scalar_lea.sflag [#allocation6], 1
    %3874 = vsyncpa %s3873, 1
  %3875 = vsyncmov [#allocation3]
  %s3876 = vpop.sfrf %3875
  %p3877 = scmp.eq.s32.totalorder %s3876, 0
  %p3878 = pneg %p3877
  %3880 = shalt.err (%p3878)
  %s3881 = scalar_lea.sflag [#allocation3], 1
  %3882 = vsyncmov %s3881
  %s3883 = vpop.sfrf %3882
  %p3884 = scmp.eq.s32.totalorder %s3883, 0
  %p3885 = pneg %p3884
  %3887 = shalt.err (%p3885)

</llo_original>
